<compile_context>
chip_gen: v6e
topology: v6e:2x2x1
jax: 0.10.0
libtpu: 0.0.40
codegen_flags: <defaults>
</compile_context>

<pallas_src>
import functools

import jax
import jax.numpy as jnp
from jax import lax
from jax.experimental import pallas as pl
from jax.experimental.pallas import tpu as pltpu

T_LEN = 24  # fixed by PositionalEncoding(length=24) / MixingBlock(input_length=24)


def _layernorm(x, gamma, beta, eps=1e-5):
    # one-pass LN: var = E[x^2] - mu^2 (halves the cross-lane XLU reductions).
    mu = jnp.mean(x, axis=-1, keepdims=True)
    var = jnp.mean(x * x, axis=-1, keepdims=True) - mu * mu
    return (x - mu) * lax.rsqrt(var + eps) * gamma + beta


def _gelu_tanh(x):
    c = 0.7978845608028654  # sqrt(2/pi)
    return 0.5 * x * (1.0 + jnp.tanh(c * (x + 0.044715 * x * x * x)))


def model2_kernel(pooled_ref, pe_ref, wc_ref, bc_ref, w1_ref, b1_ref,
                  ln1g_ref, ln1b_ref, wqkv_ref, bqkv_ref,
                  wproj_ref, bproj_ref, ln2g_ref, ln2b_ref,
                  wfc1_ref, bfc1_ref, wfc2_ref, bfc2_ref,
                  gn_ref, bn_ref, w2_ref, b2_ref,
                  out_ref, h_ref, *, num_heads, b_tile, v_chunk):
    layer = pl.program_id(1)
    n_layers = pl.num_programs(1)

    bt = b_tile
    T = pooled_ref.shape[1]
    c_in = pooled_ref.shape[2]
    D = w1_ref.shape[0]
    H = num_heads
    dh = D // H
    N = bt * T                     # flattened row count for all projections
    Vp = w2_ref.shape[1]
    n_chunks = Vp // v_chunk

    def mm(x_f32, w_bf16, b_f32):
        # bf16 MXU matmul, f32 accumulate, f32 bias add.
        return jnp.dot(x_f32.astype(jnp.bfloat16), w_bf16,
                       preferred_element_type=jnp.float32) + b_f32

    # ---- prologue (layer 0): CNN-stub projection + positional enc + linear1 ----
    @pl.when(layer == 0)
    def _init():
        x = pooled_ref[...].reshape(N, c_in)            # bf16 rows
        feat = jnp.dot(x, wc_ref[...],
                       preferred_element_type=jnp.float32) + bc_ref[...]
        h0 = (feat.reshape(bt, T, D) + pe_ref[...]).reshape(N, D)
        h_ref[...] = mm(h0, w1_ref[...], b1_ref[...])

    # ---- MixingBlock `layer` (pre-norm global MHSA + MLP), weights streamed ----
    h = h_ref[...]

    xn = _layernorm(h, ln1g_ref[0], ln1b_ref[0])
    qkv = jnp.dot(xn.astype(jnp.bfloat16), wqkv_ref[0],
                  preferred_element_type=jnp.float32) + bqkv_ref[0]
    # single head-split layout op for Q, K and V (scale pre-folded into Q cols)
    qkv = pltpu.einshape("nhd->hnd", qkv.reshape(N, 3 * H, dh))   # (3H, N, dh)
    qkv = qkv.reshape(3, H * bt, T, dh)
    q = qkv[0].astype(jnp.bfloat16)
    k = qkv[1].astype(jnp.bfloat16)
    v = qkv[2].astype(jnp.bfloat16)

    s = jnp.einsum('bqd,bkd->bqk', q, k, preferred_element_type=jnp.float32)
    s = s - jnp.max(s, axis=-1, keepdims=True)
    p = jnp.exp(s)
    p = p * pl.reciprocal(jnp.sum(p, axis=-1, keepdims=True), approx=True)
    o = jnp.einsum('bqk,bkd->bqd', p.astype(jnp.bfloat16), v,
                   preferred_element_type=jnp.float32)
    o = pltpu.einshape("hnd->nhd", o.reshape(H, N, dh)).reshape(N, D)
    h = h + mm(o, wproj_ref[0], bproj_ref[0])

    xn = _layernorm(h, ln2g_ref[0], ln2b_ref[0])
    mlp = mm(xn, wfc1_ref[0], bfc1_ref[0])
    mlp = _gelu_tanh(mlp)
    h = h + mm(mlp, wfc2_ref[0], bfc2_ref[0])
    h_ref[...] = h

    # ---- epilogue (last layer): final LN + lexicon-tiled classifier + log_softmax ----
    @pl.when(layer == n_layers - 1)
    def _finalize():
        hn = _layernorm(h, gn_ref[...], bn_ref[...]).astype(jnp.bfloat16)
        m_run = jnp.full((N, 1), -1e30, jnp.float32)
        s_run = jnp.zeros((N, 1), jnp.float32)
        # TODO(synk): static chunk loop (lane-dim ref slices must be static
        # here); switch to lax.fori_loop once dynamic lane-dim slices lower.
        for c in range(n_chunks):
            c0 = c * v_chunk
            z = jnp.dot(hn, w2_ref[:, c0:c0 + v_chunk],
                        preferred_element_type=jnp.float32) + b2_ref[:, c0:c0 + v_chunk]
            out_ref[:, :, c0:c0 + v_chunk] = z.reshape(bt, T, v_chunk)
            m_new = jnp.maximum(m_run, jnp.max(z, axis=-1, keepdims=True))
            s_run = s_run * jnp.exp(m_run - m_new) + jnp.sum(
                jnp.exp(z - m_new), axis=-1, keepdims=True)
            m_run = m_new
        lse = (m_run + jnp.log(s_run)).reshape(bt, T, 1)
        for c in range(n_chunks):
            c0 = c * v_chunk
            out_ref[:, :, c0:c0 + v_chunk] = out_ref[:, :, c0:c0 + v_chunk] - lse


def _vmem_limit_bytes():
    cap = 64 * 1024 * 1024  # conservative default: v7x physical VMEM per TC
    try:
        cap = int(getattr(pltpu.get_tpu_info(), "vmem_capacity_bytes", cap) or cap)
    except Exception:  # hardware query unavailable -> keep conservative default
        pass
    return int(min(max(cap * 3 // 4, 32 * 1024 * 1024), 96 * 1024 * 1024))


def model2_forward(x_nchw, params, *, depth, num_heads, b_tile=None):
    B, C_in, Himg, Wimg = x_nchw.shape
    T = T_LEN
    assert Wimg % T == 0, "stub CNN pools width evenly to 24"
    D = params["w1"].shape[0]
    assert D % num_heads == 0
    dh = D // num_heads
    V = params["w2"].shape[1]

    # glue: adaptive average pool (H fully, W -> T), NCHW -> (B, T, C_in); bf16 feed.
    pooled = x_nchw.reshape(B, C_in, Himg, T, Wimg // T).mean(axis=(2, 4))
    pooled = jnp.transpose(pooled, (0, 2, 1)).astype(jnp.bfloat16)

    # batch tiling: fill MXU rows (bt*24) but keep >=2 steps on the parallel
    # batch axis so both v7x TensorCores get work.
    if b_tile is None:
        b_tile = max(1, min(16, -(-B // 2)))
    bt = max(1, min(b_tile, B))
    nb = pl.cdiv(B, bt)
    Bp = nb * bt
    if Bp != B:
        pooled = jnp.pad(pooled, ((0, Bp - B), (0, 0), (0, 0)))

    # lane-dense classifier, tiled over the lexicon in v_chunk-column slabs.
    v_chunk = min(1024, pl.cdiv(V, 128) * 128)
    Vp = pl.cdiv(V, v_chunk) * v_chunk
    w2p = jnp.pad(params["w2"], ((0, 0), (0, Vp - V)))
    b2p = jnp.pad(params["b2"], ((0, 0), (0, Vp - V)), constant_values=-1e30)

    # fused QKV with the attention scale folded into the Q columns / bias.
    scale = dh ** -0.5
    wqkv = jnp.concatenate([params["wq"] * scale, params["wk"], params["wv"]], axis=-1)
    bqkv = jnp.concatenate([params["bq"] * scale, params["bk"], params["bv"]], axis=-1)

    bf16 = lambda a: a.astype(jnp.bfloat16)
    f32 = lambda a: a.astype(jnp.float32)
    row = lambda a: f32(a).reshape(depth, 1, -1)   # (depth, X) -> (depth, 1, X)

    CONST, LAYER, BATCH = 0, 1, 2
    tensors = [
        (pooled, BATCH),
        (f32(params["pe"]), CONST),
        (bf16(params["wc"]), CONST), (f32(params["bc"]), CONST),
        (bf16(params["w1"]), CONST), (f32(params["b1"]), CONST),
        (row(params["ln1_g"]), LAYER), (row(params["ln1_b"]), LAYER),
        (bf16(wqkv), LAYER), (row(bqkv), LAYER),
        (bf16(params["wproj"]), LAYER), (row(params["bproj"]), LAYER),
        (row(params["ln2_g"]), LAYER), (row(params["ln2_b"]), LAYER),
        (bf16(params["wfc1"]), LAYER), (row(params["bfc1"]), LAYER),
        (bf16(params["wfc2"]), LAYER), (row(params["bfc2"]), LAYER),
        (f32(params["gn"]), CONST), (f32(params["bn"]), CONST),
        (bf16(w2p), CONST), (f32(b2p), CONST),
    ]
    args = [a for a, _ in tensors]

    def spec_for(a, kind):
        if kind == BATCH:
            return pl.BlockSpec((bt, T, C_in), lambda b, l: (b, 0, 0))
        if kind == LAYER:
            # stream one layer slice per depth-grid step (double-buffered).
            return pl.BlockSpec((1,) + a.shape[1:], lambda b, l: (l, 0, 0))
        nd = a.ndim
        return pl.BlockSpec(a.shape, lambda b, l, _nd=nd: (0,) * _nd)

    in_specs = [spec_for(a, k) for a, k in tensors]

    kernel = functools.partial(model2_kernel, num_heads=num_heads,
                               b_tile=bt, v_chunk=v_chunk)

    out_p = pl.pallas_call(
        kernel,
        out_shape=jax.ShapeDtypeStruct((Bp, T, Vp), jnp.float32),
        grid_spec=pltpu.PrefetchScalarGridSpec(
            num_scalar_prefetch=0,
            grid=(nb, depth),                       # depth innermost, sequential
            in_specs=in_specs,
            out_specs=pl.BlockSpec((bt, T, Vp), lambda b, l: (b, 0, 0)),
            scratch_shapes=[pltpu.VMEM((bt * T, D), jnp.float32)],  # running h
        ),
        compiler_params=pltpu.CompilerParams(
            dimension_semantics=("parallel", "arbitrary"),
            vmem_limit_bytes=_vmem_limit_bytes(),
        ),
    )(*args)

    out = out_p[:B, :, :V]
    # x = x.permute((1, 0, 2)); log_softmax already applied per position in-kernel.
    return jnp.transpose(out, (1, 0, 2))


def sinusoidal_pe(length, dim):
    pos = jnp.arange(length, dtype=jnp.float32)[:, None]
    i = jnp.arange(0, dim, 2, dtype=jnp.float32)
    div = jnp.exp(-jnp.log(10000.0) * i / dim)
    pe = jnp.zeros((length, dim), jnp.float32)
    pe = pe.at[:, 0::2].set(jnp.sin(pos * div))
    pe = pe.at[:, 1::2].set(jnp.cos(pos * div))
    return pe


def init_params(key, *, in_channels, hidden, lexicon, depth, mlp_ratio=2):
    D = hidden
    R = mlp_ratio * D
    ks = jax.random.split(key, 10)

    def w(k, shape, scale=0.02):
        return (scale * jax.random.normal(k, shape)).astype(jnp.float32)

    return dict(
        pe=sinusoidal_pe(T_LEN, D),
        wc=w(ks[0], (in_channels, D)), bc=jnp.zeros((1, D), jnp.float32),
        w1=w(ks[1], (D, D)), b1=jnp.zeros((1, D), jnp.float32),
        ln1_g=jnp.ones((depth, D), jnp.float32), ln1_b=jnp.zeros((depth, D), jnp.float32),
        wq=w(ks[2], (depth, D, D)), bq=jnp.zeros((depth, D), jnp.float32),
        wk=w(ks[3], (depth, D, D)), bk=jnp.zeros((depth, D), jnp.float32),
        wv=w(ks[4], (depth, D, D)), bv=jnp.zeros((depth, D), jnp.float32),
        wproj=w(ks[5], (depth, D, D)), bproj=jnp.zeros((depth, D), jnp.float32),
        ln2_g=jnp.ones((depth, D), jnp.float32), ln2_b=jnp.zeros((depth, D), jnp.float32),
        wfc1=w(ks[6], (depth, D, R)), bfc1=jnp.zeros((depth, R), jnp.float32),
        wfc2=w(ks[7], (depth, R, D)), bfc2=jnp.zeros((depth, D), jnp.float32),
        gn=jnp.ones((1, D), jnp.float32), bn=jnp.zeros((1, D), jnp.float32),
        w2=w(ks[8], (D, lexicon)), b2=jnp.zeros((1, lexicon), jnp.float32),
    )


if __name__ == "__main__":
    key = jax.random.PRNGKey(0)
    kx, kp = jax.random.split(key)

    # small shapes consistent with the module (W must be a multiple of 24).
    B, C_in, Himg, Wimg = 4, 4, 16, 48
    hidden, num_heads, depth, lexicon = 32, 4, 2, 32

    x = jax.random.normal(kx, (B, C_in, Himg, Wimg), jnp.float32)
    params = init_params(kp, in_channels=C_in, hidden=hidden,
                         lexicon=lexicon, depth=depth)

    # auto b_tile -> bt=2, nb=2 (2 parallel batch steps x 2 streamed layers).
    out = model2_forward(x, params, depth=depth, num_heads=num_heads)
    out = jax.block_until_ready(out)

    assert out.shape == (T_LEN, B, lexicon)
    assert bool(jnp.all(jnp.isfinite(out)))
    # log_softmax sanity: probabilities sum to ~1 per (t, b) position
    assert bool(jnp.all(jnp.abs(jnp.sum(jnp.exp(out), axis=-1) - 1.0) < 1e-3))
    print("KERNEL_OK")
</pallas_src>

<mosaic_0001>
module attributes {stable_mosaic.version = 11 : i64} {
  func.func @model2_kernel(%arg0: i32, %arg1: i32, %arg2: memref<2x24x4xbf16, #tpu.memory_space<vmem>>, %arg3: memref<24x32xf32, #tpu.memory_space<vmem>>, %arg4: memref<4x32xbf16, #tpu.memory_space<vmem>>, %arg5: memref<1x32xf32, #tpu.memory_space<vmem>>, %arg6: memref<32x32xbf16, #tpu.memory_space<vmem>>, %arg7: memref<1x32xf32, #tpu.memory_space<vmem>>, %arg8: memref<1x1x32xf32, #tpu.memory_space<vmem>>, %arg9: memref<1x1x32xf32, #tpu.memory_space<vmem>>, %arg10: memref<1x32x96xbf16, #tpu.memory_space<vmem>>, %arg11: memref<1x1x96xf32, #tpu.memory_space<vmem>>, %arg12: memref<1x32x32xbf16, #tpu.memory_space<vmem>>, %arg13: memref<1x1x32xf32, #tpu.memory_space<vmem>>, %arg14: memref<1x1x32xf32, #tpu.memory_space<vmem>>, %arg15: memref<1x1x32xf32, #tpu.memory_space<vmem>>, %arg16: memref<1x32x64xbf16, #tpu.memory_space<vmem>>, %arg17: memref<1x1x64xf32, #tpu.memory_space<vmem>>, %arg18: memref<1x64x32xbf16, #tpu.memory_space<vmem>>, %arg19: memref<1x1x32xf32, #tpu.memory_space<vmem>>, %arg20: memref<1x32xf32, #tpu.memory_space<vmem>>, %arg21: memref<1x32xf32, #tpu.memory_space<vmem>>, %arg22: memref<32x128xbf16, #tpu.memory_space<vmem>>, %arg23: memref<1x128xf32, #tpu.memory_space<vmem>>, %arg24: memref<2x24x128xf32, #tpu.memory_space<vmem>>, %arg25: memref<48x32xf32, #tpu.memory_space<vmem>>) attributes {dimension_semantics = [#tpu.dimension_semantics<parallel>, #tpu.dimension_semantics<arbitrary>], iteration_bounds = array<i64: 2, 2>, scalar_prefetch = 0 : i64, scratch_operands = 1 : i64, tpu.core_type = #tpu.core_type<tc>, window_params = [{transform_indices = @transform_0, window_bounds = array<i64: 2, 24, 4>}, {pipeline_mode = #tpu.pipeline_mode<synchronous>, transform_indices = @transform_1, window_bounds = array<i64: 24, 32>}, {pipeline_mode = #tpu.pipeline_mode<synchronous>, transform_indices = @transform_2, window_bounds = array<i64: 4, 32>}, {pipeline_mode = #tpu.pipeline_mode<synchronous>, transform_indices = @transform_3, window_bounds = array<i64: 1, 32>}, {pipeline_mode = #tpu.pipeline_mode<synchronous>, transform_indices = @transform_4, window_bounds = array<i64: 32, 32>}, {pipeline_mode = #tpu.pipeline_mode<synchronous>, transform_indices = @transform_5, window_bounds = array<i64: 1, 32>}, {transform_indices = @transform_6, window_bounds = array<i64: 1, 1, 32>}, {transform_indices = @transform_7, window_bounds = array<i64: 1, 1, 32>}, {transform_indices = @transform_8, window_bounds = array<i64: 1, 32, 96>}, {transform_indices = @transform_9, window_bounds = array<i64: 1, 1, 96>}, {transform_indices = @transform_10, window_bounds = array<i64: 1, 32, 32>}, {transform_indices = @transform_11, window_bounds = array<i64: 1, 1, 32>}, {transform_indices = @transform_12, window_bounds = array<i64: 1, 1, 32>}, {transform_indices = @transform_13, window_bounds = array<i64: 1, 1, 32>}, {transform_indices = @transform_14, window_bounds = array<i64: 1, 32, 64>}, {transform_indices = @transform_15, window_bounds = array<i64: 1, 1, 64>}, {transform_indices = @transform_16, window_bounds = array<i64: 1, 64, 32>}, {transform_indices = @transform_17, window_bounds = array<i64: 1, 1, 32>}, {pipeline_mode = #tpu.pipeline_mode<synchronous>, transform_indices = @transform_18, window_bounds = array<i64: 1, 32>}, {pipeline_mode = #tpu.pipeline_mode<synchronous>, transform_indices = @transform_19, window_bounds = array<i64: 1, 32>}, {pipeline_mode = #tpu.pipeline_mode<synchronous>, transform_indices = @transform_20, window_bounds = array<i64: 32, 128>}, {pipeline_mode = #tpu.pipeline_mode<synchronous>, transform_indices = @transform_21, window_bounds = array<i64: 1, 128>}, {transform_indices = @transform_22, window_bounds = array<i64: 2, 24, 128>}]} {
    %c0_i32 = arith.constant 0 : i32
    %0 = arith.cmpi eq, %arg1, %c0_i32 : i32
    %1 = arith.extui %0 : i1 to i32
    %c0_i32_0 = arith.constant 0 : i32
    %2 = arith.cmpi ne, %1, %c0_i32_0 : i32
    scf.if %2 {
      %c0_62 = arith.constant 0 : index
      %c0_63 = arith.constant 0 : index
      %c0_64 = arith.constant 0 : index
      %135 = vector.load %arg2[%c0_62, %c0_63, %c0_64] : memref<2x24x4xbf16, #tpu.memory_space<vmem>>, vector<2x24x4xbf16>
      %136 = vector.shape_cast %135 : vector<2x24x4xbf16> to vector<48x4xbf16>
      %c0_65 = arith.constant 0 : index
      %c0_66 = arith.constant 0 : index
      %137 = vector.load %arg4[%c0_65, %c0_66] : memref<4x32xbf16, #tpu.memory_space<vmem>>, vector<4x32xbf16>
      %cst_67 = arith.constant dense<0.000000e+00> : vector<48x32xf32>
      %138 = tpu.matmul %136, %137, %cst_67 {dimension_numbers = #tpu.dot_dimension_numbers<[1], [0], [0], [1], [0, 0, 1, 1], [], []>} : vector<48x4xbf16>, vector<4x32xbf16>, vector<48x32xf32> -> vector<48x32xf32>
      %c0_68 = arith.constant 0 : index
      %c0_69 = arith.constant 0 : index
      %139 = vector.load %arg5[%c0_68, %c0_69] : memref<1x32xf32, #tpu.memory_space<vmem>>, vector<1x32xf32>
      %140 = vector.broadcast %139 : vector<1x32xf32> to vector<48x32xf32>
      %141 = arith.addf %138, %140 : vector<48x32xf32>
      %142 = vector.shape_cast %141 : vector<48x32xf32> to vector<2x24x32xf32>
      %c0_70 = arith.constant 0 : index
      %c0_71 = arith.constant 0 : index
      %143 = vector.load %arg3[%c0_70, %c0_71] : memref<24x32xf32, #tpu.memory_space<vmem>>, vector<24x32xf32>
      %144 = vector.shape_cast %143 : vector<24x32xf32> to vector<1x24x32xf32>
      %145 = vector.broadcast %144 : vector<1x24x32xf32> to vector<2x24x32xf32>
      %146 = arith.addf %142, %145 : vector<2x24x32xf32>
      %147 = vector.shape_cast %146 : vector<2x24x32xf32> to vector<48x32xf32>
      %c0_72 = arith.constant 0 : index
      %c0_73 = arith.constant 0 : index
      %148 = vector.load %arg6[%c0_72, %c0_73] : memref<32x32xbf16, #tpu.memory_space<vmem>>, vector<32x32xbf16>
      %c0_74 = arith.constant 0 : index
      %c0_75 = arith.constant 0 : index
      %149 = vector.load %arg7[%c0_74, %c0_75] : memref<1x32xf32, #tpu.memory_space<vmem>>, vector<1x32xf32>
      %150 = arith.truncf %147 : vector<48x32xf32> to vector<48x32xbf16>
      %cst_76 = arith.constant dense<0.000000e+00> : vector<48x32xf32>
      %151 = tpu.matmul %150, %148, %cst_76 {dimension_numbers = #tpu.dot_dimension_numbers<[1], [0], [0], [1], [0, 0, 1, 1], [], []>} : vector<48x32xbf16>, vector<32x32xbf16>, vector<48x32xf32> -> vector<48x32xf32>
      %152 = vector.broadcast %149 : vector<1x32xf32> to vector<48x32xf32>
      %153 = arith.addf %151, %152 : vector<48x32xf32>
      %c0_77 = arith.constant 0 : index
      %c0_78 = arith.constant 0 : index
      %154 = vector.load %arg25[%c0_77, %c0_78] : memref<48x32xf32, #tpu.memory_space<vmem>>, vector<48x32xf32>
      tpu.vector_store %arg25[%c0_77, %c0_78], %153 {strides = array<i32>} : memref<48x32xf32, #tpu.memory_space<vmem>>, vector<48x32xf32>,
    } else {
    }
    %c0 = arith.constant 0 : index
    %c0_1 = arith.constant 0 : index
    %3 = vector.load %arg25[%c0, %c0_1] : memref<48x32xf32, #tpu.memory_space<vmem>>, vector<48x32xf32>
    %c0_2 = arith.constant 0 : index
    %c0_3 = arith.constant 0 : index
    %c0_4 = arith.constant 0 : index
    %4 = vector.load %arg8[%c0_2, %c0_3, %c0_4] : memref<1x1x32xf32, #tpu.memory_space<vmem>>, vector<1x1x32xf32>
    %5 = vector.shape_cast %4 : vector<1x1x32xf32> to vector<1x32xf32>
    %c0_5 = arith.constant 0 : index
    %c0_6 = arith.constant 0 : index
    %c0_7 = arith.constant 0 : index
    %6 = vector.load %arg9[%c0_5, %c0_6, %c0_7] : memref<1x1x32xf32, #tpu.memory_space<vmem>>, vector<1x1x32xf32>
    %7 = vector.shape_cast %6 : vector<1x1x32xf32> to vector<1x32xf32>
    %cst = arith.constant dense<0.000000e+00> : vector<48xf32>
    %8 = vector.multi_reduction <add>, %3, %cst [1] : vector<48x32xf32> to vector<48xf32>
    %9 = vector.shape_cast %8 : vector<48xf32> to vector<48x1xf32>
    %cst_8 = arith.constant 3.200000e+01 : f32
    %10 = vector.broadcast %cst_8 : f32 to vector<48x1xf32>
    %11 = arith.divf %9, %10 : vector<48x1xf32>
    %12 = arith.mulf %3, %3 : vector<48x32xf32>
    %cst_9 = arith.constant dense<0.000000e+00> : vector<48xf32>
    %13 = vector.multi_reduction <add>, %12, %cst_9 [1] : vector<48x32xf32> to vector<48xf32>
    %14 = vector.shape_cast %13 : vector<48xf32> to vector<48x1xf32>
    %cst_10 = arith.constant 3.200000e+01 : f32
    %15 = vector.broadcast %cst_10 : f32 to vector<48x1xf32>
    %16 = arith.divf %14, %15 : vector<48x1xf32>
    %17 = arith.mulf %11, %11 : vector<48x1xf32>
    %18 = arith.subf %16, %17 : vector<48x1xf32>
    %19 = vector.broadcast %11 : vector<48x1xf32> to vector<48x32xf32>
    %20 = arith.subf %3, %19 : vector<48x32xf32>
    %cst_11 = arith.constant 9.99999974E-6 : f32
    %21 = vector.broadcast %cst_11 : f32 to vector<48x1xf32>
    %22 = arith.addf %18, %21 : vector<48x1xf32>
    %23 = math.rsqrt %22 : vector<48x1xf32>
    %24 = vector.broadcast %23 : vector<48x1xf32> to vector<48x32xf32>
    %25 = arith.mulf %20, %24 : vector<48x32xf32>
    %26 = vector.broadcast %5 : vector<1x32xf32> to vector<48x32xf32>
    %27 = arith.mulf %25, %26 : vector<48x32xf32>
    %28 = vector.broadcast %7 : vector<1x32xf32> to vector<48x32xf32>
    %29 = arith.addf %27, %28 : vector<48x32xf32>
    %30 = arith.truncf %29 : vector<48x32xf32> to vector<48x32xbf16>
    %c0_12 = arith.constant 0 : index
    %c0_13 = arith.constant 0 : index
    %c0_14 = arith.constant 0 : index
    %31 = vector.load %arg10[%c0_12, %c0_13, %c0_14] : memref<1x32x96xbf16, #tpu.memory_space<vmem>>, vector<1x32x96xbf16>
    %32 = vector.shape_cast %31 : vector<1x32x96xbf16> to vector<32x96xbf16>
    %cst_15 = arith.constant dense<0.000000e+00> : vector<48x96xf32>
    %33 = tpu.matmul %30, %32, %cst_15 {dimension_numbers = #tpu.dot_dimension_numbers<[1], [0], [0], [1], [0, 0, 1, 1], [], []>} : vector<48x32xbf16>, vector<32x96xbf16>, vector<48x96xf32> -> vector<48x96xf32>
    %c0_16 = arith.constant 0 : index
    %c0_17 = arith.constant 0 : index
    %c0_18 = arith.constant 0 : index
    %34 = vector.load %arg11[%c0_16, %c0_17, %c0_18] : memref<1x1x96xf32, #tpu.memory_space<vmem>>, vector<1x1x96xf32>
    %35 = vector.shape_cast %34 : vector<1x1x96xf32> to vector<1x96xf32>
    %36 = vector.broadcast %35 : vector<1x96xf32> to vector<48x96xf32>
    %37 = arith.addf %33, %36 : vector<48x96xf32>
    %38 = vector.shape_cast %37 : vector<48x96xf32> to vector<48x12x8xf32>
    %39 = tpu.transpose %38, [1, 0, 2] : vector<48x12x8xf32> -> vector<12x48x8xf32>
    %40 = vector.shape_cast %39 : vector<12x48x8xf32> to vector<3x8x24x8xf32>
    %41 = vector.extract_strided_slice %40 {offsets = [0, 0, 0, 0], sizes = [1, 8, 24, 8], strides = [1, 1, 1, 1]} : vector<3x8x24x8xf32> to vector<1x8x24x8xf32>
    %42 = vector.shape_cast %41 : vector<1x8x24x8xf32> to vector<8x24x8xf32>
    %43 = arith.truncf %42 : vector<8x24x8xf32> to vector<8x24x8xbf16>
    %44 = vector.extract_strided_slice %40 {offsets = [1, 0, 0, 0], sizes = [1, 8, 24, 8], strides = [1, 1, 1, 1]} : vector<3x8x24x8xf32> to vector<1x8x24x8xf32>
    %45 = vector.shape_cast %44 : vector<1x8x24x8xf32> to vector<8x24x8xf32>
    %46 = arith.truncf %45 : vector<8x24x8xf32> to vector<8x24x8xbf16>
    %47 = vector.extract_strided_slice %40 {offsets = [2, 0, 0, 0], sizes = [1, 8, 24, 8], strides = [1, 1, 1, 1]} : vector<3x8x24x8xf32> to vector<1x8x24x8xf32>
    %48 = vector.shape_cast %47 : vector<1x8x24x8xf32> to vector<8x24x8xf32>
    %49 = arith.truncf %48 : vector<8x24x8xf32> to vector<8x24x8xbf16>
    "tpu.trace_start"() <{level = 10 : i32, message = "bqd,bkd->bqk"}> : () -> ()
    %cst_19 = arith.constant dense<0.000000e+00> : vector<8x24x24xf32>
    %50 = tpu.matmul %43, %46, %cst_19 {dimension_numbers = #tpu.dot_dimension_numbers<[2], [2], [1], [1], [0, 0, 0, 1, 1, 1], [0], [0]>} : vector<8x24x8xbf16>, vector<8x24x8xbf16>, vector<8x24x24xf32> -> vector<8x24x24xf32>
    "tpu.trace_stop"() : () -> ()
    %cst_20 = arith.constant dense<0xFF800000> : vector<8x24xf32>
    %51 = vector.multi_reduction <maximumf>, %50, %cst_20 [2] : vector<8x24x24xf32> to vector<8x24xf32>
    %52 = vector.shape_cast %51 : vector<8x24xf32> to vector<8x24x1xf32>
    %53 = vector.broadcast %52 : vector<8x24x1xf32> to vector<8x24x24xf32>
    %54 = arith.subf %50, %53 : vector<8x24x24xf32>
    %55 = math.exp %54 : vector<8x24x24xf32>
    %cst_21 = arith.constant dense<0.000000e+00> : vector<8x24xf32>
    %56 = vector.multi_reduction <add>, %55, %cst_21 [2] : vector<8x24x24xf32> to vector<8x24xf32>
    %57 = vector.shape_cast %56 : vector<8x24xf32> to vector<8x24x1xf32>
    %58 = tpu.reciprocal %57 {approx = true} : vector<8x24x1xf32> -> vector<8x24x1xf32>
    %59 = vector.broadcast %58 : vector<8x24x1xf32> to vector<8x24x24xf32>
    %60 = arith.mulf %55, %59 : vector<8x24x24xf32>
    %61 = arith.truncf %60 : vector<8x24x24xf32> to vector<8x24x24xbf16>
    "tpu.trace_start"() <{level = 10 : i32, message = "bqk,bkd->bqd"}> : () -> ()
    %cst_22 = arith.constant dense<0.000000e+00> : vector<8x24x8xf32>
    %62 = tpu.matmul %61, %49, %cst_22 {dimension_numbers = #tpu.dot_dimension_numbers<[2], [1], [1], [2], [0, 0, 0, 1, 1, 2], [0], [0]>} : vector<8x24x24xbf16>, vector<8x24x8xbf16>, vector<8x24x8xf32> -> vector<8x24x8xf32>
    "tpu.trace_stop"() : () -> ()
    %63 = vector.shape_cast %62 : vector<8x24x8xf32> to vector<4x48x8xf32>
    %64 = tpu.transpose %63, [1, 0, 2] : vector<4x48x8xf32> -> vector<48x4x8xf32>
    %65 = vector.shape_cast %64 : vector<48x4x8xf32> to vector<48x32xf32>
    %c0_23 = arith.constant 0 : index
    %c0_24 = arith.constant 0 : index
    %c0_25 = arith.constant 0 : index
    %66 = vector.load %arg12[%c0_23, %c0_24, %c0_25] : memref<1x32x32xbf16, #tpu.memory_space<vmem>>, vector<1x32x32xbf16>
    %67 = vector.shape_cast %66 : vector<1x32x32xbf16> to vector<32x32xbf16>
    %c0_26 = arith.constant 0 : index
    %c0_27 = arith.constant 0 : index
    %c0_28 = arith.constant 0 : index
    %68 = vector.load %arg13[%c0_26, %c0_27, %c0_28] : memref<1x1x32xf32, #tpu.memory_space<vmem>>, vector<1x1x32xf32>
    %69 = vector.shape_cast %68 : vector<1x1x32xf32> to vector<1x32xf32>
    %70 = arith.truncf %65 : vector<48x32xf32> to vector<48x32xbf16>
    %cst_29 = arith.constant dense<0.000000e+00> : vector<48x32xf32>
    %71 = tpu.matmul %70, %67, %cst_29 {dimension_numbers = #tpu.dot_dimension_numbers<[1], [0], [0], [1], [0, 0, 1, 1], [], []>} : vector<48x32xbf16>, vector<32x32xbf16>, vector<48x32xf32> -> vector<48x32xf32>
    %72 = vector.broadcast %69 : vector<1x32xf32> to vector<48x32xf32>
    %73 = arith.addf %71, %72 : vector<48x32xf32>
    %74 = arith.addf %3, %73 : vector<48x32xf32>
    %c0_30 = arith.constant 0 : index
    %c0_31 = arith.constant 0 : index
    %c0_32 = arith.constant 0 : index
    %75 = vector.load %arg14[%c0_30, %c0_31, %c0_32] : memref<1x1x32xf32, #tpu.memory_space<vmem>>, vector<1x1x32xf32>
    %76 = vector.shape_cast %75 : vector<1x1x32xf32> to vector<1x32xf32>
    %c0_33 = arith.constant 0 : index
    %c0_34 = arith.constant 0 : index
    %c0_35 = arith.constant 0 : index
    %77 = vector.load %arg15[%c0_33, %c0_34, %c0_35] : memref<1x1x32xf32, #tpu.memory_space<vmem>>, vector<1x1x32xf32>
    %78 = vector.shape_cast %77 : vector<1x1x32xf32> to vector<1x32xf32>
    %cst_36 = arith.constant dense<0.000000e+00> : vector<48xf32>
    %79 = vector.multi_reduction <add>, %74, %cst_36 [1] : vector<48x32xf32> to vector<48xf32>
    %80 = vector.shape_cast %79 : vector<48xf32> to vector<48x1xf32>
    %cst_37 = arith.constant 3.200000e+01 : f32
    %81 = vector.broadcast %cst_37 : f32 to vector<48x1xf32>
    %82 = arith.divf %80, %81 : vector<48x1xf32>
    %83 = arith.mulf %74, %74 : vector<48x32xf32>
    %cst_38 = arith.constant dense<0.000000e+00> : vector<48xf32>
    %84 = vector.multi_reduction <add>, %83, %cst_38 [1] : vector<48x32xf32> to vector<48xf32>
    %85 = vector.shape_cast %84 : vector<48xf32> to vector<48x1xf32>
    %cst_39 = arith.constant 3.200000e+01 : f32
    %86 = vector.broadcast %cst_39 : f32 to vector<48x1xf32>
    %87 = arith.divf %85, %86 : vector<48x1xf32>
    %88 = arith.mulf %82, %82 : vector<48x1xf32>
    %89 = arith.subf %87, %88 : vector<48x1xf32>
    %90 = vector.broadcast %82 : vector<48x1xf32> to vector<48x32xf32>
    %91 = arith.subf %74, %90 : vector<48x32xf32>
    %cst_40 = arith.constant 9.99999974E-6 : f32
    %92 = vector.broadcast %cst_40 : f32 to vector<48x1xf32>
    %93 = arith.addf %89, %92 : vector<48x1xf32>
    %94 = math.rsqrt %93 : vector<48x1xf32>
    %95 = vector.broadcast %94 : vector<48x1xf32> to vector<48x32xf32>
    %96 = arith.mulf %91, %95 : vector<48x32xf32>
    %97 = vector.broadcast %76 : vector<1x32xf32> to vector<48x32xf32>
    %98 = arith.mulf %96, %97 : vector<48x32xf32>
    %99 = vector.broadcast %78 : vector<1x32xf32> to vector<48x32xf32>
    %100 = arith.addf %98, %99 : vector<48x32xf32>
    %c0_41 = arith.constant 0 : index
    %c0_42 = arith.constant 0 : index
    %c0_43 = arith.constant 0 : index
    %101 = vector.load %arg16[%c0_41, %c0_42, %c0_43] : memref<1x32x64xbf16, #tpu.memory_space<vmem>>, vector<1x32x64xbf16>
    %102 = vector.shape_cast %101 : vector<1x32x64xbf16> to vector<32x64xbf16>
    %c0_44 = arith.constant 0 : index
    %c0_45 = arith.constant 0 : index
    %c0_46 = arith.constant 0 : index
    %103 = vector.load %arg17[%c0_44, %c0_45, %c0_46] : memref<1x1x64xf32, #tpu.memory_space<vmem>>, vector<1x1x64xf32>
    %104 = vector.shape_cast %103 : vector<1x1x64xf32> to vector<1x64xf32>
    %105 = arith.truncf %100 : vector<48x32xf32> to vector<48x32xbf16>
    %cst_47 = arith.constant dense<0.000000e+00> : vector<48x64xf32>
    %106 = tpu.matmul %105, %102, %cst_47 {dimension_numbers = #tpu.dot_dimension_numbers<[1], [0], [0], [1], [0, 0, 1, 1], [], []>} : vector<48x32xbf16>, vector<32x64xbf16>, vector<48x64xf32> -> vector<48x64xf32>
    %107 = vector.broadcast %104 : vector<1x64xf32> to vector<48x64xf32>
    %108 = arith.addf %106, %107 : vector<48x64xf32>
    %cst_48 = arith.constant 5.000000e-01 : f32
    %109 = vector.broadcast %cst_48 : f32 to vector<48x64xf32>
    %110 = arith.mulf %109, %108 : vector<48x64xf32>
    %cst_49 = arith.constant 4.471500e-02 : f32
    %111 = vector.broadcast %cst_49 : f32 to vector<48x64xf32>
    %112 = arith.mulf %111, %108 : vector<48x64xf32>
    %113 = arith.mulf %112, %108 : vector<48x64xf32>
    %114 = arith.mulf %113, %108 : vector<48x64xf32>
    %115 = arith.addf %108, %114 : vector<48x64xf32>
    %cst_50 = arith.constant 0.797884583 : f32
    %116 = vector.broadcast %cst_50 : f32 to vector<48x64xf32>
    %117 = arith.mulf %116, %115 : vector<48x64xf32>
    %118 = math.tanh %117 : vector<48x64xf32>
    %cst_51 = arith.constant 1.000000e+00 : f32
    %119 = vector.broadcast %cst_51 : f32 to vector<48x64xf32>
    %120 = arith.addf %119, %118 : vector<48x64xf32>
    %121 = arith.mulf %110, %120 : vector<48x64xf32>
    %c0_52 = arith.constant 0 : index
    %c0_53 = arith.constant 0 : index
    %c0_54 = arith.constant 0 : index
    %122 = vector.load %arg18[%c0_52, %c0_53, %c0_54] : memref<1x64x32xbf16, #tpu.memory_space<vmem>>, vector<1x64x32xbf16>
    %123 = vector.shape_cast %122 : vector<1x64x32xbf16> to vector<64x32xbf16>
    %c0_55 = arith.constant 0 : index
    %c0_56 = arith.constant 0 : index
    %c0_57 = arith.constant 0 : index
    %124 = vector.load %arg19[%c0_55, %c0_56, %c0_57] : memref<1x1x32xf32, #tpu.memory_space<vmem>>, vector<1x1x32xf32>
    %125 = vector.shape_cast %124 : vector<1x1x32xf32> to vector<1x32xf32>
    %126 = arith.truncf %121 : vector<48x64xf32> to vector<48x64xbf16>
    %cst_58 = arith.constant dense<0.000000e+00> : vector<48x32xf32>
    %127 = tpu.matmul %126, %123, %cst_58 {dimension_numbers = #tpu.dot_dimension_numbers<[1], [0], [0], [1], [0, 0, 1, 1], [], []>} : vector<48x64xbf16>, vector<64x32xbf16>, vector<48x32xf32> -> vector<48x32xf32>
    %128 = vector.broadcast %125 : vector<1x32xf32> to vector<48x32xf32>
    %129 = arith.addf %127, %128 : vector<48x32xf32>
    %130 = arith.addf %74, %129 : vector<48x32xf32>
    %c0_59 = arith.constant 0 : index
    %c0_60 = arith.constant 0 : index
    %131 = vector.load %arg25[%c0_59, %c0_60] : memref<48x32xf32, #tpu.memory_space<vmem>>, vector<48x32xf32>
    tpu.vector_store %arg25[%c0_59, %c0_60], %130 {strides = array<i32>} : memref<48x32xf32, #tpu.memory_space<vmem>>, vector<48x32xf32>,
    %c1_i32 = arith.constant 1 : i32
    %132 = arith.cmpi eq, %arg1, %c1_i32 : i32
    %133 = arith.extui %132 : i1 to i32
    %c0_i32_61 = arith.constant 0 : i32
    %134 = arith.cmpi ne, %133, %c0_i32_61 : i32
    scf.if %134 {
      %c0_62 = arith.constant 0 : index
      %c0_63 = arith.constant 0 : index
      %135 = vector.load %arg20[%c0_62, %c0_63] : memref<1x32xf32, #tpu.memory_space<vmem>>, vector<1x32xf32>
      %c0_64 = arith.constant 0 : index
      %c0_65 = arith.constant 0 : index
      %136 = vector.load %arg21[%c0_64, %c0_65] : memref<1x32xf32, #tpu.memory_space<vmem>>, vector<1x32xf32>
      %cst_66 = arith.constant dense<0.000000e+00> : vector<48xf32>
      %137 = vector.multi_reduction <add>, %130, %cst_66 [1] : vector<48x32xf32> to vector<48xf32>
      %138 = vector.shape_cast %137 : vector<48xf32> to vector<48x1xf32>
      %cst_67 = arith.constant 3.200000e+01 : f32
      %139 = vector.broadcast %cst_67 : f32 to vector<48x1xf32>
      %140 = arith.divf %138, %139 : vector<48x1xf32>
      %141 = arith.mulf %130, %130 : vector<48x32xf32>
      %cst_68 = arith.constant dense<0.000000e+00> : vector<48xf32>
      %142 = vector.multi_reduction <add>, %141, %cst_68 [1] : vector<48x32xf32> to vector<48xf32>
      %143 = vector.shape_cast %142 : vector<48xf32> to vector<48x1xf32>
      %cst_69 = arith.constant 3.200000e+01 : f32
      %144 = vector.broadcast %cst_69 : f32 to vector<48x1xf32>
      %145 = arith.divf %143, %144 : vector<48x1xf32>
      %146 = arith.mulf %140, %140 : vector<48x1xf32>
      %147 = arith.subf %145, %146 : vector<48x1xf32>
      %148 = vector.broadcast %140 : vector<48x1xf32> to vector<48x32xf32>
      %149 = arith.subf %130, %148 : vector<48x32xf32>
      %cst_70 = arith.constant 9.99999974E-6 : f32
      %150 = vector.broadcast %cst_70 : f32 to vector<48x1xf32>
      %151 = arith.addf %147, %150 : vector<48x1xf32>
      %152 = math.rsqrt %151 : vector<48x1xf32>
      %153 = vector.broadcast %152 : vector<48x1xf32> to vector<48x32xf32>
      %154 = arith.mulf %149, %153 : vector<48x32xf32>
      %155 = vector.broadcast %135 : vector<1x32xf32> to vector<48x32xf32>
      %156 = arith.mulf %154, %155 : vector<48x32xf32>
      %157 = vector.broadcast %136 : vector<1x32xf32> to vector<48x32xf32>
      %158 = arith.addf %156, %157 : vector<48x32xf32>
      %159 = arith.truncf %158 : vector<48x32xf32> to vector<48x32xbf16>
      %cst_71 = arith.constant -1.000000e+30 : f32
      %160 = vector.broadcast %cst_71 : f32 to vector<48x1xf32>
      %cst_72 = arith.constant 0.000000e+00 : f32
      %161 = vector.broadcast %cst_72 : f32 to vector<48x1xf32>
      %c0_73 = arith.constant 0 : index
      %c0_74 = arith.constant 0 : index
      %162 = vector.load %arg22[%c0_73, %c0_74] : memref<32x128xbf16, #tpu.memory_space<vmem>>, vector<32x128xbf16>
      %cst_75 = arith.constant dense<0.000000e+00> : vector<48x128xf32>
      %163 = tpu.matmul %159, %162, %cst_75 {dimension_numbers = #tpu.dot_dimension_numbers<[1], [0], [0], [1], [0, 0, 1, 1], [], []>} : vector<48x32xbf16>, vector<32x128xbf16>, vector<48x128xf32> -> vector<48x128xf32>
      %c0_76 = arith.constant 0 : index
      %c0_77 = arith.constant 0 : index
      %164 = vector.load %arg23[%c0_76, %c0_77] : memref<1x128xf32, #tpu.memory_space<vmem>>, vector<1x128xf32>
      %165 = vector.broadcast %164 : vector<1x128xf32> to vector<48x128xf32>
      %166 = arith.addf %163, %165 : vector<48x128xf32>
      %167 = vector.shape_cast %166 : vector<48x128xf32> to vector<2x24x128xf32>
      %c0_78 = arith.constant 0 : index
      %c0_79 = arith.constant 0 : index
      %c0_80 = arith.constant 0 : index
      %168 = vector.load %arg24[%c0_78, %c0_79, %c0_80] : memref<2x24x128xf32, #tpu.memory_space<vmem>>, vector<2x24x128xf32>
      tpu.vector_store %arg24[%c0_78, %c0_79, %c0_80], %167 {strides = array<i32>} : memref<2x24x128xf32, #tpu.memory_space<vmem>>, vector<2x24x128xf32>,
      %cst_81 = arith.constant dense<0xFF800000> : vector<48xf32>
      %169 = vector.multi_reduction <maximumf>, %166, %cst_81 [1] : vector<48x128xf32> to vector<48xf32>
      %170 = vector.shape_cast %169 : vector<48xf32> to vector<48x1xf32>
      %171 = arith.maximumf %160, %170 : vector<48x1xf32>
      %172 = arith.subf %160, %171 : vector<48x1xf32>
      %173 = math.exp %172 : vector<48x1xf32>
      %174 = arith.mulf %161, %173 : vector<48x1xf32>
      %175 = vector.broadcast %171 : vector<48x1xf32> to vector<48x128xf32>
      %176 = arith.subf %166, %175 : vector<48x128xf32>
      %177 = math.exp %176 : vector<48x128xf32>
      %cst_82 = arith.constant dense<0.000000e+00> : vector<48xf32>
      %178 = vector.multi_reduction <add>, %177, %cst_82 [1] : vector<48x128xf32> to vector<48xf32>
      %179 = vector.shape_cast %178 : vector<48xf32> to vector<48x1xf32>
      %180 = arith.addf %174, %179 : vector<48x1xf32>
      %181 = math.log %180 : vector<48x1xf32>
      %182 = arith.addf %171, %181 : vector<48x1xf32>
      %183 = vector.shape_cast %182 : vector<48x1xf32> to vector<2x24x1xf32>
      %c0_83 = arith.constant 0 : index
      %c0_84 = arith.constant 0 : index
      %c0_85 = arith.constant 0 : index
      %184 = vector.load %arg24[%c0_83, %c0_84, %c0_85] : memref<2x24x128xf32, #tpu.memory_space<vmem>>, vector<2x24x128xf32>
      %185 = vector.broadcast %183 : vector<2x24x1xf32> to vector<2x24x128xf32>
      %186 = arith.subf %184, %185 : vector<2x24x128xf32>
      %c0_86 = arith.constant 0 : index
      %c0_87 = arith.constant 0 : index
      %c0_88 = arith.constant 0 : index
      %187 = vector.load %arg24[%c0_86, %c0_87, %c0_88] : memref<2x24x128xf32, #tpu.memory_space<vmem>>, vector<2x24x128xf32>
      tpu.vector_store %arg24[%c0_86, %c0_87, %c0_88], %186 {strides = array<i32>} : memref<2x24x128xf32, #tpu.memory_space<vmem>>, vector<2x24x128xf32>,
    } else {
    }
    return
  }
  func.func @transform_0(%arg0: i32, %arg1: i32) -> (i32, i32, i32) {
    %c0_i32 = arith.constant 0 : i32
    %c0_i32_0 = arith.constant 0 : i32
    %c0_i32_1 = arith.constant 0 : i32
    return %arg0, %c0_i32, %c0_i32_0 : i32, i32, i32
  }
  func.func @transform_1(%arg0: i32, %arg1: i32) -> (i32, i32) {
    %c0_i32 = arith.constant 0 : i32
    %c0_i32_0 = arith.constant 0 : i32
    %c0_i32_1 = arith.constant 0 : i32
    return %c0_i32, %c0_i32_0 : i32, i32
  }
  func.func @transform_2(%arg0: i32, %arg1: i32) -> (i32, i32) {
    %c0_i32 = arith.constant 0 : i32
    %c0_i32_0 = arith.constant 0 : i32
    %c0_i32_1 = arith.constant 0 : i32
    return %c0_i32, %c0_i32_0 : i32, i32
  }
  func.func @transform_3(%arg0: i32, %arg1: i32) -> (i32, i32) {
    %c0_i32 = arith.constant 0 : i32
    %c0_i32_0 = arith.constant 0 : i32
    %c0_i32_1 = arith.constant 0 : i32
    return %c0_i32, %c0_i32_0 : i32, i32
  }
  func.func @transform_4(%arg0: i32, %arg1: i32) -> (i32, i32) {
    %c0_i32 = arith.constant 0 : i32
    %c0_i32_0 = arith.constant 0 : i32
    %c0_i32_1 = arith.constant 0 : i32
    return %c0_i32, %c0_i32_0 : i32, i32
  }
  func.func @transform_5(%arg0: i32, %arg1: i32) -> (i32, i32) {
    %c0_i32 = arith.constant 0 : i32
    %c0_i32_0 = arith.constant 0 : i32
    %c0_i32_1 = arith.constant 0 : i32
    return %c0_i32, %c0_i32_0 : i32, i32
  }
  func.func @transform_6(%arg0: i32, %arg1: i32) -> (i32, i32, i32) {
    %c0_i32 = arith.constant 0 : i32
    %c0_i32_0 = arith.constant 0 : i32
    %c0_i32_1 = arith.constant 0 : i32
    return %arg1, %c0_i32, %c0_i32_0 : i32, i32, i32
  }
  func.func @transform_7(%arg0: i32, %arg1: i32) -> (i32, i32, i32) {
    %c0_i32 = arith.constant 0 : i32
    %c0_i32_0 = arith.constant 0 : i32
    %c0_i32_1 = arith.constant 0 : i32
    return %arg1, %c0_i32, %c0_i32_0 : i32, i32, i32
  }
  func.func @transform_8(%arg0: i32, %arg1: i32) -> (i32, i32, i32) {
    %c0_i32 = arith.constant 0 : i32
    %c0_i32_0 = arith.constant 0 : i32
    %c0_i32_1 = arith.constant 0 : i32
    return %arg1, %c0_i32, %c0_i32_0 : i32, i32, i32
  }
  func.func @transform_9(%arg0: i32, %arg1: i32) -> (i32, i32, i32) {
    %c0_i32 = arith.constant 0 : i32
    %c0_i32_0 = arith.constant 0 : i32
    %c0_i32_1 = arith.constant 0 : i32
    return %arg1, %c0_i32, %c0_i32_0 : i32, i32, i32
  }
  func.func @transform_10(%arg0: i32, %arg1: i32) -> (i32, i32, i32) {
    %c0_i32 = arith.constant 0 : i32
    %c0_i32_0 = arith.constant 0 : i32
    %c0_i32_1 = arith.constant 0 : i32
    return %arg1, %c0_i32, %c0_i32_0 : i32, i32, i32
  }
  func.func @transform_11(%arg0: i32, %arg1: i32) -> (i32, i32, i32) {
    %c0_i32 = arith.constant 0 : i32
    %c0_i32_0 = arith.constant 0 : i32
    %c0_i32_1 = arith.constant 0 : i32
    return %arg1, %c0_i32, %c0_i32_0 : i32, i32, i32
  }
  func.func @transform_12(%arg0: i32, %arg1: i32) -> (i32, i32, i32) {
    %c0_i32 = arith.constant 0 : i32
    %c0_i32_0 = arith.constant 0 : i32
    %c0_i32_1 = arith.constant 0 : i32
    return %arg1, %c0_i32, %c0_i32_0 : i32, i32, i32
  }
  func.func @transform_13(%arg0: i32, %arg1: i32) -> (i32, i32, i32) {
    %c0_i32 = arith.constant 0 : i32
    %c0_i32_0 = arith.constant 0 : i32
    %c0_i32_1 = arith.constant 0 : i32
    return %arg1, %c0_i32, %c0_i32_0 : i32, i32, i32
  }
  func.func @transform_14(%arg0: i32, %arg1: i32) -> (i32, i32, i32) {
    %c0_i32 = arith.constant 0 : i32
    %c0_i32_0 = arith.constant 0 : i32
    %c0_i32_1 = arith.constant 0 : i32
    return %arg1, %c0_i32, %c0_i32_0 : i32, i32, i32
  }
  func.func @transform_15(%arg0: i32, %arg1: i32) -> (i32, i32, i32) {
    %c0_i32 = arith.constant 0 : i32
    %c0_i32_0 = arith.constant 0 : i32
    %c0_i32_1 = arith.constant 0 : i32
    return %arg1, %c0_i32, %c0_i32_0 : i32, i32, i32
  }
  func.func @transform_16(%arg0: i32, %arg1: i32) -> (i32, i32, i32) {
    %c0_i32 = arith.constant 0 : i32
    %c0_i32_0 = arith.constant 0 : i32
    %c0_i32_1 = arith.constant 0 : i32
    return %arg1, %c0_i32, %c0_i32_0 : i32, i32, i32
  }
  func.func @transform_17(%arg0: i32, %arg1: i32) -> (i32, i32, i32) {
    %c0_i32 = arith.constant 0 : i32
    %c0_i32_0 = arith.constant 0 : i32
    %c0_i32_1 = arith.constant 0 : i32
    return %arg1, %c0_i32, %c0_i32_0 : i32, i32, i32
  }
  func.func @transform_18(%arg0: i32, %arg1: i32) -> (i32, i32) {
    %c0_i32 = arith.constant 0 : i32
    %c0_i32_0 = arith.constant 0 : i32
    %c0_i32_1 = arith.constant 0 : i32
    return %c0_i32, %c0_i32_0 : i32, i32
  }
  func.func @transform_19(%arg0: i32, %arg1: i32) -> (i32, i32) {
    %c0_i32 = arith.constant 0 : i32
    %c0_i32_0 = arith.constant 0 : i32
    %c0_i32_1 = arith.constant 0 : i32
    return %c0_i32, %c0_i32_0 : i32, i32
  }
  func.func @transform_20(%arg0: i32, %arg1: i32) -> (i32, i32) {
    %c0_i32 = arith.constant 0 : i32
    %c0_i32_0 = arith.constant 0 : i32
    %c0_i32_1 = arith.constant 0 : i32
    return %c0_i32, %c0_i32_0 : i32, i32
  }
  func.func @transform_21(%arg0: i32, %arg1: i32) -> (i32, i32) {
    %c0_i32 = arith.constant 0 : i32
    %c0_i32_0 = arith.constant 0 : i32
    %c0_i32_1 = arith.constant 0 : i32
    return %c0_i32, %c0_i32_0 : i32, i32
  }
  func.func @transform_22(%arg0: i32, %arg1: i32) -> (i32, i32, i32) {
    %c0_i32 = arith.constant 0 : i32
    %c0_i32_0 = arith.constant 0 : i32
    %c0_i32_1 = arith.constant 0 : i32
    return %arg0, %c0_i32, %c0_i32_0 : i32, i32, i32
  }
}

</mosaic_0001>

<llo_original>
// kernel: tpu_custom_call.1
$region0: #{tpu_custom_call.1}
  #allocation0 [shape = 'u32[]', space=smem, size = 0x4, offset = 0x4, fixed_abs, tag = 'smem constant byte address 0x4 - core index']
  #allocation1 [shape = 'u32[144,128]{1,0:T(1,128)}', space=vmem, size = 0x12000, scoped, tag = 'internal scratch']
  #allocation2 [shape = 'f32[48,32]{1,0:T(8,128)}', space=vmem, size = 0x6000, scoped, tag = 'scratch operand']
  %s0 = inlined_call_operand.vmem [shape: bf16[4,24,4], index: 0, kind: input, shape index: {}]
  %s1 = inlined_call_operand.vmem [shape: f32[24,32], index: 1, kind: input, shape index: {}]
  %s2 = inlined_call_operand.vmem [shape: bf16[4,32], index: 2, kind: input, shape index: {}]
  %s3 = inlined_call_operand.hbm [shape: f32[1,32], index: 3, kind: input, shape index: {}]
  %s4 = inlined_call_operand.hbm [shape: bf16[32,32], index: 4, kind: input, shape index: {}]
  %s5 = inlined_call_operand.hbm [shape: f32[1,32], index: 5, kind: input, shape index: {}]
  %s6 = inlined_call_operand.hbm [shape: f32[2,1,32], index: 6, kind: input, shape index: {}]
  %s7 = inlined_call_operand.hbm [shape: f32[2,1,32], index: 7, kind: input, shape index: {}]
  %s8 = inlined_call_operand.vmem [shape: bf16[2,32,96], index: 8, kind: input, shape index: {}]
  %s9 = inlined_call_operand.hbm [shape: f32[2,1,96], index: 9, kind: input, shape index: {}]
  %s10 = inlined_call_operand.vmem [shape: bf16[2,32,32], index: 10, kind: input, shape index: {}]
  %s11 = inlined_call_operand.vmem [shape: f32[2,1,32], index: 11, kind: input, shape index: {}]
  %s12 = inlined_call_operand.hbm [shape: f32[2,1,32], index: 12, kind: input, shape index: {}]
  %s13 = inlined_call_operand.vmem [shape: f32[2,1,32], index: 13, kind: input, shape index: {}]
  %s14 = inlined_call_operand.vmem [shape: bf16[2,32,64], index: 14, kind: input, shape index: {}]
  %s15 = inlined_call_operand.vmem [shape: f32[2,1,64], index: 15, kind: input, shape index: {}]
  %s16 = inlined_call_operand.vmem [shape: bf16[2,64,32], index: 16, kind: input, shape index: {}]
  %s17 = inlined_call_operand.vmem [shape: f32[2,1,32], index: 17, kind: input, shape index: {}]
  %s18 = inlined_call_operand.vmem [shape: f32[1,32], index: 18, kind: input, shape index: {}]
  %s19 = inlined_call_operand.vmem [shape: f32[1,32], index: 19, kind: input, shape index: {}]
  %s20 = inlined_call_operand.vmem [shape: bf16[32,128], index: 20, kind: input, shape index: {}]
  %s21 = inlined_call_operand.vmem [shape: f32[1,128], index: 21, kind: input, shape index: {}]
  %s22 = inlined_call_operand.hbm [shape: f32[4,24,128], index: 22, kind: output, shape index: {}]
  %s23 = sld [smem:[#allocation0]]
  $region157: #{tpu_custom_call.1} parent=0
    _
  %s25 = ssub.s32 1, %s23
  %s26 = scalar_select 0, %s25, %s23
  $region1: #{tpu_custom_call.1} parent=0
    #allocation3 [shape = 'u8[512]{0}', space=vmem, size = 0x400, scoped, tag = 'input window, operand 3, single buffered']
    #allocation4 [shape = 's32[2]{0}', space=sflag, size = 0x8, scoped, tag = 'scoped memory for tpu_custom_call.1']
    #allocation5 [shape = 's32[2]{0}', space=sflag, size = 0x8, scoped, tag = 'scoped memory for tpu_custom_call.1']
    #allocation6 [shape = 'u8[8192]{0}', space=vmem, size = 0x2000, scoped, tag = 'input window, operand 4, single buffered']
    #allocation7 [shape = 's32[1]{0}', space=sflag, size = 0x4, scoped, tag = 'scoped memory for tpu_custom_call.1']
    #allocation8 [shape = 'u8[512]{0}', space=vmem, size = 0x400, scoped, tag = 'input window, operand 5, single buffered']
    #allocation9 [shape = 'u8[1024]{0}', space=vmem, size = 0x400, scoped, tag = 'input window, operand 6']
    #allocation10 [shape = 's32[2]{0}', space=sflag, size = 0x8, scoped, tag = 'scoped memory for tpu_custom_call.1']
    #allocation11 [shape = 'u8[1024]{0}', space=vmem, size = 0x400, scoped, tag = 'input window, operand 7']
    #allocation12 [shape = 'u8[1024]{0}', space=vmem, size = 0x400, scoped, tag = 'input window, operand 9']
    #allocation13 [shape = 's32[2]{0}', space=sflag, size = 0x8, scoped, tag = 'scoped memory for tpu_custom_call.1']
    #allocation14 [shape = 'u8[1024]{0}', space=vmem, size = 0x400, scoped, tag = 'input window, operand 12']
    #allocation15 [shape = 'u8[49152]{0}', space=vmem, size = 0xc000, scoped, tag = 'output window, operand 0']
    %27 = vsyncpa [#allocation4], 0
    %28 = vsyncpa [#allocation7], 0
    %29 = vsyncpa [#allocation10], 0
    %s30 = scalar_lea.sflag [#allocation10], 1
    %31 = vsyncpa %s30, 0
    %32 = vsyncpa [#allocation13], 0
    %s33 = scalar_lea.sflag [#allocation13], 1
    %34 = vsyncpa %s33, 0
    %35 = vsyncpa [#allocation5], 0
    %s36 = scalar_lea.sflag [#allocation5], 1
    %37 = vsyncpa %s36, 0
    loop: start=0, step=1, limit=6
    $region2: #{tpu_custom_call.1} parent=1 // loop_pre_header
      _
    $region3: #{tpu_custom_call.1} parent=1 // loop_header
      %s39 = sphi 0, %s43
      %p40 = scmp.ge.s32.totalorder %s39, 6
      %s46 = sphi 0, %s58
      %s47 = sphi 0, %s54
      %s48 = sphi 0, %s46
      %s49 = sphi 0, %s47
      %s50 = sphi 0, %s48
      %s51 = sphi 0, %s49
      %s61 = sphi 0, %s63
      %s64 = sphi 0, %s61
      %s65 = sphi 0, %s64
      %s81 = sphi 0, %s65
      %s85 = sphi 0, %s85
      %s87 = sphi 0, %s85
      %s88 = sphi 0, %s87
      %s102 = sphi 0, %s88
      %s106 = sphi 0, %s106
      %s108 = sphi 0, %s106
      %s109 = sphi 0, %s108
      %s123 = sphi 0, %s109
      %s127 = sphi 0, %s127
      %s129 = sphi 0, %s127
      %s130 = sphi 0, %s129
      %s144 = sphi 0, %s130
      %s148 = sphi 0, %s148
      %s150 = sphi 0, %s148
      %s151 = sphi 0, %s150
      %s165 = sphi 0, %s151
      %s169 = sphi 0, %s169
      %s171 = sphi 0, %s169
      %s172 = sphi 0, %s171
      %s186 = sphi 0, %s172
      %s192 = sphi 0, %s194
      %s195 = sphi 0, %s192
      %s196 = sphi 0, %s195
      %s212 = sphi 0, %s196
      %s218 = sphi 0, %s220
      %s221 = sphi 0, %s218
      %s222 = sphi 0, %s221
      %s238 = sphi 0, %s222
      %s244 = sphi 0, %s246
      %s247 = sphi 0, %s244
      %s248 = sphi 0, %s247
      %s264 = sphi 0, %s248
      %s270 = sphi 0, %s272
      %s273 = sphi 0, %s270
      %s274 = sphi 0, %s273
      %s290 = sphi 0, %s274
      %s296 = sphi 0, %s298
      %s299 = sphi 0, %s296
      %s300 = sphi 0, %s299
      %s316 = sphi 0, %s300
      %s322 = sphi 0, %s324
      %s325 = sphi 0, %s322
      %s326 = sphi 0, %s325
      %s342 = sphi 0, %s326
      %s348 = sphi 0, %s350
      %s351 = sphi 0, %s348
      %s352 = sphi 0, %s351
      %s368 = sphi 0, %s352
      %s374 = sphi 0, %s376
      %s377 = sphi 0, %s374
      %s378 = sphi 0, %s377
      %s394 = sphi 0, %s378
      %s400 = sphi 0, %s402
      %s403 = sphi 0, %s400
      %s404 = sphi 0, %s403
      %s420 = sphi 0, %s404
      %s426 = sphi 0, %s428
      %s429 = sphi 0, %s426
      %s430 = sphi 0, %s429
      %s446 = sphi 0, %s430
      %s452 = sphi 0, %s454
      %s455 = sphi 0, %s452
      %s456 = sphi 0, %s455
      %s472 = sphi 0, %s456
      %s478 = sphi 0, %s480
      %s481 = sphi 0, %s478
      %s482 = sphi 0, %s481
      %s498 = sphi 0, %s482
      %s502 = sphi 0, %s502
      %s504 = sphi 0, %s502
      %s505 = sphi 0, %s504
      %s519 = sphi 0, %s505
      %s523 = sphi 0, %s523
      %s525 = sphi 0, %s523
      %s526 = sphi 0, %s525
      %s540 = sphi 0, %s526
      %s544 = sphi 0, %s544
      %s546 = sphi 0, %s544
      %s547 = sphi 0, %s546
      %s561 = sphi 0, %s547
      %s565 = sphi 0, %s565
      %s567 = sphi 0, %s565
      %s568 = sphi 0, %s567
      %s582 = sphi 0, %s568
      %s588 = sphi 0, %s590
      %s591 = sphi 0, %s588
      %s592 = sphi 0, %s591
      %s608 = sphi 0, %s592
    $region4: #{tpu_custom_call.1} parent=1 // loop_header_branch
      %42 = sbr.rel (%p40) target = $region8
    $region5: #{tpu_custom_call.1} parent=1 // loop_body
      %s44 = ssub.s32 %s39, 1
      %s45 = ssub.s32 %s39, 2
      %s52 = sadd.s32 1, %s47
      %p53 = scmp.ge.s32.totalorder %s52, 2
      %s54 = scalar_select %p53, 0, %s52
      %s55 = sadd.s32 1, %s46
      %s56 = scalar_select %p53, %s55, %s46
      %p57 = scmp.ge.s32.totalorder %s56, 2
      %s58 = scalar_select %p57, 0, %s56
      %s59 = ssub.s32 %s46, %s58
      %p60 = scmp.eq.s32.totalorder %s59, 0
      %s62 = sadd.s32 %s61, 1
      %s63 = scalar_select %p60, %s61, %s62
      %p66 = pneg %p60
      %p67 = scmp.eq.s32.totalorder %s39, 3
      %p68 = por %p66, %p67
      %p69 = scmp.ne.s32.totalorder %s61, %s64
      %p70 = scmp.eq.s32.totalorder %s39, 0
      %p71 = por %p69, %p70
      %p72 = scmp.ne.s32.totalorder %s61, %s64
      %p73 = scmp.eq.s32.totalorder %s44, 3
      %p74 = por %p72, %p73
      %p75 = scmp.ne.s32.totalorder %s64, %s65
      %p76 = scmp.eq.s32.totalorder %s44, 0
      %p77 = por %p75, %p76
      %p78 = scmp.ne.s32.totalorder %s64, %s65
      %p79 = scmp.eq.s32.totalorder %s45, 3
      %p80 = por %p78, %p79
      %p82 = scmp.ne.s32.totalorder %s65, %s81
      %p83 = scmp.eq.s32.totalorder %s45, 0
      %p84 = por %p82, %p83
      %s86 = sadd.s32 %s85, 1
      %p89 = scmp.eq.s32.totalorder %s39, 3
      %p90 = scmp.ne.s32.totalorder %s85, %s87
      %p91 = scmp.eq.s32.totalorder %s39, 0
      %p92 = por %p90, %p91
      %p93 = scmp.ne.s32.totalorder %s85, %s87
      %p94 = scmp.eq.s32.totalorder %s44, 3
      %p95 = por %p93, %p94
      %p96 = scmp.ne.s32.totalorder %s87, %s88
      %p97 = scmp.eq.s32.totalorder %s44, 0
      %p98 = por %p96, %p97
      %p99 = scmp.ne.s32.totalorder %s87, %s88
      %p100 = scmp.eq.s32.totalorder %s45, 3
      %p101 = por %p99, %p100
      %p103 = scmp.ne.s32.totalorder %s88, %s102
      %p104 = scmp.eq.s32.totalorder %s45, 0
      %p105 = por %p103, %p104
      %s107 = sadd.s32 %s106, 1
      %p110 = scmp.eq.s32.totalorder %s39, 3
      %p111 = scmp.ne.s32.totalorder %s106, %s108
      %p112 = scmp.eq.s32.totalorder %s39, 0
      %p113 = por %p111, %p112
      %p114 = scmp.ne.s32.totalorder %s106, %s108
      %p115 = scmp.eq.s32.totalorder %s44, 3
      %p116 = por %p114, %p115
      %p117 = scmp.ne.s32.totalorder %s108, %s109
      %p118 = scmp.eq.s32.totalorder %s44, 0
      %p119 = por %p117, %p118
      %p120 = scmp.ne.s32.totalorder %s108, %s109
      %p121 = scmp.eq.s32.totalorder %s45, 3
      %p122 = por %p120, %p121
      %p124 = scmp.ne.s32.totalorder %s109, %s123
      %p125 = scmp.eq.s32.totalorder %s45, 0
      %p126 = por %p124, %p125
      %s128 = sadd.s32 %s127, 1
      %p131 = scmp.eq.s32.totalorder %s39, 3
      %p132 = scmp.ne.s32.totalorder %s127, %s129
      %p133 = scmp.eq.s32.totalorder %s39, 0
      %p134 = por %p132, %p133
      %p135 = scmp.ne.s32.totalorder %s127, %s129
      %p136 = scmp.eq.s32.totalorder %s44, 3
      %p137 = por %p135, %p136
      %p138 = scmp.ne.s32.totalorder %s129, %s130
      %p139 = scmp.eq.s32.totalorder %s44, 0
      %p140 = por %p138, %p139
      %p141 = scmp.ne.s32.totalorder %s129, %s130
      %p142 = scmp.eq.s32.totalorder %s45, 3
      %p143 = por %p141, %p142
      %p145 = scmp.ne.s32.totalorder %s130, %s144
      %p146 = scmp.eq.s32.totalorder %s45, 0
      %p147 = por %p145, %p146
      %s149 = sadd.s32 %s148, 1
      %p152 = scmp.eq.s32.totalorder %s39, 3
      %p153 = scmp.ne.s32.totalorder %s148, %s150
      %p154 = scmp.eq.s32.totalorder %s39, 0
      %p155 = por %p153, %p154
      %p156 = scmp.ne.s32.totalorder %s148, %s150
      %p157 = scmp.eq.s32.totalorder %s44, 3
      %p158 = por %p156, %p157
      %p159 = scmp.ne.s32.totalorder %s150, %s151
      %p160 = scmp.eq.s32.totalorder %s44, 0
      %p161 = por %p159, %p160
      %p162 = scmp.ne.s32.totalorder %s150, %s151
      %p163 = scmp.eq.s32.totalorder %s45, 3
      %p164 = por %p162, %p163
      %p166 = scmp.ne.s32.totalorder %s151, %s165
      %p167 = scmp.eq.s32.totalorder %s45, 0
      %p168 = por %p166, %p167
      %s170 = sadd.s32 %s169, 1
      %p173 = scmp.eq.s32.totalorder %s39, 3
      %p174 = scmp.ne.s32.totalorder %s169, %s171
      %p175 = scmp.eq.s32.totalorder %s39, 0
      %p176 = por %p174, %p175
      %p177 = scmp.ne.s32.totalorder %s169, %s171
      %p178 = scmp.eq.s32.totalorder %s44, 3
      %p179 = por %p177, %p178
      %p180 = scmp.ne.s32.totalorder %s171, %s172
      %p181 = scmp.eq.s32.totalorder %s44, 0
      %p182 = por %p180, %p181
      %p183 = scmp.ne.s32.totalorder %s171, %s172
      %p184 = scmp.eq.s32.totalorder %s45, 3
      %p185 = por %p183, %p184
      %p187 = scmp.ne.s32.totalorder %s172, %s186
      %p188 = scmp.eq.s32.totalorder %s45, 0
      %p189 = por %p187, %p188
      %s190 = ssub.s32 %s47, %s54
      %p191 = scmp.eq.s32.totalorder %s190, 0
      %s193 = sadd.s32 %s192, 1
      %s194 = scalar_select %p191, %s192, %s193
      %p197 = pneg %p191
      %p198 = scmp.eq.s32.totalorder %s39, 3
      %p199 = por %p197, %p198
      %p200 = scmp.ne.s32.totalorder %s192, %s195
      %p201 = scmp.eq.s32.totalorder %s39, 0
      %p202 = por %p200, %p201
      %p203 = scmp.ne.s32.totalorder %s192, %s195
      %p204 = scmp.eq.s32.totalorder %s44, 3
      %p205 = por %p203, %p204
      %p206 = scmp.ne.s32.totalorder %s195, %s196
      %p207 = scmp.eq.s32.totalorder %s44, 0
      %p208 = por %p206, %p207
      %p209 = scmp.ne.s32.totalorder %s195, %s196
      %p210 = scmp.eq.s32.totalorder %s45, 3
      %p211 = por %p209, %p210
      %p213 = scmp.ne.s32.totalorder %s196, %s212
      %p214 = scmp.eq.s32.totalorder %s45, 0
      %p215 = por %p213, %p214
      %s216 = ssub.s32 %s47, %s54
      %p217 = scmp.eq.s32.totalorder %s216, 0
      %s219 = sadd.s32 %s218, 1
      %s220 = scalar_select %p217, %s218, %s219
      %p223 = pneg %p217
      %p224 = scmp.eq.s32.totalorder %s39, 3
      %p225 = por %p223, %p224
      %p226 = scmp.ne.s32.totalorder %s218, %s221
      %p227 = scmp.eq.s32.totalorder %s39, 0
      %p228 = por %p226, %p227
      %p229 = scmp.ne.s32.totalorder %s218, %s221
      %p230 = scmp.eq.s32.totalorder %s44, 3
      %p231 = por %p229, %p230
      %p232 = scmp.ne.s32.totalorder %s221, %s222
      %p233 = scmp.eq.s32.totalorder %s44, 0
      %p234 = por %p232, %p233
      %p235 = scmp.ne.s32.totalorder %s221, %s222
      %p236 = scmp.eq.s32.totalorder %s45, 3
      %p237 = por %p235, %p236
      %p239 = scmp.ne.s32.totalorder %s222, %s238
      %p240 = scmp.eq.s32.totalorder %s45, 0
      %p241 = por %p239, %p240
      %s242 = ssub.s32 %s47, %s54
      %p243 = scmp.eq.s32.totalorder %s242, 0
      %s245 = sadd.s32 %s244, 1
      %s246 = scalar_select %p243, %s244, %s245
      %p249 = pneg %p243
      %p250 = scmp.eq.s32.totalorder %s39, 3
      %p251 = por %p249, %p250
      %p252 = scmp.ne.s32.totalorder %s244, %s247
      %p253 = scmp.eq.s32.totalorder %s39, 0
      %p254 = por %p252, %p253
      %p255 = scmp.ne.s32.totalorder %s244, %s247
      %p256 = scmp.eq.s32.totalorder %s44, 3
      %p257 = por %p255, %p256
      %p258 = scmp.ne.s32.totalorder %s247, %s248
      %p259 = scmp.eq.s32.totalorder %s44, 0
      %p260 = por %p258, %p259
      %p261 = scmp.ne.s32.totalorder %s247, %s248
      %p262 = scmp.eq.s32.totalorder %s45, 3
      %p263 = por %p261, %p262
      %p265 = scmp.ne.s32.totalorder %s248, %s264
      %p266 = scmp.eq.s32.totalorder %s45, 0
      %p267 = por %p265, %p266
      %s268 = ssub.s32 %s47, %s54
      %p269 = scmp.eq.s32.totalorder %s268, 0
      %s271 = sadd.s32 %s270, 1
      %s272 = scalar_select %p269, %s270, %s271
      %p275 = pneg %p269
      %p276 = scmp.eq.s32.totalorder %s39, 3
      %p277 = por %p275, %p276
      %p278 = scmp.ne.s32.totalorder %s270, %s273
      %p279 = scmp.eq.s32.totalorder %s39, 0
      %p280 = por %p278, %p279
      %p281 = scmp.ne.s32.totalorder %s270, %s273
      %p282 = scmp.eq.s32.totalorder %s44, 3
      %p283 = por %p281, %p282
      %p284 = scmp.ne.s32.totalorder %s273, %s274
      %p285 = scmp.eq.s32.totalorder %s44, 0
      %p286 = por %p284, %p285
      %p287 = scmp.ne.s32.totalorder %s273, %s274
      %p288 = scmp.eq.s32.totalorder %s45, 3
      %p289 = por %p287, %p288
      %p291 = scmp.ne.s32.totalorder %s274, %s290
      %p292 = scmp.eq.s32.totalorder %s45, 0
      %p293 = por %p291, %p292
      %s294 = ssub.s32 %s47, %s54
      %p295 = scmp.eq.s32.totalorder %s294, 0
      %s297 = sadd.s32 %s296, 1
      %s298 = scalar_select %p295, %s296, %s297
      %p301 = pneg %p295
      %p302 = scmp.eq.s32.totalorder %s39, 3
      %p303 = por %p301, %p302
      %p304 = scmp.ne.s32.totalorder %s296, %s299
      %p305 = scmp.eq.s32.totalorder %s39, 0
      %p306 = por %p304, %p305
      %p307 = scmp.ne.s32.totalorder %s296, %s299
      %p308 = scmp.eq.s32.totalorder %s44, 3
      %p309 = por %p307, %p308
      %p310 = scmp.ne.s32.totalorder %s299, %s300
      %p311 = scmp.eq.s32.totalorder %s44, 0
      %p312 = por %p310, %p311
      %p313 = scmp.ne.s32.totalorder %s299, %s300
      %p314 = scmp.eq.s32.totalorder %s45, 3
      %p315 = por %p313, %p314
      %p317 = scmp.ne.s32.totalorder %s300, %s316
      %p318 = scmp.eq.s32.totalorder %s45, 0
      %p319 = por %p317, %p318
      %s320 = ssub.s32 %s47, %s54
      %p321 = scmp.eq.s32.totalorder %s320, 0
      %s323 = sadd.s32 %s322, 1
      %s324 = scalar_select %p321, %s322, %s323
      %p327 = pneg %p321
      %p328 = scmp.eq.s32.totalorder %s39, 3
      %p329 = por %p327, %p328
      %p330 = scmp.ne.s32.totalorder %s322, %s325
      %p331 = scmp.eq.s32.totalorder %s39, 0
      %p332 = por %p330, %p331
      %p333 = scmp.ne.s32.totalorder %s322, %s325
      %p334 = scmp.eq.s32.totalorder %s44, 3
      %p335 = por %p333, %p334
      %p336 = scmp.ne.s32.totalorder %s325, %s326
      %p337 = scmp.eq.s32.totalorder %s44, 0
      %p338 = por %p336, %p337
      %p339 = scmp.ne.s32.totalorder %s325, %s326
      %p340 = scmp.eq.s32.totalorder %s45, 3
      %p341 = por %p339, %p340
      %p343 = scmp.ne.s32.totalorder %s326, %s342
      %p344 = scmp.eq.s32.totalorder %s45, 0
      %p345 = por %p343, %p344
      %s346 = ssub.s32 %s47, %s54
      %p347 = scmp.eq.s32.totalorder %s346, 0
      %s349 = sadd.s32 %s348, 1
      %s350 = scalar_select %p347, %s348, %s349
      %p353 = pneg %p347
      %p354 = scmp.eq.s32.totalorder %s39, 3
      %p355 = por %p353, %p354
      %p356 = scmp.ne.s32.totalorder %s348, %s351
      %p357 = scmp.eq.s32.totalorder %s39, 0
      %p358 = por %p356, %p357
      %p359 = scmp.ne.s32.totalorder %s348, %s351
      %p360 = scmp.eq.s32.totalorder %s44, 3
      %p361 = por %p359, %p360
      %p362 = scmp.ne.s32.totalorder %s351, %s352
      %p363 = scmp.eq.s32.totalorder %s44, 0
      %p364 = por %p362, %p363
      %p365 = scmp.ne.s32.totalorder %s351, %s352
      %p366 = scmp.eq.s32.totalorder %s45, 3
      %p367 = por %p365, %p366
      %p369 = scmp.ne.s32.totalorder %s352, %s368
      %p370 = scmp.eq.s32.totalorder %s45, 0
      %p371 = por %p369, %p370
      %s372 = ssub.s32 %s47, %s54
      %p373 = scmp.eq.s32.totalorder %s372, 0
      %s375 = sadd.s32 %s374, 1
      %s376 = scalar_select %p373, %s374, %s375
      %p379 = pneg %p373
      %p380 = scmp.eq.s32.totalorder %s39, 3
      %p381 = por %p379, %p380
      %p382 = scmp.ne.s32.totalorder %s374, %s377
      %p383 = scmp.eq.s32.totalorder %s39, 0
      %p384 = por %p382, %p383
      %p385 = scmp.ne.s32.totalorder %s374, %s377
      %p386 = scmp.eq.s32.totalorder %s44, 3
      %p387 = por %p385, %p386
      %p388 = scmp.ne.s32.totalorder %s377, %s378
      %p389 = scmp.eq.s32.totalorder %s44, 0
      %p390 = por %p388, %p389
      %p391 = scmp.ne.s32.totalorder %s377, %s378
      %p392 = scmp.eq.s32.totalorder %s45, 3
      %p393 = por %p391, %p392
      %p395 = scmp.ne.s32.totalorder %s378, %s394
      %p396 = scmp.eq.s32.totalorder %s45, 0
      %p397 = por %p395, %p396
      %s398 = ssub.s32 %s47, %s54
      %p399 = scmp.eq.s32.totalorder %s398, 0
      %s401 = sadd.s32 %s400, 1
      %s402 = scalar_select %p399, %s400, %s401
      %p405 = pneg %p399
      %p406 = scmp.eq.s32.totalorder %s39, 3
      %p407 = por %p405, %p406
      %p408 = scmp.ne.s32.totalorder %s400, %s403
      %p409 = scmp.eq.s32.totalorder %s39, 0
      %p410 = por %p408, %p409
      %p411 = scmp.ne.s32.totalorder %s400, %s403
      %p412 = scmp.eq.s32.totalorder %s44, 3
      %p413 = por %p411, %p412
      %p414 = scmp.ne.s32.totalorder %s403, %s404
      %p415 = scmp.eq.s32.totalorder %s44, 0
      %p416 = por %p414, %p415
      %p417 = scmp.ne.s32.totalorder %s403, %s404
      %p418 = scmp.eq.s32.totalorder %s45, 3
      %p419 = por %p417, %p418
      %p421 = scmp.ne.s32.totalorder %s404, %s420
      %p422 = scmp.eq.s32.totalorder %s45, 0
      %p423 = por %p421, %p422
      %s424 = ssub.s32 %s47, %s54
      %p425 = scmp.eq.s32.totalorder %s424, 0
      %s427 = sadd.s32 %s426, 1
      %s428 = scalar_select %p425, %s426, %s427
      %p431 = pneg %p425
      %p432 = scmp.eq.s32.totalorder %s39, 3
      %p433 = por %p431, %p432
      %p434 = scmp.ne.s32.totalorder %s426, %s429
      %p435 = scmp.eq.s32.totalorder %s39, 0
      %p436 = por %p434, %p435
      %p437 = scmp.ne.s32.totalorder %s426, %s429
      %p438 = scmp.eq.s32.totalorder %s44, 3
      %p439 = por %p437, %p438
      %p440 = scmp.ne.s32.totalorder %s429, %s430
      %p441 = scmp.eq.s32.totalorder %s44, 0
      %p442 = por %p440, %p441
      %p443 = scmp.ne.s32.totalorder %s429, %s430
      %p444 = scmp.eq.s32.totalorder %s45, 3
      %p445 = por %p443, %p444
      %p447 = scmp.ne.s32.totalorder %s430, %s446
      %p448 = scmp.eq.s32.totalorder %s45, 0
      %p449 = por %p447, %p448
      %s450 = ssub.s32 %s47, %s54
      %p451 = scmp.eq.s32.totalorder %s450, 0
      %s453 = sadd.s32 %s452, 1
      %s454 = scalar_select %p451, %s452, %s453
      %p457 = pneg %p451
      %p458 = scmp.eq.s32.totalorder %s39, 3
      %p459 = por %p457, %p458
      %p460 = scmp.ne.s32.totalorder %s452, %s455
      %p461 = scmp.eq.s32.totalorder %s39, 0
      %p462 = por %p460, %p461
      %p463 = scmp.ne.s32.totalorder %s452, %s455
      %p464 = scmp.eq.s32.totalorder %s44, 3
      %p465 = por %p463, %p464
      %p466 = scmp.ne.s32.totalorder %s455, %s456
      %p467 = scmp.eq.s32.totalorder %s44, 0
      %p468 = por %p466, %p467
      %p469 = scmp.ne.s32.totalorder %s455, %s456
      %p470 = scmp.eq.s32.totalorder %s45, 3
      %p471 = por %p469, %p470
      %p473 = scmp.ne.s32.totalorder %s456, %s472
      %p474 = scmp.eq.s32.totalorder %s45, 0
      %p475 = por %p473, %p474
      %s476 = ssub.s32 %s47, %s54
      %p477 = scmp.eq.s32.totalorder %s476, 0
      %s479 = sadd.s32 %s478, 1
      %s480 = scalar_select %p477, %s478, %s479
      %p483 = pneg %p477
      %p484 = scmp.eq.s32.totalorder %s39, 3
      %p485 = por %p483, %p484
      %p486 = scmp.ne.s32.totalorder %s478, %s481
      %p487 = scmp.eq.s32.totalorder %s39, 0
      %p488 = por %p486, %p487
      %p489 = scmp.ne.s32.totalorder %s478, %s481
      %p490 = scmp.eq.s32.totalorder %s44, 3
      %p491 = por %p489, %p490
      %p492 = scmp.ne.s32.totalorder %s481, %s482
      %p493 = scmp.eq.s32.totalorder %s44, 0
      %p494 = por %p492, %p493
      %p495 = scmp.ne.s32.totalorder %s481, %s482
      %p496 = scmp.eq.s32.totalorder %s45, 3
      %p497 = por %p495, %p496
      %p499 = scmp.ne.s32.totalorder %s482, %s498
      %p500 = scmp.eq.s32.totalorder %s45, 0
      %p501 = por %p499, %p500
      %s503 = sadd.s32 %s502, 1
      %p506 = scmp.eq.s32.totalorder %s39, 3
      %p507 = scmp.ne.s32.totalorder %s502, %s504
      %p508 = scmp.eq.s32.totalorder %s39, 0
      %p509 = por %p507, %p508
      %p510 = scmp.ne.s32.totalorder %s502, %s504
      %p511 = scmp.eq.s32.totalorder %s44, 3
      %p512 = por %p510, %p511
      %p513 = scmp.ne.s32.totalorder %s504, %s505
      %p514 = scmp.eq.s32.totalorder %s44, 0
      %p515 = por %p513, %p514
      %p516 = scmp.ne.s32.totalorder %s504, %s505
      %p517 = scmp.eq.s32.totalorder %s45, 3
      %p518 = por %p516, %p517
      %p520 = scmp.ne.s32.totalorder %s505, %s519
      %p521 = scmp.eq.s32.totalorder %s45, 0
      %p522 = por %p520, %p521
      %s524 = sadd.s32 %s523, 1
      %p527 = scmp.eq.s32.totalorder %s39, 3
      %p528 = scmp.ne.s32.totalorder %s523, %s525
      %p529 = scmp.eq.s32.totalorder %s39, 0
      %p530 = por %p528, %p529
      %p531 = scmp.ne.s32.totalorder %s523, %s525
      %p532 = scmp.eq.s32.totalorder %s44, 3
      %p533 = por %p531, %p532
      %p534 = scmp.ne.s32.totalorder %s525, %s526
      %p535 = scmp.eq.s32.totalorder %s44, 0
      %p536 = por %p534, %p535
      %p537 = scmp.ne.s32.totalorder %s525, %s526
      %p538 = scmp.eq.s32.totalorder %s45, 3
      %p539 = por %p537, %p538
      %p541 = scmp.ne.s32.totalorder %s526, %s540
      %p542 = scmp.eq.s32.totalorder %s45, 0
      %p543 = por %p541, %p542
      %s545 = sadd.s32 %s544, 1
      %p548 = scmp.eq.s32.totalorder %s39, 3
      %p549 = scmp.ne.s32.totalorder %s544, %s546
      %p550 = scmp.eq.s32.totalorder %s39, 0
      %p551 = por %p549, %p550
      %p552 = scmp.ne.s32.totalorder %s544, %s546
      %p553 = scmp.eq.s32.totalorder %s44, 3
      %p554 = por %p552, %p553
      %p555 = scmp.ne.s32.totalorder %s546, %s547
      %p556 = scmp.eq.s32.totalorder %s44, 0
      %p557 = por %p555, %p556
      %p558 = scmp.ne.s32.totalorder %s546, %s547
      %p559 = scmp.eq.s32.totalorder %s45, 3
      %p560 = por %p558, %p559
      %p562 = scmp.ne.s32.totalorder %s547, %s561
      %p563 = scmp.eq.s32.totalorder %s45, 0
      %p564 = por %p562, %p563
      %s566 = sadd.s32 %s565, 1
      %p569 = scmp.eq.s32.totalorder %s39, 3
      %p570 = scmp.ne.s32.totalorder %s565, %s567
      %p571 = scmp.eq.s32.totalorder %s39, 0
      %p572 = por %p570, %p571
      %p573 = scmp.ne.s32.totalorder %s565, %s567
      %p574 = scmp.eq.s32.totalorder %s44, 3
      %p575 = por %p573, %p574
      %p576 = scmp.ne.s32.totalorder %s567, %s568
      %p577 = scmp.eq.s32.totalorder %s44, 0
      %p578 = por %p576, %p577
      %p579 = scmp.ne.s32.totalorder %s567, %s568
      %p580 = scmp.eq.s32.totalorder %s45, 3
      %p581 = por %p579, %p580
      %p583 = scmp.ne.s32.totalorder %s568, %s582
      %p584 = scmp.eq.s32.totalorder %s45, 0
      %p585 = por %p583, %p584
      %s586 = ssub.s32 %s46, %s58
      %p587 = scmp.eq.s32.totalorder %s586, 0
      %s589 = sadd.s32 %s588, 1
      %s590 = scalar_select %p587, %s588, %s589
      %p593 = pneg %p587
      %p594 = scmp.eq.s32.totalorder %s39, 3
      %p595 = por %p593, %p594
      %p596 = scmp.ne.s32.totalorder %s588, %s591
      %p597 = scmp.eq.s32.totalorder %s39, 0
      %p598 = por %p596, %p597
      %p599 = scmp.ne.s32.totalorder %s588, %s591
      %p600 = scmp.eq.s32.totalorder %s44, 3
      %p601 = por %p599, %p600
      %p602 = scmp.ne.s32.totalorder %s591, %s592
      %p603 = scmp.eq.s32.totalorder %s44, 0
      %p604 = por %p602, %p603
      %p605 = scmp.ne.s32.totalorder %s591, %s592
      %p606 = scmp.eq.s32.totalorder %s45, 3
      %p607 = por %p605, %p606
      %p609 = scmp.ne.s32.totalorder %s592, %s608
      %p610 = scmp.eq.s32.totalorder %s45, 0
      %p611 = por %p609, %p610
      %p612 = scmp.le.s32.totalorder 1, %s39
      %p613 = scmp.lt.s32.totalorder %s39, 5
      %p614 = pnand %p612, %p613
      %p615 = pneg %p614
      // Predicated region
      $region9: #{tpu_custom_call.1} parent=5 // pred_check
        _
      $region10: #{tpu_custom_call.1} parent=5 // pred_check_branch
        %617 = sbr.rel (%p614) target = $region12
      $region11: #{tpu_custom_call.1} parent=5 // pred_region
        %s618 = ssub.s32 %s39, 1
        // Predicated region
        $region13: #{tpu_custom_call.1} parent=11 // pred_check
          %p619 = pneg %p98
        $region14: #{tpu_custom_call.1} parent=11 // pred_check_branch
          %621 = sbr.rel (%p619) target = $region16
        $region15: #{tpu_custom_call.1} parent=11 // pred_region
          _
        $region16: #{tpu_custom_call.1} parent=11 // pred_fallthru
          _
        // Predicated region
        $region17: #{tpu_custom_call.1} parent=11 // pred_check
          %p622 = pneg %p119
        $region18: #{tpu_custom_call.1} parent=11 // pred_check_branch
          %624 = sbr.rel (%p622) target = $region20
        $region19: #{tpu_custom_call.1} parent=11 // pred_region
          _
        $region20: #{tpu_custom_call.1} parent=11 // pred_fallthru
          _
        // Predicated region
        $region21: #{tpu_custom_call.1} parent=11 // pred_check
          %p625 = pneg %p140
        $region22: #{tpu_custom_call.1} parent=11 // pred_check_branch
          %627 = sbr.rel (%p625) target = $region24
        $region23: #{tpu_custom_call.1} parent=11 // pred_region
          %s629 = ssub.s32 16, 16
          %630 = vsyncadd [#allocation4], %s629
          %s632 = sshll.u32 [#allocation3], 4
          %s633 = int_to_ptr.vmem [resolvable:$true] %s632
          %635 = dma.hbm_to_vmem [thread:$0]  %s3, 16, %s633, [#allocation4]
        $region24: #{tpu_custom_call.1} parent=11 // pred_fallthru
          _
        // Predicated region
        $region25: #{tpu_custom_call.1} parent=11 // pred_check
          %p636 = pneg %p161
        $region26: #{tpu_custom_call.1} parent=11 // pred_check_branch
          %638 = sbr.rel (%p636) target = $region28
        $region27: #{tpu_custom_call.1} parent=11 // pred_region
          %s640 = ssub.s32 256, 256
          %641 = vsyncadd [#allocation7], %s640
          %s642 = sshll.u32 [#allocation6], 4
          %s643 = int_to_ptr.vmem [resolvable:$true] %s642
          %648 = dma.hbm_to_vmem [thread:$0]  %s4, 256, %s643, [#allocation7], 64, 64, 4
        $region28: #{tpu_custom_call.1} parent=11 // pred_fallthru
          _
        // Predicated region
        $region29: #{tpu_custom_call.1} parent=11 // pred_check
          %p649 = pneg %p182
        $region30: #{tpu_custom_call.1} parent=11 // pred_check_branch
          %651 = sbr.rel (%p649) target = $region32
        $region31: #{tpu_custom_call.1} parent=11 // pred_region
          %s653 = ssub.s32 16, 16
          %654 = vsyncadd [#allocation7], %s653
          %s656 = sshll.u32 [#allocation8], 4
          %s657 = int_to_ptr.vmem [resolvable:$true] %s656
          %659 = dma.hbm_to_vmem [thread:$0]  %s5, 16, %s657, [#allocation7]
        $region32: #{tpu_custom_call.1} parent=11 // pred_fallthru
          _
        // Predicated region
        $region33: #{tpu_custom_call.1} parent=11 // pred_check
          %p660 = pneg %p515
        $region34: #{tpu_custom_call.1} parent=11 // pred_check_branch
          %662 = sbr.rel (%p660) target = $region36
        $region35: #{tpu_custom_call.1} parent=11 // pred_region
          _
        $region36: #{tpu_custom_call.1} parent=11 // pred_fallthru
          _
        // Predicated region
        $region37: #{tpu_custom_call.1} parent=11 // pred_check
          %p663 = pneg %p536
        $region38: #{tpu_custom_call.1} parent=11 // pred_check_branch
          %665 = sbr.rel (%p663) target = $region40
        $region39: #{tpu_custom_call.1} parent=11 // pred_region
          _
        $region40: #{tpu_custom_call.1} parent=11 // pred_fallthru
          _
        // Predicated region
        $region41: #{tpu_custom_call.1} parent=11 // pred_check
          %p666 = pneg %p557
        $region42: #{tpu_custom_call.1} parent=11 // pred_check_branch
          %668 = sbr.rel (%p666) target = $region44
        $region43: #{tpu_custom_call.1} parent=11 // pred_region
          _
        $region44: #{tpu_custom_call.1} parent=11 // pred_fallthru
          _
        // Predicated region
        $region45: #{tpu_custom_call.1} parent=11 // pred_check
          %p669 = pneg %p578
        $region46: #{tpu_custom_call.1} parent=11 // pred_check_branch
          %671 = sbr.rel (%p669) target = $region48
        $region47: #{tpu_custom_call.1} parent=11 // pred_region
          _
        $region48: #{tpu_custom_call.1} parent=11 // pred_fallthru
          _
      $region12: #{tpu_custom_call.1} parent=5 // pred_fallthru
        _
      %p672 = scmp.lt.s32.totalorder %s39, 4
      // Predicated region
      $region49: #{tpu_custom_call.1} parent=5 // pred_check
        %p673 = pneg %p672
      $region50: #{tpu_custom_call.1} parent=5 // pred_check_branch
        %675 = sbr.rel (%p673) target = $region52
      $region51: #{tpu_custom_call.1} parent=5 // pred_region
        // Predicated region
        $region53: #{tpu_custom_call.1} parent=51 // pred_check
          %p676 = pneg %p71
        $region54: #{tpu_custom_call.1} parent=51 // pred_check_branch
          %678 = sbr.rel (%p676) target = $region56
        $region55: #{tpu_custom_call.1} parent=51 // pred_region
          %s679 = smul.u32 2, %s46
          %p680 = scmp.lt.s32.totalorder %s679, 3
          %s681 = scalar_select %p680, %s679, 3
          %s682 = smul.addr %s681, 3
          %s683 = smul.addr %s682, 4
          %s684 = scalar_lea.vmem %s0, %s683
          %s685 = smul.u32 2, %s46
        $region56: #{tpu_custom_call.1} parent=51 // pred_fallthru
          _
        // Predicated region
        $region57: #{tpu_custom_call.1} parent=51 // pred_check
          %p686 = pneg %p202
        $region58: #{tpu_custom_call.1} parent=51 // pred_check_branch
          %688 = sbr.rel (%p686) target = $region60
        $region59: #{tpu_custom_call.1} parent=51 // pred_region
          %s689 = sand.u32 %s39, 1
          %s690 = scalar_lea.sflag [#allocation10], %s689
          %s691 = sand.u32 %s192, 1
          %s692 = scalar_lea.vmem [#allocation9], %s691
          %s694 = ssub.s32 16, 16
          %695 = vsyncadd %s690, %s694
          %s696 = smul.addr %s47, 16
          %s697 = scalar_lea.hbm %s6, %s696
          %s699 = sshll.u32 %s692, 4
          %s700 = int_to_ptr.vmem [resolvable:$true] %s699
          %702 = dma.hbm_to_vmem [thread:$0]  %s697, 16, %s700, %s690
        $region60: #{tpu_custom_call.1} parent=51 // pred_fallthru
          _
        // Predicated region
        $region61: #{tpu_custom_call.1} parent=51 // pred_check
          %p703 = pneg %p228
        $region62: #{tpu_custom_call.1} parent=51 // pred_check_branch
          %705 = sbr.rel (%p703) target = $region64
        $region63: #{tpu_custom_call.1} parent=51 // pred_region
          %s706 = sand.u32 %s39, 1
          %s707 = scalar_lea.sflag [#allocation10], %s706
          %s708 = sand.u32 %s218, 1
          %s709 = scalar_lea.vmem [#allocation11], %s708
          %s711 = ssub.s32 16, 16
          %712 = vsyncadd %s707, %s711
          %s713 = smul.addr %s47, 16
          %s714 = scalar_lea.hbm %s7, %s713
          %s716 = sshll.u32 %s709, 4
          %s717 = int_to_ptr.vmem [resolvable:$true] %s716
          %719 = dma.hbm_to_vmem [thread:$0]  %s714, 16, %s717, %s707
        $region64: #{tpu_custom_call.1} parent=51 // pred_fallthru
          _
        // Predicated region
        $region65: #{tpu_custom_call.1} parent=51 // pred_check
          %p720 = pneg %p254
        $region66: #{tpu_custom_call.1} parent=51 // pred_check_branch
          %722 = sbr.rel (%p720) target = $region68
        $region67: #{tpu_custom_call.1} parent=51 // pred_region
          %p723 = scmp.lt.s32.totalorder %s47, 1
          %s724 = scalar_select %p723, %s47, 1
          %s725 = smul.addr %s724, 4
          %s726 = smul.addr %s725, 4
          %s727 = scalar_lea.vmem %s8, %s726
        $region68: #{tpu_custom_call.1} parent=51 // pred_fallthru
          _
        // Predicated region
        $region69: #{tpu_custom_call.1} parent=51 // pred_check
          %p728 = pneg %p280
        $region70: #{tpu_custom_call.1} parent=51 // pred_check_branch
          %730 = sbr.rel (%p728) target = $region72
        $region71: #{tpu_custom_call.1} parent=51 // pred_region
          %s731 = sand.u32 %s39, 1
          %s732 = scalar_lea.sflag [#allocation13], %s731
          %s733 = sand.u32 %s270, 1
          %s734 = scalar_lea.vmem [#allocation12], %s733
          %s736 = ssub.s32 16, 16
          %737 = vsyncadd %s732, %s736
          %s738 = smul.addr %s47, 16
          %s739 = scalar_lea.hbm %s9, %s738
          %s741 = sshll.u32 %s734, 4
          %s742 = int_to_ptr.vmem [resolvable:$true] %s741
          %744 = dma.hbm_to_vmem [thread:$0]  %s739, 16, %s742, %s732
        $region72: #{tpu_custom_call.1} parent=51 // pred_fallthru
          _
        // Predicated region
        $region73: #{tpu_custom_call.1} parent=51 // pred_check
          %p745 = pneg %p306
        $region74: #{tpu_custom_call.1} parent=51 // pred_check_branch
          %747 = sbr.rel (%p745) target = $region76
        $region75: #{tpu_custom_call.1} parent=51 // pred_region
          %p748 = scmp.lt.s32.totalorder %s47, 1
          %s749 = scalar_select %p748, %s47, 1
          %s750 = smul.addr %s749, 4
          %s751 = smul.addr %s750, 4
          %s752 = scalar_lea.vmem %s10, %s751
        $region76: #{tpu_custom_call.1} parent=51 // pred_fallthru
          _
        // Predicated region
        $region77: #{tpu_custom_call.1} parent=51 // pred_check
          %p753 = pneg %p332
        $region78: #{tpu_custom_call.1} parent=51 // pred_check_branch
          %755 = sbr.rel (%p753) target = $region80
        $region79: #{tpu_custom_call.1} parent=51 // pred_region
          %p756 = scmp.lt.s32.totalorder %s47, 1
          %s757 = scalar_select %p756, %s47, 1
          %s758 = scalar_lea.vmem %s11, %s757
        $region80: #{tpu_custom_call.1} parent=51 // pred_fallthru
          _
        // Predicated region
        $region81: #{tpu_custom_call.1} parent=51 // pred_check
          %p759 = pneg %p358
        $region82: #{tpu_custom_call.1} parent=51 // pred_check_branch
          %761 = sbr.rel (%p759) target = $region84
        $region83: #{tpu_custom_call.1} parent=51 // pred_region
          %s762 = sand.u32 %s39, 1
          %s763 = scalar_lea.sflag [#allocation13], %s762
          %s764 = sand.u32 %s348, 1
          %s765 = scalar_lea.vmem [#allocation14], %s764
          %s767 = ssub.s32 16, 16
          %768 = vsyncadd %s763, %s767
          %s769 = smul.addr %s47, 16
          %s770 = scalar_lea.hbm %s12, %s769
          %s772 = sshll.u32 %s765, 4
          %s773 = int_to_ptr.vmem [resolvable:$true] %s772
          %775 = dma.hbm_to_vmem [thread:$0]  %s770, 16, %s773, %s763
        $region84: #{tpu_custom_call.1} parent=51 // pred_fallthru
          _
        // Predicated region
        $region85: #{tpu_custom_call.1} parent=51 // pred_check
          %p776 = pneg %p384
        $region86: #{tpu_custom_call.1} parent=51 // pred_check_branch
          %778 = sbr.rel (%p776) target = $region88
        $region87: #{tpu_custom_call.1} parent=51 // pred_region
          %p779 = scmp.lt.s32.totalorder %s47, 1
          %s780 = scalar_select %p779, %s47, 1
          %s781 = scalar_lea.vmem %s13, %s780
        $region88: #{tpu_custom_call.1} parent=51 // pred_fallthru
          _
        // Predicated region
        $region89: #{tpu_custom_call.1} parent=51 // pred_check
          %p782 = pneg %p410
        $region90: #{tpu_custom_call.1} parent=51 // pred_check_branch
          %784 = sbr.rel (%p782) target = $region92
        $region91: #{tpu_custom_call.1} parent=51 // pred_region
          %p785 = scmp.lt.s32.totalorder %s47, 1
          %s786 = scalar_select %p785, %s47, 1
          %s787 = smul.addr %s786, 4
          %s788 = smul.addr %s787, 4
          %s789 = scalar_lea.vmem %s14, %s788
        $region92: #{tpu_custom_call.1} parent=51 // pred_fallthru
          _
        // Predicated region
        $region93: #{tpu_custom_call.1} parent=51 // pred_check
          %p790 = pneg %p436
        $region94: #{tpu_custom_call.1} parent=51 // pred_check_branch
          %792 = sbr.rel (%p790) target = $region96
        $region95: #{tpu_custom_call.1} parent=51 // pred_region
          %p793 = scmp.lt.s32.totalorder %s47, 1
          %s794 = scalar_select %p793, %s47, 1
          %s795 = scalar_lea.vmem %s15, %s794
        $region96: #{tpu_custom_call.1} parent=51 // pred_fallthru
          _
        // Predicated region
        $region97: #{tpu_custom_call.1} parent=51 // pred_check
          %p796 = pneg %p462
        $region98: #{tpu_custom_call.1} parent=51 // pred_check_branch
          %798 = sbr.rel (%p796) target = $region100
        $region99: #{tpu_custom_call.1} parent=51 // pred_region
          %p799 = scmp.lt.s32.totalorder %s47, 1
          %s800 = scalar_select %p799, %s47, 1
          %s801 = smul.addr %s800, 8
          %s802 = smul.addr %s801, 4
          %s803 = scalar_lea.vmem %s16, %s802
        $region100: #{tpu_custom_call.1} parent=51 // pred_fallthru
          _
        // Predicated region
        $region101: #{tpu_custom_call.1} parent=51 // pred_check
          %p804 = pneg %p488
        $region102: #{tpu_custom_call.1} parent=51 // pred_check_branch
          %806 = sbr.rel (%p804) target = $region104
        $region103: #{tpu_custom_call.1} parent=51 // pred_region
          %p807 = scmp.lt.s32.totalorder %s47, 1
          %s808 = scalar_select %p807, %s47, 1
          %s809 = scalar_lea.vmem %s17, %s808
        $region104: #{tpu_custom_call.1} parent=51 // pred_fallthru
          _
      $region52: #{tpu_custom_call.1} parent=5 // pred_fallthru
        _
      %p810 = scmp.le.s32.totalorder 1, %s39
      %p811 = scmp.lt.s32.totalorder %s39, 5
      %p812 = pnand %p810, %p811
      %p813 = pneg %p812
      // Predicated region
      $region105: #{tpu_custom_call.1} parent=5 // pred_check
        _
      $region106: #{tpu_custom_call.1} parent=5 // pred_check_branch
        %815 = sbr.rel (%p812) target = $region108
      $region107: #{tpu_custom_call.1} parent=5 // pred_region
        %s816 = ssub.s32 %s39, 1
        // Predicated region
        $region109: #{tpu_custom_call.1} parent=107 // pred_check
          %p817 = pneg %p140
        $region110: #{tpu_custom_call.1} parent=107 // pred_check_branch
          %819 = sbr.rel (%p817) target = $region112
        $region111: #{tpu_custom_call.1} parent=107 // pred_region
          %820 = dma.done [#allocation4], 16
        $region112: #{tpu_custom_call.1} parent=107 // pred_fallthru
          _
        // Predicated region
        $region113: #{tpu_custom_call.1} parent=107 // pred_check
          %p821 = pneg %p161
        $region114: #{tpu_custom_call.1} parent=107 // pred_check_branch
          %823 = sbr.rel (%p821) target = $region116
        $region115: #{tpu_custom_call.1} parent=107 // pred_region
          %824 = dma.done [#allocation7], 256
        $region116: #{tpu_custom_call.1} parent=107 // pred_fallthru
          _
        // Predicated region
        $region117: #{tpu_custom_call.1} parent=107 // pred_check
          %p825 = pneg %p182
        $region118: #{tpu_custom_call.1} parent=107 // pred_check_branch
          %827 = sbr.rel (%p825) target = $region120
        $region119: #{tpu_custom_call.1} parent=107 // pred_region
          %828 = dma.done [#allocation7], 16
        $region120: #{tpu_custom_call.1} parent=107 // pred_fallthru
          _
        %s829 = sand.u32 %s44, 1
        %s830 = scalar_lea.sflag [#allocation10], %s829
        %s831 = sand.u32 %s195, 1
        %s832 = scalar_lea.vmem [#allocation9], %s831
        // Predicated region
        $region121: #{tpu_custom_call.1} parent=107 // pred_check
          %p833 = pneg %p208
        $region122: #{tpu_custom_call.1} parent=107 // pred_check_branch
          %835 = sbr.rel (%p833) target = $region124
        $region123: #{tpu_custom_call.1} parent=107 // pred_region
          %836 = dma.done %s830, 16
        $region124: #{tpu_custom_call.1} parent=107 // pred_fallthru
          _
        %s837 = sand.u32 %s44, 1
        %s838 = scalar_lea.sflag [#allocation10], %s837
        %s839 = sand.u32 %s221, 1
        %s840 = scalar_lea.vmem [#allocation11], %s839
        // Predicated region
        $region125: #{tpu_custom_call.1} parent=107 // pred_check
          %p841 = pneg %p234
        $region126: #{tpu_custom_call.1} parent=107 // pred_check_branch
          %843 = sbr.rel (%p841) target = $region128
        $region127: #{tpu_custom_call.1} parent=107 // pred_region
          %844 = dma.done %s838, 16
        $region128: #{tpu_custom_call.1} parent=107 // pred_fallthru
          _
        %s845 = sand.u32 %s44, 1
        %s846 = scalar_lea.sflag [#allocation13], %s845
        %s847 = sand.u32 %s273, 1
        %s848 = scalar_lea.vmem [#allocation12], %s847
        // Predicated region
        $region129: #{tpu_custom_call.1} parent=107 // pred_check
          %p849 = pneg %p286
        $region130: #{tpu_custom_call.1} parent=107 // pred_check_branch
          %851 = sbr.rel (%p849) target = $region132
        $region131: #{tpu_custom_call.1} parent=107 // pred_region
          %852 = dma.done %s846, 16
        $region132: #{tpu_custom_call.1} parent=107 // pred_fallthru
          _
        %s853 = sand.u32 %s44, 1
        %s854 = scalar_lea.sflag [#allocation13], %s853
        %s855 = sand.u32 %s351, 1
        %s856 = scalar_lea.vmem [#allocation14], %s855
        // Predicated region
        $region133: #{tpu_custom_call.1} parent=107 // pred_check
          %p857 = pneg %p364
        $region134: #{tpu_custom_call.1} parent=107 // pred_check_branch
          %859 = sbr.rel (%p857) target = $region136
        $region135: #{tpu_custom_call.1} parent=107 // pred_region
          %860 = dma.done %s854, 16
        $region136: #{tpu_custom_call.1} parent=107 // pred_fallthru
          _
        %s861 = smul.u32 2, %s48
        %p862 = scmp.lt.s32.totalorder %s861, 3
        %s863 = scalar_select %p862, %s861, 3
        %s864 = smul.addr %s863, 3
        %s865 = smul.addr %s864, 4
        %s866 = scalar_lea.vmem %s0, %s865
        %p867 = pneg %p77
        %p868 = pneg %p74
        %p869 = pneg %p98
        %p870 = pneg %p95
        %p871 = pneg %p119
        %p872 = pneg %p116
        %p873 = pneg %p140
        %p874 = pneg %p137
        %p875 = pneg %p161
        %p876 = pneg %p158
        %p877 = pneg %p182
        %p878 = pneg %p179
        %s879 = sand.u32 %s44, 1
        %s880 = scalar_lea.sflag [#allocation10], %s879
        %s881 = sand.u32 %s195, 1
        %s882 = scalar_lea.vmem [#allocation9], %s881
        %p883 = pneg %p208
        %p884 = pneg %p205
        %s885 = sand.u32 %s44, 1
        %s886 = scalar_lea.sflag [#allocation10], %s885
        %s887 = sand.u32 %s221, 1
        %s888 = scalar_lea.vmem [#allocation11], %s887
        %p889 = pneg %p234
        %p890 = pneg %p231
        %p891 = scmp.lt.s32.totalorder %s49, 1
        %s892 = scalar_select %p891, %s49, 1
        %s893 = smul.addr %s892, 4
        %s894 = smul.addr %s893, 4
        %s895 = scalar_lea.vmem %s8, %s894
        %p896 = pneg %p260
        %p897 = pneg %p257
        %s898 = sand.u32 %s44, 1
        %s899 = scalar_lea.sflag [#allocation13], %s898
        %s900 = sand.u32 %s273, 1
        %s901 = scalar_lea.vmem [#allocation12], %s900
        %p902 = pneg %p286
        %p903 = pneg %p283
        %p904 = scmp.lt.s32.totalorder %s49, 1
        %s905 = scalar_select %p904, %s49, 1
        %s906 = smul.addr %s905, 4
        %s907 = smul.addr %s906, 4
        %s908 = scalar_lea.vmem %s10, %s907
        %p909 = pneg %p312
        %p910 = pneg %p309
        %p911 = scmp.lt.s32.totalorder %s49, 1
        %s912 = scalar_select %p911, %s49, 1
        %s913 = scalar_lea.vmem %s11, %s912
        %p914 = pneg %p338
        %p915 = pneg %p335
        %s916 = sand.u32 %s44, 1
        %s917 = scalar_lea.sflag [#allocation13], %s916
        %s918 = sand.u32 %s351, 1
        %s919 = scalar_lea.vmem [#allocation14], %s918
        %p920 = pneg %p364
        %p921 = pneg %p361
        %p922 = scmp.lt.s32.totalorder %s49, 1
        %s923 = scalar_select %p922, %s49, 1
        %s924 = scalar_lea.vmem %s13, %s923
        %p925 = pneg %p390
        %p926 = pneg %p387
        %p927 = scmp.lt.s32.totalorder %s49, 1
        %s928 = scalar_select %p927, %s49, 1
        %s929 = smul.addr %s928, 4
        %s930 = smul.addr %s929, 4
        %s931 = scalar_lea.vmem %s14, %s930
        %p932 = pneg %p416
        %p933 = pneg %p413
        %p934 = scmp.lt.s32.totalorder %s49, 1
        %s935 = scalar_select %p934, %s49, 1
        %s936 = scalar_lea.vmem %s15, %s935
        %p937 = pneg %p442
        %p938 = pneg %p439
        %p939 = scmp.lt.s32.totalorder %s49, 1
        %s940 = scalar_select %p939, %s49, 1
        %s941 = smul.addr %s940, 8
        %s942 = smul.addr %s941, 4
        %s943 = scalar_lea.vmem %s16, %s942
        %p944 = pneg %p468
        %p945 = pneg %p465
        %p946 = scmp.lt.s32.totalorder %s49, 1
        %s947 = scalar_select %p946, %s49, 1
        %s948 = scalar_lea.vmem %s17, %s947
        %p949 = pneg %p494
        %p950 = pneg %p491
        %p951 = pneg %p515
        %p952 = pneg %p512
        %p953 = pneg %p536
        %p954 = pneg %p533
        %p955 = pneg %p557
        %p956 = pneg %p554
        %p957 = pneg %p578
        %p958 = pneg %p575
        %p959 = pneg %p604
        %p960 = pneg %p601
        %s961 = sand.u32 %s591, 1
        %s962 = scalar_lea.sflag [#allocation5], %s961
        %s963 = sand.u32 %s591, 1
        %s964 = smul.addr %s963, 48
        %s965 = scalar_lea.vmem [#allocation15], %s964
        %s966 = smul.u32 2, %s48
        %p967 = scmp.lt.s32.totalorder %s966, 3
        %s968 = scalar_select %p967, %s966, 3
        %s969 = smul.addr %s968, 3
        %s970 = smul.addr %s969, 4
        %s971 = scalar_lea.vmem %s0, %s970
        %s972 = smul.u32 2, %s48
        %p973 = scmp.lt.s32.totalorder %s49, 1
        %s974 = scalar_select %p973, %s49, 1
        %s975 = smul.addr %s974, 4
        %s976 = smul.addr %s975, 4
        %s977 = scalar_lea.vmem %s8, %s976
        %p978 = scmp.lt.s32.totalorder %s49, 1
        %s979 = scalar_select %p978, %s49, 1
        %s980 = smul.addr %s979, 4
        %s981 = smul.addr %s980, 4
        %s982 = scalar_lea.vmem %s10, %s981
        %p983 = scmp.lt.s32.totalorder %s49, 1
        %s984 = scalar_select %p983, %s49, 1
        %s985 = scalar_lea.vmem %s11, %s984
        %p986 = scmp.lt.s32.totalorder %s49, 1
        %s987 = scalar_select %p986, %s49, 1
        %s988 = scalar_lea.vmem %s13, %s987
        %p989 = scmp.lt.s32.totalorder %s49, 1
        %s990 = scalar_select %p989, %s49, 1
        %s991 = smul.addr %s990, 4
        %s992 = smul.addr %s991, 4
        %s993 = scalar_lea.vmem %s14, %s992
        %p994 = scmp.lt.s32.totalorder %s49, 1
        %s995 = scalar_select %p994, %s49, 1
        %s996 = scalar_lea.vmem %s15, %s995
        %p997 = scmp.lt.s32.totalorder %s49, 1
        %s998 = scalar_select %p997, %s49, 1
        %s999 = smul.addr %s998, 8
        %s1000 = smul.addr %s999, 4
        %s1001 = scalar_lea.vmem %s16, %s1000
        %p1002 = scmp.lt.s32.totalorder %s49, 1
        %s1003 = scalar_select %p1002, %s49, 1
        %s1004 = scalar_lea.vmem %s17, %s1003
        %s1005 = smul.u32 2, %s48
        %p1007 = scmp.eq.s32.totalorder %s49, 0
        // Predicated region
        $region137: #{tpu_custom_call.1} parent=107 // pred_check
          %p1008 = pneg %p1007
        $region138: #{tpu_custom_call.1} parent=107 // pred_check_branch
          %1010 = sbr.rel (%p1008) target = $region140
        $region139: #{tpu_custom_call.1} parent=107 // pred_region
          %v1011 = vld [vmem:[%s971] sm:$0xf]
          %v1012 = vld [vmem:[%s971 + $0x4] sm:$0xf]
          %v1013 = vld [vmem:[%s971 + $0x8] sm:$0xf]
          %v1014 = vld [vmem:[%s971 + $0xc] sm:$0xf]
          %v1015 = vld [vmem:[%s971 + $0x10] sm:$0xf]
          %v1016 = vld [vmem:[%s971 + $0x14] sm:$0xf]
          %v1017 = vld [vmem:[%s2] sm:$0x3]
          %v1018 = vld [vmem:[#allocation3] sm:$0x1]
          %v1020 = vlaneseq
          %v1021 = vshrl.u32 %v1020, 7
          %v1022 = vsub.s32 0, %v1021
          %v1023 = vrot.slane %v1018, %v1022
          %v1031 = vunpack.c.l.b16 %v1011
          %v1032 = vunpack.c.l.b16 %v1012
          %v1033 = vunpack.c.l.b16 %v1013
          %v1034 = vunpack.c.l.b16 %v1014
          %v1035 = vunpack.c.l.b16 %v1015
          %v1036 = vunpack.c.l.b16 %v1016
          %v1037 = vpack.c.b16 %v1032, %v1031
          %v1038 = vpack.c.b16 %v1034, %v1033
          %v1039 = vpack.c.b16 %v1036, %v1035
          %vm1040 = vcmask 31744
          %v1042 = vsel %vm1040, %v1037, 0
          %v1045 = vsel %vm1040, %v1038, 0
          %v1048 = vsel %vm1040, %v1039, 0
          %vm1050 = vcmask 1041408
          %v1052 = vsel %vm1050, %v1017, 0
          %1054 = vmatprep.subr.bf16.mxu0 0
          %1055 = vmatpush1.bf16.msra.mxu0 0
          %1056 = vmatprep.subr.bf16.mxu0 0
          %1057 = vmatpush1.bf16.msra.mxu0 0
          %1058 = vmatprep.subr.bf16.mxu0 0
          %1059 = vmatpush1.bf16.msra.mxu0 0
          %1060 = vmatprep.subr.bf16.mxu0 0
          %1061 = vmatpush1.bf16.msra.mxu0 0
          %1062 = vmatprep.subr.bf16.mxu0 0
          %1063 = vmatpush1.bf16.msra.mxu0 0
          %1064 = vmatprep.subr.bf16.mxu0 0
          %1065 = vmatpush1.bf16.msra.mxu0 0
          %1066 = vmatprep.subr.bf16.mxu0 0
          %1067 = vmatpush1.bf16.msra.mxu0 0
          %1068 = vmatprep.subr.bf16.mxu0 0
          %1069 = vmatpush1.bf16.msra.mxu0 %v1052
          %1070 = vmatprep.subr.bf16.mxu0 0
          %1071 = vmatpush2.bf16.msra.mxu0 0
          %1072 = vmatprep.subr.bf16.mxu0 0
          %1073 = vmatpush2.bf16.msra.mxu0 0
          %1074 = vmatprep.subr.bf16.mxu0 0
          %1075 = vmatpush2.bf16.msra.mxu0 0
          %1076 = vmatprep.subr.bf16.mxu0 0
          %1077 = vmatpush2.bf16.msra.mxu0 0
          %1078 = vmatprep.subr.bf16.mxu0 0
          %1079 = vmatpush2.bf16.msra.mxu0 0
          %1080 = vmatprep.subr.bf16.mxu0 0
          %1081 = vmatpush2.bf16.msra.mxu0 0
          %1082 = vmatprep.subr.bf16.mxu0 0
          %1083 = vmatpush2.bf16.msra.mxu0 0
          %1084 = vmatprep.subr.bf16.mxu0 0
          %1085 = vmatpush2.bf16.msra.mxu0 0
          %1086 = vmatprep.mubr.bf16.mxu0 0
          %1087 = vmatmul.mubr.bf16.gmra.mxu0 %v1042
          %v1088 = vpop.f32.mrf.mxu0
          %v1089 = vadd.f32 %v1023, %v1088
          %v1090 = vpop.f32.mrf.mxu0
          %v1091 = vpop.f32.mrf.mxu0
          %v1092 = vadd.f32 %v1023, %v1091
          %v1093 = vpop.f32.mrf.mxu0
          %1094 = vmatprep.mubr.bf16.mxu0 0
          %1095 = vmatmul.mubr.bf16.gmra.mxu0 %v1045
          %v1096 = vpop.f32.mrf.mxu0
          %v1097 = vadd.f32 %v1023, %v1096
          %v1098 = vpop.f32.mrf.mxu0
          %v1099 = vpop.f32.mrf.mxu0
          %v1100 = vadd.f32 %v1023, %v1099
          %v1101 = vpop.f32.mrf.mxu0
          %1102 = vmatprep.mubr.bf16.mxu0 0
          %1103 = vmatmul.mubr.bf16.gmra.mxu0 %v1048
          %v1104 = vpop.f32.mrf.mxu0
          %v1105 = vadd.f32 %v1023, %v1104
          %v1106 = vpop.f32.mrf.mxu0
          %v1107 = vpop.f32.mrf.mxu0
          %v1108 = vadd.f32 %v1023, %v1107
          %v1109 = vpop.f32.mrf.mxu0
          %1110 = vdwg.mxu0
          %v1111 = vld [vmem:[%s1] sm:$0xff]
          %v1112 = vld [vmem:[%s1 + $0x8] sm:$0xff]
          %v1113 = vld [vmem:[%s1 + $0x10] sm:$0xff]
          %v1114 = vadd.f32 %v1089, %v1111
          %v1115 = vadd.f32 %v1092, %v1112
          %v1116 = vadd.f32 %v1097, %v1113
          %v1117 = vadd.f32 %v1100, %v1111
          %v1118 = vadd.f32 %v1105, %v1112
          %v1119 = vadd.f32 %v1108, %v1113
          %v1120 = vld [vmem:[#allocation6] sm:$0xf]
          %v1121 = vld [vmem:[#allocation6 + $0x4] sm:$0xf]
          %v1122 = vld [vmem:[#allocation6 + $0x8] sm:$0xf]
          %v1123 = vld [vmem:[#allocation6 + $0xc] sm:$0xf]
          %v1124 = vld [vmem:[#allocation8] sm:$0x1]
          %v1125 = vpack.c.bf16 %v1115, %v1114
          %v1126 = vpack.c.bf16 %v1117, %v1116
          %v1127 = vpack.c.bf16 %v1119, %v1118
          %v1129 = vlaneseq
          %v1130 = vshrl.u32 %v1129, 7
          %v1131 = vsub.s32 0, %v1130
          %v1132 = vrot.slane %v1124, %v1131
          %v1138 = vunpack.c.l.b16 %v1120
          %v1139 = vunpack.c.l.b16 %v1121
          %v1140 = vunpack.c.l.b16 %v1122
          %v1141 = vunpack.c.l.b16 %v1123
          %v1142 = vpack.c.b16 %v1139, %v1138
          %v1143 = vpack.c.b16 %v1141, %v1140
          %vm1146 = vcmask 261120
          %v1148 = vsel %vm1146, %v1125, 0
          %v1151 = vsel %vm1146, %v1126, 0
          %v1154 = vsel %vm1146, %v1127, 0
          %1156 = vmatprep.subr.bf16.mxu0 0
          %1157 = vmatpush1.bf16.msra.mxu0 0
          %1158 = vmatprep.subr.bf16.mxu0 0
          %1159 = vmatpush1.bf16.msra.mxu0 0
          %1160 = vmatprep.subr.bf16.mxu0 0
          %1161 = vmatpush1.bf16.msra.mxu0 0
          %1162 = vmatprep.subr.bf16.mxu0 0
          %1163 = vmatpush1.bf16.msra.mxu0 0
          %1164 = vmatprep.subr.bf16.mxu0 0
          %1165 = vmatpush1.bf16.msra.mxu0 0
          %1166 = vmatprep.subr.bf16.mxu0 0
          %1167 = vmatpush1.bf16.msra.mxu0 0
          %1168 = vmatprep.subr.bf16.mxu0 0
          %1169 = vmatpush1.bf16.msra.mxu0 %v1143
          %1170 = vmatprep.subr.bf16.mxu0 0
          %1171 = vmatpush1.bf16.msra.mxu0 %v1142
          %1172 = vmatprep.subr.bf16.mxu0 0
          %1173 = vmatpush2.bf16.msra.mxu0 0
          %1174 = vmatprep.subr.bf16.mxu0 0
          %1175 = vmatpush2.bf16.msra.mxu0 0
          %1176 = vmatprep.subr.bf16.mxu0 0
          %1177 = vmatpush2.bf16.msra.mxu0 0
          %1178 = vmatprep.subr.bf16.mxu0 0
          %1179 = vmatpush2.bf16.msra.mxu0 0
          %1180 = vmatprep.subr.bf16.mxu0 0
          %1181 = vmatpush2.bf16.msra.mxu0 0
          %1182 = vmatprep.subr.bf16.mxu0 0
          %1183 = vmatpush2.bf16.msra.mxu0 0
          %1184 = vmatprep.subr.bf16.mxu0 0
          %1185 = vmatpush2.bf16.msra.mxu0 0
          %1186 = vmatprep.subr.bf16.mxu0 0
          %1187 = vmatpush2.bf16.msra.mxu0 0
          %1188 = vmatprep.mubr.bf16.mxu0 0
          %1189 = vmatmul.mubr.bf16.gmra.mxu0 %v1148
          %v1190 = vpop.f32.mrf.mxu0
          %v1191 = vadd.f32 %v1132, %v1190
          %v1192 = vpop.f32.mrf.mxu0
          %v1193 = vpop.f32.mrf.mxu0
          %v1194 = vadd.f32 %v1132, %v1193
          %v1195 = vpop.f32.mrf.mxu0
          %1196 = vmatprep.mubr.bf16.mxu0 0
          %1197 = vmatmul.mubr.bf16.gmra.mxu0 %v1151
          %v1198 = vpop.f32.mrf.mxu0
          %v1199 = vadd.f32 %v1132, %v1198
          %v1200 = vpop.f32.mrf.mxu0
          %v1201 = vpop.f32.mrf.mxu0
          %v1202 = vadd.f32 %v1132, %v1201
          %v1203 = vpop.f32.mrf.mxu0
          %1204 = vmatprep.mubr.bf16.mxu0 0
          %1205 = vmatmul.mubr.bf16.gmra.mxu0 %v1154
          %v1206 = vpop.f32.mrf.mxu0
          %v1207 = vadd.f32 %v1132, %v1206
          %v1208 = vpop.f32.mrf.mxu0
          %v1209 = vpop.f32.mrf.mxu0
          %v1210 = vadd.f32 %v1132, %v1209
          %v1211 = vpop.f32.mrf.mxu0
          %1212 = vdwg.mxu0
          %1213 = vst.msk [vmem:[#allocation2] sm:$0xff] %vm1146, %v1191
          %1214 = vst.msk [vmem:[#allocation2 + $0x8] sm:$0xff] %vm1146, %v1194
          %1215 = vst.msk [vmem:[#allocation2 + $0x10] sm:$0xff] %vm1146, %v1199
          %1216 = vst.msk [vmem:[#allocation2 + $0x18] sm:$0xff] %vm1146, %v1202
          %1217 = vst.msk [vmem:[#allocation2 + $0x20] sm:$0xff] %vm1146, %v1207
          %1218 = vst.msk [vmem:[#allocation2 + $0x28] sm:$0xff] %vm1146, %v1210
        $region140: #{tpu_custom_call.1} parent=107 // pred_fallthru
          _
        %v1219 = vld [vmem:[#allocation2] sm:$0xff]
        %v1220 = vld [vmem:[#allocation2 + $0x8] sm:$0xff]
        %v1221 = vld [vmem:[#allocation2 + $0x10] sm:$0xff]
        %v1222 = vld [vmem:[#allocation2 + $0x18] sm:$0xff]
        %v1223 = vld [vmem:[#allocation2 + $0x20] sm:$0xff]
        %v1224 = vld [vmem:[#allocation2 + $0x28] sm:$0xff]
        %v1225 = vld [vmem:[%s832] sm:$0x1]
        %v1226 = vld [vmem:[%s840] sm:$0x1]
        %vm1227 = vcmask 261120
        %v1228 = vsel %vm1227, %v1219, 0.0
        %1229 = vadd.xlane.f32.xlu0 %v1228
        %v1230 = vpop.xlane.xlu0 %1229
        %v1231 = vsel %vm1227, %v1220, 0.0
        %1232 = vadd.xlane.f32.xlu0 %v1231
        %v1233 = vpop.xlane.xlu0 %1232
        %v1234 = vsel %vm1227, %v1221, 0.0
        %1235 = vadd.xlane.f32.xlu0 %v1234
        %v1236 = vpop.xlane.xlu0 %1235
        %v1237 = vsel %vm1227, %v1222, 0.0
        %1238 = vadd.xlane.f32.xlu0 %v1237
        %v1239 = vpop.xlane.xlu0 %1238
        %v1240 = vsel %vm1227, %v1223, 0.0
        %1241 = vadd.xlane.f32.xlu0 %v1240
        %v1242 = vpop.xlane.xlu0 %1241
        %v1243 = vsel %vm1227, %v1224, 0.0
        %1244 = vadd.xlane.f32.xlu0 %v1243
        %v1245 = vpop.xlane.xlu0 %1244
        %v1246 = vrcp.pop 32.0
        %v1247 = vmul.f32 %v1230, %v1246
        %v1248 = vmul.f32 %v1233, %v1246
        %v1249 = vmul.f32 %v1236, %v1246
        %v1250 = vmul.f32 %v1239, %v1246
        %v1251 = vmul.f32 %v1242, %v1246
        %v1252 = vmul.f32 %v1245, %v1246
        %v1253 = vmul.f32 %v1219, %v1219
        %v1254 = vmul.f32 %v1220, %v1220
        %v1255 = vmul.f32 %v1221, %v1221
        %v1256 = vmul.f32 %v1222, %v1222
        %v1257 = vmul.f32 %v1223, %v1223
        %v1258 = vmul.f32 %v1224, %v1224
        %v1259 = vsel %vm1227, %v1253, 0.0
        %1260 = vadd.xlane.f32.xlu0 %v1259
        %v1261 = vpop.xlane.xlu0 %1260
        %v1262 = vsel %vm1227, %v1254, 0.0
        %1263 = vadd.xlane.f32.xlu0 %v1262
        %v1264 = vpop.xlane.xlu0 %1263
        %v1265 = vsel %vm1227, %v1255, 0.0
        %1266 = vadd.xlane.f32.xlu0 %v1265
        %v1267 = vpop.xlane.xlu0 %1266
        %v1268 = vsel %vm1227, %v1256, 0.0
        %1269 = vadd.xlane.f32.xlu0 %v1268
        %v1270 = vpop.xlane.xlu0 %1269
        %v1271 = vsel %vm1227, %v1257, 0.0
        %1272 = vadd.xlane.f32.xlu0 %v1271
        %v1273 = vpop.xlane.xlu0 %1272
        %v1274 = vsel %vm1227, %v1258, 0.0
        %1275 = vadd.xlane.f32.xlu0 %v1274
        %v1276 = vpop.xlane.xlu0 %1275
        %v1277 = vmul.f32 %v1261, %v1246
        %v1278 = vmul.f32 %v1264, %v1246
        %v1279 = vmul.f32 %v1267, %v1246
        %v1280 = vmul.f32 %v1270, %v1246
        %v1281 = vmul.f32 %v1273, %v1246
        %v1282 = vmul.f32 %v1276, %v1246
        %v1283 = vmul.f32 %v1247, %v1247
        %v1284 = vmul.f32 %v1248, %v1248
        %v1285 = vmul.f32 %v1249, %v1249
        %v1286 = vmul.f32 %v1250, %v1250
        %v1287 = vmul.f32 %v1251, %v1251
        %v1288 = vmul.f32 %v1252, %v1252
        %v1289 = vsub.f32 %v1277, %v1283
        %v1290 = vsub.f32 %v1278, %v1284
        %v1291 = vsub.f32 %v1279, %v1285
        %v1292 = vsub.f32 %v1280, %v1286
        %v1293 = vsub.f32 %v1281, %v1287
        %v1294 = vsub.f32 %v1282, %v1288
        %v1295 = vsub.f32 %v1219, %v1247
        %v1296 = vsub.f32 %v1220, %v1248
        %v1297 = vsub.f32 %v1221, %v1249
        %v1298 = vsub.f32 %v1222, %v1250
        %v1299 = vsub.f32 %v1223, %v1251
        %v1300 = vsub.f32 %v1224, %v1252
        %v1301 = vadd.f32 %v1289, 1e-05
        %v1302 = vadd.f32 %v1290, 1e-05
        %v1303 = vadd.f32 %v1291, 1e-05
        %v1304 = vadd.f32 %v1292, 1e-05
        %v1305 = vadd.f32 %v1293, 1e-05
        %v1306 = vadd.f32 %v1294, 1e-05
        %v1307 = vrsqrt.pop %v1301
        %v1308 = vrsqrt.pop %v1302
        %v1309 = vrsqrt.pop %v1303
        %v1310 = vrsqrt.pop %v1304
        %v1311 = vrsqrt.pop %v1305
        %v1312 = vrsqrt.pop %v1306
        %v1313 = vmul.f32 %v1295, %v1307
        %v1314 = vmul.f32 %v1296, %v1308
        %v1315 = vmul.f32 %v1297, %v1309
        %v1316 = vmul.f32 %v1298, %v1310
        %v1317 = vmul.f32 %v1299, %v1311
        %v1318 = vmul.f32 %v1300, %v1312
        %v1320 = vlaneseq
        %v1321 = vshrl.u32 %v1320, 7
        %v1322 = vsub.s32 0, %v1321
        %v1323 = vrot.slane %v1225, %v1322
        %v1325 = vmul.f32 %v1313, %v1323
        %v1326 = vmul.f32 %v1314, %v1323
        %v1327 = vmul.f32 %v1315, %v1323
        %v1328 = vmul.f32 %v1316, %v1323
        %v1329 = vmul.f32 %v1317, %v1323
        %v1330 = vmul.f32 %v1318, %v1323
        %v1332 = vlaneseq
        %v1333 = vshrl.u32 %v1332, 7
        %v1334 = vsub.s32 0, %v1333
        %v1335 = vrot.slane %v1226, %v1334
        %v1337 = vadd.f32 %v1325, %v1335
        %v1338 = vadd.f32 %v1326, %v1335
        %v1339 = vadd.f32 %v1327, %v1335
        %v1340 = vadd.f32 %v1328, %v1335
        %v1341 = vadd.f32 %v1329, %v1335
        %v1342 = vadd.f32 %v1330, %v1335
        %v1343 = vpack.c.bf16 %v1338, %v1337
        %v1344 = vpack.c.bf16 %v1340, %v1339
        %v1345 = vpack.c.bf16 %v1342, %v1341
        %v1346 = vld [vmem:[%s977] sm:$0xf]
        %v1347 = vld [vmem:[%s977 + $0x4] sm:$0xf]
        %v1348 = vld [vmem:[%s977 + $0x8] sm:$0xf]
        %v1349 = vld [vmem:[%s977 + $0xc] sm:$0xf]
        %v1350 = vld [vmem:[%s848] sm:$0x1]
        %v1352 = vlaneseq
        %v1353 = vshrl.u32 %v1352, 7
        %v1354 = vsub.s32 0, %v1353
        %v1355 = vrot.slane %v1350, %v1354
        %v1361 = vunpack.c.l.b16 %v1346
        %v1362 = vunpack.c.l.b16 %v1347
        %v1363 = vunpack.c.l.b16 %v1348
        %v1364 = vunpack.c.l.b16 %v1349
        %v1365 = vpack.c.b16 %v1362, %v1361
        %v1366 = vpack.c.b16 %v1364, %v1363
        %v1370 = vsel %vm1227, %v1343, 0
        %v1373 = vsel %vm1227, %v1344, 0
        %v1376 = vsel %vm1227, %v1345, 0
        %1378 = vmatprep.subr.bf16.mxu0 0
        %1379 = vmatpush1.bf16.msra.mxu0 0
        %1380 = vmatprep.subr.bf16.mxu0 0
        %1381 = vmatpush1.bf16.msra.mxu0 0
        %1382 = vmatprep.subr.bf16.mxu0 0
        %1383 = vmatpush1.bf16.msra.mxu0 0
        %1384 = vmatprep.subr.bf16.mxu0 0
        %1385 = vmatpush1.bf16.msra.mxu0 0
        %1386 = vmatprep.subr.bf16.mxu0 0
        %1387 = vmatpush1.bf16.msra.mxu0 0
        %1388 = vmatprep.subr.bf16.mxu0 0
        %1389 = vmatpush1.bf16.msra.mxu0 0
        %1390 = vmatprep.subr.bf16.mxu0 0
        %1391 = vmatpush1.bf16.msra.mxu0 %v1366
        %1392 = vmatprep.subr.bf16.mxu0 0
        %1393 = vmatpush1.bf16.msra.mxu0 %v1365
        %1394 = vmatprep.subr.bf16.mxu0 0
        %1395 = vmatpush2.bf16.msra.mxu0 0
        %1396 = vmatprep.subr.bf16.mxu0 0
        %1397 = vmatpush2.bf16.msra.mxu0 0
        %1398 = vmatprep.subr.bf16.mxu0 0
        %1399 = vmatpush2.bf16.msra.mxu0 0
        %1400 = vmatprep.subr.bf16.mxu0 0
        %1401 = vmatpush2.bf16.msra.mxu0 0
        %1402 = vmatprep.subr.bf16.mxu0 0
        %1403 = vmatpush2.bf16.msra.mxu0 0
        %1404 = vmatprep.subr.bf16.mxu0 0
        %1405 = vmatpush2.bf16.msra.mxu0 0
        %1406 = vmatprep.subr.bf16.mxu0 0
        %1407 = vmatpush2.bf16.msra.mxu0 0
        %1408 = vmatprep.subr.bf16.mxu0 0
        %1409 = vmatpush2.bf16.msra.mxu0 0
        %1410 = vmatprep.mubr.bf16.mxu0 0
        %1411 = vmatmul.mubr.bf16.gmra.mxu0 %v1370
        %v1412 = vpop.f32.mrf.mxu0
        %v1413 = vadd.f32 %v1355, %v1412
        %v1414 = vpop.f32.mrf.mxu0
        %v1415 = vpop.f32.mrf.mxu0
        %v1416 = vadd.f32 %v1355, %v1415
        %v1417 = vpop.f32.mrf.mxu0
        %1418 = vmatprep.mubr.bf16.mxu0 0
        %1419 = vmatmul.mubr.bf16.gmra.mxu0 %v1373
        %v1420 = vpop.f32.mrf.mxu0
        %v1421 = vadd.f32 %v1355, %v1420
        %v1422 = vpop.f32.mrf.mxu0
        %v1423 = vpop.f32.mrf.mxu0
        %v1424 = vadd.f32 %v1355, %v1423
        %v1425 = vpop.f32.mrf.mxu0
        %1426 = vmatprep.mubr.bf16.mxu0 0
        %1427 = vmatmul.mubr.bf16.gmra.mxu0 %v1376
        %v1428 = vpop.f32.mrf.mxu0
        %v1429 = vadd.f32 %v1355, %v1428
        %v1430 = vpop.f32.mrf.mxu0
        %v1431 = vpop.f32.mrf.mxu0
        %v1432 = vadd.f32 %v1355, %v1431
        %v1433 = vpop.f32.mrf.mxu0
        %1434 = vdwg.mxu0
        %1441 = vrot.lane.b32.xlu0 %v1413, 120
        %v1442 = vpop.permute.xlu0 %1441
        %1443 = vrot.lane.b32.xlu0 %v1416, 120
        %v1444 = vpop.permute.xlu0 %1443
        %1445 = vrot.lane.b32.xlu0 %v1421, 120
        %v1446 = vpop.permute.xlu0 %1445
        %1447 = vrot.lane.b32.xlu0 %v1424, 120
        %v1448 = vpop.permute.xlu0 %1447
        %1449 = vrot.lane.b32.xlu0 %v1429, 120
        %v1450 = vpop.permute.xlu0 %1449
        %1451 = vrot.lane.b32.xlu0 %v1432, 120
        %v1452 = vpop.permute.xlu0 %1451
        %1459 = vrot.lane.b32.xlu0 %v1413, 112
        %v1460 = vpop.permute.xlu0 %1459
        %1461 = vrot.lane.b32.xlu0 %v1416, 112
        %v1462 = vpop.permute.xlu0 %1461
        %1463 = vrot.lane.b32.xlu0 %v1421, 112
        %v1464 = vpop.permute.xlu0 %1463
        %1465 = vrot.lane.b32.xlu0 %v1424, 112
        %v1466 = vpop.permute.xlu0 %1465
        %1467 = vrot.lane.b32.xlu0 %v1429, 112
        %v1468 = vpop.permute.xlu0 %1467
        %1469 = vrot.lane.b32.xlu0 %v1432, 112
        %v1470 = vpop.permute.xlu0 %1469
        %1477 = vrot.lane.b32.xlu0 %v1413, 104
        %v1478 = vpop.permute.xlu0 %1477
        %1479 = vrot.lane.b32.xlu0 %v1416, 104
        %v1480 = vpop.permute.xlu0 %1479
        %1481 = vrot.lane.b32.xlu0 %v1421, 104
        %v1482 = vpop.permute.xlu0 %1481
        %1483 = vrot.lane.b32.xlu0 %v1424, 104
        %v1484 = vpop.permute.xlu0 %1483
        %1485 = vrot.lane.b32.xlu0 %v1429, 104
        %v1486 = vpop.permute.xlu0 %1485
        %1487 = vrot.lane.b32.xlu0 %v1432, 104
        %v1488 = vpop.permute.xlu0 %1487
        %1495 = vrot.lane.b32.xlu0 %v1413, 96
        %v1496 = vpop.permute.xlu0 %1495
        %1497 = vrot.lane.b32.xlu0 %v1416, 96
        %v1498 = vpop.permute.xlu0 %1497
        %1499 = vrot.lane.b32.xlu0 %v1421, 96
        %v1500 = vpop.permute.xlu0 %1499
        %1501 = vrot.lane.b32.xlu0 %v1424, 96
        %v1502 = vpop.permute.xlu0 %1501
        %1503 = vrot.lane.b32.xlu0 %v1429, 96
        %v1504 = vpop.permute.xlu0 %1503
        %1505 = vrot.lane.b32.xlu0 %v1432, 96
        %v1506 = vpop.permute.xlu0 %1505
        %1513 = vrot.lane.b32.xlu0 %v1413, 88
        %v1514 = vpop.permute.xlu0 %1513
        %1515 = vrot.lane.b32.xlu0 %v1416, 88
        %v1516 = vpop.permute.xlu0 %1515
        %1517 = vrot.lane.b32.xlu0 %v1421, 88
        %v1518 = vpop.permute.xlu0 %1517
        %1519 = vrot.lane.b32.xlu0 %v1424, 88
        %v1520 = vpop.permute.xlu0 %1519
        %1521 = vrot.lane.b32.xlu0 %v1429, 88
        %v1522 = vpop.permute.xlu0 %1521
        %1523 = vrot.lane.b32.xlu0 %v1432, 88
        %v1524 = vpop.permute.xlu0 %1523
        %1531 = vrot.lane.b32.xlu0 %v1413, 80
        %v1532 = vpop.permute.xlu0 %1531
        %1533 = vrot.lane.b32.xlu0 %v1416, 80
        %v1534 = vpop.permute.xlu0 %1533
        %1535 = vrot.lane.b32.xlu0 %v1421, 80
        %v1536 = vpop.permute.xlu0 %1535
        %1537 = vrot.lane.b32.xlu0 %v1424, 80
        %v1538 = vpop.permute.xlu0 %1537
        %1539 = vrot.lane.b32.xlu0 %v1429, 80
        %v1540 = vpop.permute.xlu0 %1539
        %1541 = vrot.lane.b32.xlu0 %v1432, 80
        %v1542 = vpop.permute.xlu0 %1541
        %1549 = vrot.lane.b32.xlu0 %v1413, 72
        %v1550 = vpop.permute.xlu0 %1549
        %1551 = vrot.lane.b32.xlu0 %v1416, 72
        %v1552 = vpop.permute.xlu0 %1551
        %1553 = vrot.lane.b32.xlu0 %v1421, 72
        %v1554 = vpop.permute.xlu0 %1553
        %1555 = vrot.lane.b32.xlu0 %v1424, 72
        %v1556 = vpop.permute.xlu0 %1555
        %1557 = vrot.lane.b32.xlu0 %v1429, 72
        %v1558 = vpop.permute.xlu0 %1557
        %1559 = vrot.lane.b32.xlu0 %v1432, 72
        %v1560 = vpop.permute.xlu0 %1559
        %1567 = vrot.lane.b32.xlu0 %v1413, 64
        %v1568 = vpop.permute.xlu0 %1567
        %1569 = vrot.lane.b32.xlu0 %v1416, 64
        %v1570 = vpop.permute.xlu0 %1569
        %1571 = vrot.lane.b32.xlu0 %v1421, 64
        %v1572 = vpop.permute.xlu0 %1571
        %1573 = vrot.lane.b32.xlu0 %v1424, 64
        %v1574 = vpop.permute.xlu0 %1573
        %1575 = vrot.lane.b32.xlu0 %v1429, 64
        %v1576 = vpop.permute.xlu0 %1575
        %1577 = vrot.lane.b32.xlu0 %v1432, 64
        %v1578 = vpop.permute.xlu0 %1577
        %1585 = vrot.lane.b32.xlu0 %v1413, 56
        %v1586 = vpop.permute.xlu0 %1585
        %1587 = vrot.lane.b32.xlu0 %v1416, 56
        %v1588 = vpop.permute.xlu0 %1587
        %1589 = vrot.lane.b32.xlu0 %v1421, 56
        %v1590 = vpop.permute.xlu0 %1589
        %1591 = vrot.lane.b32.xlu0 %v1424, 56
        %v1592 = vpop.permute.xlu0 %1591
        %1593 = vrot.lane.b32.xlu0 %v1429, 56
        %v1594 = vpop.permute.xlu0 %1593
        %1595 = vrot.lane.b32.xlu0 %v1432, 56
        %v1596 = vpop.permute.xlu0 %1595
        %1603 = vrot.lane.b32.xlu0 %v1413, 48
        %v1604 = vpop.permute.xlu0 %1603
        %1605 = vrot.lane.b32.xlu0 %v1416, 48
        %v1606 = vpop.permute.xlu0 %1605
        %1607 = vrot.lane.b32.xlu0 %v1421, 48
        %v1608 = vpop.permute.xlu0 %1607
        %1609 = vrot.lane.b32.xlu0 %v1424, 48
        %v1610 = vpop.permute.xlu0 %1609
        %1611 = vrot.lane.b32.xlu0 %v1429, 48
        %v1612 = vpop.permute.xlu0 %1611
        %1613 = vrot.lane.b32.xlu0 %v1432, 48
        %v1614 = vpop.permute.xlu0 %1613
        %1621 = vrot.lane.b32.xlu0 %v1413, 40
        %v1622 = vpop.permute.xlu0 %1621
        %1623 = vrot.lane.b32.xlu0 %v1416, 40
        %v1624 = vpop.permute.xlu0 %1623
        %1625 = vrot.lane.b32.xlu0 %v1421, 40
        %v1626 = vpop.permute.xlu0 %1625
        %1627 = vrot.lane.b32.xlu0 %v1424, 40
        %v1628 = vpop.permute.xlu0 %1627
        %1629 = vrot.lane.b32.xlu0 %v1429, 40
        %v1630 = vpop.permute.xlu0 %1629
        %1631 = vrot.lane.b32.xlu0 %v1432, 40
        %v1632 = vpop.permute.xlu0 %1631
        %v1639 = vcombine.low %v1413, %v1460
        %v1640 = vcombine.high %v1413, %v1460
        %v1642 = vunpack.c.l.s4 1983009808
        %v1643 = vunpack.c.0.s8 %v1642
        %v1644 = vlaneseq
        %v1645 = vshrl.u32 %v1644, 7
        %v1646 = vsub.s32 %v1643, %v1645
        %v1647 = vrot.slane %v1639, %v1646
        %v1649 = vunpack.c.l.s4 1983009808
        %v1650 = vunpack.c.0.s8 %v1649
        %v1651 = vlaneseq
        %v1652 = vshrl.u32 %v1651, 7
        %v1653 = vsub.s32 %v1650, %v1652
        %v1654 = vrot.slane %v1640, %v1653
        %v1655 = vcombine.low %v1442, %v1478
        %v1656 = vcombine.high %v1442, %v1478
        %v1658 = vunpack.c.l.s4 1983009808
        %v1659 = vunpack.c.0.s8 %v1658
        %v1660 = vlaneseq
        %v1661 = vshrl.u32 %v1660, 7
        %v1662 = vsub.s32 %v1659, %v1661
        %v1663 = vrot.slane %v1655, %v1662
        %v1665 = vunpack.c.l.s4 1983009808
        %v1666 = vunpack.c.0.s8 %v1665
        %v1667 = vlaneseq
        %v1668 = vshrl.u32 %v1667, 7
        %v1669 = vsub.s32 %v1666, %v1668
        %v1670 = vrot.slane %v1656, %v1669
        %v1671 = vcombine.low %v1496, %v1532
        %v1672 = vcombine.high %v1496, %v1532
        %v1674 = vunpack.c.l.s4 1983009808
        %v1675 = vunpack.c.0.s8 %v1674
        %v1676 = vlaneseq
        %v1677 = vshrl.u32 %v1676, 7
        %v1678 = vsub.s32 %v1675, %v1677
        %v1679 = vrot.slane %v1671, %v1678
        %v1681 = vunpack.c.l.s4 1983009808
        %v1682 = vunpack.c.0.s8 %v1681
        %v1683 = vlaneseq
        %v1684 = vshrl.u32 %v1683, 7
        %v1685 = vsub.s32 %v1682, %v1684
        %v1686 = vrot.slane %v1672, %v1685
        %v1687 = vcombine.low %v1514, %v1550
        %v1688 = vcombine.high %v1514, %v1550
        %v1690 = vunpack.c.l.s4 1983009808
        %v1691 = vunpack.c.0.s8 %v1690
        %v1692 = vlaneseq
        %v1693 = vshrl.u32 %v1692, 7
        %v1694 = vsub.s32 %v1691, %v1693
        %v1695 = vrot.slane %v1687, %v1694
        %v1697 = vunpack.c.l.s4 1983009808
        %v1698 = vunpack.c.0.s8 %v1697
        %v1699 = vlaneseq
        %v1700 = vshrl.u32 %v1699, 7
        %v1701 = vsub.s32 %v1698, %v1700
        %v1702 = vrot.slane %v1688, %v1701
        %v1703 = vcombine.low %v1647, %v1663
        %v1704 = vcombine.high %v1647, %v1663
        %v1706 = vunpack.c.l.s4 1934713408
        %v1707 = vunpack.c.0.s8 %v1706
        %v1708 = vlaneseq
        %v1709 = vshrl.u32 %v1708, 7
        %v1710 = vsub.s32 %v1707, %v1709
        %v1711 = vrot.slane %v1703, %v1710
        %v1713 = vunpack.c.l.s4 1934713408
        %v1714 = vunpack.c.0.s8 %v1713
        %v1715 = vlaneseq
        %v1716 = vshrl.u32 %v1715, 7
        %v1717 = vsub.s32 %v1714, %v1716
        %v1718 = vrot.slane %v1704, %v1717
        %v1719 = vcombine.low %v1654, %v1670
        %v1720 = vcombine.high %v1654, %v1670
        %v1722 = vunpack.c.l.s4 1934713408
        %v1723 = vunpack.c.0.s8 %v1722
        %v1724 = vlaneseq
        %v1725 = vshrl.u32 %v1724, 7
        %v1726 = vsub.s32 %v1723, %v1725
        %v1727 = vrot.slane %v1719, %v1726
        %v1729 = vunpack.c.l.s4 1934713408
        %v1730 = vunpack.c.0.s8 %v1729
        %v1731 = vlaneseq
        %v1732 = vshrl.u32 %v1731, 7
        %v1733 = vsub.s32 %v1730, %v1732
        %v1734 = vrot.slane %v1720, %v1733
        %v1735 = vcombine.low %v1679, %v1695
        %v1736 = vcombine.high %v1679, %v1695
        %v1738 = vunpack.c.l.s4 1934713408
        %v1739 = vunpack.c.0.s8 %v1738
        %v1740 = vlaneseq
        %v1741 = vshrl.u32 %v1740, 7
        %v1742 = vsub.s32 %v1739, %v1741
        %v1743 = vrot.slane %v1735, %v1742
        %v1745 = vunpack.c.l.s4 1934713408
        %v1746 = vunpack.c.0.s8 %v1745
        %v1747 = vlaneseq
        %v1748 = vshrl.u32 %v1747, 7
        %v1749 = vsub.s32 %v1746, %v1748
        %v1750 = vrot.slane %v1736, %v1749
        %v1751 = vcombine.low %v1686, %v1702
        %v1752 = vcombine.high %v1686, %v1702
        %v1754 = vunpack.c.l.s4 1934713408
        %v1755 = vunpack.c.0.s8 %v1754
        %v1756 = vlaneseq
        %v1757 = vshrl.u32 %v1756, 7
        %v1758 = vsub.s32 %v1755, %v1757
        %v1759 = vrot.slane %v1751, %v1758
        %v1761 = vunpack.c.l.s4 1934713408
        %v1762 = vunpack.c.0.s8 %v1761
        %v1763 = vlaneseq
        %v1764 = vshrl.u32 %v1763, 7
        %v1765 = vsub.s32 %v1762, %v1764
        %v1766 = vrot.slane %v1752, %v1765
        %v1767 = vcombine.low %v1711, %v1743
        %v1768 = vcombine.high %v1711, %v1743
        %v1769 = vcombine.low %v1718, %v1750
        %v1770 = vcombine.high %v1718, %v1750
        %v1771 = vcombine.low %v1727, %v1759
        %v1772 = vcombine.high %v1727, %v1759
        %v1773 = vcombine.low %v1734, %v1766
        %v1774 = vcombine.high %v1734, %v1766
        %v1775 = vcombine.low %v1568, %v1604
        %v1776 = vcombine.high %v1568, %v1604
        %v1778 = vunpack.c.l.s4 1983009808
        %v1779 = vunpack.c.0.s8 %v1778
        %v1780 = vlaneseq
        %v1781 = vshrl.u32 %v1780, 7
        %v1782 = vsub.s32 %v1779, %v1781
        %v1783 = vrot.slane %v1775, %v1782
        %v1785 = vunpack.c.l.s4 1983009808
        %v1786 = vunpack.c.0.s8 %v1785
        %v1787 = vlaneseq
        %v1788 = vshrl.u32 %v1787, 7
        %v1789 = vsub.s32 %v1786, %v1788
        %v1790 = vrot.slane %v1776, %v1789
        %v1791 = vcombine.low %v1586, %v1622
        %v1792 = vcombine.high %v1586, %v1622
        %v1794 = vunpack.c.l.s4 1983009808
        %v1795 = vunpack.c.0.s8 %v1794
        %v1796 = vlaneseq
        %v1797 = vshrl.u32 %v1796, 7
        %v1798 = vsub.s32 %v1795, %v1797
        %v1799 = vrot.slane %v1791, %v1798
        %v1801 = vunpack.c.l.s4 1983009808
        %v1802 = vunpack.c.0.s8 %v1801
        %v1803 = vlaneseq
        %v1804 = vshrl.u32 %v1803, 7
        %v1805 = vsub.s32 %v1802, %v1804
        %v1806 = vrot.slane %v1792, %v1805
        %v1807 = vcombine.low %v1783, %v1799
        %v1808 = vcombine.high %v1783, %v1799
        %v1810 = vunpack.c.l.s4 1934713408
        %v1811 = vunpack.c.0.s8 %v1810
        %v1812 = vlaneseq
        %v1813 = vshrl.u32 %v1812, 7
        %v1814 = vsub.s32 %v1811, %v1813
        %v1815 = vrot.slane %v1807, %v1814
        %v1817 = vunpack.c.l.s4 1934713408
        %v1818 = vunpack.c.0.s8 %v1817
        %v1819 = vlaneseq
        %v1820 = vshrl.u32 %v1819, 7
        %v1821 = vsub.s32 %v1818, %v1820
        %v1822 = vrot.slane %v1808, %v1821
        %v1823 = vcombine.low %v1790, %v1806
        %v1824 = vcombine.high %v1790, %v1806
        %v1826 = vunpack.c.l.s4 1934713408
        %v1827 = vunpack.c.0.s8 %v1826
        %v1828 = vlaneseq
        %v1829 = vshrl.u32 %v1828, 7
        %v1830 = vsub.s32 %v1827, %v1829
        %v1831 = vrot.slane %v1823, %v1830
        %v1833 = vunpack.c.l.s4 1934713408
        %v1834 = vunpack.c.0.s8 %v1833
        %v1835 = vlaneseq
        %v1836 = vshrl.u32 %v1835, 7
        %v1837 = vsub.s32 %v1834, %v1836
        %v1838 = vrot.slane %v1824, %v1837
        %v1839 = vcombine.high %v1815, 0.0
        %v1840 = vcombine.high %v1822, 0.0
        %v1841 = vcombine.high %v1831, 0.0
        %v1842 = vcombine.high %v1838, 0.0
        %v1843 = vcombine.low %v1416, %v1462
        %v1844 = vcombine.high %v1416, %v1462
        %v1846 = vunpack.c.l.s4 1983009808
        %v1847 = vunpack.c.0.s8 %v1846
        %v1848 = vlaneseq
        %v1849 = vshrl.u32 %v1848, 7
        %v1850 = vsub.s32 %v1847, %v1849
        %v1851 = vrot.slane %v1843, %v1850
        %v1853 = vunpack.c.l.s4 1983009808
        %v1854 = vunpack.c.0.s8 %v1853
        %v1855 = vlaneseq
        %v1856 = vshrl.u32 %v1855, 7
        %v1857 = vsub.s32 %v1854, %v1856
        %v1858 = vrot.slane %v1844, %v1857
        %v1859 = vcombine.low %v1444, %v1480
        %v1860 = vcombine.high %v1444, %v1480
        %v1862 = vunpack.c.l.s4 1983009808
        %v1863 = vunpack.c.0.s8 %v1862
        %v1864 = vlaneseq
        %v1865 = vshrl.u32 %v1864, 7
        %v1866 = vsub.s32 %v1863, %v1865
        %v1867 = vrot.slane %v1859, %v1866
        %v1869 = vunpack.c.l.s4 1983009808
        %v1870 = vunpack.c.0.s8 %v1869
        %v1871 = vlaneseq
        %v1872 = vshrl.u32 %v1871, 7
        %v1873 = vsub.s32 %v1870, %v1872
        %v1874 = vrot.slane %v1860, %v1873
        %v1875 = vcombine.low %v1498, %v1534
        %v1876 = vcombine.high %v1498, %v1534
        %v1878 = vunpack.c.l.s4 1983009808
        %v1879 = vunpack.c.0.s8 %v1878
        %v1880 = vlaneseq
        %v1881 = vshrl.u32 %v1880, 7
        %v1882 = vsub.s32 %v1879, %v1881
        %v1883 = vrot.slane %v1875, %v1882
        %v1885 = vunpack.c.l.s4 1983009808
        %v1886 = vunpack.c.0.s8 %v1885
        %v1887 = vlaneseq
        %v1888 = vshrl.u32 %v1887, 7
        %v1889 = vsub.s32 %v1886, %v1888
        %v1890 = vrot.slane %v1876, %v1889
        %v1891 = vcombine.low %v1516, %v1552
        %v1892 = vcombine.high %v1516, %v1552
        %v1894 = vunpack.c.l.s4 1983009808
        %v1895 = vunpack.c.0.s8 %v1894
        %v1896 = vlaneseq
        %v1897 = vshrl.u32 %v1896, 7
        %v1898 = vsub.s32 %v1895, %v1897
        %v1899 = vrot.slane %v1891, %v1898
        %v1901 = vunpack.c.l.s4 1983009808
        %v1902 = vunpack.c.0.s8 %v1901
        %v1903 = vlaneseq
        %v1904 = vshrl.u32 %v1903, 7
        %v1905 = vsub.s32 %v1902, %v1904
        %v1906 = vrot.slane %v1892, %v1905
        %v1907 = vcombine.low %v1851, %v1867
        %v1908 = vcombine.high %v1851, %v1867
        %v1910 = vunpack.c.l.s4 1934713408
        %v1911 = vunpack.c.0.s8 %v1910
        %v1912 = vlaneseq
        %v1913 = vshrl.u32 %v1912, 7
        %v1914 = vsub.s32 %v1911, %v1913
        %v1915 = vrot.slane %v1907, %v1914
        %v1917 = vunpack.c.l.s4 1934713408
        %v1918 = vunpack.c.0.s8 %v1917
        %v1919 = vlaneseq
        %v1920 = vshrl.u32 %v1919, 7
        %v1921 = vsub.s32 %v1918, %v1920
        %v1922 = vrot.slane %v1908, %v1921
        %v1923 = vcombine.low %v1858, %v1874
        %v1924 = vcombine.high %v1858, %v1874
        %v1926 = vunpack.c.l.s4 1934713408
        %v1927 = vunpack.c.0.s8 %v1926
        %v1928 = vlaneseq
        %v1929 = vshrl.u32 %v1928, 7
        %v1930 = vsub.s32 %v1927, %v1929
        %v1931 = vrot.slane %v1923, %v1930
        %v1933 = vunpack.c.l.s4 1934713408
        %v1934 = vunpack.c.0.s8 %v1933
        %v1935 = vlaneseq
        %v1936 = vshrl.u32 %v1935, 7
        %v1937 = vsub.s32 %v1934, %v1936
        %v1938 = vrot.slane %v1924, %v1937
        %v1939 = vcombine.low %v1883, %v1899
        %v1940 = vcombine.high %v1883, %v1899
        %v1942 = vunpack.c.l.s4 1934713408
        %v1943 = vunpack.c.0.s8 %v1942
        %v1944 = vlaneseq
        %v1945 = vshrl.u32 %v1944, 7
        %v1946 = vsub.s32 %v1943, %v1945
        %v1947 = vrot.slane %v1939, %v1946
        %v1949 = vunpack.c.l.s4 1934713408
        %v1950 = vunpack.c.0.s8 %v1949
        %v1951 = vlaneseq
        %v1952 = vshrl.u32 %v1951, 7
        %v1953 = vsub.s32 %v1950, %v1952
        %v1954 = vrot.slane %v1940, %v1953
        %v1955 = vcombine.low %v1890, %v1906
        %v1956 = vcombine.high %v1890, %v1906
        %v1958 = vunpack.c.l.s4 1934713408
        %v1959 = vunpack.c.0.s8 %v1958
        %v1960 = vlaneseq
        %v1961 = vshrl.u32 %v1960, 7
        %v1962 = vsub.s32 %v1959, %v1961
        %v1963 = vrot.slane %v1955, %v1962
        %v1965 = vunpack.c.l.s4 1934713408
        %v1966 = vunpack.c.0.s8 %v1965
        %v1967 = vlaneseq
        %v1968 = vshrl.u32 %v1967, 7
        %v1969 = vsub.s32 %v1966, %v1968
        %v1970 = vrot.slane %v1956, %v1969
        %v1971 = vcombine.low %v1915, %v1947
        %v1972 = vcombine.high %v1915, %v1947
        %v1973 = vcombine.low %v1922, %v1954
        %v1974 = vcombine.high %v1922, %v1954
        %v1975 = vcombine.low %v1931, %v1963
        %v1976 = vcombine.high %v1931, %v1963
        %v1977 = vcombine.low %v1938, %v1970
        %v1978 = vcombine.high %v1938, %v1970
        %v1979 = vcombine.low %v1570, %v1606
        %v1980 = vcombine.high %v1570, %v1606
        %v1982 = vunpack.c.l.s4 1983009808
        %v1983 = vunpack.c.0.s8 %v1982
        %v1984 = vlaneseq
        %v1985 = vshrl.u32 %v1984, 7
        %v1986 = vsub.s32 %v1983, %v1985
        %v1987 = vrot.slane %v1979, %v1986
        %v1989 = vunpack.c.l.s4 1983009808
        %v1990 = vunpack.c.0.s8 %v1989
        %v1991 = vlaneseq
        %v1992 = vshrl.u32 %v1991, 7
        %v1993 = vsub.s32 %v1990, %v1992
        %v1994 = vrot.slane %v1980, %v1993
        %v1995 = vcombine.low %v1588, %v1624
        %v1996 = vcombine.high %v1588, %v1624
        %v1998 = vunpack.c.l.s4 1983009808
        %v1999 = vunpack.c.0.s8 %v1998
        %v2000 = vlaneseq
        %v2001 = vshrl.u32 %v2000, 7
        %v2002 = vsub.s32 %v1999, %v2001
        %v2003 = vrot.slane %v1995, %v2002
        %v2005 = vunpack.c.l.s4 1983009808
        %v2006 = vunpack.c.0.s8 %v2005
        %v2007 = vlaneseq
        %v2008 = vshrl.u32 %v2007, 7
        %v2009 = vsub.s32 %v2006, %v2008
        %v2010 = vrot.slane %v1996, %v2009
        %v2011 = vcombine.low %v1987, %v2003
        %v2012 = vcombine.high %v1987, %v2003
        %v2014 = vunpack.c.l.s4 1934713408
        %v2015 = vunpack.c.0.s8 %v2014
        %v2016 = vlaneseq
        %v2017 = vshrl.u32 %v2016, 7
        %v2018 = vsub.s32 %v2015, %v2017
        %v2019 = vrot.slane %v2011, %v2018
        %v2021 = vunpack.c.l.s4 1934713408
        %v2022 = vunpack.c.0.s8 %v2021
        %v2023 = vlaneseq
        %v2024 = vshrl.u32 %v2023, 7
        %v2025 = vsub.s32 %v2022, %v2024
        %v2026 = vrot.slane %v2012, %v2025
        %v2027 = vcombine.low %v1994, %v2010
        %v2028 = vcombine.high %v1994, %v2010
        %v2030 = vunpack.c.l.s4 1934713408
        %v2031 = vunpack.c.0.s8 %v2030
        %v2032 = vlaneseq
        %v2033 = vshrl.u32 %v2032, 7
        %v2034 = vsub.s32 %v2031, %v2033
        %v2035 = vrot.slane %v2027, %v2034
        %v2037 = vunpack.c.l.s4 1934713408
        %v2038 = vunpack.c.0.s8 %v2037
        %v2039 = vlaneseq
        %v2040 = vshrl.u32 %v2039, 7
        %v2041 = vsub.s32 %v2038, %v2040
        %v2042 = vrot.slane %v2028, %v2041
        %v2043 = vcombine.high %v2019, 0.0
        %v2044 = vcombine.high %v2026, 0.0
        %v2045 = vcombine.high %v2035, 0.0
        %v2046 = vcombine.high %v2042, 0.0
        %v2047 = vcombine.low %v1421, %v1464
        %v2048 = vcombine.high %v1421, %v1464
        %v2050 = vunpack.c.l.s4 1983009808
        %v2051 = vunpack.c.0.s8 %v2050
        %v2052 = vlaneseq
        %v2053 = vshrl.u32 %v2052, 7
        %v2054 = vsub.s32 %v2051, %v2053
        %v2055 = vrot.slane %v2047, %v2054
        %v2057 = vunpack.c.l.s4 1983009808
        %v2058 = vunpack.c.0.s8 %v2057
        %v2059 = vlaneseq
        %v2060 = vshrl.u32 %v2059, 7
        %v2061 = vsub.s32 %v2058, %v2060
        %v2062 = vrot.slane %v2048, %v2061
        %v2063 = vcombine.low %v1446, %v1482
        %v2064 = vcombine.high %v1446, %v1482
        %v2066 = vunpack.c.l.s4 1983009808
        %v2067 = vunpack.c.0.s8 %v2066
        %v2068 = vlaneseq
        %v2069 = vshrl.u32 %v2068, 7
        %v2070 = vsub.s32 %v2067, %v2069
        %v2071 = vrot.slane %v2063, %v2070
        %v2073 = vunpack.c.l.s4 1983009808
        %v2074 = vunpack.c.0.s8 %v2073
        %v2075 = vlaneseq
        %v2076 = vshrl.u32 %v2075, 7
        %v2077 = vsub.s32 %v2074, %v2076
        %v2078 = vrot.slane %v2064, %v2077
        %v2079 = vcombine.low %v1500, %v1536
        %v2080 = vcombine.high %v1500, %v1536
        %v2082 = vunpack.c.l.s4 1983009808
        %v2083 = vunpack.c.0.s8 %v2082
        %v2084 = vlaneseq
        %v2085 = vshrl.u32 %v2084, 7
        %v2086 = vsub.s32 %v2083, %v2085
        %v2087 = vrot.slane %v2079, %v2086
        %v2089 = vunpack.c.l.s4 1983009808
        %v2090 = vunpack.c.0.s8 %v2089
        %v2091 = vlaneseq
        %v2092 = vshrl.u32 %v2091, 7
        %v2093 = vsub.s32 %v2090, %v2092
        %v2094 = vrot.slane %v2080, %v2093
        %v2095 = vcombine.low %v1518, %v1554
        %v2096 = vcombine.high %v1518, %v1554
        %v2098 = vunpack.c.l.s4 1983009808
        %v2099 = vunpack.c.0.s8 %v2098
        %v2100 = vlaneseq
        %v2101 = vshrl.u32 %v2100, 7
        %v2102 = vsub.s32 %v2099, %v2101
        %v2103 = vrot.slane %v2095, %v2102
        %v2105 = vunpack.c.l.s4 1983009808
        %v2106 = vunpack.c.0.s8 %v2105
        %v2107 = vlaneseq
        %v2108 = vshrl.u32 %v2107, 7
        %v2109 = vsub.s32 %v2106, %v2108
        %v2110 = vrot.slane %v2096, %v2109
        %v2111 = vcombine.low %v2055, %v2071
        %v2112 = vcombine.high %v2055, %v2071
        %v2114 = vunpack.c.l.s4 1934713408
        %v2115 = vunpack.c.0.s8 %v2114
        %v2116 = vlaneseq
        %v2117 = vshrl.u32 %v2116, 7
        %v2118 = vsub.s32 %v2115, %v2117
        %v2119 = vrot.slane %v2111, %v2118
        %v2121 = vunpack.c.l.s4 1934713408
        %v2122 = vunpack.c.0.s8 %v2121
        %v2123 = vlaneseq
        %v2124 = vshrl.u32 %v2123, 7
        %v2125 = vsub.s32 %v2122, %v2124
        %v2126 = vrot.slane %v2112, %v2125
        %v2127 = vcombine.low %v2062, %v2078
        %v2128 = vcombine.high %v2062, %v2078
        %v2130 = vunpack.c.l.s4 1934713408
        %v2131 = vunpack.c.0.s8 %v2130
        %v2132 = vlaneseq
        %v2133 = vshrl.u32 %v2132, 7
        %v2134 = vsub.s32 %v2131, %v2133
        %v2135 = vrot.slane %v2127, %v2134
        %v2137 = vunpack.c.l.s4 1934713408
        %v2138 = vunpack.c.0.s8 %v2137
        %v2139 = vlaneseq
        %v2140 = vshrl.u32 %v2139, 7
        %v2141 = vsub.s32 %v2138, %v2140
        %v2142 = vrot.slane %v2128, %v2141
        %v2143 = vcombine.low %v2087, %v2103
        %v2144 = vcombine.high %v2087, %v2103
        %v2146 = vunpack.c.l.s4 1934713408
        %v2147 = vunpack.c.0.s8 %v2146
        %v2148 = vlaneseq
        %v2149 = vshrl.u32 %v2148, 7
        %v2150 = vsub.s32 %v2147, %v2149
        %v2151 = vrot.slane %v2143, %v2150
        %v2153 = vunpack.c.l.s4 1934713408
        %v2154 = vunpack.c.0.s8 %v2153
        %v2155 = vlaneseq
        %v2156 = vshrl.u32 %v2155, 7
        %v2157 = vsub.s32 %v2154, %v2156
        %v2158 = vrot.slane %v2144, %v2157
        %v2159 = vcombine.low %v2094, %v2110
        %v2160 = vcombine.high %v2094, %v2110
        %v2162 = vunpack.c.l.s4 1934713408
        %v2163 = vunpack.c.0.s8 %v2162
        %v2164 = vlaneseq
        %v2165 = vshrl.u32 %v2164, 7
        %v2166 = vsub.s32 %v2163, %v2165
        %v2167 = vrot.slane %v2159, %v2166
        %v2169 = vunpack.c.l.s4 1934713408
        %v2170 = vunpack.c.0.s8 %v2169
        %v2171 = vlaneseq
        %v2172 = vshrl.u32 %v2171, 7
        %v2173 = vsub.s32 %v2170, %v2172
        %v2174 = vrot.slane %v2160, %v2173
        %v2175 = vcombine.low %v2119, %v2151
        %v2176 = vcombine.high %v2119, %v2151
        %v2177 = vcombine.low %v2126, %v2158
        %v2178 = vcombine.high %v2126, %v2158
        %v2179 = vcombine.low %v2135, %v2167
        %v2180 = vcombine.high %v2135, %v2167
        %v2181 = vcombine.low %v2142, %v2174
        %v2182 = vcombine.high %v2142, %v2174
        %v2183 = vcombine.low %v1572, %v1608
        %v2184 = vcombine.high %v1572, %v1608
        %v2186 = vunpack.c.l.s4 1983009808
        %v2187 = vunpack.c.0.s8 %v2186
        %v2188 = vlaneseq
        %v2189 = vshrl.u32 %v2188, 7
        %v2190 = vsub.s32 %v2187, %v2189
        %v2191 = vrot.slane %v2183, %v2190
        %v2193 = vunpack.c.l.s4 1983009808
        %v2194 = vunpack.c.0.s8 %v2193
        %v2195 = vlaneseq
        %v2196 = vshrl.u32 %v2195, 7
        %v2197 = vsub.s32 %v2194, %v2196
        %v2198 = vrot.slane %v2184, %v2197
        %v2199 = vcombine.low %v1590, %v1626
        %v2200 = vcombine.high %v1590, %v1626
        %v2202 = vunpack.c.l.s4 1983009808
        %v2203 = vunpack.c.0.s8 %v2202
        %v2204 = vlaneseq
        %v2205 = vshrl.u32 %v2204, 7
        %v2206 = vsub.s32 %v2203, %v2205
        %v2207 = vrot.slane %v2199, %v2206
        %v2209 = vunpack.c.l.s4 1983009808
        %v2210 = vunpack.c.0.s8 %v2209
        %v2211 = vlaneseq
        %v2212 = vshrl.u32 %v2211, 7
        %v2213 = vsub.s32 %v2210, %v2212
        %v2214 = vrot.slane %v2200, %v2213
        %v2215 = vcombine.low %v2191, %v2207
        %v2216 = vcombine.high %v2191, %v2207
        %v2218 = vunpack.c.l.s4 1934713408
        %v2219 = vunpack.c.0.s8 %v2218
        %v2220 = vlaneseq
        %v2221 = vshrl.u32 %v2220, 7
        %v2222 = vsub.s32 %v2219, %v2221
        %v2223 = vrot.slane %v2215, %v2222
        %v2225 = vunpack.c.l.s4 1934713408
        %v2226 = vunpack.c.0.s8 %v2225
        %v2227 = vlaneseq
        %v2228 = vshrl.u32 %v2227, 7
        %v2229 = vsub.s32 %v2226, %v2228
        %v2230 = vrot.slane %v2216, %v2229
        %v2231 = vcombine.low %v2198, %v2214
        %v2232 = vcombine.high %v2198, %v2214
        %v2234 = vunpack.c.l.s4 1934713408
        %v2235 = vunpack.c.0.s8 %v2234
        %v2236 = vlaneseq
        %v2237 = vshrl.u32 %v2236, 7
        %v2238 = vsub.s32 %v2235, %v2237
        %v2239 = vrot.slane %v2231, %v2238
        %v2241 = vunpack.c.l.s4 1934713408
        %v2242 = vunpack.c.0.s8 %v2241
        %v2243 = vlaneseq
        %v2244 = vshrl.u32 %v2243, 7
        %v2245 = vsub.s32 %v2242, %v2244
        %v2246 = vrot.slane %v2232, %v2245
        %v2247 = vcombine.high %v2223, 0.0
        %v2248 = vcombine.high %v2230, 0.0
        %v2249 = vcombine.high %v2239, 0.0
        %v2250 = vcombine.high %v2246, 0.0
        %v2251 = vcombine.low %v1424, %v1466
        %v2252 = vcombine.high %v1424, %v1466
        %v2254 = vunpack.c.l.s4 1983009808
        %v2255 = vunpack.c.0.s8 %v2254
        %v2256 = vlaneseq
        %v2257 = vshrl.u32 %v2256, 7
        %v2258 = vsub.s32 %v2255, %v2257
        %v2259 = vrot.slane %v2251, %v2258
        %v2261 = vunpack.c.l.s4 1983009808
        %v2262 = vunpack.c.0.s8 %v2261
        %v2263 = vlaneseq
        %v2264 = vshrl.u32 %v2263, 7
        %v2265 = vsub.s32 %v2262, %v2264
        %v2266 = vrot.slane %v2252, %v2265
        %v2267 = vcombine.low %v1448, %v1484
        %v2268 = vcombine.high %v1448, %v1484
        %v2270 = vunpack.c.l.s4 1983009808
        %v2271 = vunpack.c.0.s8 %v2270
        %v2272 = vlaneseq
        %v2273 = vshrl.u32 %v2272, 7
        %v2274 = vsub.s32 %v2271, %v2273
        %v2275 = vrot.slane %v2267, %v2274
        %v2277 = vunpack.c.l.s4 1983009808
        %v2278 = vunpack.c.0.s8 %v2277
        %v2279 = vlaneseq
        %v2280 = vshrl.u32 %v2279, 7
        %v2281 = vsub.s32 %v2278, %v2280
        %v2282 = vrot.slane %v2268, %v2281
        %v2283 = vcombine.low %v1502, %v1538
        %v2284 = vcombine.high %v1502, %v1538
        %v2286 = vunpack.c.l.s4 1983009808
        %v2287 = vunpack.c.0.s8 %v2286
        %v2288 = vlaneseq
        %v2289 = vshrl.u32 %v2288, 7
        %v2290 = vsub.s32 %v2287, %v2289
        %v2291 = vrot.slane %v2283, %v2290
        %v2293 = vunpack.c.l.s4 1983009808
        %v2294 = vunpack.c.0.s8 %v2293
        %v2295 = vlaneseq
        %v2296 = vshrl.u32 %v2295, 7
        %v2297 = vsub.s32 %v2294, %v2296
        %v2298 = vrot.slane %v2284, %v2297
        %v2299 = vcombine.low %v1520, %v1556
        %v2300 = vcombine.high %v1520, %v1556
        %v2302 = vunpack.c.l.s4 1983009808
        %v2303 = vunpack.c.0.s8 %v2302
        %v2304 = vlaneseq
        %v2305 = vshrl.u32 %v2304, 7
        %v2306 = vsub.s32 %v2303, %v2305
        %v2307 = vrot.slane %v2299, %v2306
        %v2309 = vunpack.c.l.s4 1983009808
        %v2310 = vunpack.c.0.s8 %v2309
        %v2311 = vlaneseq
        %v2312 = vshrl.u32 %v2311, 7
        %v2313 = vsub.s32 %v2310, %v2312
        %v2314 = vrot.slane %v2300, %v2313
        %v2315 = vcombine.low %v2259, %v2275
        %v2316 = vcombine.high %v2259, %v2275
        %v2318 = vunpack.c.l.s4 1934713408
        %v2319 = vunpack.c.0.s8 %v2318
        %v2320 = vlaneseq
        %v2321 = vshrl.u32 %v2320, 7
        %v2322 = vsub.s32 %v2319, %v2321
        %v2323 = vrot.slane %v2315, %v2322
        %v2325 = vunpack.c.l.s4 1934713408
        %v2326 = vunpack.c.0.s8 %v2325
        %v2327 = vlaneseq
        %v2328 = vshrl.u32 %v2327, 7
        %v2329 = vsub.s32 %v2326, %v2328
        %v2330 = vrot.slane %v2316, %v2329
        %v2331 = vcombine.low %v2266, %v2282
        %v2332 = vcombine.high %v2266, %v2282
        %v2334 = vunpack.c.l.s4 1934713408
        %v2335 = vunpack.c.0.s8 %v2334
        %v2336 = vlaneseq
        %v2337 = vshrl.u32 %v2336, 7
        %v2338 = vsub.s32 %v2335, %v2337
        %v2339 = vrot.slane %v2331, %v2338
        %v2341 = vunpack.c.l.s4 1934713408
        %v2342 = vunpack.c.0.s8 %v2341
        %v2343 = vlaneseq
        %v2344 = vshrl.u32 %v2343, 7
        %v2345 = vsub.s32 %v2342, %v2344
        %v2346 = vrot.slane %v2332, %v2345
        %v2347 = vcombine.low %v2291, %v2307
        %v2348 = vcombine.high %v2291, %v2307
        %v2350 = vunpack.c.l.s4 1934713408
        %v2351 = vunpack.c.0.s8 %v2350
        %v2352 = vlaneseq
        %v2353 = vshrl.u32 %v2352, 7
        %v2354 = vsub.s32 %v2351, %v2353
        %v2355 = vrot.slane %v2347, %v2354
        %v2357 = vunpack.c.l.s4 1934713408
        %v2358 = vunpack.c.0.s8 %v2357
        %v2359 = vlaneseq
        %v2360 = vshrl.u32 %v2359, 7
        %v2361 = vsub.s32 %v2358, %v2360
        %v2362 = vrot.slane %v2348, %v2361
        %v2363 = vcombine.low %v2298, %v2314
        %v2364 = vcombine.high %v2298, %v2314
        %v2366 = vunpack.c.l.s4 1934713408
        %v2367 = vunpack.c.0.s8 %v2366
        %v2368 = vlaneseq
        %v2369 = vshrl.u32 %v2368, 7
        %v2370 = vsub.s32 %v2367, %v2369
        %v2371 = vrot.slane %v2363, %v2370
        %v2373 = vunpack.c.l.s4 1934713408
        %v2374 = vunpack.c.0.s8 %v2373
        %v2375 = vlaneseq
        %v2376 = vshrl.u32 %v2375, 7
        %v2377 = vsub.s32 %v2374, %v2376
        %v2378 = vrot.slane %v2364, %v2377
        %v2379 = vcombine.low %v2323, %v2355
        %v2380 = vcombine.high %v2323, %v2355
        %v2381 = vcombine.low %v2330, %v2362
        %v2382 = vcombine.high %v2330, %v2362
        %v2383 = vcombine.low %v2339, %v2371
        %v2384 = vcombine.high %v2339, %v2371
        %v2385 = vcombine.low %v2346, %v2378
        %v2386 = vcombine.high %v2346, %v2378
        %v2387 = vcombine.low %v1574, %v1610
        %v2388 = vcombine.high %v1574, %v1610
        %v2390 = vunpack.c.l.s4 1983009808
        %v2391 = vunpack.c.0.s8 %v2390
        %v2392 = vlaneseq
        %v2393 = vshrl.u32 %v2392, 7
        %v2394 = vsub.s32 %v2391, %v2393
        %v2395 = vrot.slane %v2387, %v2394
        %v2397 = vunpack.c.l.s4 1983009808
        %v2398 = vunpack.c.0.s8 %v2397
        %v2399 = vlaneseq
        %v2400 = vshrl.u32 %v2399, 7
        %v2401 = vsub.s32 %v2398, %v2400
        %v2402 = vrot.slane %v2388, %v2401
        %v2403 = vcombine.low %v1592, %v1628
        %v2404 = vcombine.high %v1592, %v1628
        %v2406 = vunpack.c.l.s4 1983009808
        %v2407 = vunpack.c.0.s8 %v2406
        %v2408 = vlaneseq
        %v2409 = vshrl.u32 %v2408, 7
        %v2410 = vsub.s32 %v2407, %v2409
        %v2411 = vrot.slane %v2403, %v2410
        %v2413 = vunpack.c.l.s4 1983009808
        %v2414 = vunpack.c.0.s8 %v2413
        %v2415 = vlaneseq
        %v2416 = vshrl.u32 %v2415, 7
        %v2417 = vsub.s32 %v2414, %v2416
        %v2418 = vrot.slane %v2404, %v2417
        %v2419 = vcombine.low %v2395, %v2411
        %v2420 = vcombine.high %v2395, %v2411
        %v2422 = vunpack.c.l.s4 1934713408
        %v2423 = vunpack.c.0.s8 %v2422
        %v2424 = vlaneseq
        %v2425 = vshrl.u32 %v2424, 7
        %v2426 = vsub.s32 %v2423, %v2425
        %v2427 = vrot.slane %v2419, %v2426
        %v2429 = vunpack.c.l.s4 1934713408
        %v2430 = vunpack.c.0.s8 %v2429
        %v2431 = vlaneseq
        %v2432 = vshrl.u32 %v2431, 7
        %v2433 = vsub.s32 %v2430, %v2432
        %v2434 = vrot.slane %v2420, %v2433
        %v2435 = vcombine.low %v2402, %v2418
        %v2436 = vcombine.high %v2402, %v2418
        %v2438 = vunpack.c.l.s4 1934713408
        %v2439 = vunpack.c.0.s8 %v2438
        %v2440 = vlaneseq
        %v2441 = vshrl.u32 %v2440, 7
        %v2442 = vsub.s32 %v2439, %v2441
        %v2443 = vrot.slane %v2435, %v2442
        %v2445 = vunpack.c.l.s4 1934713408
        %v2446 = vunpack.c.0.s8 %v2445
        %v2447 = vlaneseq
        %v2448 = vshrl.u32 %v2447, 7
        %v2449 = vsub.s32 %v2446, %v2448
        %v2450 = vrot.slane %v2436, %v2449
        %v2451 = vcombine.high %v2427, 0.0
        %v2452 = vcombine.high %v2434, 0.0
        %v2453 = vcombine.high %v2443, 0.0
        %v2454 = vcombine.high %v2450, 0.0
        %v2455 = vcombine.low %v1429, %v1468
        %v2456 = vcombine.high %v1429, %v1468
        %v2458 = vunpack.c.l.s4 1983009808
        %v2459 = vunpack.c.0.s8 %v2458
        %v2460 = vlaneseq
        %v2461 = vshrl.u32 %v2460, 7
        %v2462 = vsub.s32 %v2459, %v2461
        %v2463 = vrot.slane %v2455, %v2462
        %v2465 = vunpack.c.l.s4 1983009808
        %v2466 = vunpack.c.0.s8 %v2465
        %v2467 = vlaneseq
        %v2468 = vshrl.u32 %v2467, 7
        %v2469 = vsub.s32 %v2466, %v2468
        %v2470 = vrot.slane %v2456, %v2469
        %v2471 = vcombine.low %v1450, %v1486
        %v2472 = vcombine.high %v1450, %v1486
        %v2474 = vunpack.c.l.s4 1983009808
        %v2475 = vunpack.c.0.s8 %v2474
        %v2476 = vlaneseq
        %v2477 = vshrl.u32 %v2476, 7
        %v2478 = vsub.s32 %v2475, %v2477
        %v2479 = vrot.slane %v2471, %v2478
        %v2481 = vunpack.c.l.s4 1983009808
        %v2482 = vunpack.c.0.s8 %v2481
        %v2483 = vlaneseq
        %v2484 = vshrl.u32 %v2483, 7
        %v2485 = vsub.s32 %v2482, %v2484
        %v2486 = vrot.slane %v2472, %v2485
        %v2487 = vcombine.low %v1504, %v1540
        %v2488 = vcombine.high %v1504, %v1540
        %v2490 = vunpack.c.l.s4 1983009808
        %v2491 = vunpack.c.0.s8 %v2490
        %v2492 = vlaneseq
        %v2493 = vshrl.u32 %v2492, 7
        %v2494 = vsub.s32 %v2491, %v2493
        %v2495 = vrot.slane %v2487, %v2494
        %v2497 = vunpack.c.l.s4 1983009808
        %v2498 = vunpack.c.0.s8 %v2497
        %v2499 = vlaneseq
        %v2500 = vshrl.u32 %v2499, 7
        %v2501 = vsub.s32 %v2498, %v2500
        %v2502 = vrot.slane %v2488, %v2501
        %v2503 = vcombine.low %v1522, %v1558
        %v2504 = vcombine.high %v1522, %v1558
        %v2506 = vunpack.c.l.s4 1983009808
        %v2507 = vunpack.c.0.s8 %v2506
        %v2508 = vlaneseq
        %v2509 = vshrl.u32 %v2508, 7
        %v2510 = vsub.s32 %v2507, %v2509
        %v2511 = vrot.slane %v2503, %v2510
        %v2513 = vunpack.c.l.s4 1983009808
        %v2514 = vunpack.c.0.s8 %v2513
        %v2515 = vlaneseq
        %v2516 = vshrl.u32 %v2515, 7
        %v2517 = vsub.s32 %v2514, %v2516
        %v2518 = vrot.slane %v2504, %v2517
        %v2519 = vcombine.low %v2463, %v2479
        %v2520 = vcombine.high %v2463, %v2479
        %v2522 = vunpack.c.l.s4 1934713408
        %v2523 = vunpack.c.0.s8 %v2522
        %v2524 = vlaneseq
        %v2525 = vshrl.u32 %v2524, 7
        %v2526 = vsub.s32 %v2523, %v2525
        %v2527 = vrot.slane %v2519, %v2526
        %v2529 = vunpack.c.l.s4 1934713408
        %v2530 = vunpack.c.0.s8 %v2529
        %v2531 = vlaneseq
        %v2532 = vshrl.u32 %v2531, 7
        %v2533 = vsub.s32 %v2530, %v2532
        %v2534 = vrot.slane %v2520, %v2533
        %v2535 = vcombine.low %v2470, %v2486
        %v2536 = vcombine.high %v2470, %v2486
        %v2538 = vunpack.c.l.s4 1934713408
        %v2539 = vunpack.c.0.s8 %v2538
        %v2540 = vlaneseq
        %v2541 = vshrl.u32 %v2540, 7
        %v2542 = vsub.s32 %v2539, %v2541
        %v2543 = vrot.slane %v2535, %v2542
        %v2545 = vunpack.c.l.s4 1934713408
        %v2546 = vunpack.c.0.s8 %v2545
        %v2547 = vlaneseq
        %v2548 = vshrl.u32 %v2547, 7
        %v2549 = vsub.s32 %v2546, %v2548
        %v2550 = vrot.slane %v2536, %v2549
        %v2551 = vcombine.low %v2495, %v2511
        %v2552 = vcombine.high %v2495, %v2511
        %v2554 = vunpack.c.l.s4 1934713408
        %v2555 = vunpack.c.0.s8 %v2554
        %v2556 = vlaneseq
        %v2557 = vshrl.u32 %v2556, 7
        %v2558 = vsub.s32 %v2555, %v2557
        %v2559 = vrot.slane %v2551, %v2558
        %v2561 = vunpack.c.l.s4 1934713408
        %v2562 = vunpack.c.0.s8 %v2561
        %v2563 = vlaneseq
        %v2564 = vshrl.u32 %v2563, 7
        %v2565 = vsub.s32 %v2562, %v2564
        %v2566 = vrot.slane %v2552, %v2565
        %v2567 = vcombine.low %v2502, %v2518
        %v2568 = vcombine.high %v2502, %v2518
        %v2570 = vunpack.c.l.s4 1934713408
        %v2571 = vunpack.c.0.s8 %v2570
        %v2572 = vlaneseq
        %v2573 = vshrl.u32 %v2572, 7
        %v2574 = vsub.s32 %v2571, %v2573
        %v2575 = vrot.slane %v2567, %v2574
        %v2577 = vunpack.c.l.s4 1934713408
        %v2578 = vunpack.c.0.s8 %v2577
        %v2579 = vlaneseq
        %v2580 = vshrl.u32 %v2579, 7
        %v2581 = vsub.s32 %v2578, %v2580
        %v2582 = vrot.slane %v2568, %v2581
        %v2583 = vcombine.low %v2527, %v2559
        %v2584 = vcombine.high %v2527, %v2559
        %v2585 = vcombine.low %v2534, %v2566
        %v2586 = vcombine.high %v2534, %v2566
        %v2587 = vcombine.low %v2543, %v2575
        %v2588 = vcombine.high %v2543, %v2575
        %v2589 = vcombine.low %v2550, %v2582
        %v2590 = vcombine.high %v2550, %v2582
        %v2591 = vcombine.low %v1576, %v1612
        %v2592 = vcombine.high %v1576, %v1612
        %v2594 = vunpack.c.l.s4 1983009808
        %v2595 = vunpack.c.0.s8 %v2594
        %v2596 = vlaneseq
        %v2597 = vshrl.u32 %v2596, 7
        %v2598 = vsub.s32 %v2595, %v2597
        %v2599 = vrot.slane %v2591, %v2598
        %v2601 = vunpack.c.l.s4 1983009808
        %v2602 = vunpack.c.0.s8 %v2601
        %v2603 = vlaneseq
        %v2604 = vshrl.u32 %v2603, 7
        %v2605 = vsub.s32 %v2602, %v2604
        %v2606 = vrot.slane %v2592, %v2605
        %v2607 = vcombine.low %v1594, %v1630
        %v2608 = vcombine.high %v1594, %v1630
        %v2610 = vunpack.c.l.s4 1983009808
        %v2611 = vunpack.c.0.s8 %v2610
        %v2612 = vlaneseq
        %v2613 = vshrl.u32 %v2612, 7
        %v2614 = vsub.s32 %v2611, %v2613
        %v2615 = vrot.slane %v2607, %v2614
        %v2617 = vunpack.c.l.s4 1983009808
        %v2618 = vunpack.c.0.s8 %v2617
        %v2619 = vlaneseq
        %v2620 = vshrl.u32 %v2619, 7
        %v2621 = vsub.s32 %v2618, %v2620
        %v2622 = vrot.slane %v2608, %v2621
        %v2623 = vcombine.low %v2599, %v2615
        %v2624 = vcombine.high %v2599, %v2615
        %v2626 = vunpack.c.l.s4 1934713408
        %v2627 = vunpack.c.0.s8 %v2626
        %v2628 = vlaneseq
        %v2629 = vshrl.u32 %v2628, 7
        %v2630 = vsub.s32 %v2627, %v2629
        %v2631 = vrot.slane %v2623, %v2630
        %v2633 = vunpack.c.l.s4 1934713408
        %v2634 = vunpack.c.0.s8 %v2633
        %v2635 = vlaneseq
        %v2636 = vshrl.u32 %v2635, 7
        %v2637 = vsub.s32 %v2634, %v2636
        %v2638 = vrot.slane %v2624, %v2637
        %v2639 = vcombine.low %v2606, %v2622
        %v2640 = vcombine.high %v2606, %v2622
        %v2642 = vunpack.c.l.s4 1934713408
        %v2643 = vunpack.c.0.s8 %v2642
        %v2644 = vlaneseq
        %v2645 = vshrl.u32 %v2644, 7
        %v2646 = vsub.s32 %v2643, %v2645
        %v2647 = vrot.slane %v2639, %v2646
        %v2649 = vunpack.c.l.s4 1934713408
        %v2650 = vunpack.c.0.s8 %v2649
        %v2651 = vlaneseq
        %v2652 = vshrl.u32 %v2651, 7
        %v2653 = vsub.s32 %v2650, %v2652
        %v2654 = vrot.slane %v2640, %v2653
        %v2655 = vcombine.high %v2631, 0.0
        %v2656 = vcombine.high %v2638, 0.0
        %v2657 = vcombine.high %v2647, 0.0
        %v2658 = vcombine.high %v2654, 0.0
        %v2659 = vcombine.low %v1432, %v1470
        %v2660 = vcombine.high %v1432, %v1470
        %v2662 = vunpack.c.l.s4 1983009808
        %v2663 = vunpack.c.0.s8 %v2662
        %v2664 = vlaneseq
        %v2665 = vshrl.u32 %v2664, 7
        %v2666 = vsub.s32 %v2663, %v2665
        %v2667 = vrot.slane %v2659, %v2666
        %v2669 = vunpack.c.l.s4 1983009808
        %v2670 = vunpack.c.0.s8 %v2669
        %v2671 = vlaneseq
        %v2672 = vshrl.u32 %v2671, 7
        %v2673 = vsub.s32 %v2670, %v2672
        %v2674 = vrot.slane %v2660, %v2673
        %v2675 = vcombine.low %v1452, %v1488
        %v2676 = vcombine.high %v1452, %v1488
        %v2678 = vunpack.c.l.s4 1983009808
        %v2679 = vunpack.c.0.s8 %v2678
        %v2680 = vlaneseq
        %v2681 = vshrl.u32 %v2680, 7
        %v2682 = vsub.s32 %v2679, %v2681
        %v2683 = vrot.slane %v2675, %v2682
        %v2685 = vunpack.c.l.s4 1983009808
        %v2686 = vunpack.c.0.s8 %v2685
        %v2687 = vlaneseq
        %v2688 = vshrl.u32 %v2687, 7
        %v2689 = vsub.s32 %v2686, %v2688
        %v2690 = vrot.slane %v2676, %v2689
        %v2691 = vcombine.low %v1506, %v1542
        %v2692 = vcombine.high %v1506, %v1542
        %v2694 = vunpack.c.l.s4 1983009808
        %v2695 = vunpack.c.0.s8 %v2694
        %v2696 = vlaneseq
        %v2697 = vshrl.u32 %v2696, 7
        %v2698 = vsub.s32 %v2695, %v2697
        %v2699 = vrot.slane %v2691, %v2698
        %v2701 = vunpack.c.l.s4 1983009808
        %v2702 = vunpack.c.0.s8 %v2701
        %v2703 = vlaneseq
        %v2704 = vshrl.u32 %v2703, 7
        %v2705 = vsub.s32 %v2702, %v2704
        %v2706 = vrot.slane %v2692, %v2705
        %v2707 = vcombine.low %v1524, %v1560
        %v2708 = vcombine.high %v1524, %v1560
        %v2710 = vunpack.c.l.s4 1983009808
        %v2711 = vunpack.c.0.s8 %v2710
        %v2712 = vlaneseq
        %v2713 = vshrl.u32 %v2712, 7
        %v2714 = vsub.s32 %v2711, %v2713
        %v2715 = vrot.slane %v2707, %v2714
        %v2717 = vunpack.c.l.s4 1983009808
        %v2718 = vunpack.c.0.s8 %v2717
        %v2719 = vlaneseq
        %v2720 = vshrl.u32 %v2719, 7
        %v2721 = vsub.s32 %v2718, %v2720
        %v2722 = vrot.slane %v2708, %v2721
        %v2723 = vcombine.low %v2667, %v2683
        %v2724 = vcombine.high %v2667, %v2683
        %v2726 = vunpack.c.l.s4 1934713408
        %v2727 = vunpack.c.0.s8 %v2726
        %v2728 = vlaneseq
        %v2729 = vshrl.u32 %v2728, 7
        %v2730 = vsub.s32 %v2727, %v2729
        %v2731 = vrot.slane %v2723, %v2730
        %v2733 = vunpack.c.l.s4 1934713408
        %v2734 = vunpack.c.0.s8 %v2733
        %v2735 = vlaneseq
        %v2736 = vshrl.u32 %v2735, 7
        %v2737 = vsub.s32 %v2734, %v2736
        %v2738 = vrot.slane %v2724, %v2737
        %v2739 = vcombine.low %v2674, %v2690
        %v2740 = vcombine.high %v2674, %v2690
        %v2742 = vunpack.c.l.s4 1934713408
        %v2743 = vunpack.c.0.s8 %v2742
        %v2744 = vlaneseq
        %v2745 = vshrl.u32 %v2744, 7
        %v2746 = vsub.s32 %v2743, %v2745
        %v2747 = vrot.slane %v2739, %v2746
        %v2749 = vunpack.c.l.s4 1934713408
        %v2750 = vunpack.c.0.s8 %v2749
        %v2751 = vlaneseq
        %v2752 = vshrl.u32 %v2751, 7
        %v2753 = vsub.s32 %v2750, %v2752
        %v2754 = vrot.slane %v2740, %v2753
        %v2755 = vcombine.low %v2699, %v2715
        %v2756 = vcombine.high %v2699, %v2715
        %v2758 = vunpack.c.l.s4 1934713408
        %v2759 = vunpack.c.0.s8 %v2758
        %v2760 = vlaneseq
        %v2761 = vshrl.u32 %v2760, 7
        %v2762 = vsub.s32 %v2759, %v2761
        %v2763 = vrot.slane %v2755, %v2762
        %v2765 = vunpack.c.l.s4 1934713408
        %v2766 = vunpack.c.0.s8 %v2765
        %v2767 = vlaneseq
        %v2768 = vshrl.u32 %v2767, 7
        %v2769 = vsub.s32 %v2766, %v2768
        %v2770 = vrot.slane %v2756, %v2769
        %v2771 = vcombine.low %v2706, %v2722
        %v2772 = vcombine.high %v2706, %v2722
        %v2774 = vunpack.c.l.s4 1934713408
        %v2775 = vunpack.c.0.s8 %v2774
        %v2776 = vlaneseq
        %v2777 = vshrl.u32 %v2776, 7
        %v2778 = vsub.s32 %v2775, %v2777
        %v2779 = vrot.slane %v2771, %v2778
        %v2781 = vunpack.c.l.s4 1934713408
        %v2782 = vunpack.c.0.s8 %v2781
        %v2783 = vlaneseq
        %v2784 = vshrl.u32 %v2783, 7
        %v2785 = vsub.s32 %v2782, %v2784
        %v2786 = vrot.slane %v2772, %v2785
        %v2787 = vcombine.low %v2731, %v2763
        %v2788 = vcombine.high %v2731, %v2763
        %v2789 = vcombine.low %v2738, %v2770
        %v2790 = vcombine.high %v2738, %v2770
        %v2791 = vcombine.low %v2747, %v2779
        %v2792 = vcombine.high %v2747, %v2779
        %v2793 = vcombine.low %v2754, %v2786
        %v2794 = vcombine.high %v2754, %v2786
        %v2795 = vcombine.low %v1578, %v1614
        %v2796 = vcombine.high %v1578, %v1614
        %v2798 = vunpack.c.l.s4 1983009808
        %v2799 = vunpack.c.0.s8 %v2798
        %v2800 = vlaneseq
        %v2801 = vshrl.u32 %v2800, 7
        %v2802 = vsub.s32 %v2799, %v2801
        %v2803 = vrot.slane %v2795, %v2802
        %v2805 = vunpack.c.l.s4 1983009808
        %v2806 = vunpack.c.0.s8 %v2805
        %v2807 = vlaneseq
        %v2808 = vshrl.u32 %v2807, 7
        %v2809 = vsub.s32 %v2806, %v2808
        %v2810 = vrot.slane %v2796, %v2809
        %v2811 = vcombine.low %v1596, %v1632
        %v2812 = vcombine.high %v1596, %v1632
        %v2814 = vunpack.c.l.s4 1983009808
        %v2815 = vunpack.c.0.s8 %v2814
        %v2816 = vlaneseq
        %v2817 = vshrl.u32 %v2816, 7
        %v2818 = vsub.s32 %v2815, %v2817
        %v2819 = vrot.slane %v2811, %v2818
        %v2821 = vunpack.c.l.s4 1983009808
        %v2822 = vunpack.c.0.s8 %v2821
        %v2823 = vlaneseq
        %v2824 = vshrl.u32 %v2823, 7
        %v2825 = vsub.s32 %v2822, %v2824
        %v2826 = vrot.slane %v2812, %v2825
        %v2827 = vcombine.low %v2803, %v2819
        %v2828 = vcombine.high %v2803, %v2819
        %v2830 = vunpack.c.l.s4 1934713408
        %v2831 = vunpack.c.0.s8 %v2830
        %v2832 = vlaneseq
        %v2833 = vshrl.u32 %v2832, 7
        %v2834 = vsub.s32 %v2831, %v2833
        %v2835 = vrot.slane %v2827, %v2834
        %v2837 = vunpack.c.l.s4 1934713408
        %v2838 = vunpack.c.0.s8 %v2837
        %v2839 = vlaneseq
        %v2840 = vshrl.u32 %v2839, 7
        %v2841 = vsub.s32 %v2838, %v2840
        %v2842 = vrot.slane %v2828, %v2841
        %v2843 = vcombine.low %v2810, %v2826
        %v2844 = vcombine.high %v2810, %v2826
        %v2846 = vunpack.c.l.s4 1934713408
        %v2847 = vunpack.c.0.s8 %v2846
        %v2848 = vlaneseq
        %v2849 = vshrl.u32 %v2848, 7
        %v2850 = vsub.s32 %v2847, %v2849
        %v2851 = vrot.slane %v2843, %v2850
        %v2853 = vunpack.c.l.s4 1934713408
        %v2854 = vunpack.c.0.s8 %v2853
        %v2855 = vlaneseq
        %v2856 = vshrl.u32 %v2855, 7
        %v2857 = vsub.s32 %v2854, %v2856
        %v2858 = vrot.slane %v2844, %v2857
        %v2859 = vcombine.high %v2835, 0.0
        %v2860 = vcombine.high %v2842, 0.0
        %v2861 = vcombine.high %v2851, 0.0
        %v2862 = vcombine.high %v2858, 0.0
        %v2863 = vcombine.low %v1767, %v1769
        %v2864 = vcombine.high %v1767, %v1769
        %v2866 = vunpack.c.l.s4 1983009808
        %v2867 = vunpack.c.0.s8 %v2866
        %v2868 = vlaneseq
        %v2869 = vshrl.u32 %v2868, 7
        %v2870 = vsub.s32 %v2867, %v2869
        %v2871 = vrot.slane %v2863, %v2870
        %v2873 = vunpack.c.l.s4 1983009808
        %v2874 = vunpack.c.0.s8 %v2873
        %v2875 = vlaneseq
        %v2876 = vshrl.u32 %v2875, 7
        %v2877 = vsub.s32 %v2874, %v2876
        %v2878 = vrot.slane %v2864, %v2877
        %v2879 = vcombine.low %v1768, %v1770
        %v2880 = vcombine.high %v1768, %v1770
        %v2882 = vunpack.c.l.s4 1983009808
        %v2883 = vunpack.c.0.s8 %v2882
        %v2884 = vlaneseq
        %v2885 = vshrl.u32 %v2884, 7
        %v2886 = vsub.s32 %v2883, %v2885
        %v2887 = vrot.slane %v2879, %v2886
        %v2889 = vunpack.c.l.s4 1983009808
        %v2890 = vunpack.c.0.s8 %v2889
        %v2891 = vlaneseq
        %v2892 = vshrl.u32 %v2891, 7
        %v2893 = vsub.s32 %v2890, %v2892
        %v2894 = vrot.slane %v2880, %v2893
        %v2895 = vcombine.low %v1771, %v1773
        %v2896 = vcombine.high %v1771, %v1773
        %v2898 = vunpack.c.l.s4 1983009808
        %v2899 = vunpack.c.0.s8 %v2898
        %v2900 = vlaneseq
        %v2901 = vshrl.u32 %v2900, 7
        %v2902 = vsub.s32 %v2899, %v2901
        %v2903 = vrot.slane %v2895, %v2902
        %v2905 = vunpack.c.l.s4 1983009808
        %v2906 = vunpack.c.0.s8 %v2905
        %v2907 = vlaneseq
        %v2908 = vshrl.u32 %v2907, 7
        %v2909 = vsub.s32 %v2906, %v2908
        %v2910 = vrot.slane %v2896, %v2909
        %v2911 = vcombine.low %v1772, %v1774
        %v2912 = vcombine.high %v1772, %v1774
        %v2914 = vunpack.c.l.s4 1983009808
        %v2915 = vunpack.c.0.s8 %v2914
        %v2916 = vlaneseq
        %v2917 = vshrl.u32 %v2916, 7
        %v2918 = vsub.s32 %v2915, %v2917
        %v2919 = vrot.slane %v2911, %v2918
        %v2921 = vunpack.c.l.s4 1983009808
        %v2922 = vunpack.c.0.s8 %v2921
        %v2923 = vlaneseq
        %v2924 = vshrl.u32 %v2923, 7
        %v2925 = vsub.s32 %v2922, %v2924
        %v2926 = vrot.slane %v2912, %v2925
        %v2927 = vcombine.low %v2871, %v2887
        %v2928 = vcombine.high %v2871, %v2887
        %v2930 = vunpack.c.l.s4 1934713408
        %v2931 = vunpack.c.0.s8 %v2930
        %v2932 = vlaneseq
        %v2933 = vshrl.u32 %v2932, 7
        %v2934 = vsub.s32 %v2931, %v2933
        %v2935 = vrot.slane %v2927, %v2934
        %v2937 = vunpack.c.l.s4 1934713408
        %v2938 = vunpack.c.0.s8 %v2937
        %v2939 = vlaneseq
        %v2940 = vshrl.u32 %v2939, 7
        %v2941 = vsub.s32 %v2938, %v2940
        %v2942 = vrot.slane %v2928, %v2941
        %v2943 = vcombine.low %v2878, %v2894
        %v2944 = vcombine.high %v2878, %v2894
        %v2946 = vunpack.c.l.s4 1934713408
        %v2947 = vunpack.c.0.s8 %v2946
        %v2948 = vlaneseq
        %v2949 = vshrl.u32 %v2948, 7
        %v2950 = vsub.s32 %v2947, %v2949
        %v2951 = vrot.slane %v2943, %v2950
        %v2953 = vunpack.c.l.s4 1934713408
        %v2954 = vunpack.c.0.s8 %v2953
        %v2955 = vlaneseq
        %v2956 = vshrl.u32 %v2955, 7
        %v2957 = vsub.s32 %v2954, %v2956
        %v2958 = vrot.slane %v2944, %v2957
        %v2959 = vcombine.low %v2903, %v2919
        %v2960 = vcombine.high %v2903, %v2919
        %v2962 = vunpack.c.l.s4 1934713408
        %v2963 = vunpack.c.0.s8 %v2962
        %v2964 = vlaneseq
        %v2965 = vshrl.u32 %v2964, 7
        %v2966 = vsub.s32 %v2963, %v2965
        %v2967 = vrot.slane %v2959, %v2966
        %v2969 = vunpack.c.l.s4 1934713408
        %v2970 = vunpack.c.0.s8 %v2969
        %v2971 = vlaneseq
        %v2972 = vshrl.u32 %v2971, 7
        %v2973 = vsub.s32 %v2970, %v2972
        %v2974 = vrot.slane %v2960, %v2973
        %v2975 = vcombine.low %v2910, %v2926
        %v2976 = vcombine.high %v2910, %v2926
        %v2978 = vunpack.c.l.s4 1934713408
        %v2979 = vunpack.c.0.s8 %v2978
        %v2980 = vlaneseq
        %v2981 = vshrl.u32 %v2980, 7
        %v2982 = vsub.s32 %v2979, %v2981
        %v2983 = vrot.slane %v2975, %v2982
        %v2985 = vunpack.c.l.s4 1934713408
        %v2986 = vunpack.c.0.s8 %v2985
        %v2987 = vlaneseq
        %v2988 = vshrl.u32 %v2987, 7
        %v2989 = vsub.s32 %v2986, %v2988
        %v2990 = vrot.slane %v2976, %v2989
        %v2991 = vcombine.low %v2935, %v2967
        %v2992 = vcombine.high %v2935, %v2967
        %v2993 = vcombine.low %v2942, %v2974
        %v2994 = vcombine.high %v2942, %v2974
        %v2995 = vcombine.low %v2951, %v2983
        %v2996 = vcombine.high %v2951, %v2983
        %v2997 = vcombine.low %v2958, %v2990
        %v2998 = vcombine.high %v2958, %v2990
        %v2999 = vcombine.low %v1971, %v1973
        %v3000 = vcombine.high %v1971, %v1973
        %v3002 = vunpack.c.l.s4 1983009808
        %v3003 = vunpack.c.0.s8 %v3002
        %v3004 = vlaneseq
        %v3005 = vshrl.u32 %v3004, 7
        %v3006 = vsub.s32 %v3003, %v3005
        %v3007 = vrot.slane %v2999, %v3006
        %v3009 = vunpack.c.l.s4 1983009808
        %v3010 = vunpack.c.0.s8 %v3009
        %v3011 = vlaneseq
        %v3012 = vshrl.u32 %v3011, 7
        %v3013 = vsub.s32 %v3010, %v3012
        %v3014 = vrot.slane %v3000, %v3013
        %v3015 = vcombine.low %v1972, %v1974
        %v3016 = vcombine.high %v1972, %v1974
        %v3018 = vunpack.c.l.s4 1983009808
        %v3019 = vunpack.c.0.s8 %v3018
        %v3020 = vlaneseq
        %v3021 = vshrl.u32 %v3020, 7
        %v3022 = vsub.s32 %v3019, %v3021
        %v3023 = vrot.slane %v3015, %v3022
        %v3025 = vunpack.c.l.s4 1983009808
        %v3026 = vunpack.c.0.s8 %v3025
        %v3027 = vlaneseq
        %v3028 = vshrl.u32 %v3027, 7
        %v3029 = vsub.s32 %v3026, %v3028
        %v3030 = vrot.slane %v3016, %v3029
        %v3031 = vcombine.low %v1975, %v1977
        %v3032 = vcombine.high %v1975, %v1977
        %v3034 = vunpack.c.l.s4 1983009808
        %v3035 = vunpack.c.0.s8 %v3034
        %v3036 = vlaneseq
        %v3037 = vshrl.u32 %v3036, 7
        %v3038 = vsub.s32 %v3035, %v3037
        %v3039 = vrot.slane %v3031, %v3038
        %v3041 = vunpack.c.l.s4 1983009808
        %v3042 = vunpack.c.0.s8 %v3041
        %v3043 = vlaneseq
        %v3044 = vshrl.u32 %v3043, 7
        %v3045 = vsub.s32 %v3042, %v3044
        %v3046 = vrot.slane %v3032, %v3045
        %v3047 = vcombine.low %v1976, %v1978
        %v3048 = vcombine.high %v1976, %v1978
        %v3050 = vunpack.c.l.s4 1983009808
        %v3051 = vunpack.c.0.s8 %v3050
        %v3052 = vlaneseq
        %v3053 = vshrl.u32 %v3052, 7
        %v3054 = vsub.s32 %v3051, %v3053
        %v3055 = vrot.slane %v3047, %v3054
        %v3057 = vunpack.c.l.s4 1983009808
        %v3058 = vunpack.c.0.s8 %v3057
        %v3059 = vlaneseq
        %v3060 = vshrl.u32 %v3059, 7
        %v3061 = vsub.s32 %v3058, %v3060
        %v3062 = vrot.slane %v3048, %v3061
        %v3063 = vcombine.low %v3007, %v3023
        %v3064 = vcombine.high %v3007, %v3023
        %v3066 = vunpack.c.l.s4 1934713408
        %v3067 = vunpack.c.0.s8 %v3066
        %v3068 = vlaneseq
        %v3069 = vshrl.u32 %v3068, 7
        %v3070 = vsub.s32 %v3067, %v3069
        %v3071 = vrot.slane %v3063, %v3070
        %v3073 = vunpack.c.l.s4 1934713408
        %v3074 = vunpack.c.0.s8 %v3073
        %v3075 = vlaneseq
        %v3076 = vshrl.u32 %v3075, 7
        %v3077 = vsub.s32 %v3074, %v3076
        %v3078 = vrot.slane %v3064, %v3077
        %v3079 = vcombine.low %v3014, %v3030
        %v3080 = vcombine.high %v3014, %v3030
        %v3082 = vunpack.c.l.s4 1934713408
        %v3083 = vunpack.c.0.s8 %v3082
        %v3084 = vlaneseq
        %v3085 = vshrl.u32 %v3084, 7
        %v3086 = vsub.s32 %v3083, %v3085
        %v3087 = vrot.slane %v3079, %v3086
        %v3089 = vunpack.c.l.s4 1934713408
        %v3090 = vunpack.c.0.s8 %v3089
        %v3091 = vlaneseq
        %v3092 = vshrl.u32 %v3091, 7
        %v3093 = vsub.s32 %v3090, %v3092
        %v3094 = vrot.slane %v3080, %v3093
        %v3095 = vcombine.low %v3039, %v3055
        %v3096 = vcombine.high %v3039, %v3055
        %v3098 = vunpack.c.l.s4 1934713408
        %v3099 = vunpack.c.0.s8 %v3098
        %v3100 = vlaneseq
        %v3101 = vshrl.u32 %v3100, 7
        %v3102 = vsub.s32 %v3099, %v3101
        %v3103 = vrot.slane %v3095, %v3102
        %v3105 = vunpack.c.l.s4 1934713408
        %v3106 = vunpack.c.0.s8 %v3105
        %v3107 = vlaneseq
        %v3108 = vshrl.u32 %v3107, 7
        %v3109 = vsub.s32 %v3106, %v3108
        %v3110 = vrot.slane %v3096, %v3109
        %v3111 = vcombine.low %v3046, %v3062
        %v3112 = vcombine.high %v3046, %v3062
        %v3114 = vunpack.c.l.s4 1934713408
        %v3115 = vunpack.c.0.s8 %v3114
        %v3116 = vlaneseq
        %v3117 = vshrl.u32 %v3116, 7
        %v3118 = vsub.s32 %v3115, %v3117
        %v3119 = vrot.slane %v3111, %v3118
        %v3121 = vunpack.c.l.s4 1934713408
        %v3122 = vunpack.c.0.s8 %v3121
        %v3123 = vlaneseq
        %v3124 = vshrl.u32 %v3123, 7
        %v3125 = vsub.s32 %v3122, %v3124
        %v3126 = vrot.slane %v3112, %v3125
        %v3127 = vcombine.low %v3071, %v3103
        %v3128 = vcombine.high %v3071, %v3103
        %v3129 = vcombine.low %v3078, %v3110
        %v3130 = vcombine.high %v3078, %v3110
        %v3131 = vcombine.low %v3087, %v3119
        %v3132 = vcombine.high %v3087, %v3119
        %v3133 = vcombine.low %v3094, %v3126
        %v3134 = vcombine.high %v3094, %v3126
        %v3135 = vcombine.low %v2175, %v2177
        %v3136 = vcombine.high %v2175, %v2177
        %v3138 = vunpack.c.l.s4 1983009808
        %v3139 = vunpack.c.0.s8 %v3138
        %v3140 = vlaneseq
        %v3141 = vshrl.u32 %v3140, 7
        %v3142 = vsub.s32 %v3139, %v3141
        %v3143 = vrot.slane %v3135, %v3142
        %v3145 = vunpack.c.l.s4 1983009808
        %v3146 = vunpack.c.0.s8 %v3145
        %v3147 = vlaneseq
        %v3148 = vshrl.u32 %v3147, 7
        %v3149 = vsub.s32 %v3146, %v3148
        %v3150 = vrot.slane %v3136, %v3149
        %v3151 = vcombine.low %v2176, %v2178
        %v3152 = vcombine.high %v2176, %v2178
        %v3154 = vunpack.c.l.s4 1983009808
        %v3155 = vunpack.c.0.s8 %v3154
        %v3156 = vlaneseq
        %v3157 = vshrl.u32 %v3156, 7
        %v3158 = vsub.s32 %v3155, %v3157
        %v3159 = vrot.slane %v3151, %v3158
        %v3161 = vunpack.c.l.s4 1983009808
        %v3162 = vunpack.c.0.s8 %v3161
        %v3163 = vlaneseq
        %v3164 = vshrl.u32 %v3163, 7
        %v3165 = vsub.s32 %v3162, %v3164
        %v3166 = vrot.slane %v3152, %v3165
        %v3167 = vcombine.low %v2179, %v2181
        %v3168 = vcombine.high %v2179, %v2181
        %v3170 = vunpack.c.l.s4 1983009808
        %v3171 = vunpack.c.0.s8 %v3170
        %v3172 = vlaneseq
        %v3173 = vshrl.u32 %v3172, 7
        %v3174 = vsub.s32 %v3171, %v3173
        %v3175 = vrot.slane %v3167, %v3174
        %v3177 = vunpack.c.l.s4 1983009808
        %v3178 = vunpack.c.0.s8 %v3177
        %v3179 = vlaneseq
        %v3180 = vshrl.u32 %v3179, 7
        %v3181 = vsub.s32 %v3178, %v3180
        %v3182 = vrot.slane %v3168, %v3181
        %v3183 = vcombine.low %v2180, %v2182
        %v3184 = vcombine.high %v2180, %v2182
        %v3186 = vunpack.c.l.s4 1983009808
        %v3187 = vunpack.c.0.s8 %v3186
        %v3188 = vlaneseq
        %v3189 = vshrl.u32 %v3188, 7
        %v3190 = vsub.s32 %v3187, %v3189
        %v3191 = vrot.slane %v3183, %v3190
        %v3193 = vunpack.c.l.s4 1983009808
        %v3194 = vunpack.c.0.s8 %v3193
        %v3195 = vlaneseq
        %v3196 = vshrl.u32 %v3195, 7
        %v3197 = vsub.s32 %v3194, %v3196
        %v3198 = vrot.slane %v3184, %v3197
        %v3199 = vcombine.low %v3143, %v3159
        %v3200 = vcombine.high %v3143, %v3159
        %v3202 = vunpack.c.l.s4 1934713408
        %v3203 = vunpack.c.0.s8 %v3202
        %v3204 = vlaneseq
        %v3205 = vshrl.u32 %v3204, 7
        %v3206 = vsub.s32 %v3203, %v3205
        %v3207 = vrot.slane %v3199, %v3206
        %v3209 = vunpack.c.l.s4 1934713408
        %v3210 = vunpack.c.0.s8 %v3209
        %v3211 = vlaneseq
        %v3212 = vshrl.u32 %v3211, 7
        %v3213 = vsub.s32 %v3210, %v3212
        %v3214 = vrot.slane %v3200, %v3213
        %v3215 = vcombine.low %v3150, %v3166
        %v3216 = vcombine.high %v3150, %v3166
        %v3218 = vunpack.c.l.s4 1934713408
        %v3219 = vunpack.c.0.s8 %v3218
        %v3220 = vlaneseq
        %v3221 = vshrl.u32 %v3220, 7
        %v3222 = vsub.s32 %v3219, %v3221
        %v3223 = vrot.slane %v3215, %v3222
        %v3225 = vunpack.c.l.s4 1934713408
        %v3226 = vunpack.c.0.s8 %v3225
        %v3227 = vlaneseq
        %v3228 = vshrl.u32 %v3227, 7
        %v3229 = vsub.s32 %v3226, %v3228
        %v3230 = vrot.slane %v3216, %v3229
        %v3231 = vcombine.low %v3175, %v3191
        %v3232 = vcombine.high %v3175, %v3191
        %v3234 = vunpack.c.l.s4 1934713408
        %v3235 = vunpack.c.0.s8 %v3234
        %v3236 = vlaneseq
        %v3237 = vshrl.u32 %v3236, 7
        %v3238 = vsub.s32 %v3235, %v3237
        %v3239 = vrot.slane %v3231, %v3238
        %v3241 = vunpack.c.l.s4 1934713408
        %v3242 = vunpack.c.0.s8 %v3241
        %v3243 = vlaneseq
        %v3244 = vshrl.u32 %v3243, 7
        %v3245 = vsub.s32 %v3242, %v3244
        %v3246 = vrot.slane %v3232, %v3245
        %v3247 = vcombine.low %v3182, %v3198
        %v3248 = vcombine.high %v3182, %v3198
        %v3250 = vunpack.c.l.s4 1934713408
        %v3251 = vunpack.c.0.s8 %v3250
        %v3252 = vlaneseq
        %v3253 = vshrl.u32 %v3252, 7
        %v3254 = vsub.s32 %v3251, %v3253
        %v3255 = vrot.slane %v3247, %v3254
        %v3257 = vunpack.c.l.s4 1934713408
        %v3258 = vunpack.c.0.s8 %v3257
        %v3259 = vlaneseq
        %v3260 = vshrl.u32 %v3259, 7
        %v3261 = vsub.s32 %v3258, %v3260
        %v3262 = vrot.slane %v3248, %v3261
        %v3263 = vcombine.low %v3207, %v3239
        %v3264 = vcombine.high %v3207, %v3239
        %v3265 = vcombine.low %v3214, %v3246
        %v3266 = vcombine.high %v3214, %v3246
        %v3267 = vcombine.low %v3223, %v3255
        %v3268 = vcombine.high %v3223, %v3255
        %v3269 = vcombine.low %v3230, %v3262
        %v3270 = vcombine.high %v3230, %v3262
        %v3271 = vcombine.low %v2379, %v2381
        %v3272 = vcombine.high %v2379, %v2381
        %v3274 = vunpack.c.l.s4 1983009808
        %v3275 = vunpack.c.0.s8 %v3274
        %v3276 = vlaneseq
        %v3277 = vshrl.u32 %v3276, 7
        %v3278 = vsub.s32 %v3275, %v3277
        %v3279 = vrot.slane %v3271, %v3278
        %v3281 = vunpack.c.l.s4 1983009808
        %v3282 = vunpack.c.0.s8 %v3281
        %v3283 = vlaneseq
        %v3284 = vshrl.u32 %v3283, 7
        %v3285 = vsub.s32 %v3282, %v3284
        %v3286 = vrot.slane %v3272, %v3285
        %v3287 = vcombine.low %v2380, %v2382
        %v3288 = vcombine.high %v2380, %v2382
        %v3290 = vunpack.c.l.s4 1983009808
        %v3291 = vunpack.c.0.s8 %v3290
        %v3292 = vlaneseq
        %v3293 = vshrl.u32 %v3292, 7
        %v3294 = vsub.s32 %v3291, %v3293
        %v3295 = vrot.slane %v3287, %v3294
        %v3297 = vunpack.c.l.s4 1983009808
        %v3298 = vunpack.c.0.s8 %v3297
        %v3299 = vlaneseq
        %v3300 = vshrl.u32 %v3299, 7
        %v3301 = vsub.s32 %v3298, %v3300
        %v3302 = vrot.slane %v3288, %v3301
        %v3303 = vcombine.low %v2383, %v2385
        %v3304 = vcombine.high %v2383, %v2385
        %v3306 = vunpack.c.l.s4 1983009808
        %v3307 = vunpack.c.0.s8 %v3306
        %v3308 = vlaneseq
        %v3309 = vshrl.u32 %v3308, 7
        %v3310 = vsub.s32 %v3307, %v3309
        %v3311 = vrot.slane %v3303, %v3310
        %v3313 = vunpack.c.l.s4 1983009808
        %v3314 = vunpack.c.0.s8 %v3313
        %v3315 = vlaneseq
        %v3316 = vshrl.u32 %v3315, 7
        %v3317 = vsub.s32 %v3314, %v3316
        %v3318 = vrot.slane %v3304, %v3317
        %v3319 = vcombine.low %v2384, %v2386
        %v3320 = vcombine.high %v2384, %v2386
        %v3322 = vunpack.c.l.s4 1983009808
        %v3323 = vunpack.c.0.s8 %v3322
        %v3324 = vlaneseq
        %v3325 = vshrl.u32 %v3324, 7
        %v3326 = vsub.s32 %v3323, %v3325
        %v3327 = vrot.slane %v3319, %v3326
        %v3329 = vunpack.c.l.s4 1983009808
        %v3330 = vunpack.c.0.s8 %v3329
        %v3331 = vlaneseq
        %v3332 = vshrl.u32 %v3331, 7
        %v3333 = vsub.s32 %v3330, %v3332
        %v3334 = vrot.slane %v3320, %v3333
        %v3335 = vcombine.low %v3279, %v3295
        %v3336 = vcombine.high %v3279, %v3295
        %v3338 = vunpack.c.l.s4 1934713408
        %v3339 = vunpack.c.0.s8 %v3338
        %v3340 = vlaneseq
        %v3341 = vshrl.u32 %v3340, 7
        %v3342 = vsub.s32 %v3339, %v3341
        %v3343 = vrot.slane %v3335, %v3342
        %v3345 = vunpack.c.l.s4 1934713408
        %v3346 = vunpack.c.0.s8 %v3345
        %v3347 = vlaneseq
        %v3348 = vshrl.u32 %v3347, 7
        %v3349 = vsub.s32 %v3346, %v3348
        %v3350 = vrot.slane %v3336, %v3349
        %v3351 = vcombine.low %v3286, %v3302
        %v3352 = vcombine.high %v3286, %v3302
        %v3354 = vunpack.c.l.s4 1934713408
        %v3355 = vunpack.c.0.s8 %v3354
        %v3356 = vlaneseq
        %v3357 = vshrl.u32 %v3356, 7
        %v3358 = vsub.s32 %v3355, %v3357
        %v3359 = vrot.slane %v3351, %v3358
        %v3361 = vunpack.c.l.s4 1934713408
        %v3362 = vunpack.c.0.s8 %v3361
        %v3363 = vlaneseq
        %v3364 = vshrl.u32 %v3363, 7
        %v3365 = vsub.s32 %v3362, %v3364
        %v3366 = vrot.slane %v3352, %v3365
        %v3367 = vcombine.low %v3311, %v3327
        %v3368 = vcombine.high %v3311, %v3327
        %v3370 = vunpack.c.l.s4 1934713408
        %v3371 = vunpack.c.0.s8 %v3370
        %v3372 = vlaneseq
        %v3373 = vshrl.u32 %v3372, 7
        %v3374 = vsub.s32 %v3371, %v3373
        %v3375 = vrot.slane %v3367, %v3374
        %v3377 = vunpack.c.l.s4 1934713408
        %v3378 = vunpack.c.0.s8 %v3377
        %v3379 = vlaneseq
        %v3380 = vshrl.u32 %v3379, 7
        %v3381 = vsub.s32 %v3378, %v3380
        %v3382 = vrot.slane %v3368, %v3381
        %v3383 = vcombine.low %v3318, %v3334
        %v3384 = vcombine.high %v3318, %v3334
        %v3386 = vunpack.c.l.s4 1934713408
        %v3387 = vunpack.c.0.s8 %v3386
        %v3388 = vlaneseq
        %v3389 = vshrl.u32 %v3388, 7
        %v3390 = vsub.s32 %v3387, %v3389
        %v3391 = vrot.slane %v3383, %v3390
        %v3393 = vunpack.c.l.s4 1934713408
        %v3394 = vunpack.c.0.s8 %v3393
        %v3395 = vlaneseq
        %v3396 = vshrl.u32 %v3395, 7
        %v3397 = vsub.s32 %v3394, %v3396
        %v3398 = vrot.slane %v3384, %v3397
        %v3399 = vcombine.low %v3343, %v3375
        %v3400 = vcombine.high %v3343, %v3375
        %v3401 = vcombine.low %v3350, %v3382
        %v3402 = vcombine.high %v3350, %v3382
        %v3403 = vcombine.low %v3359, %v3391
        %v3404 = vcombine.high %v3359, %v3391
        %v3405 = vcombine.low %v3366, %v3398
        %v3406 = vcombine.high %v3366, %v3398
        %v3407 = vcombine.low %v2583, %v2585
        %v3408 = vcombine.high %v2583, %v2585
        %v3410 = vunpack.c.l.s4 1983009808
        %v3411 = vunpack.c.0.s8 %v3410
        %v3412 = vlaneseq
        %v3413 = vshrl.u32 %v3412, 7
        %v3414 = vsub.s32 %v3411, %v3413
        %v3415 = vrot.slane %v3407, %v3414
        %v3417 = vunpack.c.l.s4 1983009808
        %v3418 = vunpack.c.0.s8 %v3417
        %v3419 = vlaneseq
        %v3420 = vshrl.u32 %v3419, 7
        %v3421 = vsub.s32 %v3418, %v3420
        %v3422 = vrot.slane %v3408, %v3421
        %v3423 = vcombine.low %v2584, %v2586
        %v3424 = vcombine.high %v2584, %v2586
        %v3426 = vunpack.c.l.s4 1983009808
        %v3427 = vunpack.c.0.s8 %v3426
        %v3428 = vlaneseq
        %v3429 = vshrl.u32 %v3428, 7
        %v3430 = vsub.s32 %v3427, %v3429
        %v3431 = vrot.slane %v3423, %v3430
        %v3433 = vunpack.c.l.s4 1983009808
        %v3434 = vunpack.c.0.s8 %v3433
        %v3435 = vlaneseq
        %v3436 = vshrl.u32 %v3435, 7
        %v3437 = vsub.s32 %v3434, %v3436
        %v3438 = vrot.slane %v3424, %v3437
        %v3439 = vcombine.low %v2587, %v2589
        %v3440 = vcombine.high %v2587, %v2589
        %v3442 = vunpack.c.l.s4 1983009808
        %v3443 = vunpack.c.0.s8 %v3442
        %v3444 = vlaneseq
        %v3445 = vshrl.u32 %v3444, 7
        %v3446 = vsub.s32 %v3443, %v3445
        %v3447 = vrot.slane %v3439, %v3446
        %v3449 = vunpack.c.l.s4 1983009808
        %v3450 = vunpack.c.0.s8 %v3449
        %v3451 = vlaneseq
        %v3452 = vshrl.u32 %v3451, 7
        %v3453 = vsub.s32 %v3450, %v3452
        %v3454 = vrot.slane %v3440, %v3453
        %v3455 = vcombine.low %v2588, %v2590
        %v3456 = vcombine.high %v2588, %v2590
        %v3458 = vunpack.c.l.s4 1983009808
        %v3459 = vunpack.c.0.s8 %v3458
        %v3460 = vlaneseq
        %v3461 = vshrl.u32 %v3460, 7
        %v3462 = vsub.s32 %v3459, %v3461
        %v3463 = vrot.slane %v3455, %v3462
        %v3465 = vunpack.c.l.s4 1983009808
        %v3466 = vunpack.c.0.s8 %v3465
        %v3467 = vlaneseq
        %v3468 = vshrl.u32 %v3467, 7
        %v3469 = vsub.s32 %v3466, %v3468
        %v3470 = vrot.slane %v3456, %v3469
        %v3471 = vcombine.low %v3415, %v3431
        %v3472 = vcombine.high %v3415, %v3431
        %v3474 = vunpack.c.l.s4 1934713408
        %v3475 = vunpack.c.0.s8 %v3474
        %v3476 = vlaneseq
        %v3477 = vshrl.u32 %v3476, 7
        %v3478 = vsub.s32 %v3475, %v3477
        %v3479 = vrot.slane %v3471, %v3478
        %v3481 = vunpack.c.l.s4 1934713408
        %v3482 = vunpack.c.0.s8 %v3481
        %v3483 = vlaneseq
        %v3484 = vshrl.u32 %v3483, 7
        %v3485 = vsub.s32 %v3482, %v3484
        %v3486 = vrot.slane %v3472, %v3485
        %v3487 = vcombine.low %v3422, %v3438
        %v3488 = vcombine.high %v3422, %v3438
        %v3490 = vunpack.c.l.s4 1934713408
        %v3491 = vunpack.c.0.s8 %v3490
        %v3492 = vlaneseq
        %v3493 = vshrl.u32 %v3492, 7
        %v3494 = vsub.s32 %v3491, %v3493
        %v3495 = vrot.slane %v3487, %v3494
        %v3497 = vunpack.c.l.s4 1934713408
        %v3498 = vunpack.c.0.s8 %v3497
        %v3499 = vlaneseq
        %v3500 = vshrl.u32 %v3499, 7
        %v3501 = vsub.s32 %v3498, %v3500
        %v3502 = vrot.slane %v3488, %v3501
        %v3503 = vcombine.low %v3447, %v3463
        %v3504 = vcombine.high %v3447, %v3463
        %v3506 = vunpack.c.l.s4 1934713408
        %v3507 = vunpack.c.0.s8 %v3506
        %v3508 = vlaneseq
        %v3509 = vshrl.u32 %v3508, 7
        %v3510 = vsub.s32 %v3507, %v3509
        %v3511 = vrot.slane %v3503, %v3510
        %v3513 = vunpack.c.l.s4 1934713408
        %v3514 = vunpack.c.0.s8 %v3513
        %v3515 = vlaneseq
        %v3516 = vshrl.u32 %v3515, 7
        %v3517 = vsub.s32 %v3514, %v3516
        %v3518 = vrot.slane %v3504, %v3517
        %v3519 = vcombine.low %v3454, %v3470
        %v3520 = vcombine.high %v3454, %v3470
        %v3522 = vunpack.c.l.s4 1934713408
        %v3523 = vunpack.c.0.s8 %v3522
        %v3524 = vlaneseq
        %v3525 = vshrl.u32 %v3524, 7
        %v3526 = vsub.s32 %v3523, %v3525
        %v3527 = vrot.slane %v3519, %v3526
        %v3529 = vunpack.c.l.s4 1934713408
        %v3530 = vunpack.c.0.s8 %v3529
        %v3531 = vlaneseq
        %v3532 = vshrl.u32 %v3531, 7
        %v3533 = vsub.s32 %v3530, %v3532
        %v3534 = vrot.slane %v3520, %v3533
        %v3535 = vcombine.low %v3479, %v3511
        %v3536 = vcombine.high %v3479, %v3511
        %v3537 = vcombine.low %v3486, %v3518
        %v3538 = vcombine.high %v3486, %v3518
        %v3539 = vcombine.low %v3495, %v3527
        %v3540 = vcombine.high %v3495, %v3527
        %v3541 = vcombine.low %v3502, %v3534
        %v3542 = vcombine.high %v3502, %v3534
        %v3543 = vcombine.low %v2787, %v2789
        %v3544 = vcombine.high %v2787, %v2789
        %v3546 = vunpack.c.l.s4 1983009808
        %v3547 = vunpack.c.0.s8 %v3546
        %v3548 = vlaneseq
        %v3549 = vshrl.u32 %v3548, 7
        %v3550 = vsub.s32 %v3547, %v3549
        %v3551 = vrot.slane %v3543, %v3550
        %v3553 = vunpack.c.l.s4 1983009808
        %v3554 = vunpack.c.0.s8 %v3553
        %v3555 = vlaneseq
        %v3556 = vshrl.u32 %v3555, 7
        %v3557 = vsub.s32 %v3554, %v3556
        %v3558 = vrot.slane %v3544, %v3557
        %v3559 = vcombine.low %v2788, %v2790
        %v3560 = vcombine.high %v2788, %v2790
        %v3562 = vunpack.c.l.s4 1983009808
        %v3563 = vunpack.c.0.s8 %v3562
        %v3564 = vlaneseq
        %v3565 = vshrl.u32 %v3564, 7
        %v3566 = vsub.s32 %v3563, %v3565
        %v3567 = vrot.slane %v3559, %v3566
        %v3569 = vunpack.c.l.s4 1983009808
        %v3570 = vunpack.c.0.s8 %v3569
        %v3571 = vlaneseq
        %v3572 = vshrl.u32 %v3571, 7
        %v3573 = vsub.s32 %v3570, %v3572
        %v3574 = vrot.slane %v3560, %v3573
        %v3575 = vcombine.low %v2791, %v2793
        %v3576 = vcombine.high %v2791, %v2793
        %v3578 = vunpack.c.l.s4 1983009808
        %v3579 = vunpack.c.0.s8 %v3578
        %v3580 = vlaneseq
        %v3581 = vshrl.u32 %v3580, 7
        %v3582 = vsub.s32 %v3579, %v3581
        %v3583 = vrot.slane %v3575, %v3582
        %v3585 = vunpack.c.l.s4 1983009808
        %v3586 = vunpack.c.0.s8 %v3585
        %v3587 = vlaneseq
        %v3588 = vshrl.u32 %v3587, 7
        %v3589 = vsub.s32 %v3586, %v3588
        %v3590 = vrot.slane %v3576, %v3589
        %v3591 = vcombine.low %v2792, %v2794
        %v3592 = vcombine.high %v2792, %v2794
        %v3594 = vunpack.c.l.s4 1983009808
        %v3595 = vunpack.c.0.s8 %v3594
        %v3596 = vlaneseq
        %v3597 = vshrl.u32 %v3596, 7
        %v3598 = vsub.s32 %v3595, %v3597
        %v3599 = vrot.slane %v3591, %v3598
        %v3601 = vunpack.c.l.s4 1983009808
        %v3602 = vunpack.c.0.s8 %v3601
        %v3603 = vlaneseq
        %v3604 = vshrl.u32 %v3603, 7
        %v3605 = vsub.s32 %v3602, %v3604
        %v3606 = vrot.slane %v3592, %v3605
        %v3607 = vcombine.low %v3551, %v3567
        %v3608 = vcombine.high %v3551, %v3567
        %v3610 = vunpack.c.l.s4 1934713408
        %v3611 = vunpack.c.0.s8 %v3610
        %v3612 = vlaneseq
        %v3613 = vshrl.u32 %v3612, 7
        %v3614 = vsub.s32 %v3611, %v3613
        %v3615 = vrot.slane %v3607, %v3614
        %v3617 = vunpack.c.l.s4 1934713408
        %v3618 = vunpack.c.0.s8 %v3617
        %v3619 = vlaneseq
        %v3620 = vshrl.u32 %v3619, 7
        %v3621 = vsub.s32 %v3618, %v3620
        %v3622 = vrot.slane %v3608, %v3621
        %v3623 = vcombine.low %v3558, %v3574
        %v3624 = vcombine.high %v3558, %v3574
        %v3626 = vunpack.c.l.s4 1934713408
        %v3627 = vunpack.c.0.s8 %v3626
        %v3628 = vlaneseq
        %v3629 = vshrl.u32 %v3628, 7
        %v3630 = vsub.s32 %v3627, %v3629
        %v3631 = vrot.slane %v3623, %v3630
        %v3633 = vunpack.c.l.s4 1934713408
        %v3634 = vunpack.c.0.s8 %v3633
        %v3635 = vlaneseq
        %v3636 = vshrl.u32 %v3635, 7
        %v3637 = vsub.s32 %v3634, %v3636
        %v3638 = vrot.slane %v3624, %v3637
        %v3639 = vcombine.low %v3583, %v3599
        %v3640 = vcombine.high %v3583, %v3599
        %v3642 = vunpack.c.l.s4 1934713408
        %v3643 = vunpack.c.0.s8 %v3642
        %v3644 = vlaneseq
        %v3645 = vshrl.u32 %v3644, 7
        %v3646 = vsub.s32 %v3643, %v3645
        %v3647 = vrot.slane %v3639, %v3646
        %v3649 = vunpack.c.l.s4 1934713408
        %v3650 = vunpack.c.0.s8 %v3649
        %v3651 = vlaneseq
        %v3652 = vshrl.u32 %v3651, 7
        %v3653 = vsub.s32 %v3650, %v3652
        %v3654 = vrot.slane %v3640, %v3653
        %v3655 = vcombine.low %v3590, %v3606
        %v3656 = vcombine.high %v3590, %v3606
        %v3658 = vunpack.c.l.s4 1934713408
        %v3659 = vunpack.c.0.s8 %v3658
        %v3660 = vlaneseq
        %v3661 = vshrl.u32 %v3660, 7
        %v3662 = vsub.s32 %v3659, %v3661
        %v3663 = vrot.slane %v3655, %v3662
        %v3665 = vunpack.c.l.s4 1934713408
        %v3666 = vunpack.c.0.s8 %v3665
        %v3667 = vlaneseq
        %v3668 = vshrl.u32 %v3667, 7
        %v3669 = vsub.s32 %v3666, %v3668
        %v3670 = vrot.slane %v3656, %v3669
        %v3671 = vcombine.low %v3615, %v3647
        %v3672 = vcombine.high %v3615, %v3647
        %v3673 = vcombine.low %v3622, %v3654
        %v3674 = vcombine.high %v3622, %v3654
        %v3675 = vcombine.low %v3631, %v3663
        %v3676 = vcombine.high %v3631, %v3663
        %v3677 = vcombine.low %v3638, %v3670
        %v3678 = vcombine.high %v3638, %v3670
        %v3679 = vcombine.low %v1815, %v1822
        %v3681 = vunpack.c.l.s4 1983009808
        %v3682 = vunpack.c.0.s8 %v3681
        %v3683 = vlaneseq
        %v3684 = vshrl.u32 %v3683, 7
        %v3685 = vsub.s32 %v3682, %v3684
        %v3686 = vrot.slane %v3679, %v3685
        %v3687 = vcombine.low %v1839, %v1840
        %v3689 = vunpack.c.l.s4 1983009808
        %v3690 = vunpack.c.0.s8 %v3689
        %v3691 = vlaneseq
        %v3692 = vshrl.u32 %v3691, 7
        %v3693 = vsub.s32 %v3690, %v3692
        %v3694 = vrot.slane %v3687, %v3693
        %v3695 = vcombine.low %v1831, %v1838
        %v3697 = vunpack.c.l.s4 1983009808
        %v3698 = vunpack.c.0.s8 %v3697
        %v3699 = vlaneseq
        %v3700 = vshrl.u32 %v3699, 7
        %v3701 = vsub.s32 %v3698, %v3700
        %v3702 = vrot.slane %v3695, %v3701
        %v3703 = vcombine.low %v1841, %v1842
        %v3705 = vunpack.c.l.s4 1983009808
        %v3706 = vunpack.c.0.s8 %v3705
        %v3707 = vlaneseq
        %v3708 = vshrl.u32 %v3707, 7
        %v3709 = vsub.s32 %v3706, %v3708
        %v3710 = vrot.slane %v3703, %v3709
        %v3711 = vcombine.low %v3686, %v3694
        %v3712 = vcombine.high %v3686, %v3694
        %v3714 = vunpack.c.l.s4 1934713408
        %v3715 = vunpack.c.0.s8 %v3714
        %v3716 = vlaneseq
        %v3717 = vshrl.u32 %v3716, 7
        %v3718 = vsub.s32 %v3715, %v3717
        %v3719 = vrot.slane %v3711, %v3718
        %v3721 = vunpack.c.l.s4 1934713408
        %v3722 = vunpack.c.0.s8 %v3721
        %v3723 = vlaneseq
        %v3724 = vshrl.u32 %v3723, 7
        %v3725 = vsub.s32 %v3722, %v3724
        %v3726 = vrot.slane %v3712, %v3725
        %v3727 = vcombine.low %v3702, %v3710
        %v3728 = vcombine.high %v3702, %v3710
        %v3730 = vunpack.c.l.s4 1934713408
        %v3731 = vunpack.c.0.s8 %v3730
        %v3732 = vlaneseq
        %v3733 = vshrl.u32 %v3732, 7
        %v3734 = vsub.s32 %v3731, %v3733
        %v3735 = vrot.slane %v3727, %v3734
        %v3737 = vunpack.c.l.s4 1934713408
        %v3738 = vunpack.c.0.s8 %v3737
        %v3739 = vlaneseq
        %v3740 = vshrl.u32 %v3739, 7
        %v3741 = vsub.s32 %v3738, %v3740
        %v3742 = vrot.slane %v3728, %v3741
        %v3743 = vcombine.low %v3719, %v3735
        %v3744 = vcombine.high %v3719, %v3735
        %v3745 = vcombine.low %v3726, %v3742
        %v3746 = vcombine.high %v3726, %v3742
        %v3747 = vcombine.low %v2019, %v2026
        %v3749 = vunpack.c.l.s4 1983009808
        %v3750 = vunpack.c.0.s8 %v3749
        %v3751 = vlaneseq
        %v3752 = vshrl.u32 %v3751, 7
        %v3753 = vsub.s32 %v3750, %v3752
        %v3754 = vrot.slane %v3747, %v3753
        %v3755 = vcombine.low %v2043, %v2044
        %v3757 = vunpack.c.l.s4 1983009808
        %v3758 = vunpack.c.0.s8 %v3757
        %v3759 = vlaneseq
        %v3760 = vshrl.u32 %v3759, 7
        %v3761 = vsub.s32 %v3758, %v3760
        %v3762 = vrot.slane %v3755, %v3761
        %v3763 = vcombine.low %v2035, %v2042
        %v3765 = vunpack.c.l.s4 1983009808
        %v3766 = vunpack.c.0.s8 %v3765
        %v3767 = vlaneseq
        %v3768 = vshrl.u32 %v3767, 7
        %v3769 = vsub.s32 %v3766, %v3768
        %v3770 = vrot.slane %v3763, %v3769
        %v3771 = vcombine.low %v2045, %v2046
        %v3773 = vunpack.c.l.s4 1983009808
        %v3774 = vunpack.c.0.s8 %v3773
        %v3775 = vlaneseq
        %v3776 = vshrl.u32 %v3775, 7
        %v3777 = vsub.s32 %v3774, %v3776
        %v3778 = vrot.slane %v3771, %v3777
        %v3779 = vcombine.low %v3754, %v3762
        %v3780 = vcombine.high %v3754, %v3762
        %v3782 = vunpack.c.l.s4 1934713408
        %v3783 = vunpack.c.0.s8 %v3782
        %v3784 = vlaneseq
        %v3785 = vshrl.u32 %v3784, 7
        %v3786 = vsub.s32 %v3783, %v3785
        %v3787 = vrot.slane %v3779, %v3786
        %v3789 = vunpack.c.l.s4 1934713408
        %v3790 = vunpack.c.0.s8 %v3789
        %v3791 = vlaneseq
        %v3792 = vshrl.u32 %v3791, 7
        %v3793 = vsub.s32 %v3790, %v3792
        %v3794 = vrot.slane %v3780, %v3793
        %v3795 = vcombine.low %v3770, %v3778
        %v3796 = vcombine.high %v3770, %v3778
        %v3798 = vunpack.c.l.s4 1934713408
        %v3799 = vunpack.c.0.s8 %v3798
        %v3800 = vlaneseq
        %v3801 = vshrl.u32 %v3800, 7
        %v3802 = vsub.s32 %v3799, %v3801
        %v3803 = vrot.slane %v3795, %v3802
        %v3805 = vunpack.c.l.s4 1934713408
        %v3806 = vunpack.c.0.s8 %v3805
        %v3807 = vlaneseq
        %v3808 = vshrl.u32 %v3807, 7
        %v3809 = vsub.s32 %v3806, %v3808
        %v3810 = vrot.slane %v3796, %v3809
        %v3811 = vcombine.low %v3787, %v3803
        %v3812 = vcombine.high %v3787, %v3803
        %v3813 = vcombine.low %v3794, %v3810
        %v3814 = vcombine.high %v3794, %v3810
        %v3815 = vcombine.low %v2223, %v2230
        %v3817 = vunpack.c.l.s4 1983009808
        %v3818 = vunpack.c.0.s8 %v3817
        %v3819 = vlaneseq
        %v3820 = vshrl.u32 %v3819, 7
        %v3821 = vsub.s32 %v3818, %v3820
        %v3822 = vrot.slane %v3815, %v3821
        %v3823 = vcombine.low %v2247, %v2248
        %v3825 = vunpack.c.l.s4 1983009808
        %v3826 = vunpack.c.0.s8 %v3825
        %v3827 = vlaneseq
        %v3828 = vshrl.u32 %v3827, 7
        %v3829 = vsub.s32 %v3826, %v3828
        %v3830 = vrot.slane %v3823, %v3829
        %v3831 = vcombine.low %v2239, %v2246
        %v3833 = vunpack.c.l.s4 1983009808
        %v3834 = vunpack.c.0.s8 %v3833
        %v3835 = vlaneseq
        %v3836 = vshrl.u32 %v3835, 7
        %v3837 = vsub.s32 %v3834, %v3836
        %v3838 = vrot.slane %v3831, %v3837
        %v3839 = vcombine.low %v2249, %v2250
        %v3841 = vunpack.c.l.s4 1983009808
        %v3842 = vunpack.c.0.s8 %v3841
        %v3843 = vlaneseq
        %v3844 = vshrl.u32 %v3843, 7
        %v3845 = vsub.s32 %v3842, %v3844
        %v3846 = vrot.slane %v3839, %v3845
        %v3847 = vcombine.low %v3822, %v3830
        %v3848 = vcombine.high %v3822, %v3830
        %v3850 = vunpack.c.l.s4 1934713408
        %v3851 = vunpack.c.0.s8 %v3850
        %v3852 = vlaneseq
        %v3853 = vshrl.u32 %v3852, 7
        %v3854 = vsub.s32 %v3851, %v3853
        %v3855 = vrot.slane %v3847, %v3854
        %v3857 = vunpack.c.l.s4 1934713408
        %v3858 = vunpack.c.0.s8 %v3857
        %v3859 = vlaneseq
        %v3860 = vshrl.u32 %v3859, 7
        %v3861 = vsub.s32 %v3858, %v3860
        %v3862 = vrot.slane %v3848, %v3861
        %v3863 = vcombine.low %v3838, %v3846
        %v3864 = vcombine.high %v3838, %v3846
        %v3866 = vunpack.c.l.s4 1934713408
        %v3867 = vunpack.c.0.s8 %v3866
        %v3868 = vlaneseq
        %v3869 = vshrl.u32 %v3868, 7
        %v3870 = vsub.s32 %v3867, %v3869
        %v3871 = vrot.slane %v3863, %v3870
        %v3873 = vunpack.c.l.s4 1934713408
        %v3874 = vunpack.c.0.s8 %v3873
        %v3875 = vlaneseq
        %v3876 = vshrl.u32 %v3875, 7
        %v3877 = vsub.s32 %v3874, %v3876
        %v3878 = vrot.slane %v3864, %v3877
        %v3879 = vcombine.low %v3855, %v3871
        %v3880 = vcombine.high %v3855, %v3871
        %v3881 = vcombine.low %v3862, %v3878
        %v3882 = vcombine.high %v3862, %v3878
        %v3883 = vcombine.low %v2427, %v2434
        %v3885 = vunpack.c.l.s4 1983009808
        %v3886 = vunpack.c.0.s8 %v3885
        %v3887 = vlaneseq
        %v3888 = vshrl.u32 %v3887, 7
        %v3889 = vsub.s32 %v3886, %v3888
        %v3890 = vrot.slane %v3883, %v3889
        %v3891 = vcombine.low %v2451, %v2452
        %v3893 = vunpack.c.l.s4 1983009808
        %v3894 = vunpack.c.0.s8 %v3893
        %v3895 = vlaneseq
        %v3896 = vshrl.u32 %v3895, 7
        %v3897 = vsub.s32 %v3894, %v3896
        %v3898 = vrot.slane %v3891, %v3897
        %v3899 = vcombine.low %v2443, %v2450
        %v3901 = vunpack.c.l.s4 1983009808
        %v3902 = vunpack.c.0.s8 %v3901
        %v3903 = vlaneseq
        %v3904 = vshrl.u32 %v3903, 7
        %v3905 = vsub.s32 %v3902, %v3904
        %v3906 = vrot.slane %v3899, %v3905
        %v3907 = vcombine.low %v2453, %v2454
        %v3909 = vunpack.c.l.s4 1983009808
        %v3910 = vunpack.c.0.s8 %v3909
        %v3911 = vlaneseq
        %v3912 = vshrl.u32 %v3911, 7
        %v3913 = vsub.s32 %v3910, %v3912
        %v3914 = vrot.slane %v3907, %v3913
        %v3915 = vcombine.low %v3890, %v3898
        %v3916 = vcombine.high %v3890, %v3898
        %v3918 = vunpack.c.l.s4 1934713408
        %v3919 = vunpack.c.0.s8 %v3918
        %v3920 = vlaneseq
        %v3921 = vshrl.u32 %v3920, 7
        %v3922 = vsub.s32 %v3919, %v3921
        %v3923 = vrot.slane %v3915, %v3922
        %v3925 = vunpack.c.l.s4 1934713408
        %v3926 = vunpack.c.0.s8 %v3925
        %v3927 = vlaneseq
        %v3928 = vshrl.u32 %v3927, 7
        %v3929 = vsub.s32 %v3926, %v3928
        %v3930 = vrot.slane %v3916, %v3929
        %v3931 = vcombine.low %v3906, %v3914
        %v3932 = vcombine.high %v3906, %v3914
        %v3934 = vunpack.c.l.s4 1934713408
        %v3935 = vunpack.c.0.s8 %v3934
        %v3936 = vlaneseq
        %v3937 = vshrl.u32 %v3936, 7
        %v3938 = vsub.s32 %v3935, %v3937
        %v3939 = vrot.slane %v3931, %v3938
        %v3941 = vunpack.c.l.s4 1934713408
        %v3942 = vunpack.c.0.s8 %v3941
        %v3943 = vlaneseq
        %v3944 = vshrl.u32 %v3943, 7
        %v3945 = vsub.s32 %v3942, %v3944
        %v3946 = vrot.slane %v3932, %v3945
        %v3947 = vcombine.low %v3923, %v3939
        %v3948 = vcombine.high %v3923, %v3939
        %v3949 = vcombine.low %v3930, %v3946
        %v3950 = vcombine.high %v3930, %v3946
        %v3951 = vcombine.low %v2631, %v2638
        %v3953 = vunpack.c.l.s4 1983009808
        %v3954 = vunpack.c.0.s8 %v3953
        %v3955 = vlaneseq
        %v3956 = vshrl.u32 %v3955, 7
        %v3957 = vsub.s32 %v3954, %v3956
        %v3958 = vrot.slane %v3951, %v3957
        %v3959 = vcombine.low %v2655, %v2656
        %v3961 = vunpack.c.l.s4 1983009808
        %v3962 = vunpack.c.0.s8 %v3961
        %v3963 = vlaneseq
        %v3964 = vshrl.u32 %v3963, 7
        %v3965 = vsub.s32 %v3962, %v3964
        %v3966 = vrot.slane %v3959, %v3965
        %v3967 = vcombine.low %v2647, %v2654
        %v3969 = vunpack.c.l.s4 1983009808
        %v3970 = vunpack.c.0.s8 %v3969
        %v3971 = vlaneseq
        %v3972 = vshrl.u32 %v3971, 7
        %v3973 = vsub.s32 %v3970, %v3972
        %v3974 = vrot.slane %v3967, %v3973
        %v3975 = vcombine.low %v2657, %v2658
        %v3977 = vunpack.c.l.s4 1983009808
        %v3978 = vunpack.c.0.s8 %v3977
        %v3979 = vlaneseq
        %v3980 = vshrl.u32 %v3979, 7
        %v3981 = vsub.s32 %v3978, %v3980
        %v3982 = vrot.slane %v3975, %v3981
        %v3983 = vcombine.low %v3958, %v3966
        %v3984 = vcombine.high %v3958, %v3966
        %v3986 = vunpack.c.l.s4 1934713408
        %v3987 = vunpack.c.0.s8 %v3986
        %v3988 = vlaneseq
        %v3989 = vshrl.u32 %v3988, 7
        %v3990 = vsub.s32 %v3987, %v3989
        %v3991 = vrot.slane %v3983, %v3990
        %v3993 = vunpack.c.l.s4 1934713408
        %v3994 = vunpack.c.0.s8 %v3993
        %v3995 = vlaneseq
        %v3996 = vshrl.u32 %v3995, 7
        %v3997 = vsub.s32 %v3994, %v3996
        %v3998 = vrot.slane %v3984, %v3997
        %v3999 = vcombine.low %v3974, %v3982
        %v4000 = vcombine.high %v3974, %v3982
        %v4002 = vunpack.c.l.s4 1934713408
        %v4003 = vunpack.c.0.s8 %v4002
        %v4004 = vlaneseq
        %v4005 = vshrl.u32 %v4004, 7
        %v4006 = vsub.s32 %v4003, %v4005
        %v4007 = vrot.slane %v3999, %v4006
        %v4009 = vunpack.c.l.s4 1934713408
        %v4010 = vunpack.c.0.s8 %v4009
        %v4011 = vlaneseq
        %v4012 = vshrl.u32 %v4011, 7
        %v4013 = vsub.s32 %v4010, %v4012
        %v4014 = vrot.slane %v4000, %v4013
        %v4015 = vcombine.low %v3991, %v4007
        %v4016 = vcombine.high %v3991, %v4007
        %v4017 = vcombine.low %v3998, %v4014
        %v4018 = vcombine.high %v3998, %v4014
        %v4019 = vcombine.low %v2835, %v2842
        %v4021 = vunpack.c.l.s4 1983009808
        %v4022 = vunpack.c.0.s8 %v4021
        %v4023 = vlaneseq
        %v4024 = vshrl.u32 %v4023, 7
        %v4025 = vsub.s32 %v4022, %v4024
        %v4026 = vrot.slane %v4019, %v4025
        %v4027 = vcombine.low %v2859, %v2860
        %v4029 = vunpack.c.l.s4 1983009808
        %v4030 = vunpack.c.0.s8 %v4029
        %v4031 = vlaneseq
        %v4032 = vshrl.u32 %v4031, 7
        %v4033 = vsub.s32 %v4030, %v4032
        %v4034 = vrot.slane %v4027, %v4033
        %v4035 = vcombine.low %v2851, %v2858
        %v4037 = vunpack.c.l.s4 1983009808
        %v4038 = vunpack.c.0.s8 %v4037
        %v4039 = vlaneseq
        %v4040 = vshrl.u32 %v4039, 7
        %v4041 = vsub.s32 %v4038, %v4040
        %v4042 = vrot.slane %v4035, %v4041
        %v4043 = vcombine.low %v2861, %v2862
        %v4045 = vunpack.c.l.s4 1983009808
        %v4046 = vunpack.c.0.s8 %v4045
        %v4047 = vlaneseq
        %v4048 = vshrl.u32 %v4047, 7
        %v4049 = vsub.s32 %v4046, %v4048
        %v4050 = vrot.slane %v4043, %v4049
        %v4051 = vcombine.low %v4026, %v4034
        %v4052 = vcombine.high %v4026, %v4034
        %v4054 = vunpack.c.l.s4 1934713408
        %v4055 = vunpack.c.0.s8 %v4054
        %v4056 = vlaneseq
        %v4057 = vshrl.u32 %v4056, 7
        %v4058 = vsub.s32 %v4055, %v4057
        %v4059 = vrot.slane %v4051, %v4058
        %v4061 = vunpack.c.l.s4 1934713408
        %v4062 = vunpack.c.0.s8 %v4061
        %v4063 = vlaneseq
        %v4064 = vshrl.u32 %v4063, 7
        %v4065 = vsub.s32 %v4062, %v4064
        %v4066 = vrot.slane %v4052, %v4065
        %v4067 = vcombine.low %v4042, %v4050
        %v4068 = vcombine.high %v4042, %v4050
        %v4070 = vunpack.c.l.s4 1934713408
        %v4071 = vunpack.c.0.s8 %v4070
        %v4072 = vlaneseq
        %v4073 = vshrl.u32 %v4072, 7
        %v4074 = vsub.s32 %v4071, %v4073
        %v4075 = vrot.slane %v4067, %v4074
        %v4077 = vunpack.c.l.s4 1934713408
        %v4078 = vunpack.c.0.s8 %v4077
        %v4079 = vlaneseq
        %v4080 = vshrl.u32 %v4079, 7
        %v4081 = vsub.s32 %v4078, %v4080
        %v4082 = vrot.slane %v4068, %v4081
        %v4083 = vcombine.low %v4059, %v4075
        %v4084 = vcombine.high %v4059, %v4075
        %v4085 = vcombine.low %v4066, %v4082
        %v4086 = vcombine.high %v4066, %v4082
        %v4087 = vpack.c.bf16 %v3127, %v2991
        %v4088 = vpack.c.bf16 %v3263, %v3263
        %v4089 = vpack.c.bf16 %v3535, %v3399
        %v4090 = vpack.c.bf16 %v3671, %v3671
        %v4091 = vpack.c.bf16 %v3128, %v2992
        %v4092 = vpack.c.bf16 %v3264, %v3264
        %v4093 = vpack.c.bf16 %v3536, %v3400
        %v4094 = vpack.c.bf16 %v3672, %v3672
        %v4095 = vpack.c.bf16 %v3129, %v2993
        %v4096 = vpack.c.bf16 %v3265, %v3265
        %v4097 = vpack.c.bf16 %v3537, %v3401
        %v4098 = vpack.c.bf16 %v3673, %v3673
        %v4099 = vpack.c.bf16 %v3130, %v2994
        %v4100 = vpack.c.bf16 %v3266, %v3266
        %v4101 = vpack.c.bf16 %v3538, %v3402
        %v4102 = vpack.c.bf16 %v3674, %v3674
        %v4103 = vpack.c.bf16 %v3131, %v2995
        %v4104 = vpack.c.bf16 %v3267, %v3267
        %v4105 = vpack.c.bf16 %v3539, %v3403
        %v4106 = vpack.c.bf16 %v3675, %v3675
        %v4107 = vpack.c.bf16 %v3132, %v2996
        %v4108 = vpack.c.bf16 %v3268, %v3268
        %v4109 = vpack.c.bf16 %v3540, %v3404
        %v4110 = vpack.c.bf16 %v3676, %v3676
        %v4111 = vpack.c.bf16 %v3133, %v2997
        %v4112 = vpack.c.bf16 %v3269, %v3269
        %v4113 = vpack.c.bf16 %v3541, %v3405
        %v4114 = vpack.c.bf16 %v3677, %v3677
        %v4115 = vpack.c.bf16 %v3134, %v2998
        %v4116 = vpack.c.bf16 %v3270, %v3270
        %v4117 = vpack.c.bf16 %v3542, %v3406
        %v4118 = vpack.c.bf16 %v3678, %v3678
        %v4119 = vpack.c.bf16 %v3811, %v3743
        %v4120 = vpack.c.bf16 %v3879, %v3879
        %v4121 = vpack.c.bf16 %v4015, %v3947
        %v4122 = vpack.c.bf16 %v4083, %v4083
        %v4123 = vpack.c.bf16 %v3812, %v3744
        %v4124 = vpack.c.bf16 %v3880, %v3880
        %v4125 = vpack.c.bf16 %v4016, %v3948
        %v4126 = vpack.c.bf16 %v4084, %v4084
        %v4127 = vpack.c.bf16 %v3813, %v3745
        %v4128 = vpack.c.bf16 %v3881, %v3881
        %v4129 = vpack.c.bf16 %v4017, %v3949
        %v4130 = vpack.c.bf16 %v4085, %v4085
        %v4131 = vpack.c.bf16 %v3814, %v3746
        %v4132 = vpack.c.bf16 %v3882, %v3882
        %v4133 = vpack.c.bf16 %v4018, %v3950
        %v4134 = vpack.c.bf16 %v4086, %v4086
        %vm4135 = vcmask 64512
        %v4137 = vsel %vm4135, %v4087, 0
        %v4140 = vsel %vm4135, %v4088, 0
        %v4143 = vsel %vm4135, %v4103, 0
        %v4146 = vsel %vm4135, %v4104, 0
        %4148 = vmatprep.subr.bf16.mxu0 0
        %4149 = vmatpush1.bf16.xpose.msra.mxu0 0
        %4150 = vmatprep.subr.bf16.mxu0 0
        %4151 = vmatpush1.bf16.xpose.msra.mxu0 0
        %4152 = vmatprep.subr.bf16.mxu0 0
        %4153 = vmatpush1.bf16.xpose.msra.mxu0 0
        %4154 = vmatprep.subr.bf16.mxu0 0
        %4155 = vmatpush1.bf16.xpose.msra.mxu0 0
        %4156 = vmatprep.subr.bf16.mxu0 0
        %4157 = vmatpush1.bf16.xpose.msra.mxu0 0
        %4158 = vmatprep.subr.bf16.mxu0 0
        %4159 = vmatpush1.bf16.xpose.msra.mxu0 0
        %4160 = vmatprep.subr.bf16.mxu0 0
        %4161 = vmatpush1.bf16.xpose.msra.mxu0 %v4146
        %4162 = vmatprep.subr.bf16.mxu0 0
        %4163 = vmatpush1.bf16.xpose.msra.mxu0 %v4143
        %4164 = vmatprep.subr.bf16.mxu0 0
        %4165 = vmatpush2.bf16.xpose.msra.mxu0 0
        %4166 = vmatprep.subr.bf16.mxu0 0
        %4167 = vmatpush2.bf16.xpose.msra.mxu0 0
        %4168 = vmatprep.subr.bf16.mxu0 0
        %4169 = vmatpush2.bf16.xpose.msra.mxu0 0
        %4170 = vmatprep.subr.bf16.mxu0 0
        %4171 = vmatpush2.bf16.xpose.msra.mxu0 0
        %4172 = vmatprep.subr.bf16.mxu0 0
        %4173 = vmatpush2.bf16.xpose.msra.mxu0 0
        %4174 = vmatprep.subr.bf16.mxu0 0
        %4175 = vmatpush2.bf16.xpose.msra.mxu0 0
        %4176 = vmatprep.subr.bf16.mxu0 0
        %4177 = vmatpush2.bf16.xpose.msra.mxu0 0
        %4178 = vmatprep.subr.bf16.mxu0 0
        %4179 = vmatpush2.bf16.xpose.msra.mxu0 0
        %4180 = vmatprep.mubr.bf16.mxu0 0
        %4181 = vmatmul.mubr.bf16.gmra.mxu0 %v4137
        %v4182 = vpop.f32.mrf.mxu0
        %v4183 = vadd.f32 0.0, %v4182
        %v4184 = vpop.f32.mrf.mxu0
        %v4185 = vpop.f32.mrf.mxu0
        %v4186 = vadd.f32 0.0, %v4185
        %v4187 = vpop.f32.mrf.mxu0
        %4188 = vmatprep.mubr.bf16.mxu0 0
        %4189 = vmatmul.mubr.bf16.gmra.mxu0 %v4140
        %v4190 = vpop.f32.mrf.mxu0
        %v4191 = vadd.f32 0.0, %v4190
        %v4192 = vpop.f32.mrf.mxu0
        %v4193 = vpop.f32.mrf.mxu0
        %v4194 = vpop.f32.mrf.mxu0
        %4195 = vdwg.mxu0
        %v4197 = vsel %vm4135, %v4089, 0
        %v4200 = vsel %vm4135, %v4090, 0
        %v4203 = vsel %vm4135, %v4105, 0
        %v4206 = vsel %vm4135, %v4106, 0
        %4208 = vmatprep.subr.bf16.mxu0 0
        %4209 = vmatpush1.bf16.xpose.msra.mxu0 0
        %4210 = vmatprep.subr.bf16.mxu0 0
        %4211 = vmatpush1.bf16.xpose.msra.mxu0 0
        %4212 = vmatprep.subr.bf16.mxu0 0
        %4213 = vmatpush1.bf16.xpose.msra.mxu0 0
        %4214 = vmatprep.subr.bf16.mxu0 0
        %4215 = vmatpush1.bf16.xpose.msra.mxu0 0
        %4216 = vmatprep.subr.bf16.mxu0 0
        %4217 = vmatpush1.bf16.xpose.msra.mxu0 0
        %4218 = vmatprep.subr.bf16.mxu0 0
        %4219 = vmatpush1.bf16.xpose.msra.mxu0 0
        %4220 = vmatprep.subr.bf16.mxu0 0
        %4221 = vmatpush1.bf16.xpose.msra.mxu0 %v4206
        %4222 = vmatprep.subr.bf16.mxu0 0
        %4223 = vmatpush1.bf16.xpose.msra.mxu0 %v4203
        %4224 = vmatprep.subr.bf16.mxu0 0
        %4225 = vmatpush2.bf16.xpose.msra.mxu0 0
        %4226 = vmatprep.subr.bf16.mxu0 0
        %4227 = vmatpush2.bf16.xpose.msra.mxu0 0
        %4228 = vmatprep.subr.bf16.mxu0 0
        %4229 = vmatpush2.bf16.xpose.msra.mxu0 0
        %4230 = vmatprep.subr.bf16.mxu0 0
        %4231 = vmatpush2.bf16.xpose.msra.mxu0 0
        %4232 = vmatprep.subr.bf16.mxu0 0
        %4233 = vmatpush2.bf16.xpose.msra.mxu0 0
        %4234 = vmatprep.subr.bf16.mxu0 0
        %4235 = vmatpush2.bf16.xpose.msra.mxu0 0
        %4236 = vmatprep.subr.bf16.mxu0 0
        %4237 = vmatpush2.bf16.xpose.msra.mxu0 0
        %4238 = vmatprep.subr.bf16.mxu0 0
        %4239 = vmatpush2.bf16.xpose.msra.mxu0 0
        %4240 = vmatprep.mubr.bf16.mxu0 0
        %4241 = vmatmul.mubr.bf16.gmra.mxu0 %v4197
        %v4242 = vpop.f32.mrf.mxu0
        %v4243 = vadd.f32 0.0, %v4242
        %v4244 = vpop.f32.mrf.mxu0
        %v4245 = vpop.f32.mrf.mxu0
        %v4246 = vadd.f32 0.0, %v4245
        %v4247 = vpop.f32.mrf.mxu0
        %4248 = vmatprep.mubr.bf16.mxu0 0
        %4249 = vmatmul.mubr.bf16.gmra.mxu0 %v4200
        %v4250 = vpop.f32.mrf.mxu0
        %v4251 = vadd.f32 0.0, %v4250
        %v4252 = vpop.f32.mrf.mxu0
        %v4253 = vpop.f32.mrf.mxu0
        %v4254 = vpop.f32.mrf.mxu0
        %4255 = vdwg.mxu0
        %v4257 = vsel %vm4135, %v4091, 0
        %v4260 = vsel %vm4135, %v4092, 0
        %v4263 = vsel %vm4135, %v4107, 0
        %v4266 = vsel %vm4135, %v4108, 0
        %4268 = vmatprep.subr.bf16.mxu0 0
        %4269 = vmatpush1.bf16.xpose.msra.mxu0 0
        %4270 = vmatprep.subr.bf16.mxu0 0
        %4271 = vmatpush1.bf16.xpose.msra.mxu0 0
        %4272 = vmatprep.subr.bf16.mxu0 0
        %4273 = vmatpush1.bf16.xpose.msra.mxu0 0
        %4274 = vmatprep.subr.bf16.mxu0 0
        %4275 = vmatpush1.bf16.xpose.msra.mxu0 0
        %4276 = vmatprep.subr.bf16.mxu0 0
        %4277 = vmatpush1.bf16.xpose.msra.mxu0 0
        %4278 = vmatprep.subr.bf16.mxu0 0
        %4279 = vmatpush1.bf16.xpose.msra.mxu0 0
        %4280 = vmatprep.subr.bf16.mxu0 0
        %4281 = vmatpush1.bf16.xpose.msra.mxu0 %v4266
        %4282 = vmatprep.subr.bf16.mxu0 0
        %4283 = vmatpush1.bf16.xpose.msra.mxu0 %v4263
        %4284 = vmatprep.subr.bf16.mxu0 0
        %4285 = vmatpush2.bf16.xpose.msra.mxu0 0
        %4286 = vmatprep.subr.bf16.mxu0 0
        %4287 = vmatpush2.bf16.xpose.msra.mxu0 0
        %4288 = vmatprep.subr.bf16.mxu0 0
        %4289 = vmatpush2.bf16.xpose.msra.mxu0 0
        %4290 = vmatprep.subr.bf16.mxu0 0
        %4291 = vmatpush2.bf16.xpose.msra.mxu0 0
        %4292 = vmatprep.subr.bf16.mxu0 0
        %4293 = vmatpush2.bf16.xpose.msra.mxu0 0
        %4294 = vmatprep.subr.bf16.mxu0 0
        %4295 = vmatpush2.bf16.xpose.msra.mxu0 0
        %4296 = vmatprep.subr.bf16.mxu0 0
        %4297 = vmatpush2.bf16.xpose.msra.mxu0 0
        %4298 = vmatprep.subr.bf16.mxu0 0
        %4299 = vmatpush2.bf16.xpose.msra.mxu0 0
        %4300 = vmatprep.mubr.bf16.mxu0 0
        %4301 = vmatmul.mubr.bf16.gmra.mxu0 %v4257
        %v4302 = vpop.f32.mrf.mxu0
        %v4303 = vadd.f32 0.0, %v4302
        %v4304 = vpop.f32.mrf.mxu0
        %v4305 = vpop.f32.mrf.mxu0
        %v4306 = vadd.f32 0.0, %v4305
        %v4307 = vpop.f32.mrf.mxu0
        %4308 = vmatprep.mubr.bf16.mxu0 0
        %4309 = vmatmul.mubr.bf16.gmra.mxu0 %v4260
        %v4310 = vpop.f32.mrf.mxu0
        %v4311 = vadd.f32 0.0, %v4310
        %v4312 = vpop.f32.mrf.mxu0
        %v4313 = vpop.f32.mrf.mxu0
        %v4314 = vpop.f32.mrf.mxu0
        %4315 = vdwg.mxu0
        %v4317 = vsel %vm4135, %v4093, 0
        %v4320 = vsel %vm4135, %v4094, 0
        %v4323 = vsel %vm4135, %v4109, 0
        %v4326 = vsel %vm4135, %v4110, 0
        %4328 = vmatprep.subr.bf16.mxu0 0
        %4329 = vmatpush1.bf16.xpose.msra.mxu0 0
        %4330 = vmatprep.subr.bf16.mxu0 0
        %4331 = vmatpush1.bf16.xpose.msra.mxu0 0
        %4332 = vmatprep.subr.bf16.mxu0 0
        %4333 = vmatpush1.bf16.xpose.msra.mxu0 0
        %4334 = vmatprep.subr.bf16.mxu0 0
        %4335 = vmatpush1.bf16.xpose.msra.mxu0 0
        %4336 = vmatprep.subr.bf16.mxu0 0
        %4337 = vmatpush1.bf16.xpose.msra.mxu0 0
        %4338 = vmatprep.subr.bf16.mxu0 0
        %4339 = vmatpush1.bf16.xpose.msra.mxu0 0
        %4340 = vmatprep.subr.bf16.mxu0 0
        %4341 = vmatpush1.bf16.xpose.msra.mxu0 %v4326
        %4342 = vmatprep.subr.bf16.mxu0 0
        %4343 = vmatpush1.bf16.xpose.msra.mxu0 %v4323
        %4344 = vmatprep.subr.bf16.mxu0 0
        %4345 = vmatpush2.bf16.xpose.msra.mxu0 0
        %4346 = vmatprep.subr.bf16.mxu0 0
        %4347 = vmatpush2.bf16.xpose.msra.mxu0 0
        %4348 = vmatprep.subr.bf16.mxu0 0
        %4349 = vmatpush2.bf16.xpose.msra.mxu0 0
        %4350 = vmatprep.subr.bf16.mxu0 0
        %4351 = vmatpush2.bf16.xpose.msra.mxu0 0
        %4352 = vmatprep.subr.bf16.mxu0 0
        %4353 = vmatpush2.bf16.xpose.msra.mxu0 0
        %4354 = vmatprep.subr.bf16.mxu0 0
        %4355 = vmatpush2.bf16.xpose.msra.mxu0 0
        %4356 = vmatprep.subr.bf16.mxu0 0
        %4357 = vmatpush2.bf16.xpose.msra.mxu0 0
        %4358 = vmatprep.subr.bf16.mxu0 0
        %4359 = vmatpush2.bf16.xpose.msra.mxu0 0
        %4360 = vmatprep.mubr.bf16.mxu0 0
        %4361 = vmatmul.mubr.bf16.gmra.mxu0 %v4317
        %v4362 = vpop.f32.mrf.mxu0
        %v4363 = vadd.f32 0.0, %v4362
        %v4364 = vpop.f32.mrf.mxu0
        %v4365 = vpop.f32.mrf.mxu0
        %v4366 = vadd.f32 0.0, %v4365
        %v4367 = vpop.f32.mrf.mxu0
        %4368 = vmatprep.mubr.bf16.mxu0 0
        %4369 = vmatmul.mubr.bf16.gmra.mxu0 %v4320
        %v4370 = vpop.f32.mrf.mxu0
        %v4371 = vadd.f32 0.0, %v4370
        %v4372 = vpop.f32.mrf.mxu0
        %v4373 = vpop.f32.mrf.mxu0
        %v4374 = vpop.f32.mrf.mxu0
        %4375 = vdwg.mxu0
        %v4377 = vsel %vm4135, %v4095, 0
        %v4380 = vsel %vm4135, %v4096, 0
        %v4383 = vsel %vm4135, %v4111, 0
        %v4386 = vsel %vm4135, %v4112, 0
        %4388 = vmatprep.subr.bf16.mxu0 0
        %4389 = vmatpush1.bf16.xpose.msra.mxu0 0
        %4390 = vmatprep.subr.bf16.mxu0 0
        %4391 = vmatpush1.bf16.xpose.msra.mxu0 0
        %4392 = vmatprep.subr.bf16.mxu0 0
        %4393 = vmatpush1.bf16.xpose.msra.mxu0 0
        %4394 = vmatprep.subr.bf16.mxu0 0
        %4395 = vmatpush1.bf16.xpose.msra.mxu0 0
        %4396 = vmatprep.subr.bf16.mxu0 0
        %4397 = vmatpush1.bf16.xpose.msra.mxu0 0
        %4398 = vmatprep.subr.bf16.mxu0 0
        %4399 = vmatpush1.bf16.xpose.msra.mxu0 0
        %4400 = vmatprep.subr.bf16.mxu0 0
        %4401 = vmatpush1.bf16.xpose.msra.mxu0 %v4386
        %4402 = vmatprep.subr.bf16.mxu0 0
        %4403 = vmatpush1.bf16.xpose.msra.mxu0 %v4383
        %4404 = vmatprep.subr.bf16.mxu0 0
        %4405 = vmatpush2.bf16.xpose.msra.mxu0 0
        %4406 = vmatprep.subr.bf16.mxu0 0
        %4407 = vmatpush2.bf16.xpose.msra.mxu0 0
        %4408 = vmatprep.subr.bf16.mxu0 0
        %4409 = vmatpush2.bf16.xpose.msra.mxu0 0
        %4410 = vmatprep.subr.bf16.mxu0 0
        %4411 = vmatpush2.bf16.xpose.msra.mxu0 0
        %4412 = vmatprep.subr.bf16.mxu0 0
        %4413 = vmatpush2.bf16.xpose.msra.mxu0 0
        %4414 = vmatprep.subr.bf16.mxu0 0
        %4415 = vmatpush2.bf16.xpose.msra.mxu0 0
        %4416 = vmatprep.subr.bf16.mxu0 0
        %4417 = vmatpush2.bf16.xpose.msra.mxu0 0
        %4418 = vmatprep.subr.bf16.mxu0 0
        %4419 = vmatpush2.bf16.xpose.msra.mxu0 0
        %4420 = vmatprep.mubr.bf16.mxu0 0
        %4421 = vmatmul.mubr.bf16.gmra.mxu0 %v4377
        %v4422 = vpop.f32.mrf.mxu0
        %v4423 = vadd.f32 0.0, %v4422
        %v4424 = vpop.f32.mrf.mxu0
        %v4425 = vpop.f32.mrf.mxu0
        %v4426 = vadd.f32 0.0, %v4425
        %v4427 = vpop.f32.mrf.mxu0
        %4428 = vmatprep.mubr.bf16.mxu0 0
        %4429 = vmatmul.mubr.bf16.gmra.mxu0 %v4380
        %v4430 = vpop.f32.mrf.mxu0
        %v4431 = vadd.f32 0.0, %v4430
        %v4432 = vpop.f32.mrf.mxu0
        %v4433 = vpop.f32.mrf.mxu0
        %v4434 = vpop.f32.mrf.mxu0
        %4435 = vdwg.mxu0
        %v4437 = vsel %vm4135, %v4097, 0
        %v4440 = vsel %vm4135, %v4098, 0
        %v4443 = vsel %vm4135, %v4113, 0
        %v4446 = vsel %vm4135, %v4114, 0
        %4448 = vmatprep.subr.bf16.mxu0 0
        %4449 = vmatpush1.bf16.xpose.msra.mxu0 0
        %4450 = vmatprep.subr.bf16.mxu0 0
        %4451 = vmatpush1.bf16.xpose.msra.mxu0 0
        %4452 = vmatprep.subr.bf16.mxu0 0
        %4453 = vmatpush1.bf16.xpose.msra.mxu0 0
        %4454 = vmatprep.subr.bf16.mxu0 0
        %4455 = vmatpush1.bf16.xpose.msra.mxu0 0
        %4456 = vmatprep.subr.bf16.mxu0 0
        %4457 = vmatpush1.bf16.xpose.msra.mxu0 0
        %4458 = vmatprep.subr.bf16.mxu0 0
        %4459 = vmatpush1.bf16.xpose.msra.mxu0 0
        %4460 = vmatprep.subr.bf16.mxu0 0
        %4461 = vmatpush1.bf16.xpose.msra.mxu0 %v4446
        %4462 = vmatprep.subr.bf16.mxu0 0
        %4463 = vmatpush1.bf16.xpose.msra.mxu0 %v4443
        %4464 = vmatprep.subr.bf16.mxu0 0
        %4465 = vmatpush2.bf16.xpose.msra.mxu0 0
        %4466 = vmatprep.subr.bf16.mxu0 0
        %4467 = vmatpush2.bf16.xpose.msra.mxu0 0
        %4468 = vmatprep.subr.bf16.mxu0 0
        %4469 = vmatpush2.bf16.xpose.msra.mxu0 0
        %4470 = vmatprep.subr.bf16.mxu0 0
        %4471 = vmatpush2.bf16.xpose.msra.mxu0 0
        %4472 = vmatprep.subr.bf16.mxu0 0
        %4473 = vmatpush2.bf16.xpose.msra.mxu0 0
        %4474 = vmatprep.subr.bf16.mxu0 0
        %4475 = vmatpush2.bf16.xpose.msra.mxu0 0
        %4476 = vmatprep.subr.bf16.mxu0 0
        %4477 = vmatpush2.bf16.xpose.msra.mxu0 0
        %4478 = vmatprep.subr.bf16.mxu0 0
        %4479 = vmatpush2.bf16.xpose.msra.mxu0 0
        %4480 = vmatprep.mubr.bf16.mxu0 0
        %4481 = vmatmul.mubr.bf16.gmra.mxu0 %v4437
        %v4482 = vpop.f32.mrf.mxu0
        %v4483 = vadd.f32 0.0, %v4482
        %v4484 = vpop.f32.mrf.mxu0
        %v4485 = vpop.f32.mrf.mxu0
        %v4486 = vadd.f32 0.0, %v4485
        %v4487 = vpop.f32.mrf.mxu0
        %4488 = vmatprep.mubr.bf16.mxu0 0
        %4489 = vmatmul.mubr.bf16.gmra.mxu0 %v4440
        %v4490 = vpop.f32.mrf.mxu0
        %v4491 = vadd.f32 0.0, %v4490
        %v4492 = vpop.f32.mrf.mxu0
        %v4493 = vpop.f32.mrf.mxu0
        %v4494 = vpop.f32.mrf.mxu0
        %4495 = vdwg.mxu0
        %v4497 = vsel %vm4135, %v4099, 0
        %v4500 = vsel %vm4135, %v4100, 0
        %v4503 = vsel %vm4135, %v4115, 0
        %v4506 = vsel %vm4135, %v4116, 0
        %4508 = vmatprep.subr.bf16.mxu0 0
        %4509 = vmatpush1.bf16.xpose.msra.mxu0 0
        %4510 = vmatprep.subr.bf16.mxu0 0
        %4511 = vmatpush1.bf16.xpose.msra.mxu0 0
        %4512 = vmatprep.subr.bf16.mxu0 0
        %4513 = vmatpush1.bf16.xpose.msra.mxu0 0
        %4514 = vmatprep.subr.bf16.mxu0 0
        %4515 = vmatpush1.bf16.xpose.msra.mxu0 0
        %4516 = vmatprep.subr.bf16.mxu0 0
        %4517 = vmatpush1.bf16.xpose.msra.mxu0 0
        %4518 = vmatprep.subr.bf16.mxu0 0
        %4519 = vmatpush1.bf16.xpose.msra.mxu0 0
        %4520 = vmatprep.subr.bf16.mxu0 0
        %4521 = vmatpush1.bf16.xpose.msra.mxu0 %v4506
        %4522 = vmatprep.subr.bf16.mxu0 0
        %4523 = vmatpush1.bf16.xpose.msra.mxu0 %v4503
        %4524 = vmatprep.subr.bf16.mxu0 0
        %4525 = vmatpush2.bf16.xpose.msra.mxu0 0
        %4526 = vmatprep.subr.bf16.mxu0 0
        %4527 = vmatpush2.bf16.xpose.msra.mxu0 0
        %4528 = vmatprep.subr.bf16.mxu0 0
        %4529 = vmatpush2.bf16.xpose.msra.mxu0 0
        %4530 = vmatprep.subr.bf16.mxu0 0
        %4531 = vmatpush2.bf16.xpose.msra.mxu0 0
        %4532 = vmatprep.subr.bf16.mxu0 0
        %4533 = vmatpush2.bf16.xpose.msra.mxu0 0
        %4534 = vmatprep.subr.bf16.mxu0 0
        %4535 = vmatpush2.bf16.xpose.msra.mxu0 0
        %4536 = vmatprep.subr.bf16.mxu0 0
        %4537 = vmatpush2.bf16.xpose.msra.mxu0 0
        %4538 = vmatprep.subr.bf16.mxu0 0
        %4539 = vmatpush2.bf16.xpose.msra.mxu0 0
        %4540 = vmatprep.mubr.bf16.mxu0 0
        %4541 = vmatmul.mubr.bf16.gmra.mxu0 %v4497
        %v4542 = vpop.f32.mrf.mxu0
        %v4543 = vadd.f32 0.0, %v4542
        %v4544 = vpop.f32.mrf.mxu0
        %v4545 = vpop.f32.mrf.mxu0
        %v4546 = vadd.f32 0.0, %v4545
        %v4547 = vpop.f32.mrf.mxu0
        %4548 = vmatprep.mubr.bf16.mxu0 0
        %4549 = vmatmul.mubr.bf16.gmra.mxu0 %v4500
        %v4550 = vpop.f32.mrf.mxu0
        %v4551 = vadd.f32 0.0, %v4550
        %v4552 = vpop.f32.mrf.mxu0
        %v4553 = vpop.f32.mrf.mxu0
        %v4554 = vpop.f32.mrf.mxu0
        %4555 = vdwg.mxu0
        %v4557 = vsel %vm4135, %v4101, 0
        %v4560 = vsel %vm4135, %v4102, 0
        %v4563 = vsel %vm4135, %v4117, 0
        %v4566 = vsel %vm4135, %v4118, 0
        %4568 = vmatprep.subr.bf16.mxu0 0
        %4569 = vmatpush1.bf16.xpose.msra.mxu0 0
        %4570 = vmatprep.subr.bf16.mxu0 0
        %4571 = vmatpush1.bf16.xpose.msra.mxu0 0
        %4572 = vmatprep.subr.bf16.mxu0 0
        %4573 = vmatpush1.bf16.xpose.msra.mxu0 0
        %4574 = vmatprep.subr.bf16.mxu0 0
        %4575 = vmatpush1.bf16.xpose.msra.mxu0 0
        %4576 = vmatprep.subr.bf16.mxu0 0
        %4577 = vmatpush1.bf16.xpose.msra.mxu0 0
        %4578 = vmatprep.subr.bf16.mxu0 0
        %4579 = vmatpush1.bf16.xpose.msra.mxu0 0
        %4580 = vmatprep.subr.bf16.mxu0 0
        %4581 = vmatpush1.bf16.xpose.msra.mxu0 %v4566
        %4582 = vmatprep.subr.bf16.mxu0 0
        %4583 = vmatpush1.bf16.xpose.msra.mxu0 %v4563
        %4584 = vmatprep.subr.bf16.mxu0 0
        %4585 = vmatpush2.bf16.xpose.msra.mxu0 0
        %4586 = vmatprep.subr.bf16.mxu0 0
        %4587 = vmatpush2.bf16.xpose.msra.mxu0 0
        %4588 = vmatprep.subr.bf16.mxu0 0
        %4589 = vmatpush2.bf16.xpose.msra.mxu0 0
        %4590 = vmatprep.subr.bf16.mxu0 0
        %4591 = vmatpush2.bf16.xpose.msra.mxu0 0
        %4592 = vmatprep.subr.bf16.mxu0 0
        %4593 = vmatpush2.bf16.xpose.msra.mxu0 0
        %4594 = vmatprep.subr.bf16.mxu0 0
        %4595 = vmatpush2.bf16.xpose.msra.mxu0 0
        %4596 = vmatprep.subr.bf16.mxu0 0
        %4597 = vmatpush2.bf16.xpose.msra.mxu0 0
        %4598 = vmatprep.subr.bf16.mxu0 0
        %4599 = vmatpush2.bf16.xpose.msra.mxu0 0
        %4600 = vmatprep.mubr.bf16.mxu0 0
        %4601 = vmatmul.mubr.bf16.gmra.mxu0 %v4557
        %v4602 = vpop.f32.mrf.mxu0
        %v4603 = vadd.f32 0.0, %v4602
        %v4604 = vpop.f32.mrf.mxu0
        %v4605 = vpop.f32.mrf.mxu0
        %v4606 = vadd.f32 0.0, %v4605
        %v4607 = vpop.f32.mrf.mxu0
        %4608 = vmatprep.mubr.bf16.mxu0 0
        %4609 = vmatmul.mubr.bf16.gmra.mxu0 %v4560
        %v4610 = vpop.f32.mrf.mxu0
        %v4611 = vadd.f32 0.0, %v4610
        %v4612 = vpop.f32.mrf.mxu0
        %v4613 = vpop.f32.mrf.mxu0
        %v4614 = vpop.f32.mrf.mxu0
        %4615 = vdwg.mxu0
        %vm4616 = vcmask 195584
        %v4617 = vsel %vm4616, %v4183, -inf
        %4618 = vmax.xlane.f32.xlu0 %v4617
        %v4619 = vpop.xlane.xlu0 %4618
        %v4620 = vsel %vm4616, %v4186, -inf
        %4621 = vmax.xlane.f32.xlu0 %v4620
        %v4622 = vpop.xlane.xlu0 %4621
        %v4623 = vsel %vm4616, %v4191, -inf
        %4624 = vmax.xlane.f32.xlu0 %v4623
        %v4625 = vpop.xlane.xlu0 %4624
        %v4626 = vsel %vm4616, %v4243, -inf
        %4627 = vmax.xlane.f32.xlu0 %v4626
        %v4628 = vpop.xlane.xlu0 %4627
        %v4629 = vsel %vm4616, %v4246, -inf
        %4630 = vmax.xlane.f32.xlu0 %v4629
        %v4631 = vpop.xlane.xlu0 %4630
        %v4632 = vsel %vm4616, %v4251, -inf
        %4633 = vmax.xlane.f32.xlu0 %v4632
        %v4634 = vpop.xlane.xlu0 %4633
        %v4635 = vsel %vm4616, %v4303, -inf
        %4636 = vmax.xlane.f32.xlu0 %v4635
        %v4637 = vpop.xlane.xlu0 %4636
        %v4638 = vsel %vm4616, %v4306, -inf
        %4639 = vmax.xlane.f32.xlu0 %v4638
        %v4640 = vpop.xlane.xlu0 %4639
        %v4641 = vsel %vm4616, %v4311, -inf
        %4642 = vmax.xlane.f32.xlu0 %v4641
        %v4643 = vpop.xlane.xlu0 %4642
        %v4644 = vsel %vm4616, %v4363, -inf
        %4645 = vmax.xlane.f32.xlu0 %v4644
        %v4646 = vpop.xlane.xlu0 %4645
        %v4647 = vsel %vm4616, %v4366, -inf
        %4648 = vmax.xlane.f32.xlu0 %v4647
        %v4649 = vpop.xlane.xlu0 %4648
        %v4650 = vsel %vm4616, %v4371, -inf
        %4651 = vmax.xlane.f32.xlu0 %v4650
        %v4652 = vpop.xlane.xlu0 %4651
        %v4653 = vsel %vm4616, %v4423, -inf
        %4654 = vmax.xlane.f32.xlu0 %v4653
        %v4655 = vpop.xlane.xlu0 %4654
        %v4656 = vsel %vm4616, %v4426, -inf
        %4657 = vmax.xlane.f32.xlu0 %v4656
        %v4658 = vpop.xlane.xlu0 %4657
        %v4659 = vsel %vm4616, %v4431, -inf
        %4660 = vmax.xlane.f32.xlu0 %v4659
        %v4661 = vpop.xlane.xlu0 %4660
        %v4662 = vsel %vm4616, %v4483, -inf
        %4663 = vmax.xlane.f32.xlu0 %v4662
        %v4664 = vpop.xlane.xlu0 %4663
        %v4665 = vsel %vm4616, %v4486, -inf
        %4666 = vmax.xlane.f32.xlu0 %v4665
        %v4667 = vpop.xlane.xlu0 %4666
        %v4668 = vsel %vm4616, %v4491, -inf
        %4669 = vmax.xlane.f32.xlu0 %v4668
        %v4670 = vpop.xlane.xlu0 %4669
        %v4671 = vsel %vm4616, %v4543, -inf
        %4672 = vmax.xlane.f32.xlu0 %v4671
        %v4673 = vpop.xlane.xlu0 %4672
        %v4674 = vsel %vm4616, %v4546, -inf
        %4675 = vmax.xlane.f32.xlu0 %v4674
        %v4676 = vpop.xlane.xlu0 %4675
        %v4677 = vsel %vm4616, %v4551, -inf
        %4678 = vmax.xlane.f32.xlu0 %v4677
        %v4679 = vpop.xlane.xlu0 %4678
        %v4680 = vsel %vm4616, %v4603, -inf
        %4681 = vmax.xlane.f32.xlu0 %v4680
        %v4682 = vpop.xlane.xlu0 %4681
        %v4683 = vsel %vm4616, %v4606, -inf
        %4684 = vmax.xlane.f32.xlu0 %v4683
        %v4685 = vpop.xlane.xlu0 %4684
        %v4686 = vsel %vm4616, %v4611, -inf
        %4687 = vmax.xlane.f32.xlu0 %v4686
        %v4688 = vpop.xlane.xlu0 %4687
        %v4689 = vsub.f32 %v4183, %v4619
        %v4690 = vsub.f32 %v4186, %v4622
        %v4691 = vsub.f32 %v4191, %v4625
        %v4692 = vsub.f32 %v4243, %v4628
        %v4693 = vsub.f32 %v4246, %v4631
        %v4694 = vsub.f32 %v4251, %v4634
        %v4695 = vsub.f32 %v4303, %v4637
        %v4696 = vsub.f32 %v4306, %v4640
        %v4697 = vsub.f32 %v4311, %v4643
        %v4698 = vsub.f32 %v4363, %v4646
        %v4699 = vsub.f32 %v4366, %v4649
        %v4700 = vsub.f32 %v4371, %v4652
        %v4701 = vsub.f32 %v4423, %v4655
        %v4702 = vsub.f32 %v4426, %v4658
        %v4703 = vsub.f32 %v4431, %v4661
        %v4704 = vsub.f32 %v4483, %v4664
        %v4705 = vsub.f32 %v4486, %v4667
        %v4706 = vsub.f32 %v4491, %v4670
        %v4707 = vsub.f32 %v4543, %v4673
        %v4708 = vsub.f32 %v4546, %v4676
        %v4709 = vsub.f32 %v4551, %v4679
        %v4710 = vsub.f32 %v4603, %v4682
        %v4711 = vsub.f32 %v4606, %v4685
        %v4712 = vsub.f32 %v4611, %v4688
        %v4713 = vmul.f32 %v4689, 1.442695
        %v4714 = vpow.pop %v4713
        %v4715 = vmul.f32 %v4690, 1.442695
        %v4716 = vpow.pop %v4715
        %v4717 = vmul.f32 %v4691, 1.442695
        %v4718 = vpow.pop %v4717
        %v4719 = vmul.f32 %v4692, 1.442695
        %v4720 = vpow.pop %v4719
        %v4721 = vmul.f32 %v4693, 1.442695
        %v4722 = vpow.pop %v4721
        %v4723 = vmul.f32 %v4694, 1.442695
        %v4724 = vpow.pop %v4723
        %v4725 = vmul.f32 %v4695, 1.442695
        %v4726 = vpow.pop %v4725
        %v4727 = vmul.f32 %v4696, 1.442695
        %v4728 = vpow.pop %v4727
        %v4729 = vmul.f32 %v4697, 1.442695
        %v4730 = vpow.pop %v4729
        %v4731 = vmul.f32 %v4698, 1.442695
        %v4732 = vpow.pop %v4731
        %v4733 = vmul.f32 %v4699, 1.442695
        %v4734 = vpow.pop %v4733
        %v4735 = vmul.f32 %v4700, 1.442695
        %v4736 = vpow.pop %v4735
        %v4737 = vmul.f32 %v4701, 1.442695
        %v4738 = vpow.pop %v4737
        %v4739 = vmul.f32 %v4702, 1.442695
        %v4740 = vpow.pop %v4739
        %v4741 = vmul.f32 %v4703, 1.442695
        %v4742 = vpow.pop %v4741
        %v4743 = vmul.f32 %v4704, 1.442695
        %v4744 = vpow.pop %v4743
        %v4745 = vmul.f32 %v4705, 1.442695
        %v4746 = vpow.pop %v4745
        %v4747 = vmul.f32 %v4706, 1.442695
        %v4748 = vpow.pop %v4747
        %v4749 = vmul.f32 %v4707, 1.442695
        %v4750 = vpow.pop %v4749
        %v4751 = vmul.f32 %v4708, 1.442695
        %v4752 = vpow.pop %v4751
        %v4753 = vmul.f32 %v4709, 1.442695
        %v4754 = vpow.pop %v4753
        %v4755 = vmul.f32 %v4710, 1.442695
        %v4756 = vpow.pop %v4755
        %v4757 = vmul.f32 %v4711, 1.442695
        %v4758 = vpow.pop %v4757
        %v4759 = vmul.f32 %v4712, 1.442695
        %v4760 = vpow.pop %v4759
        %v4761 = vsel %vm4616, %v4714, 0.0
        %4762 = vadd.xlane.f32.xlu0 %v4761
        %v4763 = vpop.xlane.xlu0 %4762
        %v4764 = vsel %vm4616, %v4716, 0.0
        %4765 = vadd.xlane.f32.xlu0 %v4764
        %v4766 = vpop.xlane.xlu0 %4765
        %v4767 = vsel %vm4616, %v4718, 0.0
        %4768 = vadd.xlane.f32.xlu0 %v4767
        %v4769 = vpop.xlane.xlu0 %4768
        %v4770 = vsel %vm4616, %v4720, 0.0
        %4771 = vadd.xlane.f32.xlu0 %v4770
        %v4772 = vpop.xlane.xlu0 %4771
        %v4773 = vsel %vm4616, %v4722, 0.0
        %4774 = vadd.xlane.f32.xlu0 %v4773
        %v4775 = vpop.xlane.xlu0 %4774
        %v4776 = vsel %vm4616, %v4724, 0.0
        %4777 = vadd.xlane.f32.xlu0 %v4776
        %v4778 = vpop.xlane.xlu0 %4777
        %v4779 = vsel %vm4616, %v4726, 0.0
        %4780 = vadd.xlane.f32.xlu0 %v4779
        %v4781 = vpop.xlane.xlu0 %4780
        %v4782 = vsel %vm4616, %v4728, 0.0
        %4783 = vadd.xlane.f32.xlu0 %v4782
        %v4784 = vpop.xlane.xlu0 %4783
        %v4785 = vsel %vm4616, %v4730, 0.0
        %4786 = vadd.xlane.f32.xlu0 %v4785
        %v4787 = vpop.xlane.xlu0 %4786
        %v4788 = vsel %vm4616, %v4732, 0.0
        %4789 = vadd.xlane.f32.xlu0 %v4788
        %v4790 = vpop.xlane.xlu0 %4789
        %v4791 = vsel %vm4616, %v4734, 0.0
        %4792 = vadd.xlane.f32.xlu0 %v4791
        %v4793 = vpop.xlane.xlu0 %4792
        %v4794 = vsel %vm4616, %v4736, 0.0
        %4795 = vadd.xlane.f32.xlu0 %v4794
        %v4796 = vpop.xlane.xlu0 %4795
        %v4797 = vsel %vm4616, %v4738, 0.0
        %4798 = vadd.xlane.f32.xlu0 %v4797
        %v4799 = vpop.xlane.xlu0 %4798
        %v4800 = vsel %vm4616, %v4740, 0.0
        %4801 = vadd.xlane.f32.xlu0 %v4800
        %v4802 = vpop.xlane.xlu0 %4801
        %v4803 = vsel %vm4616, %v4742, 0.0
        %4804 = vadd.xlane.f32.xlu0 %v4803
        %v4805 = vpop.xlane.xlu0 %4804
        %v4806 = vsel %vm4616, %v4744, 0.0
        %4807 = vadd.xlane.f32.xlu0 %v4806
        %v4808 = vpop.xlane.xlu0 %4807
        %v4809 = vsel %vm4616, %v4746, 0.0
        %4810 = vadd.xlane.f32.xlu0 %v4809
        %v4811 = vpop.xlane.xlu0 %4810
        %v4812 = vsel %vm4616, %v4748, 0.0
        %4813 = vadd.xlane.f32.xlu0 %v4812
        %v4814 = vpop.xlane.xlu0 %4813
        %v4815 = vsel %vm4616, %v4750, 0.0
        %4816 = vadd.xlane.f32.xlu0 %v4815
        %v4817 = vpop.xlane.xlu0 %4816
        %v4818 = vsel %vm4616, %v4752, 0.0
        %4819 = vadd.xlane.f32.xlu0 %v4818
        %v4820 = vpop.xlane.xlu0 %4819
        %v4821 = vsel %vm4616, %v4754, 0.0
        %4822 = vadd.xlane.f32.xlu0 %v4821
        %v4823 = vpop.xlane.xlu0 %4822
        %v4824 = vsel %vm4616, %v4756, 0.0
        %4825 = vadd.xlane.f32.xlu0 %v4824
        %v4826 = vpop.xlane.xlu0 %4825
        %v4827 = vsel %vm4616, %v4758, 0.0
        %4828 = vadd.xlane.f32.xlu0 %v4827
        %v4829 = vpop.xlane.xlu0 %4828
        %v4830 = vsel %vm4616, %v4760, 0.0
        %4831 = vadd.xlane.f32.xlu0 %v4830
        %v4832 = vpop.xlane.xlu0 %4831
        %v4833 = vrcp.pop %v4763
        %v4834 = vrcp.pop %v4766
        %v4835 = vrcp.pop %v4769
        %v4836 = vrcp.pop %v4772
        %v4837 = vrcp.pop %v4775
        %v4838 = vrcp.pop %v4778
        %v4839 = vrcp.pop %v4781
        %v4840 = vrcp.pop %v4784
        %v4841 = vrcp.pop %v4787
        %v4842 = vrcp.pop %v4790
        %v4843 = vrcp.pop %v4793
        %v4844 = vrcp.pop %v4796
        %v4845 = vrcp.pop %v4799
        %v4846 = vrcp.pop %v4802
        %v4847 = vrcp.pop %v4805
        %v4848 = vrcp.pop %v4808
        %v4849 = vrcp.pop %v4811
        %v4850 = vrcp.pop %v4814
        %v4851 = vrcp.pop %v4817
        %v4852 = vrcp.pop %v4820
        %v4853 = vrcp.pop %v4823
        %v4854 = vrcp.pop %v4826
        %v4855 = vrcp.pop %v4829
        %v4856 = vrcp.pop %v4832
        %v4857 = vmul.f32 %v4714, %v4833
        %v4858 = vmul.f32 %v4716, %v4834
        %v4859 = vmul.f32 %v4718, %v4835
        %v4860 = vmul.f32 %v4720, %v4836
        %v4861 = vmul.f32 %v4722, %v4837
        %v4862 = vmul.f32 %v4724, %v4838
        %v4863 = vmul.f32 %v4726, %v4839
        %v4864 = vmul.f32 %v4728, %v4840
        %v4865 = vmul.f32 %v4730, %v4841
        %v4866 = vmul.f32 %v4732, %v4842
        %v4867 = vmul.f32 %v4734, %v4843
        %v4868 = vmul.f32 %v4736, %v4844
        %v4869 = vmul.f32 %v4738, %v4845
        %v4870 = vmul.f32 %v4740, %v4846
        %v4871 = vmul.f32 %v4742, %v4847
        %v4872 = vmul.f32 %v4744, %v4848
        %v4873 = vmul.f32 %v4746, %v4849
        %v4874 = vmul.f32 %v4748, %v4850
        %v4875 = vmul.f32 %v4750, %v4851
        %v4876 = vmul.f32 %v4752, %v4852
        %v4877 = vmul.f32 %v4754, %v4853
        %v4878 = vmul.f32 %v4756, %v4854
        %v4879 = vmul.f32 %v4758, %v4855
        %v4880 = vmul.f32 %v4760, %v4856
        %v4881 = vpack.c.bf16 %v4858, %v4857
        %v4882 = vpack.c.bf16 %v4859, %v4859
        %v4883 = vpack.c.bf16 %v4861, %v4860
        %v4884 = vpack.c.bf16 %v4862, %v4862
        %v4885 = vpack.c.bf16 %v4864, %v4863
        %v4886 = vpack.c.bf16 %v4865, %v4865
        %v4887 = vpack.c.bf16 %v4867, %v4866
        %v4888 = vpack.c.bf16 %v4868, %v4868
        %v4889 = vpack.c.bf16 %v4870, %v4869
        %v4890 = vpack.c.bf16 %v4871, %v4871
        %v4891 = vpack.c.bf16 %v4873, %v4872
        %v4892 = vpack.c.bf16 %v4874, %v4874
        %v4893 = vpack.c.bf16 %v4876, %v4875
        %v4894 = vpack.c.bf16 %v4877, %v4877
        %v4895 = vpack.c.bf16 %v4879, %v4878
        %v4896 = vpack.c.bf16 %v4880, %v4880
        %v4898 = vsel %vm4616, %v4881, 0
        %v4901 = vsel %vm4616, %v4882, 0
        %vm4903 = vcmask 1043456
        %v4905 = vsel %vm4903, %v4120, 0
        %4907 = vmatprep.subr.bf16.mxu0 0
        %4908 = vmatpush1.bf16.msra.mxu0 0
        %4909 = vmatprep.subr.bf16.mxu0 0
        %4910 = vmatpush1.bf16.msra.mxu0 0
        %4911 = vmatprep.subr.bf16.mxu0 0
        %4912 = vmatpush1.bf16.msra.mxu0 0
        %4913 = vmatprep.subr.bf16.mxu0 0
        %4914 = vmatpush1.bf16.msra.mxu0 0
        %4915 = vmatprep.subr.bf16.mxu0 0
        %4916 = vmatpush1.bf16.msra.mxu0 0
        %4917 = vmatprep.subr.bf16.mxu0 0
        %4918 = vmatpush1.bf16.msra.mxu0 0
        %4919 = vmatprep.subr.bf16.mxu0 0
        %4920 = vmatpush1.bf16.msra.mxu0 %v4905
        %4921 = vmatprep.subr.bf16.mxu0 0
        %4922 = vmatpush1.bf16.msra.mxu0 %v4119
        %4923 = vmatprep.subr.bf16.mxu0 0
        %4924 = vmatpush2.bf16.msra.mxu0 0
        %4925 = vmatprep.subr.bf16.mxu0 0
        %4926 = vmatpush2.bf16.msra.mxu0 0
        %4927 = vmatprep.subr.bf16.mxu0 0
        %4928 = vmatpush2.bf16.msra.mxu0 0
        %4929 = vmatprep.subr.bf16.mxu0 0
        %4930 = vmatpush2.bf16.msra.mxu0 0
        %4931 = vmatprep.subr.bf16.mxu0 0
        %4932 = vmatpush2.bf16.msra.mxu0 0
        %4933 = vmatprep.subr.bf16.mxu0 0
        %4934 = vmatpush2.bf16.msra.mxu0 0
        %4935 = vmatprep.subr.bf16.mxu0 0
        %4936 = vmatpush2.bf16.msra.mxu0 0
        %4937 = vmatprep.subr.bf16.mxu0 0
        %4938 = vmatpush2.bf16.msra.mxu0 0
        %4939 = vmatprep.mubr.bf16.mxu0 0
        %4940 = vmatmul.mubr.bf16.gmra.mxu0 %v4898
        %v4941 = vpop.f32.mrf.mxu0
        %v4942 = vadd.f32 0.0, %v4941
        %v4943 = vpop.f32.mrf.mxu0
        %v4944 = vpop.f32.mrf.mxu0
        %v4945 = vadd.f32 0.0, %v4944
        %v4946 = vpop.f32.mrf.mxu0
        %4947 = vmatprep.mubr.bf16.mxu0 0
        %4948 = vmatmul.mubr.bf16.gmra.mxu0 %v4901
        %v4949 = vpop.f32.mrf.mxu0
        %v4950 = vadd.f32 0.0, %v4949
        %v4951 = vpop.f32.mrf.mxu0
        %v4952 = vpop.f32.mrf.mxu0
        %v4953 = vpop.f32.mrf.mxu0
        %4954 = vdwg.mxu0
        %v4956 = vsel %vm4616, %v4883, 0
        %v4959 = vsel %vm4616, %v4884, 0
        %v4962 = vsel %vm4903, %v4122, 0
        %4964 = vmatprep.subr.bf16.mxu0 0
        %4965 = vmatpush1.bf16.msra.mxu0 0
        %4966 = vmatprep.subr.bf16.mxu0 0
        %4967 = vmatpush1.bf16.msra.mxu0 0
        %4968 = vmatprep.subr.bf16.mxu0 0
        %4969 = vmatpush1.bf16.msra.mxu0 0
        %4970 = vmatprep.subr.bf16.mxu0 0
        %4971 = vmatpush1.bf16.msra.mxu0 0
        %4972 = vmatprep.subr.bf16.mxu0 0
        %4973 = vmatpush1.bf16.msra.mxu0 0
        %4974 = vmatprep.subr.bf16.mxu0 0
        %4975 = vmatpush1.bf16.msra.mxu0 0
        %4976 = vmatprep.subr.bf16.mxu0 0
        %4977 = vmatpush1.bf16.msra.mxu0 %v4962
        %4978 = vmatprep.subr.bf16.mxu0 0
        %4979 = vmatpush1.bf16.msra.mxu0 %v4121
        %4980 = vmatprep.subr.bf16.mxu0 0
        %4981 = vmatpush2.bf16.msra.mxu0 0
        %4982 = vmatprep.subr.bf16.mxu0 0
        %4983 = vmatpush2.bf16.msra.mxu0 0
        %4984 = vmatprep.subr.bf16.mxu0 0
        %4985 = vmatpush2.bf16.msra.mxu0 0
        %4986 = vmatprep.subr.bf16.mxu0 0
        %4987 = vmatpush2.bf16.msra.mxu0 0
        %4988 = vmatprep.subr.bf16.mxu0 0
        %4989 = vmatpush2.bf16.msra.mxu0 0
        %4990 = vmatprep.subr.bf16.mxu0 0
        %4991 = vmatpush2.bf16.msra.mxu0 0
        %4992 = vmatprep.subr.bf16.mxu0 0
        %4993 = vmatpush2.bf16.msra.mxu0 0
        %4994 = vmatprep.subr.bf16.mxu0 0
        %4995 = vmatpush2.bf16.msra.mxu0 0
        %4996 = vmatprep.mubr.bf16.mxu0 0
        %4997 = vmatmul.mubr.bf16.gmra.mxu0 %v4956
        %v4998 = vpop.f32.mrf.mxu0
        %v4999 = vadd.f32 0.0, %v4998
        %v5000 = vpop.f32.mrf.mxu0
        %v5001 = vpop.f32.mrf.mxu0
        %v5002 = vadd.f32 0.0, %v5001
        %v5003 = vpop.f32.mrf.mxu0
        %5004 = vmatprep.mubr.bf16.mxu0 0
        %5005 = vmatmul.mubr.bf16.gmra.mxu0 %v4959
        %v5006 = vpop.f32.mrf.mxu0
        %v5007 = vadd.f32 0.0, %v5006
        %v5008 = vpop.f32.mrf.mxu0
        %v5009 = vpop.f32.mrf.mxu0
        %v5010 = vpop.f32.mrf.mxu0
        %5011 = vdwg.mxu0
        %v5013 = vsel %vm4616, %v4885, 0
        %v5016 = vsel %vm4616, %v4886, 0
        %v5019 = vsel %vm4903, %v4124, 0
        %5021 = vmatprep.subr.bf16.mxu0 0
        %5022 = vmatpush1.bf16.msra.mxu0 0
        %5023 = vmatprep.subr.bf16.mxu0 0
        %5024 = vmatpush1.bf16.msra.mxu0 0
        %5025 = vmatprep.subr.bf16.mxu0 0
        %5026 = vmatpush1.bf16.msra.mxu0 0
        %5027 = vmatprep.subr.bf16.mxu0 0
        %5028 = vmatpush1.bf16.msra.mxu0 0
        %5029 = vmatprep.subr.bf16.mxu0 0
        %5030 = vmatpush1.bf16.msra.mxu0 0
        %5031 = vmatprep.subr.bf16.mxu0 0
        %5032 = vmatpush1.bf16.msra.mxu0 0
        %5033 = vmatprep.subr.bf16.mxu0 0
        %5034 = vmatpush1.bf16.msra.mxu0 %v5019
        %5035 = vmatprep.subr.bf16.mxu0 0
        %5036 = vmatpush1.bf16.msra.mxu0 %v4123
        %5037 = vmatprep.subr.bf16.mxu0 0
        %5038 = vmatpush2.bf16.msra.mxu0 0
        %5039 = vmatprep.subr.bf16.mxu0 0
        %5040 = vmatpush2.bf16.msra.mxu0 0
        %5041 = vmatprep.subr.bf16.mxu0 0
        %5042 = vmatpush2.bf16.msra.mxu0 0
        %5043 = vmatprep.subr.bf16.mxu0 0
        %5044 = vmatpush2.bf16.msra.mxu0 0
        %5045 = vmatprep.subr.bf16.mxu0 0
        %5046 = vmatpush2.bf16.msra.mxu0 0
        %5047 = vmatprep.subr.bf16.mxu0 0
        %5048 = vmatpush2.bf16.msra.mxu0 0
        %5049 = vmatprep.subr.bf16.mxu0 0
        %5050 = vmatpush2.bf16.msra.mxu0 0
        %5051 = vmatprep.subr.bf16.mxu0 0
        %5052 = vmatpush2.bf16.msra.mxu0 0
        %5053 = vmatprep.mubr.bf16.mxu0 0
        %5054 = vmatmul.mubr.bf16.gmra.mxu0 %v5013
        %v5055 = vpop.f32.mrf.mxu0
        %v5056 = vadd.f32 0.0, %v5055
        %v5057 = vpop.f32.mrf.mxu0
        %v5058 = vpop.f32.mrf.mxu0
        %v5059 = vadd.f32 0.0, %v5058
        %v5060 = vpop.f32.mrf.mxu0
        %5061 = vmatprep.mubr.bf16.mxu0 0
        %5062 = vmatmul.mubr.bf16.gmra.mxu0 %v5016
        %v5063 = vpop.f32.mrf.mxu0
        %v5064 = vadd.f32 0.0, %v5063
        %v5065 = vpop.f32.mrf.mxu0
        %v5066 = vpop.f32.mrf.mxu0
        %v5067 = vpop.f32.mrf.mxu0
        %5068 = vdwg.mxu0
        %v5070 = vsel %vm4616, %v4887, 0
        %v5073 = vsel %vm4616, %v4888, 0
        %v5076 = vsel %vm4903, %v4126, 0
        %5078 = vmatprep.subr.bf16.mxu0 0
        %5079 = vmatpush1.bf16.msra.mxu0 0
        %5080 = vmatprep.subr.bf16.mxu0 0
        %5081 = vmatpush1.bf16.msra.mxu0 0
        %5082 = vmatprep.subr.bf16.mxu0 0
        %5083 = vmatpush1.bf16.msra.mxu0 0
        %5084 = vmatprep.subr.bf16.mxu0 0
        %5085 = vmatpush1.bf16.msra.mxu0 0
        %5086 = vmatprep.subr.bf16.mxu0 0
        %5087 = vmatpush1.bf16.msra.mxu0 0
        %5088 = vmatprep.subr.bf16.mxu0 0
        %5089 = vmatpush1.bf16.msra.mxu0 0
        %5090 = vmatprep.subr.bf16.mxu0 0
        %5091 = vmatpush1.bf16.msra.mxu0 %v5076
        %5092 = vmatprep.subr.bf16.mxu0 0
        %5093 = vmatpush1.bf16.msra.mxu0 %v4125
        %5094 = vmatprep.subr.bf16.mxu0 0
        %5095 = vmatpush2.bf16.msra.mxu0 0
        %5096 = vmatprep.subr.bf16.mxu0 0
        %5097 = vmatpush2.bf16.msra.mxu0 0
        %5098 = vmatprep.subr.bf16.mxu0 0
        %5099 = vmatpush2.bf16.msra.mxu0 0
        %5100 = vmatprep.subr.bf16.mxu0 0
        %5101 = vmatpush2.bf16.msra.mxu0 0
        %5102 = vmatprep.subr.bf16.mxu0 0
        %5103 = vmatpush2.bf16.msra.mxu0 0
        %5104 = vmatprep.subr.bf16.mxu0 0
        %5105 = vmatpush2.bf16.msra.mxu0 0
        %5106 = vmatprep.subr.bf16.mxu0 0
        %5107 = vmatpush2.bf16.msra.mxu0 0
        %5108 = vmatprep.subr.bf16.mxu0 0
        %5109 = vmatpush2.bf16.msra.mxu0 0
        %5110 = vmatprep.mubr.bf16.mxu0 0
        %5111 = vmatmul.mubr.bf16.gmra.mxu0 %v5070
        %v5112 = vpop.f32.mrf.mxu0
        %v5113 = vadd.f32 0.0, %v5112
        %v5114 = vpop.f32.mrf.mxu0
        %v5115 = vpop.f32.mrf.mxu0
        %v5116 = vadd.f32 0.0, %v5115
        %v5117 = vpop.f32.mrf.mxu0
        %5118 = vmatprep.mubr.bf16.mxu0 0
        %5119 = vmatmul.mubr.bf16.gmra.mxu0 %v5073
        %v5120 = vpop.f32.mrf.mxu0
        %v5121 = vadd.f32 0.0, %v5120
        %v5122 = vpop.f32.mrf.mxu0
        %v5123 = vpop.f32.mrf.mxu0
        %v5124 = vpop.f32.mrf.mxu0
        %5125 = vdwg.mxu0
        %v5127 = vsel %vm4616, %v4889, 0
        %v5130 = vsel %vm4616, %v4890, 0
        %v5133 = vsel %vm4903, %v4128, 0
        %5135 = vmatprep.subr.bf16.mxu0 0
        %5136 = vmatpush1.bf16.msra.mxu0 0
        %5137 = vmatprep.subr.bf16.mxu0 0
        %5138 = vmatpush1.bf16.msra.mxu0 0
        %5139 = vmatprep.subr.bf16.mxu0 0
        %5140 = vmatpush1.bf16.msra.mxu0 0
        %5141 = vmatprep.subr.bf16.mxu0 0
        %5142 = vmatpush1.bf16.msra.mxu0 0
        %5143 = vmatprep.subr.bf16.mxu0 0
        %5144 = vmatpush1.bf16.msra.mxu0 0
        %5145 = vmatprep.subr.bf16.mxu0 0
        %5146 = vmatpush1.bf16.msra.mxu0 0
        %5147 = vmatprep.subr.bf16.mxu0 0
        %5148 = vmatpush1.bf16.msra.mxu0 %v5133
        %5149 = vmatprep.subr.bf16.mxu0 0
        %5150 = vmatpush1.bf16.msra.mxu0 %v4127
        %5151 = vmatprep.subr.bf16.mxu0 0
        %5152 = vmatpush2.bf16.msra.mxu0 0
        %5153 = vmatprep.subr.bf16.mxu0 0
        %5154 = vmatpush2.bf16.msra.mxu0 0
        %5155 = vmatprep.subr.bf16.mxu0 0
        %5156 = vmatpush2.bf16.msra.mxu0 0
        %5157 = vmatprep.subr.bf16.mxu0 0
        %5158 = vmatpush2.bf16.msra.mxu0 0
        %5159 = vmatprep.subr.bf16.mxu0 0
        %5160 = vmatpush2.bf16.msra.mxu0 0
        %5161 = vmatprep.subr.bf16.mxu0 0
        %5162 = vmatpush2.bf16.msra.mxu0 0
        %5163 = vmatprep.subr.bf16.mxu0 0
        %5164 = vmatpush2.bf16.msra.mxu0 0
        %5165 = vmatprep.subr.bf16.mxu0 0
        %5166 = vmatpush2.bf16.msra.mxu0 0
        %5167 = vmatprep.mubr.bf16.mxu0 0
        %5168 = vmatmul.mubr.bf16.gmra.mxu0 %v5127
        %v5169 = vpop.f32.mrf.mxu0
        %v5170 = vadd.f32 0.0, %v5169
        %v5171 = vpop.f32.mrf.mxu0
        %v5172 = vpop.f32.mrf.mxu0
        %v5173 = vadd.f32 0.0, %v5172
        %v5174 = vpop.f32.mrf.mxu0
        %5175 = vmatprep.mubr.bf16.mxu0 0
        %5176 = vmatmul.mubr.bf16.gmra.mxu0 %v5130
        %v5177 = vpop.f32.mrf.mxu0
        %v5178 = vadd.f32 0.0, %v5177
        %v5179 = vpop.f32.mrf.mxu0
        %v5180 = vpop.f32.mrf.mxu0
        %v5181 = vpop.f32.mrf.mxu0
        %5182 = vdwg.mxu0
        %v5184 = vsel %vm4616, %v4891, 0
        %v5187 = vsel %vm4616, %v4892, 0
        %v5190 = vsel %vm4903, %v4130, 0
        %5192 = vmatprep.subr.bf16.mxu0 0
        %5193 = vmatpush1.bf16.msra.mxu0 0
        %5194 = vmatprep.subr.bf16.mxu0 0
        %5195 = vmatpush1.bf16.msra.mxu0 0
        %5196 = vmatprep.subr.bf16.mxu0 0
        %5197 = vmatpush1.bf16.msra.mxu0 0
        %5198 = vmatprep.subr.bf16.mxu0 0
        %5199 = vmatpush1.bf16.msra.mxu0 0
        %5200 = vmatprep.subr.bf16.mxu0 0
        %5201 = vmatpush1.bf16.msra.mxu0 0
        %5202 = vmatprep.subr.bf16.mxu0 0
        %5203 = vmatpush1.bf16.msra.mxu0 0
        %5204 = vmatprep.subr.bf16.mxu0 0
        %5205 = vmatpush1.bf16.msra.mxu0 %v5190
        %5206 = vmatprep.subr.bf16.mxu0 0
        %5207 = vmatpush1.bf16.msra.mxu0 %v4129
        %5208 = vmatprep.subr.bf16.mxu0 0
        %5209 = vmatpush2.bf16.msra.mxu0 0
        %5210 = vmatprep.subr.bf16.mxu0 0
        %5211 = vmatpush2.bf16.msra.mxu0 0
        %5212 = vmatprep.subr.bf16.mxu0 0
        %5213 = vmatpush2.bf16.msra.mxu0 0
        %5214 = vmatprep.subr.bf16.mxu0 0
        %5215 = vmatpush2.bf16.msra.mxu0 0
        %5216 = vmatprep.subr.bf16.mxu0 0
        %5217 = vmatpush2.bf16.msra.mxu0 0
        %5218 = vmatprep.subr.bf16.mxu0 0
        %5219 = vmatpush2.bf16.msra.mxu0 0
        %5220 = vmatprep.subr.bf16.mxu0 0
        %5221 = vmatpush2.bf16.msra.mxu0 0
        %5222 = vmatprep.subr.bf16.mxu0 0
        %5223 = vmatpush2.bf16.msra.mxu0 0
        %5224 = vmatprep.mubr.bf16.mxu0 0
        %5225 = vmatmul.mubr.bf16.gmra.mxu0 %v5184
        %v5226 = vpop.f32.mrf.mxu0
        %v5227 = vadd.f32 0.0, %v5226
        %v5228 = vpop.f32.mrf.mxu0
        %v5229 = vpop.f32.mrf.mxu0
        %v5230 = vadd.f32 0.0, %v5229
        %v5231 = vpop.f32.mrf.mxu0
        %5232 = vmatprep.mubr.bf16.mxu0 0
        %5233 = vmatmul.mubr.bf16.gmra.mxu0 %v5187
        %v5234 = vpop.f32.mrf.mxu0
        %v5235 = vadd.f32 0.0, %v5234
        %v5236 = vpop.f32.mrf.mxu0
        %v5237 = vpop.f32.mrf.mxu0
        %v5238 = vpop.f32.mrf.mxu0
        %5239 = vdwg.mxu0
        %v5241 = vsel %vm4616, %v4893, 0
        %v5244 = vsel %vm4616, %v4894, 0
        %v5247 = vsel %vm4903, %v4132, 0
        %5249 = vmatprep.subr.bf16.mxu0 0
        %5250 = vmatpush1.bf16.msra.mxu0 0
        %5251 = vmatprep.subr.bf16.mxu0 0
        %5252 = vmatpush1.bf16.msra.mxu0 0
        %5253 = vmatprep.subr.bf16.mxu0 0
        %5254 = vmatpush1.bf16.msra.mxu0 0
        %5255 = vmatprep.subr.bf16.mxu0 0
        %5256 = vmatpush1.bf16.msra.mxu0 0
        %5257 = vmatprep.subr.bf16.mxu0 0
        %5258 = vmatpush1.bf16.msra.mxu0 0
        %5259 = vmatprep.subr.bf16.mxu0 0
        %5260 = vmatpush1.bf16.msra.mxu0 0
        %5261 = vmatprep.subr.bf16.mxu0 0
        %5262 = vmatpush1.bf16.msra.mxu0 %v5247
        %5263 = vmatprep.subr.bf16.mxu0 0
        %5264 = vmatpush1.bf16.msra.mxu0 %v4131
        %5265 = vmatprep.subr.bf16.mxu0 0
        %5266 = vmatpush2.bf16.msra.mxu0 0
        %5267 = vmatprep.subr.bf16.mxu0 0
        %5268 = vmatpush2.bf16.msra.mxu0 0
        %5269 = vmatprep.subr.bf16.mxu0 0
        %5270 = vmatpush2.bf16.msra.mxu0 0
        %5271 = vmatprep.subr.bf16.mxu0 0
        %5272 = vmatpush2.bf16.msra.mxu0 0
        %5273 = vmatprep.subr.bf16.mxu0 0
        %5274 = vmatpush2.bf16.msra.mxu0 0
        %5275 = vmatprep.subr.bf16.mxu0 0
        %5276 = vmatpush2.bf16.msra.mxu0 0
        %5277 = vmatprep.subr.bf16.mxu0 0
        %5278 = vmatpush2.bf16.msra.mxu0 0
        %5279 = vmatprep.subr.bf16.mxu0 0
        %5280 = vmatpush2.bf16.msra.mxu0 0
        %5281 = vmatprep.mubr.bf16.mxu0 0
        %5282 = vmatmul.mubr.bf16.gmra.mxu0 %v5241
        %v5283 = vpop.f32.mrf.mxu0
        %v5284 = vadd.f32 0.0, %v5283
        %v5285 = vpop.f32.mrf.mxu0
        %v5286 = vpop.f32.mrf.mxu0
        %v5287 = vadd.f32 0.0, %v5286
        %v5288 = vpop.f32.mrf.mxu0
        %5289 = vmatprep.mubr.bf16.mxu0 0
        %5290 = vmatmul.mubr.bf16.gmra.mxu0 %v5244
        %v5291 = vpop.f32.mrf.mxu0
        %v5292 = vadd.f32 0.0, %v5291
        %v5293 = vpop.f32.mrf.mxu0
        %v5294 = vpop.f32.mrf.mxu0
        %v5295 = vpop.f32.mrf.mxu0
        %5296 = vdwg.mxu0
        %v5298 = vsel %vm4616, %v4895, 0
        %v5301 = vsel %vm4616, %v4896, 0
        %v5304 = vsel %vm4903, %v4134, 0
        %5306 = vmatprep.subr.bf16.mxu0 0
        %5307 = vmatpush1.bf16.msra.mxu0 0
        %5308 = vmatprep.subr.bf16.mxu0 0
        %5309 = vmatpush1.bf16.msra.mxu0 0
        %5310 = vmatprep.subr.bf16.mxu0 0
        %5311 = vmatpush1.bf16.msra.mxu0 0
        %5312 = vmatprep.subr.bf16.mxu0 0
        %5313 = vmatpush1.bf16.msra.mxu0 0
        %5314 = vmatprep.subr.bf16.mxu0 0
        %5315 = vmatpush1.bf16.msra.mxu0 0
        %5316 = vmatprep.subr.bf16.mxu0 0
        %5317 = vmatpush1.bf16.msra.mxu0 0
        %5318 = vmatprep.subr.bf16.mxu0 0
        %5319 = vmatpush1.bf16.msra.mxu0 %v5304
        %5320 = vmatprep.subr.bf16.mxu0 0
        %5321 = vmatpush1.bf16.msra.mxu0 %v4133
        %5322 = vmatprep.subr.bf16.mxu0 0
        %5323 = vmatpush2.bf16.msra.mxu0 0
        %5324 = vmatprep.subr.bf16.mxu0 0
        %5325 = vmatpush2.bf16.msra.mxu0 0
        %5326 = vmatprep.subr.bf16.mxu0 0
        %5327 = vmatpush2.bf16.msra.mxu0 0
        %5328 = vmatprep.subr.bf16.mxu0 0
        %5329 = vmatpush2.bf16.msra.mxu0 0
        %5330 = vmatprep.subr.bf16.mxu0 0
        %5331 = vmatpush2.bf16.msra.mxu0 0
        %5332 = vmatprep.subr.bf16.mxu0 0
        %5333 = vmatpush2.bf16.msra.mxu0 0
        %5334 = vmatprep.subr.bf16.mxu0 0
        %5335 = vmatpush2.bf16.msra.mxu0 0
        %5336 = vmatprep.subr.bf16.mxu0 0
        %5337 = vmatpush2.bf16.msra.mxu0 0
        %5338 = vmatprep.mubr.bf16.mxu0 0
        %5339 = vmatmul.mubr.bf16.gmra.mxu0 %v5298
        %v5340 = vpop.f32.mrf.mxu0
        %v5341 = vadd.f32 0.0, %v5340
        %v5342 = vpop.f32.mrf.mxu0
        %v5343 = vpop.f32.mrf.mxu0
        %v5344 = vadd.f32 0.0, %v5343
        %v5345 = vpop.f32.mrf.mxu0
        %5346 = vmatprep.mubr.bf16.mxu0 0
        %5347 = vmatmul.mubr.bf16.gmra.mxu0 %v5301
        %v5348 = vpop.f32.mrf.mxu0
        %v5349 = vadd.f32 0.0, %v5348
        %v5350 = vpop.f32.mrf.mxu0
        %v5351 = vpop.f32.mrf.mxu0
        %v5352 = vpop.f32.mrf.mxu0
        %5353 = vdwg.mxu0
        %v5354 = vcombine.low %v4942, %v5170
        %v5355 = vcombine.high %v4942, %v5170
        %v5357 = vunpack.c.l.s4 1983009808
        %v5358 = vunpack.c.0.s8 %v5357
        %v5359 = vlaneseq
        %v5360 = vshrl.u32 %v5359, 7
        %v5361 = vsub.s32 %v5358, %v5360
        %v5362 = vrot.slane %v5354, %v5361
        %v5364 = vunpack.c.l.s4 1983009808
        %v5365 = vunpack.c.0.s8 %v5364
        %v5366 = vlaneseq
        %v5367 = vshrl.u32 %v5366, 7
        %v5368 = vsub.s32 %v5365, %v5367
        %v5369 = vrot.slane %v5355, %v5368
        %v5370 = vcombine.low %v5056, %v5284
        %v5371 = vcombine.high %v5056, %v5284
        %v5373 = vunpack.c.l.s4 1983009808
        %v5374 = vunpack.c.0.s8 %v5373
        %v5375 = vlaneseq
        %v5376 = vshrl.u32 %v5375, 7
        %v5377 = vsub.s32 %v5374, %v5376
        %v5378 = vrot.slane %v5370, %v5377
        %v5380 = vunpack.c.l.s4 1983009808
        %v5381 = vunpack.c.0.s8 %v5380
        %v5382 = vlaneseq
        %v5383 = vshrl.u32 %v5382, 7
        %v5384 = vsub.s32 %v5381, %v5383
        %v5385 = vrot.slane %v5371, %v5384
        %v5386 = vcombine.low %v5362, %v5378
        %v5387 = vcombine.high %v5362, %v5378
        %v5389 = vunpack.c.l.s4 1934713408
        %v5390 = vunpack.c.0.s8 %v5389
        %v5391 = vlaneseq
        %v5392 = vshrl.u32 %v5391, 7
        %v5393 = vsub.s32 %v5390, %v5392
        %v5394 = vrot.slane %v5386, %v5393
        %v5396 = vunpack.c.l.s4 1934713408
        %v5397 = vunpack.c.0.s8 %v5396
        %v5398 = vlaneseq
        %v5399 = vshrl.u32 %v5398, 7
        %v5400 = vsub.s32 %v5397, %v5399
        %v5401 = vrot.slane %v5387, %v5400
        %v5402 = vcombine.low %v5369, %v5385
        %v5403 = vcombine.high %v5369, %v5385
        %v5405 = vunpack.c.l.s4 1934713408
        %v5406 = vunpack.c.0.s8 %v5405
        %v5407 = vlaneseq
        %v5408 = vshrl.u32 %v5407, 7
        %v5409 = vsub.s32 %v5406, %v5408
        %v5410 = vrot.slane %v5402, %v5409
        %v5412 = vunpack.c.l.s4 1934713408
        %v5413 = vunpack.c.0.s8 %v5412
        %v5414 = vlaneseq
        %v5415 = vshrl.u32 %v5414, 7
        %v5416 = vsub.s32 %v5413, %v5415
        %v5417 = vrot.slane %v5403, %v5416
        %v5418 = vcombine.high %v5394, 0.0
        %v5419 = vcombine.high %v5401, 0.0
        %v5420 = vcombine.high %v5410, 0.0
        %v5421 = vcombine.high %v5417, 0.0
        %v5422 = vcombine.low %v4945, %v5173
        %v5423 = vcombine.high %v4945, %v5173
        %v5425 = vunpack.c.l.s4 1983009808
        %v5426 = vunpack.c.0.s8 %v5425
        %v5427 = vlaneseq
        %v5428 = vshrl.u32 %v5427, 7
        %v5429 = vsub.s32 %v5426, %v5428
        %v5430 = vrot.slane %v5422, %v5429
        %v5432 = vunpack.c.l.s4 1983009808
        %v5433 = vunpack.c.0.s8 %v5432
        %v5434 = vlaneseq
        %v5435 = vshrl.u32 %v5434, 7
        %v5436 = vsub.s32 %v5433, %v5435
        %v5437 = vrot.slane %v5423, %v5436
        %v5438 = vcombine.low %v5059, %v5287
        %v5439 = vcombine.high %v5059, %v5287
        %v5441 = vunpack.c.l.s4 1983009808
        %v5442 = vunpack.c.0.s8 %v5441
        %v5443 = vlaneseq
        %v5444 = vshrl.u32 %v5443, 7
        %v5445 = vsub.s32 %v5442, %v5444
        %v5446 = vrot.slane %v5438, %v5445
        %v5448 = vunpack.c.l.s4 1983009808
        %v5449 = vunpack.c.0.s8 %v5448
        %v5450 = vlaneseq
        %v5451 = vshrl.u32 %v5450, 7
        %v5452 = vsub.s32 %v5449, %v5451
        %v5453 = vrot.slane %v5439, %v5452
        %v5454 = vcombine.low %v5430, %v5446
        %v5455 = vcombine.high %v5430, %v5446
        %v5457 = vunpack.c.l.s4 1934713408
        %v5458 = vunpack.c.0.s8 %v5457
        %v5459 = vlaneseq
        %v5460 = vshrl.u32 %v5459, 7
        %v5461 = vsub.s32 %v5458, %v5460
        %v5462 = vrot.slane %v5454, %v5461
        %v5464 = vunpack.c.l.s4 1934713408
        %v5465 = vunpack.c.0.s8 %v5464
        %v5466 = vlaneseq
        %v5467 = vshrl.u32 %v5466, 7
        %v5468 = vsub.s32 %v5465, %v5467
        %v5469 = vrot.slane %v5455, %v5468
        %v5470 = vcombine.low %v5437, %v5453
        %v5471 = vcombine.high %v5437, %v5453
        %v5473 = vunpack.c.l.s4 1934713408
        %v5474 = vunpack.c.0.s8 %v5473
        %v5475 = vlaneseq
        %v5476 = vshrl.u32 %v5475, 7
        %v5477 = vsub.s32 %v5474, %v5476
        %v5478 = vrot.slane %v5470, %v5477
        %v5480 = vunpack.c.l.s4 1934713408
        %v5481 = vunpack.c.0.s8 %v5480
        %v5482 = vlaneseq
        %v5483 = vshrl.u32 %v5482, 7
        %v5484 = vsub.s32 %v5481, %v5483
        %v5485 = vrot.slane %v5471, %v5484
        %v5486 = vcombine.high %v5462, 0.0
        %v5487 = vcombine.high %v5469, 0.0
        %v5488 = vcombine.high %v5478, 0.0
        %v5489 = vcombine.high %v5485, 0.0
        %v5490 = vcombine.low %v4950, %v5178
        %v5491 = vcombine.high %v4950, %v5178
        %v5493 = vunpack.c.l.s4 1983009808
        %v5494 = vunpack.c.0.s8 %v5493
        %v5495 = vlaneseq
        %v5496 = vshrl.u32 %v5495, 7
        %v5497 = vsub.s32 %v5494, %v5496
        %v5498 = vrot.slane %v5490, %v5497
        %v5500 = vunpack.c.l.s4 1983009808
        %v5501 = vunpack.c.0.s8 %v5500
        %v5502 = vlaneseq
        %v5503 = vshrl.u32 %v5502, 7
        %v5504 = vsub.s32 %v5501, %v5503
        %v5505 = vrot.slane %v5491, %v5504
        %v5506 = vcombine.low %v5064, %v5292
        %v5507 = vcombine.high %v5064, %v5292
        %v5509 = vunpack.c.l.s4 1983009808
        %v5510 = vunpack.c.0.s8 %v5509
        %v5511 = vlaneseq
        %v5512 = vshrl.u32 %v5511, 7
        %v5513 = vsub.s32 %v5510, %v5512
        %v5514 = vrot.slane %v5506, %v5513
        %v5516 = vunpack.c.l.s4 1983009808
        %v5517 = vunpack.c.0.s8 %v5516
        %v5518 = vlaneseq
        %v5519 = vshrl.u32 %v5518, 7
        %v5520 = vsub.s32 %v5517, %v5519
        %v5521 = vrot.slane %v5507, %v5520
        %v5522 = vcombine.low %v5498, %v5514
        %v5523 = vcombine.high %v5498, %v5514
        %v5525 = vunpack.c.l.s4 1934713408
        %v5526 = vunpack.c.0.s8 %v5525
        %v5527 = vlaneseq
        %v5528 = vshrl.u32 %v5527, 7
        %v5529 = vsub.s32 %v5526, %v5528
        %v5530 = vrot.slane %v5522, %v5529
        %v5532 = vunpack.c.l.s4 1934713408
        %v5533 = vunpack.c.0.s8 %v5532
        %v5534 = vlaneseq
        %v5535 = vshrl.u32 %v5534, 7
        %v5536 = vsub.s32 %v5533, %v5535
        %v5537 = vrot.slane %v5523, %v5536
        %v5538 = vcombine.low %v5505, %v5521
        %v5539 = vcombine.high %v5505, %v5521
        %v5541 = vunpack.c.l.s4 1934713408
        %v5542 = vunpack.c.0.s8 %v5541
        %v5543 = vlaneseq
        %v5544 = vshrl.u32 %v5543, 7
        %v5545 = vsub.s32 %v5542, %v5544
        %v5546 = vrot.slane %v5538, %v5545
        %v5548 = vunpack.c.l.s4 1934713408
        %v5549 = vunpack.c.0.s8 %v5548
        %v5550 = vlaneseq
        %v5551 = vshrl.u32 %v5550, 7
        %v5552 = vsub.s32 %v5549, %v5551
        %v5553 = vrot.slane %v5539, %v5552
        %v5554 = vcombine.high %v5530, 0.0
        %v5555 = vcombine.high %v5537, 0.0
        %v5556 = vcombine.high %v5546, 0.0
        %v5557 = vcombine.high %v5553, 0.0
        %v5558 = vcombine.low %v4999, %v5227
        %v5559 = vcombine.high %v4999, %v5227
        %v5561 = vunpack.c.l.s4 1983009808
        %v5562 = vunpack.c.0.s8 %v5561
        %v5563 = vlaneseq
        %v5564 = vshrl.u32 %v5563, 7
        %v5565 = vsub.s32 %v5562, %v5564
        %v5566 = vrot.slane %v5558, %v5565
        %v5568 = vunpack.c.l.s4 1983009808
        %v5569 = vunpack.c.0.s8 %v5568
        %v5570 = vlaneseq
        %v5571 = vshrl.u32 %v5570, 7
        %v5572 = vsub.s32 %v5569, %v5571
        %v5573 = vrot.slane %v5559, %v5572
        %v5574 = vcombine.low %v5113, %v5341
        %v5575 = vcombine.high %v5113, %v5341
        %v5577 = vunpack.c.l.s4 1983009808
        %v5578 = vunpack.c.0.s8 %v5577
        %v5579 = vlaneseq
        %v5580 = vshrl.u32 %v5579, 7
        %v5581 = vsub.s32 %v5578, %v5580
        %v5582 = vrot.slane %v5574, %v5581
        %v5584 = vunpack.c.l.s4 1983009808
        %v5585 = vunpack.c.0.s8 %v5584
        %v5586 = vlaneseq
        %v5587 = vshrl.u32 %v5586, 7
        %v5588 = vsub.s32 %v5585, %v5587
        %v5589 = vrot.slane %v5575, %v5588
        %v5590 = vcombine.low %v5566, %v5582
        %v5591 = vcombine.high %v5566, %v5582
        %v5593 = vunpack.c.l.s4 1934713408
        %v5594 = vunpack.c.0.s8 %v5593
        %v5595 = vlaneseq
        %v5596 = vshrl.u32 %v5595, 7
        %v5597 = vsub.s32 %v5594, %v5596
        %v5598 = vrot.slane %v5590, %v5597
        %v5600 = vunpack.c.l.s4 1934713408
        %v5601 = vunpack.c.0.s8 %v5600
        %v5602 = vlaneseq
        %v5603 = vshrl.u32 %v5602, 7
        %v5604 = vsub.s32 %v5601, %v5603
        %v5605 = vrot.slane %v5591, %v5604
        %v5606 = vcombine.low %v5573, %v5589
        %v5607 = vcombine.high %v5573, %v5589
        %v5609 = vunpack.c.l.s4 1934713408
        %v5610 = vunpack.c.0.s8 %v5609
        %v5611 = vlaneseq
        %v5612 = vshrl.u32 %v5611, 7
        %v5613 = vsub.s32 %v5610, %v5612
        %v5614 = vrot.slane %v5606, %v5613
        %v5616 = vunpack.c.l.s4 1934713408
        %v5617 = vunpack.c.0.s8 %v5616
        %v5618 = vlaneseq
        %v5619 = vshrl.u32 %v5618, 7
        %v5620 = vsub.s32 %v5617, %v5619
        %v5621 = vrot.slane %v5607, %v5620
        %v5622 = vcombine.high %v5598, 0.0
        %v5623 = vcombine.high %v5605, 0.0
        %v5624 = vcombine.high %v5614, 0.0
        %v5625 = vcombine.high %v5621, 0.0
        %v5626 = vcombine.low %v5002, %v5230
        %v5627 = vcombine.high %v5002, %v5230
        %v5629 = vunpack.c.l.s4 1983009808
        %v5630 = vunpack.c.0.s8 %v5629
        %v5631 = vlaneseq
        %v5632 = vshrl.u32 %v5631, 7
        %v5633 = vsub.s32 %v5630, %v5632
        %v5634 = vrot.slane %v5626, %v5633
        %v5636 = vunpack.c.l.s4 1983009808
        %v5637 = vunpack.c.0.s8 %v5636
        %v5638 = vlaneseq
        %v5639 = vshrl.u32 %v5638, 7
        %v5640 = vsub.s32 %v5637, %v5639
        %v5641 = vrot.slane %v5627, %v5640
        %v5642 = vcombine.low %v5116, %v5344
        %v5643 = vcombine.high %v5116, %v5344
        %v5645 = vunpack.c.l.s4 1983009808
        %v5646 = vunpack.c.0.s8 %v5645
        %v5647 = vlaneseq
        %v5648 = vshrl.u32 %v5647, 7
        %v5649 = vsub.s32 %v5646, %v5648
        %v5650 = vrot.slane %v5642, %v5649
        %v5652 = vunpack.c.l.s4 1983009808
        %v5653 = vunpack.c.0.s8 %v5652
        %v5654 = vlaneseq
        %v5655 = vshrl.u32 %v5654, 7
        %v5656 = vsub.s32 %v5653, %v5655
        %v5657 = vrot.slane %v5643, %v5656
        %v5658 = vcombine.low %v5634, %v5650
        %v5659 = vcombine.high %v5634, %v5650
        %v5661 = vunpack.c.l.s4 1934713408
        %v5662 = vunpack.c.0.s8 %v5661
        %v5663 = vlaneseq
        %v5664 = vshrl.u32 %v5663, 7
        %v5665 = vsub.s32 %v5662, %v5664
        %v5666 = vrot.slane %v5658, %v5665
        %v5668 = vunpack.c.l.s4 1934713408
        %v5669 = vunpack.c.0.s8 %v5668
        %v5670 = vlaneseq
        %v5671 = vshrl.u32 %v5670, 7
        %v5672 = vsub.s32 %v5669, %v5671
        %v5673 = vrot.slane %v5659, %v5672
        %v5674 = vcombine.low %v5641, %v5657
        %v5675 = vcombine.high %v5641, %v5657
        %v5677 = vunpack.c.l.s4 1934713408
        %v5678 = vunpack.c.0.s8 %v5677
        %v5679 = vlaneseq
        %v5680 = vshrl.u32 %v5679, 7
        %v5681 = vsub.s32 %v5678, %v5680
        %v5682 = vrot.slane %v5674, %v5681
        %v5684 = vunpack.c.l.s4 1934713408
        %v5685 = vunpack.c.0.s8 %v5684
        %v5686 = vlaneseq
        %v5687 = vshrl.u32 %v5686, 7
        %v5688 = vsub.s32 %v5685, %v5687
        %v5689 = vrot.slane %v5675, %v5688
        %v5690 = vcombine.high %v5666, 0.0
        %v5691 = vcombine.high %v5673, 0.0
        %v5692 = vcombine.high %v5682, 0.0
        %v5693 = vcombine.high %v5689, 0.0
        %v5694 = vcombine.low %v5007, %v5235
        %v5695 = vcombine.high %v5007, %v5235
        %v5697 = vunpack.c.l.s4 1983009808
        %v5698 = vunpack.c.0.s8 %v5697
        %v5699 = vlaneseq
        %v5700 = vshrl.u32 %v5699, 7
        %v5701 = vsub.s32 %v5698, %v5700
        %v5702 = vrot.slane %v5694, %v5701
        %v5704 = vunpack.c.l.s4 1983009808
        %v5705 = vunpack.c.0.s8 %v5704
        %v5706 = vlaneseq
        %v5707 = vshrl.u32 %v5706, 7
        %v5708 = vsub.s32 %v5705, %v5707
        %v5709 = vrot.slane %v5695, %v5708
        %v5710 = vcombine.low %v5121, %v5349
        %v5711 = vcombine.high %v5121, %v5349
        %v5713 = vunpack.c.l.s4 1983009808
        %v5714 = vunpack.c.0.s8 %v5713
        %v5715 = vlaneseq
        %v5716 = vshrl.u32 %v5715, 7
        %v5717 = vsub.s32 %v5714, %v5716
        %v5718 = vrot.slane %v5710, %v5717
        %v5720 = vunpack.c.l.s4 1983009808
        %v5721 = vunpack.c.0.s8 %v5720
        %v5722 = vlaneseq
        %v5723 = vshrl.u32 %v5722, 7
        %v5724 = vsub.s32 %v5721, %v5723
        %v5725 = vrot.slane %v5711, %v5724
        %v5726 = vcombine.low %v5702, %v5718
        %v5727 = vcombine.high %v5702, %v5718
        %v5729 = vunpack.c.l.s4 1934713408
        %v5730 = vunpack.c.0.s8 %v5729
        %v5731 = vlaneseq
        %v5732 = vshrl.u32 %v5731, 7
        %v5733 = vsub.s32 %v5730, %v5732
        %v5734 = vrot.slane %v5726, %v5733
        %v5736 = vunpack.c.l.s4 1934713408
        %v5737 = vunpack.c.0.s8 %v5736
        %v5738 = vlaneseq
        %v5739 = vshrl.u32 %v5738, 7
        %v5740 = vsub.s32 %v5737, %v5739
        %v5741 = vrot.slane %v5727, %v5740
        %v5742 = vcombine.low %v5709, %v5725
        %v5743 = vcombine.high %v5709, %v5725
        %v5745 = vunpack.c.l.s4 1934713408
        %v5746 = vunpack.c.0.s8 %v5745
        %v5747 = vlaneseq
        %v5748 = vshrl.u32 %v5747, 7
        %v5749 = vsub.s32 %v5746, %v5748
        %v5750 = vrot.slane %v5742, %v5749
        %v5752 = vunpack.c.l.s4 1934713408
        %v5753 = vunpack.c.0.s8 %v5752
        %v5754 = vlaneseq
        %v5755 = vshrl.u32 %v5754, 7
        %v5756 = vsub.s32 %v5753, %v5755
        %v5757 = vrot.slane %v5743, %v5756
        %v5758 = vcombine.high %v5734, 0.0
        %v5759 = vcombine.high %v5741, 0.0
        %v5760 = vcombine.high %v5750, 0.0
        %v5761 = vcombine.high %v5757, 0.0
        %v5762 = vcombine.low %v5394, %v5401
        %v5764 = vunpack.c.l.s4 1983009808
        %v5765 = vunpack.c.0.s8 %v5764
        %v5766 = vlaneseq
        %v5767 = vshrl.u32 %v5766, 7
        %v5768 = vsub.s32 %v5765, %v5767
        %v5769 = vrot.slane %v5762, %v5768
        %v5770 = vcombine.low %v5418, %v5419
        %v5772 = vunpack.c.l.s4 1983009808
        %v5773 = vunpack.c.0.s8 %v5772
        %v5774 = vlaneseq
        %v5775 = vshrl.u32 %v5774, 7
        %v5776 = vsub.s32 %v5773, %v5775
        %v5777 = vrot.slane %v5770, %v5776
        %v5778 = vcombine.low %v5410, %v5417
        %v5780 = vunpack.c.l.s4 1983009808
        %v5781 = vunpack.c.0.s8 %v5780
        %v5782 = vlaneseq
        %v5783 = vshrl.u32 %v5782, 7
        %v5784 = vsub.s32 %v5781, %v5783
        %v5785 = vrot.slane %v5778, %v5784
        %v5786 = vcombine.low %v5420, %v5421
        %v5788 = vunpack.c.l.s4 1983009808
        %v5789 = vunpack.c.0.s8 %v5788
        %v5790 = vlaneseq
        %v5791 = vshrl.u32 %v5790, 7
        %v5792 = vsub.s32 %v5789, %v5791
        %v5793 = vrot.slane %v5786, %v5792
        %v5794 = vcombine.low %v5769, %v5777
        %v5795 = vcombine.high %v5769, %v5777
        %v5797 = vunpack.c.l.s4 1934713408
        %v5798 = vunpack.c.0.s8 %v5797
        %v5799 = vlaneseq
        %v5800 = vshrl.u32 %v5799, 7
        %v5801 = vsub.s32 %v5798, %v5800
        %v5802 = vrot.slane %v5794, %v5801
        %v5804 = vunpack.c.l.s4 1934713408
        %v5805 = vunpack.c.0.s8 %v5804
        %v5806 = vlaneseq
        %v5807 = vshrl.u32 %v5806, 7
        %v5808 = vsub.s32 %v5805, %v5807
        %v5809 = vrot.slane %v5795, %v5808
        %v5810 = vcombine.low %v5785, %v5793
        %v5811 = vcombine.high %v5785, %v5793
        %v5813 = vunpack.c.l.s4 1934713408
        %v5814 = vunpack.c.0.s8 %v5813
        %v5815 = vlaneseq
        %v5816 = vshrl.u32 %v5815, 7
        %v5817 = vsub.s32 %v5814, %v5816
        %v5818 = vrot.slane %v5810, %v5817
        %v5820 = vunpack.c.l.s4 1934713408
        %v5821 = vunpack.c.0.s8 %v5820
        %v5822 = vlaneseq
        %v5823 = vshrl.u32 %v5822, 7
        %v5824 = vsub.s32 %v5821, %v5823
        %v5825 = vrot.slane %v5811, %v5824
        %v5826 = vcombine.low %v5802, %v5818
        %v5827 = vcombine.high %v5802, %v5818
        %v5828 = vcombine.low %v5809, %v5825
        %v5829 = vcombine.high %v5809, %v5825
        %v5830 = vcombine.low %v5462, %v5469
        %v5832 = vunpack.c.l.s4 1983009808
        %v5833 = vunpack.c.0.s8 %v5832
        %v5834 = vlaneseq
        %v5835 = vshrl.u32 %v5834, 7
        %v5836 = vsub.s32 %v5833, %v5835
        %v5837 = vrot.slane %v5830, %v5836
        %v5838 = vcombine.low %v5486, %v5487
        %v5840 = vunpack.c.l.s4 1983009808
        %v5841 = vunpack.c.0.s8 %v5840
        %v5842 = vlaneseq
        %v5843 = vshrl.u32 %v5842, 7
        %v5844 = vsub.s32 %v5841, %v5843
        %v5845 = vrot.slane %v5838, %v5844
        %v5846 = vcombine.low %v5478, %v5485
        %v5848 = vunpack.c.l.s4 1983009808
        %v5849 = vunpack.c.0.s8 %v5848
        %v5850 = vlaneseq
        %v5851 = vshrl.u32 %v5850, 7
        %v5852 = vsub.s32 %v5849, %v5851
        %v5853 = vrot.slane %v5846, %v5852
        %v5854 = vcombine.low %v5488, %v5489
        %v5856 = vunpack.c.l.s4 1983009808
        %v5857 = vunpack.c.0.s8 %v5856
        %v5858 = vlaneseq
        %v5859 = vshrl.u32 %v5858, 7
        %v5860 = vsub.s32 %v5857, %v5859
        %v5861 = vrot.slane %v5854, %v5860
        %v5862 = vcombine.low %v5837, %v5845
        %v5863 = vcombine.high %v5837, %v5845
        %v5865 = vunpack.c.l.s4 1934713408
        %v5866 = vunpack.c.0.s8 %v5865
        %v5867 = vlaneseq
        %v5868 = vshrl.u32 %v5867, 7
        %v5869 = vsub.s32 %v5866, %v5868
        %v5870 = vrot.slane %v5862, %v5869
        %v5872 = vunpack.c.l.s4 1934713408
        %v5873 = vunpack.c.0.s8 %v5872
        %v5874 = vlaneseq
        %v5875 = vshrl.u32 %v5874, 7
        %v5876 = vsub.s32 %v5873, %v5875
        %v5877 = vrot.slane %v5863, %v5876
        %v5878 = vcombine.low %v5853, %v5861
        %v5879 = vcombine.high %v5853, %v5861
        %v5881 = vunpack.c.l.s4 1934713408
        %v5882 = vunpack.c.0.s8 %v5881
        %v5883 = vlaneseq
        %v5884 = vshrl.u32 %v5883, 7
        %v5885 = vsub.s32 %v5882, %v5884
        %v5886 = vrot.slane %v5878, %v5885
        %v5888 = vunpack.c.l.s4 1934713408
        %v5889 = vunpack.c.0.s8 %v5888
        %v5890 = vlaneseq
        %v5891 = vshrl.u32 %v5890, 7
        %v5892 = vsub.s32 %v5889, %v5891
        %v5893 = vrot.slane %v5879, %v5892
        %v5894 = vcombine.low %v5870, %v5886
        %v5895 = vcombine.high %v5870, %v5886
        %v5896 = vcombine.low %v5877, %v5893
        %v5897 = vcombine.high %v5877, %v5893
        %v5898 = vcombine.low %v5530, %v5537
        %v5900 = vunpack.c.l.s4 1983009808
        %v5901 = vunpack.c.0.s8 %v5900
        %v5902 = vlaneseq
        %v5903 = vshrl.u32 %v5902, 7
        %v5904 = vsub.s32 %v5901, %v5903
        %v5905 = vrot.slane %v5898, %v5904
        %v5906 = vcombine.low %v5554, %v5555
        %v5908 = vunpack.c.l.s4 1983009808
        %v5909 = vunpack.c.0.s8 %v5908
        %v5910 = vlaneseq
        %v5911 = vshrl.u32 %v5910, 7
        %v5912 = vsub.s32 %v5909, %v5911
        %v5913 = vrot.slane %v5906, %v5912
        %v5914 = vcombine.low %v5546, %v5553
        %v5916 = vunpack.c.l.s4 1983009808
        %v5917 = vunpack.c.0.s8 %v5916
        %v5918 = vlaneseq
        %v5919 = vshrl.u32 %v5918, 7
        %v5920 = vsub.s32 %v5917, %v5919
        %v5921 = vrot.slane %v5914, %v5920
        %v5922 = vcombine.low %v5556, %v5557
        %v5924 = vunpack.c.l.s4 1983009808
        %v5925 = vunpack.c.0.s8 %v5924
        %v5926 = vlaneseq
        %v5927 = vshrl.u32 %v5926, 7
        %v5928 = vsub.s32 %v5925, %v5927
        %v5929 = vrot.slane %v5922, %v5928
        %v5930 = vcombine.low %v5905, %v5913
        %v5931 = vcombine.high %v5905, %v5913
        %v5933 = vunpack.c.l.s4 1934713408
        %v5934 = vunpack.c.0.s8 %v5933
        %v5935 = vlaneseq
        %v5936 = vshrl.u32 %v5935, 7
        %v5937 = vsub.s32 %v5934, %v5936
        %v5938 = vrot.slane %v5930, %v5937
        %v5940 = vunpack.c.l.s4 1934713408
        %v5941 = vunpack.c.0.s8 %v5940
        %v5942 = vlaneseq
        %v5943 = vshrl.u32 %v5942, 7
        %v5944 = vsub.s32 %v5941, %v5943
        %v5945 = vrot.slane %v5931, %v5944
        %v5946 = vcombine.low %v5921, %v5929
        %v5947 = vcombine.high %v5921, %v5929
        %v5949 = vunpack.c.l.s4 1934713408
        %v5950 = vunpack.c.0.s8 %v5949
        %v5951 = vlaneseq
        %v5952 = vshrl.u32 %v5951, 7
        %v5953 = vsub.s32 %v5950, %v5952
        %v5954 = vrot.slane %v5946, %v5953
        %v5956 = vunpack.c.l.s4 1934713408
        %v5957 = vunpack.c.0.s8 %v5956
        %v5958 = vlaneseq
        %v5959 = vshrl.u32 %v5958, 7
        %v5960 = vsub.s32 %v5957, %v5959
        %v5961 = vrot.slane %v5947, %v5960
        %v5962 = vcombine.low %v5938, %v5954
        %v5963 = vcombine.high %v5938, %v5954
        %v5964 = vcombine.low %v5945, %v5961
        %v5965 = vcombine.high %v5945, %v5961
        %v5966 = vcombine.low %v5598, %v5605
        %v5968 = vunpack.c.l.s4 1983009808
        %v5969 = vunpack.c.0.s8 %v5968
        %v5970 = vlaneseq
        %v5971 = vshrl.u32 %v5970, 7
        %v5972 = vsub.s32 %v5969, %v5971
        %v5973 = vrot.slane %v5966, %v5972
        %v5974 = vcombine.low %v5622, %v5623
        %v5976 = vunpack.c.l.s4 1983009808
        %v5977 = vunpack.c.0.s8 %v5976
        %v5978 = vlaneseq
        %v5979 = vshrl.u32 %v5978, 7
        %v5980 = vsub.s32 %v5977, %v5979
        %v5981 = vrot.slane %v5974, %v5980
        %v5982 = vcombine.low %v5614, %v5621
        %v5984 = vunpack.c.l.s4 1983009808
        %v5985 = vunpack.c.0.s8 %v5984
        %v5986 = vlaneseq
        %v5987 = vshrl.u32 %v5986, 7
        %v5988 = vsub.s32 %v5985, %v5987
        %v5989 = vrot.slane %v5982, %v5988
        %v5990 = vcombine.low %v5624, %v5625
        %v5992 = vunpack.c.l.s4 1983009808
        %v5993 = vunpack.c.0.s8 %v5992
        %v5994 = vlaneseq
        %v5995 = vshrl.u32 %v5994, 7
        %v5996 = vsub.s32 %v5993, %v5995
        %v5997 = vrot.slane %v5990, %v5996
        %v5998 = vcombine.low %v5973, %v5981
        %v5999 = vcombine.high %v5973, %v5981
        %v6001 = vunpack.c.l.s4 1934713408
        %v6002 = vunpack.c.0.s8 %v6001
        %v6003 = vlaneseq
        %v6004 = vshrl.u32 %v6003, 7
        %v6005 = vsub.s32 %v6002, %v6004
        %v6006 = vrot.slane %v5998, %v6005
        %v6008 = vunpack.c.l.s4 1934713408
        %v6009 = vunpack.c.0.s8 %v6008
        %v6010 = vlaneseq
        %v6011 = vshrl.u32 %v6010, 7
        %v6012 = vsub.s32 %v6009, %v6011
        %v6013 = vrot.slane %v5999, %v6012
        %v6014 = vcombine.low %v5989, %v5997
        %v6015 = vcombine.high %v5989, %v5997
        %v6017 = vunpack.c.l.s4 1934713408
        %v6018 = vunpack.c.0.s8 %v6017
        %v6019 = vlaneseq
        %v6020 = vshrl.u32 %v6019, 7
        %v6021 = vsub.s32 %v6018, %v6020
        %v6022 = vrot.slane %v6014, %v6021
        %v6024 = vunpack.c.l.s4 1934713408
        %v6025 = vunpack.c.0.s8 %v6024
        %v6026 = vlaneseq
        %v6027 = vshrl.u32 %v6026, 7
        %v6028 = vsub.s32 %v6025, %v6027
        %v6029 = vrot.slane %v6015, %v6028
        %v6030 = vcombine.low %v6006, %v6022
        %v6031 = vcombine.high %v6006, %v6022
        %v6032 = vcombine.low %v6013, %v6029
        %v6033 = vcombine.high %v6013, %v6029
        %v6034 = vcombine.low %v5666, %v5673
        %v6036 = vunpack.c.l.s4 1983009808
        %v6037 = vunpack.c.0.s8 %v6036
        %v6038 = vlaneseq
        %v6039 = vshrl.u32 %v6038, 7
        %v6040 = vsub.s32 %v6037, %v6039
        %v6041 = vrot.slane %v6034, %v6040
        %v6042 = vcombine.low %v5690, %v5691
        %v6044 = vunpack.c.l.s4 1983009808
        %v6045 = vunpack.c.0.s8 %v6044
        %v6046 = vlaneseq
        %v6047 = vshrl.u32 %v6046, 7
        %v6048 = vsub.s32 %v6045, %v6047
        %v6049 = vrot.slane %v6042, %v6048
        %v6050 = vcombine.low %v5682, %v5689
        %v6052 = vunpack.c.l.s4 1983009808
        %v6053 = vunpack.c.0.s8 %v6052
        %v6054 = vlaneseq
        %v6055 = vshrl.u32 %v6054, 7
        %v6056 = vsub.s32 %v6053, %v6055
        %v6057 = vrot.slane %v6050, %v6056
        %v6058 = vcombine.low %v5692, %v5693
        %v6060 = vunpack.c.l.s4 1983009808
        %v6061 = vunpack.c.0.s8 %v6060
        %v6062 = vlaneseq
        %v6063 = vshrl.u32 %v6062, 7
        %v6064 = vsub.s32 %v6061, %v6063
        %v6065 = vrot.slane %v6058, %v6064
        %v6066 = vcombine.low %v6041, %v6049
        %v6067 = vcombine.high %v6041, %v6049
        %v6069 = vunpack.c.l.s4 1934713408
        %v6070 = vunpack.c.0.s8 %v6069
        %v6071 = vlaneseq
        %v6072 = vshrl.u32 %v6071, 7
        %v6073 = vsub.s32 %v6070, %v6072
        %v6074 = vrot.slane %v6066, %v6073
        %v6076 = vunpack.c.l.s4 1934713408
        %v6077 = vunpack.c.0.s8 %v6076
        %v6078 = vlaneseq
        %v6079 = vshrl.u32 %v6078, 7
        %v6080 = vsub.s32 %v6077, %v6079
        %v6081 = vrot.slane %v6067, %v6080
        %v6082 = vcombine.low %v6057, %v6065
        %v6083 = vcombine.high %v6057, %v6065
        %v6085 = vunpack.c.l.s4 1934713408
        %v6086 = vunpack.c.0.s8 %v6085
        %v6087 = vlaneseq
        %v6088 = vshrl.u32 %v6087, 7
        %v6089 = vsub.s32 %v6086, %v6088
        %v6090 = vrot.slane %v6082, %v6089
        %v6092 = vunpack.c.l.s4 1934713408
        %v6093 = vunpack.c.0.s8 %v6092
        %v6094 = vlaneseq
        %v6095 = vshrl.u32 %v6094, 7
        %v6096 = vsub.s32 %v6093, %v6095
        %v6097 = vrot.slane %v6083, %v6096
        %v6098 = vcombine.low %v6074, %v6090
        %v6099 = vcombine.high %v6074, %v6090
        %v6100 = vcombine.low %v6081, %v6097
        %v6101 = vcombine.high %v6081, %v6097
        %v6102 = vcombine.low %v5734, %v5741
        %v6104 = vunpack.c.l.s4 1983009808
        %v6105 = vunpack.c.0.s8 %v6104
        %v6106 = vlaneseq
        %v6107 = vshrl.u32 %v6106, 7
        %v6108 = vsub.s32 %v6105, %v6107
        %v6109 = vrot.slane %v6102, %v6108
        %v6110 = vcombine.low %v5758, %v5759
        %v6112 = vunpack.c.l.s4 1983009808
        %v6113 = vunpack.c.0.s8 %v6112
        %v6114 = vlaneseq
        %v6115 = vshrl.u32 %v6114, 7
        %v6116 = vsub.s32 %v6113, %v6115
        %v6117 = vrot.slane %v6110, %v6116
        %v6118 = vcombine.low %v5750, %v5757
        %v6120 = vunpack.c.l.s4 1983009808
        %v6121 = vunpack.c.0.s8 %v6120
        %v6122 = vlaneseq
        %v6123 = vshrl.u32 %v6122, 7
        %v6124 = vsub.s32 %v6121, %v6123
        %v6125 = vrot.slane %v6118, %v6124
        %v6126 = vcombine.low %v5760, %v5761
        %v6128 = vunpack.c.l.s4 1983009808
        %v6129 = vunpack.c.0.s8 %v6128
        %v6130 = vlaneseq
        %v6131 = vshrl.u32 %v6130, 7
        %v6132 = vsub.s32 %v6129, %v6131
        %v6133 = vrot.slane %v6126, %v6132
        %v6134 = vcombine.low %v6109, %v6117
        %v6135 = vcombine.high %v6109, %v6117
        %v6137 = vunpack.c.l.s4 1934713408
        %v6138 = vunpack.c.0.s8 %v6137
        %v6139 = vlaneseq
        %v6140 = vshrl.u32 %v6139, 7
        %v6141 = vsub.s32 %v6138, %v6140
        %v6142 = vrot.slane %v6134, %v6141
        %v6144 = vunpack.c.l.s4 1934713408
        %v6145 = vunpack.c.0.s8 %v6144
        %v6146 = vlaneseq
        %v6147 = vshrl.u32 %v6146, 7
        %v6148 = vsub.s32 %v6145, %v6147
        %v6149 = vrot.slane %v6135, %v6148
        %v6150 = vcombine.low %v6125, %v6133
        %v6151 = vcombine.high %v6125, %v6133
        %v6153 = vunpack.c.l.s4 1934713408
        %v6154 = vunpack.c.0.s8 %v6153
        %v6155 = vlaneseq
        %v6156 = vshrl.u32 %v6155, 7
        %v6157 = vsub.s32 %v6154, %v6156
        %v6158 = vrot.slane %v6150, %v6157
        %v6160 = vunpack.c.l.s4 1934713408
        %v6161 = vunpack.c.0.s8 %v6160
        %v6162 = vlaneseq
        %v6163 = vshrl.u32 %v6162, 7
        %v6164 = vsub.s32 %v6161, %v6163
        %v6165 = vrot.slane %v6151, %v6164
        %v6166 = vcombine.low %v6142, %v6158
        %v6167 = vcombine.high %v6142, %v6158
        %v6168 = vcombine.low %v6149, %v6165
        %v6169 = vcombine.high %v6149, %v6165
        %6176 = vrot.lane.b32.xlu0 %v5827, 8
        %v6177 = vpop.permute.xlu0 %6176
        %6178 = vrot.lane.b32.xlu0 %v5895, 8
        %v6179 = vpop.permute.xlu0 %6178
        %6180 = vrot.lane.b32.xlu0 %v5963, 8
        %v6181 = vpop.permute.xlu0 %6180
        %6182 = vrot.lane.b32.xlu0 %v6031, 8
        %v6183 = vpop.permute.xlu0 %6182
        %6184 = vrot.lane.b32.xlu0 %v6099, 8
        %v6185 = vpop.permute.xlu0 %6184
        %6186 = vrot.lane.b32.xlu0 %v6167, 8
        %v6187 = vpop.permute.xlu0 %6186
        %6200 = vrot.lane.b32.xlu0 %v5828, 16
        %v6201 = vpop.permute.xlu0 %6200
        %6202 = vrot.lane.b32.xlu0 %v5896, 16
        %v6203 = vpop.permute.xlu0 %6202
        %6204 = vrot.lane.b32.xlu0 %v5964, 16
        %v6205 = vpop.permute.xlu0 %6204
        %6206 = vrot.lane.b32.xlu0 %v6032, 16
        %v6207 = vpop.permute.xlu0 %6206
        %6208 = vrot.lane.b32.xlu0 %v6100, 16
        %v6209 = vpop.permute.xlu0 %6208
        %6210 = vrot.lane.b32.xlu0 %v6168, 16
        %v6211 = vpop.permute.xlu0 %6210
        %6224 = vrot.lane.b32.xlu0 %v5829, 24
        %v6225 = vpop.permute.xlu0 %6224
        %6226 = vrot.lane.b32.xlu0 %v5897, 24
        %v6227 = vpop.permute.xlu0 %6226
        %6228 = vrot.lane.b32.xlu0 %v5965, 24
        %v6229 = vpop.permute.xlu0 %6228
        %6230 = vrot.lane.b32.xlu0 %v6033, 24
        %v6231 = vpop.permute.xlu0 %6230
        %6232 = vrot.lane.b32.xlu0 %v6101, 24
        %v6233 = vpop.permute.xlu0 %6232
        %6234 = vrot.lane.b32.xlu0 %v6169, 24
        %v6235 = vpop.permute.xlu0 %6234
        %v6242 = vsel %vm4135, %v5826, %v6177
        %v6243 = vsel %vm4135, %v5894, %v6179
        %v6244 = vsel %vm4135, %v5962, %v6181
        %v6245 = vsel %vm4135, %v6030, %v6183
        %v6246 = vsel %vm4135, %v6098, %v6185
        %v6247 = vsel %vm4135, %v6166, %v6187
        %vm6248 = vcmask 130048
        %v6249 = vsel %vm6248, %v6242, %v6201
        %v6250 = vsel %vm6248, %v6243, %v6203
        %v6251 = vsel %vm6248, %v6244, %v6205
        %v6252 = vsel %vm6248, %v6245, %v6207
        %v6253 = vsel %vm6248, %v6246, %v6209
        %v6254 = vsel %vm6248, %v6247, %v6211
        %v6255 = vsel %vm4616, %v6249, %v6225
        %v6256 = vsel %vm4616, %v6250, %v6227
        %v6257 = vsel %vm4616, %v6251, %v6229
        %v6258 = vsel %vm4616, %v6252, %v6231
        %v6259 = vsel %vm4616, %v6253, %v6233
        %v6260 = vsel %vm4616, %v6254, %v6235
        %v6261 = vld [vmem:[%s982] sm:$0xf]
        %v6262 = vld [vmem:[%s982 + $0x4] sm:$0xf]
        %v6263 = vld [vmem:[%s982 + $0x8] sm:$0xf]
        %v6264 = vld [vmem:[%s982 + $0xc] sm:$0xf]
        %v6265 = vld [vmem:[%s985] sm:$0x1]
        %v6266 = vpack.c.bf16 %v6256, %v6255
        %v6267 = vpack.c.bf16 %v6258, %v6257
        %v6268 = vpack.c.bf16 %v6260, %v6259
        %v6270 = vlaneseq
        %v6271 = vshrl.u32 %v6270, 7
        %v6272 = vsub.s32 0, %v6271
        %v6273 = vrot.slane %v6265, %v6272
        %v6279 = vunpack.c.l.b16 %v6261
        %v6280 = vunpack.c.l.b16 %v6262
        %v6281 = vunpack.c.l.b16 %v6263
        %v6282 = vunpack.c.l.b16 %v6264
        %v6283 = vpack.c.b16 %v6280, %v6279
        %v6284 = vpack.c.b16 %v6282, %v6281
        %v6288 = vsel %vm1227, %v6266, 0
        %v6291 = vsel %vm1227, %v6267, 0
        %v6294 = vsel %vm1227, %v6268, 0
        %6296 = vmatprep.subr.bf16.mxu0 0
        %6297 = vmatpush1.bf16.msra.mxu0 0
        %6298 = vmatprep.subr.bf16.mxu0 0
        %6299 = vmatpush1.bf16.msra.mxu0 0
        %6300 = vmatprep.subr.bf16.mxu0 0
        %6301 = vmatpush1.bf16.msra.mxu0 0
        %6302 = vmatprep.subr.bf16.mxu0 0
        %6303 = vmatpush1.bf16.msra.mxu0 0
        %6304 = vmatprep.subr.bf16.mxu0 0
        %6305 = vmatpush1.bf16.msra.mxu0 0
        %6306 = vmatprep.subr.bf16.mxu0 0
        %6307 = vmatpush1.bf16.msra.mxu0 0
        %6308 = vmatprep.subr.bf16.mxu0 0
        %6309 = vmatpush1.bf16.msra.mxu0 %v6284
        %6310 = vmatprep.subr.bf16.mxu0 0
        %6311 = vmatpush1.bf16.msra.mxu0 %v6283
        %6312 = vmatprep.subr.bf16.mxu0 0
        %6313 = vmatpush2.bf16.msra.mxu0 0
        %6314 = vmatprep.subr.bf16.mxu0 0
        %6315 = vmatpush2.bf16.msra.mxu0 0
        %6316 = vmatprep.subr.bf16.mxu0 0
        %6317 = vmatpush2.bf16.msra.mxu0 0
        %6318 = vmatprep.subr.bf16.mxu0 0
        %6319 = vmatpush2.bf16.msra.mxu0 0
        %6320 = vmatprep.subr.bf16.mxu0 0
        %6321 = vmatpush2.bf16.msra.mxu0 0
        %6322 = vmatprep.subr.bf16.mxu0 0
        %6323 = vmatpush2.bf16.msra.mxu0 0
        %6324 = vmatprep.subr.bf16.mxu0 0
        %6325 = vmatpush2.bf16.msra.mxu0 0
        %6326 = vmatprep.subr.bf16.mxu0 0
        %6327 = vmatpush2.bf16.msra.mxu0 0
        %6328 = vmatprep.mubr.bf16.mxu0 0
        %6329 = vmatmul.mubr.bf16.gmra.mxu0 %v6288
        %v6330 = vpop.f32.mrf.mxu0
        %v6331 = vadd.f32 %v6273, %v6330
        %v6332 = vpop.f32.mrf.mxu0
        %v6333 = vpop.f32.mrf.mxu0
        %v6334 = vadd.f32 %v6273, %v6333
        %v6335 = vpop.f32.mrf.mxu0
        %6336 = vmatprep.mubr.bf16.mxu0 0
        %6337 = vmatmul.mubr.bf16.gmra.mxu0 %v6291
        %v6338 = vpop.f32.mrf.mxu0
        %v6339 = vadd.f32 %v6273, %v6338
        %v6340 = vpop.f32.mrf.mxu0
        %v6341 = vpop.f32.mrf.mxu0
        %v6342 = vadd.f32 %v6273, %v6341
        %v6343 = vpop.f32.mrf.mxu0
        %6344 = vmatprep.mubr.bf16.mxu0 0
        %6345 = vmatmul.mubr.bf16.gmra.mxu0 %v6294
        %v6346 = vpop.f32.mrf.mxu0
        %v6347 = vadd.f32 %v6273, %v6346
        %v6348 = vpop.f32.mrf.mxu0
        %v6349 = vpop.f32.mrf.mxu0
        %v6350 = vadd.f32 %v6273, %v6349
        %v6351 = vpop.f32.mrf.mxu0
        %6352 = vdwg.mxu0
        %v6353 = vadd.f32 %v1219, %v6331
        %v6354 = vadd.f32 %v1220, %v6334
        %v6355 = vadd.f32 %v1221, %v6339
        %v6356 = vadd.f32 %v1222, %v6342
        %v6357 = vadd.f32 %v1223, %v6347
        %v6358 = vadd.f32 %v1224, %v6350
        %v6359 = vld [vmem:[%s856] sm:$0x1]
        %v6360 = vld [vmem:[%s988] sm:$0x1]
        %v6361 = vsel %vm1227, %v6353, 0.0
        %6362 = vadd.xlane.f32.xlu0 %v6361
        %v6363 = vpop.xlane.xlu0 %6362
        %v6364 = vsel %vm1227, %v6354, 0.0
        %6365 = vadd.xlane.f32.xlu0 %v6364
        %v6366 = vpop.xlane.xlu0 %6365
        %v6367 = vsel %vm1227, %v6355, 0.0
        %6368 = vadd.xlane.f32.xlu0 %v6367
        %v6369 = vpop.xlane.xlu0 %6368
        %v6370 = vsel %vm1227, %v6356, 0.0
        %6371 = vadd.xlane.f32.xlu0 %v6370
        %v6372 = vpop.xlane.xlu0 %6371
        %v6373 = vsel %vm1227, %v6357, 0.0
        %6374 = vadd.xlane.f32.xlu0 %v6373
        %v6375 = vpop.xlane.xlu0 %6374
        %v6376 = vsel %vm1227, %v6358, 0.0
        %6377 = vadd.xlane.f32.xlu0 %v6376
        %v6378 = vpop.xlane.xlu0 %6377
        %v6379 = vmul.f32 %v6363, %v1246
        %v6380 = vmul.f32 %v6366, %v1246
        %v6381 = vmul.f32 %v6369, %v1246
        %v6382 = vmul.f32 %v6372, %v1246
        %v6383 = vmul.f32 %v6375, %v1246
        %v6384 = vmul.f32 %v6378, %v1246
        %v6385 = vmul.f32 %v6353, %v6353
        %v6386 = vmul.f32 %v6354, %v6354
        %v6387 = vmul.f32 %v6355, %v6355
        %v6388 = vmul.f32 %v6356, %v6356
        %v6389 = vmul.f32 %v6357, %v6357
        %v6390 = vmul.f32 %v6358, %v6358
        %v6391 = vsel %vm1227, %v6385, 0.0
        %6392 = vadd.xlane.f32.xlu0 %v6391
        %v6393 = vpop.xlane.xlu0 %6392
        %v6394 = vsel %vm1227, %v6386, 0.0
        %6395 = vadd.xlane.f32.xlu0 %v6394
        %v6396 = vpop.xlane.xlu0 %6395
        %v6397 = vsel %vm1227, %v6387, 0.0
        %6398 = vadd.xlane.f32.xlu0 %v6397
        %v6399 = vpop.xlane.xlu0 %6398
        %v6400 = vsel %vm1227, %v6388, 0.0
        %6401 = vadd.xlane.f32.xlu0 %v6400
        %v6402 = vpop.xlane.xlu0 %6401
        %v6403 = vsel %vm1227, %v6389, 0.0
        %6404 = vadd.xlane.f32.xlu0 %v6403
        %v6405 = vpop.xlane.xlu0 %6404
        %v6406 = vsel %vm1227, %v6390, 0.0
        %6407 = vadd.xlane.f32.xlu0 %v6406
        %v6408 = vpop.xlane.xlu0 %6407
        %v6409 = vmul.f32 %v6393, %v1246
        %v6410 = vmul.f32 %v6396, %v1246
        %v6411 = vmul.f32 %v6399, %v1246
        %v6412 = vmul.f32 %v6402, %v1246
        %v6413 = vmul.f32 %v6405, %v1246
        %v6414 = vmul.f32 %v6408, %v1246
        %v6415 = vmul.f32 %v6379, %v6379
        %v6416 = vmul.f32 %v6380, %v6380
        %v6417 = vmul.f32 %v6381, %v6381
        %v6418 = vmul.f32 %v6382, %v6382
        %v6419 = vmul.f32 %v6383, %v6383
        %v6420 = vmul.f32 %v6384, %v6384
        %v6421 = vsub.f32 %v6409, %v6415
        %v6422 = vsub.f32 %v6410, %v6416
        %v6423 = vsub.f32 %v6411, %v6417
        %v6424 = vsub.f32 %v6412, %v6418
        %v6425 = vsub.f32 %v6413, %v6419
        %v6426 = vsub.f32 %v6414, %v6420
        %v6427 = vsub.f32 %v6353, %v6379
        %v6428 = vsub.f32 %v6354, %v6380
        %v6429 = vsub.f32 %v6355, %v6381
        %v6430 = vsub.f32 %v6356, %v6382
        %v6431 = vsub.f32 %v6357, %v6383
        %v6432 = vsub.f32 %v6358, %v6384
        %v6433 = vadd.f32 %v6421, 1e-05
        %v6434 = vadd.f32 %v6422, 1e-05
        %v6435 = vadd.f32 %v6423, 1e-05
        %v6436 = vadd.f32 %v6424, 1e-05
        %v6437 = vadd.f32 %v6425, 1e-05
        %v6438 = vadd.f32 %v6426, 1e-05
        %v6439 = vrsqrt.pop %v6433
        %v6440 = vrsqrt.pop %v6434
        %v6441 = vrsqrt.pop %v6435
        %v6442 = vrsqrt.pop %v6436
        %v6443 = vrsqrt.pop %v6437
        %v6444 = vrsqrt.pop %v6438
        %v6445 = vmul.f32 %v6427, %v6439
        %v6446 = vmul.f32 %v6428, %v6440
        %v6447 = vmul.f32 %v6429, %v6441
        %v6448 = vmul.f32 %v6430, %v6442
        %v6449 = vmul.f32 %v6431, %v6443
        %v6450 = vmul.f32 %v6432, %v6444
        %v6452 = vlaneseq
        %v6453 = vshrl.u32 %v6452, 7
        %v6454 = vsub.s32 0, %v6453
        %v6455 = vrot.slane %v6359, %v6454
        %v6457 = vmul.f32 %v6445, %v6455
        %v6458 = vmul.f32 %v6446, %v6455
        %v6459 = vmul.f32 %v6447, %v6455
        %v6460 = vmul.f32 %v6448, %v6455
        %v6461 = vmul.f32 %v6449, %v6455
        %v6462 = vmul.f32 %v6450, %v6455
        %v6464 = vlaneseq
        %v6465 = vshrl.u32 %v6464, 7
        %v6466 = vsub.s32 0, %v6465
        %v6467 = vrot.slane %v6360, %v6466
        %v6469 = vadd.f32 %v6457, %v6467
        %v6470 = vadd.f32 %v6458, %v6467
        %v6471 = vadd.f32 %v6459, %v6467
        %v6472 = vadd.f32 %v6460, %v6467
        %v6473 = vadd.f32 %v6461, %v6467
        %v6474 = vadd.f32 %v6462, %v6467
        %v6475 = vld [vmem:[%s993] sm:$0xf]
        %v6476 = vld [vmem:[%s993 + $0x4] sm:$0xf]
        %v6477 = vld [vmem:[%s993 + $0x8] sm:$0xf]
        %v6478 = vld [vmem:[%s993 + $0xc] sm:$0xf]
        %v6479 = vld [vmem:[%s996] sm:$0x1]
        %v6480 = vpack.c.bf16 %v6470, %v6469
        %v6481 = vpack.c.bf16 %v6472, %v6471
        %v6482 = vpack.c.bf16 %v6474, %v6473
        %v6484 = vlaneseq
        %v6485 = vshrl.u32 %v6484, 7
        %v6486 = vsub.s32 0, %v6485
        %v6487 = vrot.slane %v6479, %v6486
        %v6493 = vunpack.c.l.b16 %v6475
        %v6494 = vunpack.c.l.b16 %v6476
        %v6495 = vunpack.c.l.b16 %v6477
        %v6496 = vunpack.c.l.b16 %v6478
        %v6497 = vpack.c.b16 %v6494, %v6493
        %v6498 = vpack.c.b16 %v6496, %v6495
        %v6502 = vsel %vm1227, %v6480, 0
        %v6505 = vsel %vm1227, %v6481, 0
        %v6508 = vsel %vm1227, %v6482, 0
        %6510 = vmatprep.subr.bf16.mxu0 0
        %6511 = vmatpush1.bf16.msra.mxu0 0
        %6512 = vmatprep.subr.bf16.mxu0 0
        %6513 = vmatpush1.bf16.msra.mxu0 0
        %6514 = vmatprep.subr.bf16.mxu0 0
        %6515 = vmatpush1.bf16.msra.mxu0 0
        %6516 = vmatprep.subr.bf16.mxu0 0
        %6517 = vmatpush1.bf16.msra.mxu0 0
        %6518 = vmatprep.subr.bf16.mxu0 0
        %6519 = vmatpush1.bf16.msra.mxu0 0
        %6520 = vmatprep.subr.bf16.mxu0 0
        %6521 = vmatpush1.bf16.msra.mxu0 0
        %6522 = vmatprep.subr.bf16.mxu0 0
        %6523 = vmatpush1.bf16.msra.mxu0 %v6498
        %6524 = vmatprep.subr.bf16.mxu0 0
        %6525 = vmatpush1.bf16.msra.mxu0 %v6497
        %6526 = vmatprep.subr.bf16.mxu0 0
        %6527 = vmatpush2.bf16.msra.mxu0 0
        %6528 = vmatprep.subr.bf16.mxu0 0
        %6529 = vmatpush2.bf16.msra.mxu0 0
        %6530 = vmatprep.subr.bf16.mxu0 0
        %6531 = vmatpush2.bf16.msra.mxu0 0
        %6532 = vmatprep.subr.bf16.mxu0 0
        %6533 = vmatpush2.bf16.msra.mxu0 0
        %6534 = vmatprep.subr.bf16.mxu0 0
        %6535 = vmatpush2.bf16.msra.mxu0 0
        %6536 = vmatprep.subr.bf16.mxu0 0
        %6537 = vmatpush2.bf16.msra.mxu0 0
        %6538 = vmatprep.subr.bf16.mxu0 0
        %6539 = vmatpush2.bf16.msra.mxu0 0
        %6540 = vmatprep.subr.bf16.mxu0 0
        %6541 = vmatpush2.bf16.msra.mxu0 0
        %6542 = vmatprep.mubr.bf16.mxu0 0
        %6543 = vmatmul.mubr.bf16.gmra.mxu0 %v6502
        %v6544 = vpop.f32.mrf.mxu0
        %v6545 = vadd.f32 %v6487, %v6544
        %v6546 = vpop.f32.mrf.mxu0
        %v6547 = vpop.f32.mrf.mxu0
        %v6548 = vadd.f32 %v6487, %v6547
        %v6549 = vpop.f32.mrf.mxu0
        %6550 = vmatprep.mubr.bf16.mxu0 0
        %6551 = vmatmul.mubr.bf16.gmra.mxu0 %v6505
        %v6552 = vpop.f32.mrf.mxu0
        %v6553 = vadd.f32 %v6487, %v6552
        %v6554 = vpop.f32.mrf.mxu0
        %v6555 = vpop.f32.mrf.mxu0
        %v6556 = vadd.f32 %v6487, %v6555
        %v6557 = vpop.f32.mrf.mxu0
        %6558 = vmatprep.mubr.bf16.mxu0 0
        %6559 = vmatmul.mubr.bf16.gmra.mxu0 %v6508
        %v6560 = vpop.f32.mrf.mxu0
        %v6561 = vadd.f32 %v6487, %v6560
        %v6562 = vpop.f32.mrf.mxu0
        %v6563 = vpop.f32.mrf.mxu0
        %v6564 = vadd.f32 %v6487, %v6563
        %v6565 = vpop.f32.mrf.mxu0
        %6566 = vdwg.mxu0
        %v6567 = vmul.f32 %v6545, 0.5
        %v6568 = vmul.f32 %v6548, 0.5
        %v6569 = vmul.f32 %v6553, 0.5
        %v6570 = vmul.f32 %v6556, 0.5
        %v6571 = vmul.f32 %v6561, 0.5
        %v6572 = vmul.f32 %v6564, 0.5
        %v6573 = vmul.f32 %v6545, 0.044715
        %v6574 = vmul.f32 %v6548, 0.044715
        %v6575 = vmul.f32 %v6553, 0.044715
        %v6576 = vmul.f32 %v6556, 0.044715
        %v6577 = vmul.f32 %v6561, 0.044715
        %v6578 = vmul.f32 %v6564, 0.044715
        %v6579 = vmul.f32 %v6573, %v6545
        %v6580 = vmul.f32 %v6574, %v6548
        %v6581 = vmul.f32 %v6575, %v6553
        %v6582 = vmul.f32 %v6576, %v6556
        %v6583 = vmul.f32 %v6577, %v6561
        %v6584 = vmul.f32 %v6578, %v6564
        %v6585 = vmul.f32 %v6579, %v6545
        %v6586 = vmul.f32 %v6580, %v6548
        %v6587 = vmul.f32 %v6581, %v6553
        %v6588 = vmul.f32 %v6582, %v6556
        %v6589 = vmul.f32 %v6583, %v6561
        %v6590 = vmul.f32 %v6584, %v6564
        %v6591 = vadd.f32 %v6545, %v6585
        %v6592 = vadd.f32 %v6548, %v6586
        %v6593 = vadd.f32 %v6553, %v6587
        %v6594 = vadd.f32 %v6556, %v6588
        %v6595 = vadd.f32 %v6561, %v6589
        %v6596 = vadd.f32 %v6564, %v6590
        %v6597 = vmul.f32 %v6591, 0.7978846
        %v6598 = vmul.f32 %v6592, 0.7978846
        %v6599 = vmul.f32 %v6593, 0.7978846
        %v6600 = vmul.f32 %v6594, 0.7978846
        %v6601 = vmul.f32 %v6595, 0.7978846
        %v6602 = vmul.f32 %v6596, 0.7978846
        %v6603 = vtanh.pop %v6597
        %v6604 = vtanh.pop %v6598
        %v6605 = vtanh.pop %v6599
        %v6606 = vtanh.pop %v6600
        %v6607 = vtanh.pop %v6601
        %v6608 = vtanh.pop %v6602
        %v6609 = vadd.f32 %v6603, 1.0
        %v6610 = vadd.f32 %v6604, 1.0
        %v6611 = vadd.f32 %v6605, 1.0
        %v6612 = vadd.f32 %v6606, 1.0
        %v6613 = vadd.f32 %v6607, 1.0
        %v6614 = vadd.f32 %v6608, 1.0
        %v6615 = vmul.f32 %v6567, %v6609
        %v6616 = vmul.f32 %v6568, %v6610
        %v6617 = vmul.f32 %v6569, %v6611
        %v6618 = vmul.f32 %v6570, %v6612
        %v6619 = vmul.f32 %v6571, %v6613
        %v6620 = vmul.f32 %v6572, %v6614
        %v6621 = vld [vmem:[%s1001] sm:$0xf]
        %v6622 = vld [vmem:[%s1001 + $0x4] sm:$0xf]
        %v6623 = vld [vmem:[%s1001 + $0x8] sm:$0xf]
        %v6624 = vld [vmem:[%s1001 + $0xc] sm:$0xf]
        %v6625 = vld [vmem:[%s1001 + $0x10] sm:$0xf]
        %v6626 = vld [vmem:[%s1001 + $0x14] sm:$0xf]
        %v6627 = vld [vmem:[%s1001 + $0x18] sm:$0xf]
        %v6628 = vld [vmem:[%s1001 + $0x1c] sm:$0xf]
        %v6629 = vld [vmem:[%s1004] sm:$0x1]
        %v6630 = vpack.c.bf16 %v6616, %v6615
        %v6631 = vpack.c.bf16 %v6618, %v6617
        %v6632 = vpack.c.bf16 %v6620, %v6619
        %v6634 = vlaneseq
        %v6635 = vshrl.u32 %v6634, 7
        %v6636 = vsub.s32 0, %v6635
        %v6637 = vrot.slane %v6629, %v6636
        %v6647 = vunpack.c.l.b16 %v6621
        %v6648 = vunpack.c.l.b16 %v6622
        %v6649 = vunpack.c.l.b16 %v6623
        %v6650 = vunpack.c.l.b16 %v6624
        %v6651 = vunpack.c.l.b16 %v6625
        %v6652 = vunpack.c.l.b16 %v6626
        %v6653 = vunpack.c.l.b16 %v6627
        %v6654 = vunpack.c.l.b16 %v6628
        %v6655 = vpack.c.b16 %v6648, %v6647
        %v6656 = vpack.c.b16 %v6650, %v6649
        %v6657 = vpack.c.b16 %v6652, %v6651
        %v6658 = vpack.c.b16 %v6654, %v6653
        %vm6663 = vcmask 523264
        %v6665 = vsel %vm6663, %v6630, 0
        %v6668 = vsel %vm6663, %v6631, 0
        %v6671 = vsel %vm6663, %v6632, 0
        %6673 = vmatprep.subr.bf16.mxu0 0
        %6674 = vmatpush1.bf16.msra.mxu0 0
        %6675 = vmatprep.subr.bf16.mxu0 0
        %6676 = vmatpush1.bf16.msra.mxu0 0
        %6677 = vmatprep.subr.bf16.mxu0 0
        %6678 = vmatpush1.bf16.msra.mxu0 0
        %6679 = vmatprep.subr.bf16.mxu0 0
        %6680 = vmatpush1.bf16.msra.mxu0 0
        %6681 = vmatprep.subr.bf16.mxu0 0
        %6682 = vmatpush1.bf16.msra.mxu0 %v6658
        %6683 = vmatprep.subr.bf16.mxu0 0
        %6684 = vmatpush1.bf16.msra.mxu0 %v6657
        %6685 = vmatprep.subr.bf16.mxu0 0
        %6686 = vmatpush1.bf16.msra.mxu0 %v6656
        %6687 = vmatprep.subr.bf16.mxu0 0
        %6688 = vmatpush1.bf16.msra.mxu0 %v6655
        %6689 = vmatprep.subr.bf16.mxu0 0
        %6690 = vmatpush2.bf16.msra.mxu0 0
        %6691 = vmatprep.subr.bf16.mxu0 0
        %6692 = vmatpush2.bf16.msra.mxu0 0
        %6693 = vmatprep.subr.bf16.mxu0 0
        %6694 = vmatpush2.bf16.msra.mxu0 0
        %6695 = vmatprep.subr.bf16.mxu0 0
        %6696 = vmatpush2.bf16.msra.mxu0 0
        %6697 = vmatprep.subr.bf16.mxu0 0
        %6698 = vmatpush2.bf16.msra.mxu0 0
        %6699 = vmatprep.subr.bf16.mxu0 0
        %6700 = vmatpush2.bf16.msra.mxu0 0
        %6701 = vmatprep.subr.bf16.mxu0 0
        %6702 = vmatpush2.bf16.msra.mxu0 0
        %6703 = vmatprep.subr.bf16.mxu0 0
        %6704 = vmatpush2.bf16.msra.mxu0 0
        %6705 = vmatprep.mubr.bf16.mxu0 0
        %6706 = vmatmul.mubr.bf16.gmra.mxu0 %v6665
        %v6707 = vpop.f32.mrf.mxu0
        %v6708 = vadd.f32 %v6637, %v6707
        %v6709 = vpop.f32.mrf.mxu0
        %v6710 = vpop.f32.mrf.mxu0
        %v6711 = vadd.f32 %v6637, %v6710
        %v6712 = vpop.f32.mrf.mxu0
        %6713 = vmatprep.mubr.bf16.mxu0 0
        %6714 = vmatmul.mubr.bf16.gmra.mxu0 %v6668
        %v6715 = vpop.f32.mrf.mxu0
        %v6716 = vadd.f32 %v6637, %v6715
        %v6717 = vpop.f32.mrf.mxu0
        %v6718 = vpop.f32.mrf.mxu0
        %v6719 = vadd.f32 %v6637, %v6718
        %v6720 = vpop.f32.mrf.mxu0
        %6721 = vmatprep.mubr.bf16.mxu0 0
        %6722 = vmatmul.mubr.bf16.gmra.mxu0 %v6671
        %v6723 = vpop.f32.mrf.mxu0
        %v6724 = vadd.f32 %v6637, %v6723
        %v6725 = vpop.f32.mrf.mxu0
        %v6726 = vpop.f32.mrf.mxu0
        %v6727 = vadd.f32 %v6637, %v6726
        %v6728 = vpop.f32.mrf.mxu0
        %6729 = vdwg.mxu0
        %v6730 = vadd.f32 %v6353, %v6708
        %v6731 = vadd.f32 %v6354, %v6711
        %v6732 = vadd.f32 %v6355, %v6716
        %v6733 = vadd.f32 %v6356, %v6719
        %v6734 = vadd.f32 %v6357, %v6724
        %v6735 = vadd.f32 %v6358, %v6727
        %6736 = vst.msk [vmem:[#allocation2] sm:$0xff] %vm1227, %v6730
        %6737 = vst.msk [vmem:[#allocation2 + $0x8] sm:$0xff] %vm1227, %v6731
        %6738 = vst.msk [vmem:[#allocation2 + $0x10] sm:$0xff] %vm1227, %v6732
        %6739 = vst.msk [vmem:[#allocation2 + $0x18] sm:$0xff] %vm1227, %v6733
        %6740 = vst.msk [vmem:[#allocation2 + $0x20] sm:$0xff] %vm1227, %v6734
        %6741 = vst.msk [vmem:[#allocation2 + $0x28] sm:$0xff] %vm1227, %v6735
        %p6742 = scmp.eq.s32.totalorder %s49, 1
        // Predicated region
        $region141: #{tpu_custom_call.1} parent=107 // pred_check
          %p6743 = pneg %p6742
        $region142: #{tpu_custom_call.1} parent=107 // pred_check_branch
          %6745 = sbr.rel (%p6743) target = $region144
        $region143: #{tpu_custom_call.1} parent=107 // pred_region
          %v6746 = vld [vmem:[%s18] sm:$0x1]
          %v6747 = vld [vmem:[%s19] sm:$0x1]
          %v6748 = vsel %vm1227, %v6730, 0.0
          %6749 = vadd.xlane.f32.xlu0 %v6748
          %v6750 = vpop.xlane.xlu0 %6749
          %v6751 = vsel %vm1227, %v6731, 0.0
          %6752 = vadd.xlane.f32.xlu0 %v6751
          %v6753 = vpop.xlane.xlu0 %6752
          %v6754 = vsel %vm1227, %v6732, 0.0
          %6755 = vadd.xlane.f32.xlu0 %v6754
          %v6756 = vpop.xlane.xlu0 %6755
          %v6757 = vsel %vm1227, %v6733, 0.0
          %6758 = vadd.xlane.f32.xlu0 %v6757
          %v6759 = vpop.xlane.xlu0 %6758
          %v6760 = vsel %vm1227, %v6734, 0.0
          %6761 = vadd.xlane.f32.xlu0 %v6760
          %v6762 = vpop.xlane.xlu0 %6761
          %v6763 = vsel %vm1227, %v6735, 0.0
          %6764 = vadd.xlane.f32.xlu0 %v6763
          %v6765 = vpop.xlane.xlu0 %6764
          %v6766 = vmul.f32 %v6750, %v1246
          %v6767 = vmul.f32 %v6753, %v1246
          %v6768 = vmul.f32 %v6756, %v1246
          %v6769 = vmul.f32 %v6759, %v1246
          %v6770 = vmul.f32 %v6762, %v1246
          %v6771 = vmul.f32 %v6765, %v1246
          %v6772 = vmul.f32 %v6730, %v6730
          %v6773 = vmul.f32 %v6731, %v6731
          %v6774 = vmul.f32 %v6732, %v6732
          %v6775 = vmul.f32 %v6733, %v6733
          %v6776 = vmul.f32 %v6734, %v6734
          %v6777 = vmul.f32 %v6735, %v6735
          %v6778 = vsel %vm1227, %v6772, 0.0
          %6779 = vadd.xlane.f32.xlu0 %v6778
          %v6780 = vpop.xlane.xlu0 %6779
          %v6781 = vsel %vm1227, %v6773, 0.0
          %6782 = vadd.xlane.f32.xlu0 %v6781
          %v6783 = vpop.xlane.xlu0 %6782
          %v6784 = vsel %vm1227, %v6774, 0.0
          %6785 = vadd.xlane.f32.xlu0 %v6784
          %v6786 = vpop.xlane.xlu0 %6785
          %v6787 = vsel %vm1227, %v6775, 0.0
          %6788 = vadd.xlane.f32.xlu0 %v6787
          %v6789 = vpop.xlane.xlu0 %6788
          %v6790 = vsel %vm1227, %v6776, 0.0
          %6791 = vadd.xlane.f32.xlu0 %v6790
          %v6792 = vpop.xlane.xlu0 %6791
          %v6793 = vsel %vm1227, %v6777, 0.0
          %6794 = vadd.xlane.f32.xlu0 %v6793
          %v6795 = vpop.xlane.xlu0 %6794
          %v6796 = vmul.f32 %v6780, %v1246
          %v6797 = vmul.f32 %v6783, %v1246
          %v6798 = vmul.f32 %v6786, %v1246
          %v6799 = vmul.f32 %v6789, %v1246
          %v6800 = vmul.f32 %v6792, %v1246
          %v6801 = vmul.f32 %v6795, %v1246
          %v6802 = vmul.f32 %v6766, %v6766
          %v6803 = vmul.f32 %v6767, %v6767
          %v6804 = vmul.f32 %v6768, %v6768
          %v6805 = vmul.f32 %v6769, %v6769
          %v6806 = vmul.f32 %v6770, %v6770
          %v6807 = vmul.f32 %v6771, %v6771
          %v6808 = vsub.f32 %v6796, %v6802
          %v6809 = vsub.f32 %v6797, %v6803
          %v6810 = vsub.f32 %v6798, %v6804
          %v6811 = vsub.f32 %v6799, %v6805
          %v6812 = vsub.f32 %v6800, %v6806
          %v6813 = vsub.f32 %v6801, %v6807
          %v6814 = vsub.f32 %v6730, %v6766
          %v6815 = vsub.f32 %v6731, %v6767
          %v6816 = vsub.f32 %v6732, %v6768
          %v6817 = vsub.f32 %v6733, %v6769
          %v6818 = vsub.f32 %v6734, %v6770
          %v6819 = vsub.f32 %v6735, %v6771
          %v6820 = vadd.f32 %v6808, 1e-05
          %v6821 = vadd.f32 %v6809, 1e-05
          %v6822 = vadd.f32 %v6810, 1e-05
          %v6823 = vadd.f32 %v6811, 1e-05
          %v6824 = vadd.f32 %v6812, 1e-05
          %v6825 = vadd.f32 %v6813, 1e-05
          %v6826 = vrsqrt.pop %v6820
          %v6827 = vrsqrt.pop %v6821
          %v6828 = vrsqrt.pop %v6822
          %v6829 = vrsqrt.pop %v6823
          %v6830 = vrsqrt.pop %v6824
          %v6831 = vrsqrt.pop %v6825
          %v6832 = vmul.f32 %v6814, %v6826
          %v6833 = vmul.f32 %v6815, %v6827
          %v6834 = vmul.f32 %v6816, %v6828
          %v6835 = vmul.f32 %v6817, %v6829
          %v6836 = vmul.f32 %v6818, %v6830
          %v6837 = vmul.f32 %v6819, %v6831
          %v6839 = vlaneseq
          %v6840 = vshrl.u32 %v6839, 7
          %v6841 = vsub.s32 0, %v6840
          %v6842 = vrot.slane %v6746, %v6841
          %v6844 = vmul.f32 %v6832, %v6842
          %v6845 = vmul.f32 %v6833, %v6842
          %v6846 = vmul.f32 %v6834, %v6842
          %v6847 = vmul.f32 %v6835, %v6842
          %v6848 = vmul.f32 %v6836, %v6842
          %v6849 = vmul.f32 %v6837, %v6842
          %v6851 = vlaneseq
          %v6852 = vshrl.u32 %v6851, 7
          %v6853 = vsub.s32 0, %v6852
          %v6854 = vrot.slane %v6747, %v6853
          %v6856 = vadd.f32 %v6844, %v6854
          %v6857 = vadd.f32 %v6845, %v6854
          %v6858 = vadd.f32 %v6846, %v6854
          %v6859 = vadd.f32 %v6847, %v6854
          %v6860 = vadd.f32 %v6848, %v6854
          %v6861 = vadd.f32 %v6849, %v6854
          %v6862 = vpack.c.bf16 %v6857, %v6856
          %v6863 = vpack.c.bf16 %v6859, %v6858
          %v6864 = vpack.c.bf16 %v6861, %v6860
          %v6865 = vld [vmem:[%s20] sm:$0xf]
          %v6866 = vld [vmem:[%s20 + $0x4] sm:$0xf]
          %v6867 = vld [vmem:[%s20 + $0x8] sm:$0xf]
          %v6868 = vld [vmem:[%s20 + $0xc] sm:$0xf]
          %v6869 = vld [vmem:[%s21] sm:$0x1]
          %v6871 = vlaneseq
          %v6872 = vshrl.u32 %v6871, 7
          %v6873 = vsub.s32 0, %v6872
          %v6874 = vrot.slane %v6869, %v6873
          %v6880 = vunpack.c.l.b16 %v6865
          %v6881 = vunpack.c.l.b16 %v6866
          %v6882 = vunpack.c.l.b16 %v6867
          %v6883 = vunpack.c.l.b16 %v6868
          %v6884 = vpack.c.b16 %v6881, %v6880
          %v6885 = vpack.c.b16 %v6883, %v6882
          %v6889 = vsel %vm1227, %v6862, 0
          %v6892 = vsel %vm1227, %v6863, 0
          %v6895 = vsel %vm1227, %v6864, 0
          %6897 = vmatprep.subr.bf16.mxu0 0
          %6898 = vmatpush1.bf16.msra.mxu0 0
          %6899 = vmatprep.subr.bf16.mxu0 0
          %6900 = vmatpush1.bf16.msra.mxu0 0
          %6901 = vmatprep.subr.bf16.mxu0 0
          %6902 = vmatpush1.bf16.msra.mxu0 0
          %6903 = vmatprep.subr.bf16.mxu0 0
          %6904 = vmatpush1.bf16.msra.mxu0 0
          %6905 = vmatprep.subr.bf16.mxu0 0
          %6906 = vmatpush1.bf16.msra.mxu0 0
          %6907 = vmatprep.subr.bf16.mxu0 0
          %6908 = vmatpush1.bf16.msra.mxu0 0
          %6909 = vmatprep.subr.bf16.mxu0 0
          %6910 = vmatpush1.bf16.msra.mxu0 %v6885
          %6911 = vmatprep.subr.bf16.mxu0 0
          %6912 = vmatpush1.bf16.msra.mxu0 %v6884
          %6913 = vmatprep.subr.bf16.mxu0 0
          %6914 = vmatpush2.bf16.msra.mxu0 0
          %6915 = vmatprep.subr.bf16.mxu0 0
          %6916 = vmatpush2.bf16.msra.mxu0 0
          %6917 = vmatprep.subr.bf16.mxu0 0
          %6918 = vmatpush2.bf16.msra.mxu0 0
          %6919 = vmatprep.subr.bf16.mxu0 0
          %6920 = vmatpush2.bf16.msra.mxu0 0
          %6921 = vmatprep.subr.bf16.mxu0 0
          %6922 = vmatpush2.bf16.msra.mxu0 0
          %6923 = vmatprep.subr.bf16.mxu0 0
          %6924 = vmatpush2.bf16.msra.mxu0 0
          %6925 = vmatprep.subr.bf16.mxu0 0
          %6926 = vmatpush2.bf16.msra.mxu0 0
          %6927 = vmatprep.subr.bf16.mxu0 0
          %6928 = vmatpush2.bf16.msra.mxu0 0
          %6929 = vmatprep.mubr.bf16.mxu0 0
          %6930 = vmatmul.mubr.bf16.gmra.mxu0 %v6889
          %v6931 = vpop.f32.mrf.mxu0
          %v6932 = vadd.f32 %v6874, %v6931
          %v6933 = vpop.f32.mrf.mxu0
          %v6934 = vpop.f32.mrf.mxu0
          %v6935 = vadd.f32 %v6874, %v6934
          %v6936 = vpop.f32.mrf.mxu0
          %6937 = vmatprep.mubr.bf16.mxu0 0
          %6938 = vmatmul.mubr.bf16.gmra.mxu0 %v6892
          %v6939 = vpop.f32.mrf.mxu0
          %v6940 = vadd.f32 %v6874, %v6939
          %v6941 = vpop.f32.mrf.mxu0
          %v6942 = vpop.f32.mrf.mxu0
          %v6943 = vadd.f32 %v6874, %v6942
          %v6944 = vpop.f32.mrf.mxu0
          %6945 = vmatprep.mubr.bf16.mxu0 0
          %6946 = vmatmul.mubr.bf16.gmra.mxu0 %v6895
          %v6947 = vpop.f32.mrf.mxu0
          %v6948 = vadd.f32 %v6874, %v6947
          %v6949 = vpop.f32.mrf.mxu0
          %v6950 = vpop.f32.mrf.mxu0
          %v6951 = vadd.f32 %v6874, %v6950
          %v6952 = vpop.f32.mrf.mxu0
          %6953 = vdwg.mxu0
          %6954 = vst [vmem:[%s965] sm:$0xff] %v6932
          %6955 = vst [vmem:[%s965 + $0x8] sm:$0xff] %v6935
          %6956 = vst [vmem:[%s965 + $0x10] sm:$0xff] %v6940
          %6957 = vst [vmem:[%s965 + $0x18] sm:$0xff] %v6943
          %6958 = vst [vmem:[%s965 + $0x20] sm:$0xff] %v6948
          %6959 = vst [vmem:[%s965 + $0x28] sm:$0xff] %v6951
          %6960 = vmax.xlane.f32.xlu0 %v6932
          %v6961 = vpop.xlane.xlu0 %6960
          %6962 = vmax.xlane.f32.xlu0 %v6935
          %v6963 = vpop.xlane.xlu0 %6962
          %6964 = vmax.xlane.f32.xlu0 %v6940
          %v6965 = vpop.xlane.xlu0 %6964
          %6966 = vmax.xlane.f32.xlu0 %v6943
          %v6967 = vpop.xlane.xlu0 %6966
          %6968 = vmax.xlane.f32.xlu0 %v6948
          %v6969 = vpop.xlane.xlu0 %6968
          %6970 = vmax.xlane.f32.xlu0 %v6951
          %v6971 = vpop.xlane.xlu0 %6970
          %v6972 = vmax.f32 %v6961, -1e+30
          %v6973 = vmax.f32 %v6963, -1e+30
          %v6974 = vmax.f32 %v6965, -1e+30
          %v6975 = vmax.f32 %v6967, -1e+30
          %v6976 = vmax.f32 %v6969, -1e+30
          %v6977 = vmax.f32 %v6971, -1e+30
          %v6978 = vsub.f32 -1e+30, %v6972
          %v6979 = vsub.f32 -1e+30, %v6973
          %v6980 = vsub.f32 -1e+30, %v6974
          %v6981 = vsub.f32 -1e+30, %v6975
          %v6982 = vsub.f32 -1e+30, %v6976
          %v6983 = vsub.f32 -1e+30, %v6977
          %v6984 = vmul.f32 %v6978, 1.442695
          %v6985 = vpow.pop %v6984
          %v6986 = vmul.f32 %v6979, 1.442695
          %v6987 = vpow.pop %v6986
          %v6988 = vmul.f32 %v6980, 1.442695
          %v6989 = vpow.pop %v6988
          %v6990 = vmul.f32 %v6981, 1.442695
          %v6991 = vpow.pop %v6990
          %v6992 = vmul.f32 %v6982, 1.442695
          %v6993 = vpow.pop %v6992
          %v6994 = vmul.f32 %v6983, 1.442695
          %v6995 = vpow.pop %v6994
          %v6996 = vmul.f32 %v6985, 0.0
          %v6997 = vmul.f32 %v6987, 0.0
          %v6998 = vmul.f32 %v6989, 0.0
          %v6999 = vmul.f32 %v6991, 0.0
          %v7000 = vmul.f32 %v6993, 0.0
          %v7001 = vmul.f32 %v6995, 0.0
          %v7002 = vsub.f32 %v6932, %v6972
          %v7003 = vsub.f32 %v6935, %v6973
          %v7004 = vsub.f32 %v6940, %v6974
          %v7005 = vsub.f32 %v6943, %v6975
          %v7006 = vsub.f32 %v6948, %v6976
          %v7007 = vsub.f32 %v6951, %v6977
          %v7008 = vmul.f32 %v7002, 1.442695
          %v7009 = vpow.pop %v7008
          %v7010 = vmul.f32 %v7003, 1.442695
          %v7011 = vpow.pop %v7010
          %v7012 = vmul.f32 %v7004, 1.442695
          %v7013 = vpow.pop %v7012
          %v7014 = vmul.f32 %v7005, 1.442695
          %v7015 = vpow.pop %v7014
          %v7016 = vmul.f32 %v7006, 1.442695
          %v7017 = vpow.pop %v7016
          %v7018 = vmul.f32 %v7007, 1.442695
          %v7019 = vpow.pop %v7018
          %7020 = vadd.xlane.f32.xlu0 %v7009
          %v7021 = vpop.xlane.xlu0 %7020
          %7022 = vadd.xlane.f32.xlu0 %v7011
          %v7023 = vpop.xlane.xlu0 %7022
          %7024 = vadd.xlane.f32.xlu0 %v7013
          %v7025 = vpop.xlane.xlu0 %7024
          %7026 = vadd.xlane.f32.xlu0 %v7015
          %v7027 = vpop.xlane.xlu0 %7026
          %7028 = vadd.xlane.f32.xlu0 %v7017
          %v7029 = vpop.xlane.xlu0 %7028
          %7030 = vadd.xlane.f32.xlu0 %v7019
          %v7031 = vpop.xlane.xlu0 %7030
          %v7032 = vadd.f32 %v6996, %v7021
          %v7033 = vadd.f32 %v6997, %v7023
          %v7034 = vadd.f32 %v6998, %v7025
          %v7035 = vadd.f32 %v6999, %v7027
          %v7036 = vadd.f32 %v7000, %v7029
          %v7037 = vadd.f32 %v7001, %v7031
          %v7038 = vlog2.pop %v7032
          %v7039 = vmul.f32 %v7038, 0.6931472
          %v7040 = vlog2.pop %v7033
          %v7041 = vmul.f32 %v7040, 0.6931472
          %v7042 = vlog2.pop %v7034
          %v7043 = vmul.f32 %v7042, 0.6931472
          %v7044 = vlog2.pop %v7035
          %v7045 = vmul.f32 %v7044, 0.6931472
          %v7046 = vlog2.pop %v7036
          %v7047 = vmul.f32 %v7046, 0.6931472
          %v7048 = vlog2.pop %v7037
          %v7049 = vmul.f32 %v7048, 0.6931472
          %v7050 = vadd.f32 %v6972, %v7039
          %v7051 = vadd.f32 %v6973, %v7041
          %v7052 = vadd.f32 %v6974, %v7043
          %v7053 = vadd.f32 %v6975, %v7045
          %v7054 = vadd.f32 %v6976, %v7047
          %v7055 = vadd.f32 %v6977, %v7049
          %v7056 = vld [vmem:[%s965] sm:$0xff]
          %v7057 = vld [vmem:[%s965 + $0x8] sm:$0xff]
          %v7058 = vld [vmem:[%s965 + $0x10] sm:$0xff]
          %v7059 = vld [vmem:[%s965 + $0x18] sm:$0xff]
          %v7060 = vld [vmem:[%s965 + $0x20] sm:$0xff]
          %v7061 = vld [vmem:[%s965 + $0x28] sm:$0xff]
          %v7062 = vsub.f32 %v7056, %v7050
          %v7063 = vsub.f32 %v7057, %v7051
          %v7064 = vsub.f32 %v7058, %v7052
          %v7065 = vsub.f32 %v7059, %v7053
          %v7066 = vsub.f32 %v7060, %v7054
          %v7067 = vsub.f32 %v7061, %v7055
          %7068 = vst [vmem:[%s965] sm:$0xff] %v7062
          %7069 = vst [vmem:[%s965 + $0x8] sm:$0xff] %v7063
          %7070 = vst [vmem:[%s965 + $0x10] sm:$0xff] %v7064
          %7071 = vst [vmem:[%s965 + $0x18] sm:$0xff] %v7065
          %7072 = vst [vmem:[%s965 + $0x20] sm:$0xff] %v7066
          %7073 = vst [vmem:[%s965 + $0x28] sm:$0xff] %v7067
        $region144: #{tpu_custom_call.1} parent=107 // pred_fallthru
          _
        %s7074 = sand.u32 %s591, 1
        %s7075 = scalar_lea.sflag [#allocation5], %s7074
        %s7076 = sand.u32 %s591, 1
        %s7077 = smul.addr %s7076, 48
        %s7078 = scalar_lea.vmem [#allocation15], %s7077
        // Predicated region
        $region145: #{tpu_custom_call.1} parent=107 // pred_check
          %p7079 = pneg %p601
        $region146: #{tpu_custom_call.1} parent=107 // pred_check_branch
          %7081 = sbr.rel (%p7079) target = $region148
        $region147: #{tpu_custom_call.1} parent=107 // pred_region
          %s7082 = smul.u32 2, %s48
          %s7084 = ssub.s32 768, 768
          %7085 = vsyncadd %s7075, %s7084
          %s7086 = smul.addr %s7082, 3
          %s7087 = smul.addr %s7086, 128
          %s7088 = scalar_lea.hbm %s22, %s7087
          %s7089 = sshll.u32 %s7078, 4
          %s7090 = int_to_ptr.vmem [resolvable:$true] %s7089
          %7095 = dma.vmem_to_hbm [thread:$0]  %s7090, 768, %s7088, %s7075, 128, 128, 8
        $region148: #{tpu_custom_call.1} parent=107 // pred_fallthru
          _
      $region108: #{tpu_custom_call.1} parent=5 // pred_fallthru
        _
      %p7096 = scmp.le.s32.totalorder 2, %s39
      // Predicated region
      $region149: #{tpu_custom_call.1} parent=5 // pred_check
        %p7097 = pneg %p7096
      $region150: #{tpu_custom_call.1} parent=5 // pred_check_branch
        %7099 = sbr.rel (%p7097) target = $region152
      $region151: #{tpu_custom_call.1} parent=5 // pred_region
        %s7100 = ssub.s32 %s39, 2
        // Predicated region
        $region153: #{tpu_custom_call.1} parent=151 // pred_check
          %p7101 = pneg %p607
        $region154: #{tpu_custom_call.1} parent=151 // pred_check_branch
          %7103 = sbr.rel (%p7101) target = $region156
        $region155: #{tpu_custom_call.1} parent=151 // pred_region
          %s7104 = sand.u32 %s592, 1
          %s7105 = scalar_lea.sflag [#allocation5], %s7104
          %s7106 = sand.u32 %s592, 1
          %s7107 = smul.addr %s7106, 48
          %s7108 = scalar_lea.vmem [#allocation15], %s7107
          %7109 = dma.done %s7105, 768
        $region156: #{tpu_custom_call.1} parent=151 // pred_fallthru
          _
      $region152: #{tpu_custom_call.1} parent=5 // pred_fallthru
        _
    $region6: #{tpu_custom_call.1} parent=1 // loop_footer
      %s43 = sadd.s32 1, %s39
    $region7: #{tpu_custom_call.1} parent=1 // loop_footer_branch
      %38 = sbr.rel target = $region3
    $region8: #{tpu_custom_call.1} parent=1 // loop_exit
      _
    %7110 = vsyncpa [#allocation4], 1
    %s7111 = scalar_lea.sflag [#allocation4], 1
    %7112 = vsyncpa %s7111, 1
    %7113 = vsyncpa [#allocation7], 1
    %7114 = vsyncpa [#allocation10], 1
    %s7115 = scalar_lea.sflag [#allocation10], 1
    %7116 = vsyncpa %s7115, 1
    %7117 = vsyncpa [#allocation13], 1
    %s7118 = scalar_lea.sflag [#allocation13], 1
    %7119 = vsyncpa %s7118, 1
    %7120 = vsyncpa [#allocation5], 1
    %s7121 = scalar_lea.sflag [#allocation5], 1
    %7122 = vsyncpa %s7121, 1

</llo_original>
